<compile_context>
chip_gen: v6e
topology: v6e:2x2x1
jax: 0.10.0
libtpu: 0.0.40
codegen_flags: <defaults>
</compile_context>

<pallas_src>
import jax
import jax.numpy as jnp
from jax import lax
from jax.experimental import pallas as pl
from jax.experimental.pallas import tpu as pltpu


_S1 = 176   # per-image row stride of the flattened conv1 input  (13*13=169 -> 176)
_S2 = 88    # per-image row stride of the flattened conv2 input  ( 9* 9= 81 ->  88)


def _round_up(x, m):
    return (x + m - 1) // m * m


# ----------------------------------------------------------------------------
# Fused Pallas kernel (built per static batch size n)
# ----------------------------------------------------------------------------
def _make_fused_forward(n):
    # conv1 virtual-output rows (row-major 13-wide grid per image, batches merged)
    L1 = _round_up((n - 1) * _S1 + 141, 8)
    # pool1 intermediate lengths.  B1 is padded to a sublane multiple so the
    # pool1 scratch store is a full, aligned (B1, 48) store.
    B1 = _round_up((n - 1) * _S1 + 115, 8)   # rows of the full 2x2 pool1 max
    A1 = B1 + 13                             # rows of the horizontal pair-max
    # conv2 virtual-output rows (row-major 9-wide grid per image, batches merged)
    L2 = (n - 1) * _S2 + 32
    C2 = (n - 1) * _S2 + 30                  # rows of pool2 horizontal pair-max
    D2 = (n - 1) * _S2 + 21                  # rows of pool2 full 2x2 max

    def kernel(xs_ref, w1_ref, b1_ref, w2_ref, b2_ref, o_ref, p1_ref, buf2_ref):
        # -------- conv1 (as a 3x3 / stride-1 conv over the s2d input) --------
        acc1 = jnp.zeros((L1, 48), jnp.float32)
        for q in range(3):
            for p in range(3):
                patch = xs_ref[pl.ds(q * 13 + p, L1), :].astype(jnp.bfloat16)
                acc1 = acc1 + jnp.dot(patch, w1_ref[q * 3 + p],
                                      preferred_element_type=jnp.float32)
        out1 = jnp.maximum(acc1 + b1_ref[...], 0.0)           # bias + ReLU (f32)

        # -------- maxpool1 2x2/s2 over the 11x11 map (width-13 row-major) ----
        m1 = jnp.maximum(out1[0:A1, :], out1[1:A1 + 1, :])    # max over dj
        p1_ref[...] = jnp.maximum(m1[0:B1, :], m1[13:13 + B1, :])   # max over di

        # Zero-padded conv2 input (the zeros double as conv2's padding=2), then
        # scatter the valid 5x5 pooled rows per image as 5-row blocks using
        # stride-2 reads from the pool1 scratch.
        buf2_ref[...] = jnp.zeros((n * _S2, 48), jnp.float32)
        for b in range(n):
            for ohp in range(5):
                src = b * _S1 + 26 * ohp                 # pooled row, stride 2 over owp
                dst = b * _S2 + (ohp + 2) * 9 + 2        # (+2,+2) = conv2 pad offset
                buf2_ref[dst:dst + 5, :] = p1_ref[pl.ds(src, 5, stride=2), :]

        # -------- conv2 (5x5 / stride-1, pad 2) -------------------------------
        acc2 = jnp.zeros((L2, 128), jnp.float32)
        for i in range(5):
            for j in range(5):
                patch = buf2_ref[pl.ds(i * 9 + j, L2), :].astype(jnp.bfloat16)
                acc2 = acc2 + jnp.dot(patch, w2_ref[i * 5 + j],
                                      preferred_element_type=jnp.float32)
        out2 = jnp.maximum(acc2 + b2_ref[...], 0.0)           # bias + ReLU (f32)

        # -------- maxpool2 2x2/s2 over the 5x5 map (width-9 row-major) -------
        m1b = jnp.maximum(out2[0:C2, :], out2[1:C2 + 1, :])
        m2b = jnp.maximum(m1b[0:D2, :], m1b[9:9 + D2, :])

        # gather the (n, 2, 2) valid outputs as a lane-dense (n*4, 128) slab
        rows = []
        for b in range(n):
            for oh in range(2):
                for ow in range(2):
                    r = b * _S2 + 18 * oh + 2 * ow
                    rows.append(m2b[r:r + 1, :])
        o_ref[...] = jnp.concatenate(rows, axis=0)

    return pl.pallas_call(
        kernel,
        out_shape=jax.ShapeDtypeStruct((n * 4, 128), jnp.float32),
        scratch_shapes=[pltpu.VMEM((B1, 48), jnp.float32),        # pool1 result
                        pltpu.VMEM((n * _S2, 48), jnp.float32)],  # conv2 padded input
    )


# ----------------------------------------------------------------------------
# Layout glue (a handful of tiny XLA ops, all fusible)
# ----------------------------------------------------------------------------
def _prep_input(x_nchw):
    """NCHW (n,3,51,51) -> space-to-depth, flattened (n*176, 48) f32."""
    n = x_nchw.shape[0]
    x = jnp.transpose(x_nchw, (0, 2, 3, 1))                  # (n,51,51,3) NHWC
    x = jnp.pad(x, ((0, 0), (0, 1), (0, 1), (0, 0)))         # (n,52,52,3)
    x = x.reshape(n, 13, 4, 13, 4, 3)                        # (n,a,r,b,s,c) H=4a+r
    x = jnp.transpose(x, (0, 1, 3, 2, 4, 5))                 # (n,a,b,r,s,c)
    x = x.reshape(n, 169, 48)                                # d = r*12 + s*3 + c
    x = jnp.pad(x, ((0, 0), (0, _S1 - 169), (0, 0)))         # (n,176,48)
    return x.reshape(n * _S1, 48)


def prepare_params(params):
    """One-time repack of the weights into the kernel's tap-matrix layout."""
    w1 = jnp.pad(params["w1"], ((0, 1), (0, 1), (0, 0), (0, 0)))  # (12,12,3,48)
    w1 = w1.reshape(3, 4, 3, 4, 3, 48)                            # (q,r,p,s,c,f)
    w1 = jnp.transpose(w1, (0, 2, 1, 3, 4, 5))                    # (q,p,r,s,c,f)
    w1s = w1.reshape(9, 48, 48).astype(jnp.bfloat16)              # t=q*3+p, d=r*12+s*3+c
    w2s = params["w2"].reshape(25, 48, 128).astype(jnp.bfloat16)  # t=i*5+j
    b1 = params["b1"].reshape(1, 48).astype(jnp.float32)
    b2 = params["b2"].reshape(1, 128).astype(jnp.float32)
    return {"w1s": w1s, "b1": b1, "w2s": w2s, "b2": b2}


def init_params(key):
    k1, k2, k3, k4 = jax.random.split(key, 4)
    return {
        # HWIO layout (PyTorch (O,I,kh,kw) weights would be transposed to (kh,kw,I,O))
        "w1": 0.05 * jax.random.normal(k1, (11, 11, 3, 48), jnp.float32),
        "b1": 0.05 * jax.random.normal(k2, (48,), jnp.float32),
        "w2": 0.05 * jax.random.normal(k3, (5, 5, 48, 128), jnp.float32),
        "b2": 0.05 * jax.random.normal(k4, (128,), jnp.float32),
    }


# ----------------------------------------------------------------------------
# Module1 forward
# ----------------------------------------------------------------------------
@jax.jit
def module1_forward(x_nchw, kparams):
    n, c, h, w = x_nchw.shape
    assert (c, h, w) == (3, 51, 51), "fused kernel is specialized to 3x51x51 inputs"
    xs = _prep_input(x_nchw)
    out2d = _make_fused_forward(n)(xs, kparams["w1s"], kparams["b1"],
                                   kparams["w2s"], kparams["b2"])
    return jnp.transpose(out2d.reshape(n, 2, 2, 128), (0, 3, 1, 2))   # NCHW


def _reference_forward(x_nchw, params):
    """Pure-JAX reference (lax conv + reduce_window) for a sanity check."""
    x = jnp.transpose(x_nchw, (0, 2, 3, 1))

    def conv(x, w, b, stride, pad):
        y = lax.conv_general_dilated(
            x, w, window_strides=(stride, stride),
            padding=[(pad, pad), (pad, pad)],
            dimension_numbers=("NHWC", "HWIO", "NHWC"))
        return jnp.maximum(y + b, 0.0)

    def pool(x):
        return lax.reduce_window(x, -jnp.inf, lax.max,
                                 (1, 2, 2, 1), (1, 2, 2, 1), "VALID")

    x = pool(conv(x, params["w1"], params["b1"], 4, 0))
    x = pool(conv(x, params["w2"], params["b2"], 1, 2))
    return jnp.transpose(x, (0, 3, 1, 2))


if __name__ == "__main__":
    key = jax.random.PRNGKey(0)
    kx, kp = jax.random.split(key)

    # N=2, C=3, H=W=51:
    # conv1 (k11,s4) -> 11x11 -> pool -> 5x5 -> conv2 (k5,p2) -> 5x5 -> pool -> 2x2
    x = jax.random.normal(kx, (2, 3, 51, 51), jnp.float32)
    params = init_params(kp)
    kparams = prepare_params(params)

    out = jax.block_until_ready(module1_forward(x, kparams))
    assert out.shape == (2, 128, 2, 2), out.shape

    ref = jax.block_until_ready(_reference_forward(x, params))
    assert jnp.allclose(out, ref, rtol=5e-2, atol=5e-2), (
        float(jnp.max(jnp.abs(out - ref))))

    print("KERNEL_OK")
</pallas_src>

<mosaic_0001>
module attributes {stable_mosaic.version = 11 : i64} {
  func.func @kernel(%arg0: memref<352x48xf32, #tpu.memory_space<vmem>>, %arg1: memref<9x48x48xbf16, #tpu.memory_space<vmem>>, %arg2: memref<1x48xf32, #tpu.memory_space<vmem>>, %arg3: memref<25x48x128xbf16, #tpu.memory_space<vmem>>, %arg4: memref<1x128xf32, #tpu.memory_space<vmem>>, %arg5: memref<8x128xf32, #tpu.memory_space<vmem>>, %arg6: memref<296x48xf32, #tpu.memory_space<vmem>>, %arg7: memref<176x48xf32, #tpu.memory_space<vmem>>) attributes {dimension_semantics = [], scalar_prefetch = 0 : i64, scratch_operands = 2 : i64, tpu.core_type = #tpu.core_type<tc>} {
    %cst = arith.constant 0.000000e+00 : f32
    %0 = vector.broadcast %cst : f32 to vector<320x48xf32>
    %c0 = arith.constant 0 : index
    %c0_0 = arith.constant 0 : index
    %1 = vector.load %arg0[%c0, %c0_0] : memref<352x48xf32, #tpu.memory_space<vmem>>, vector<320x48xf32>
    %2 = arith.truncf %1 : vector<320x48xf32> to vector<320x48xbf16>
    %c0_1 = arith.constant 0 : index
    %c0_2 = arith.constant 0 : index
    %c0_3 = arith.constant 0 : index
    %3 = vector.load %arg1[%c0_1, %c0_2, %c0_3] : memref<9x48x48xbf16, #tpu.memory_space<vmem>>, vector<1x48x48xbf16>
    %4 = vector.shape_cast %3 : vector<1x48x48xbf16> to vector<48x48xbf16>
    %cst_4 = arith.constant dense<0.000000e+00> : vector<320x48xf32>
    %5 = tpu.matmul %2, %4, %cst_4 {dimension_numbers = #tpu.dot_dimension_numbers<[1], [0], [0], [1], [0, 0, 1, 1], [], []>} : vector<320x48xbf16>, vector<48x48xbf16>, vector<320x48xf32> -> vector<320x48xf32>
    %6 = arith.addf %0, %5 : vector<320x48xf32>
    %c1 = arith.constant 1 : index
    %c0_5 = arith.constant 0 : index
    %7 = vector.load %arg0[%c1, %c0_5] : memref<352x48xf32, #tpu.memory_space<vmem>>, vector<320x48xf32>
    %8 = arith.truncf %7 : vector<320x48xf32> to vector<320x48xbf16>
    %c1_6 = arith.constant 1 : index
    %c0_7 = arith.constant 0 : index
    %c0_8 = arith.constant 0 : index
    %9 = vector.load %arg1[%c1_6, %c0_7, %c0_8] : memref<9x48x48xbf16, #tpu.memory_space<vmem>>, vector<1x48x48xbf16>
    %10 = vector.shape_cast %9 : vector<1x48x48xbf16> to vector<48x48xbf16>
    %cst_9 = arith.constant dense<0.000000e+00> : vector<320x48xf32>
    %11 = tpu.matmul %8, %10, %cst_9 {dimension_numbers = #tpu.dot_dimension_numbers<[1], [0], [0], [1], [0, 0, 1, 1], [], []>} : vector<320x48xbf16>, vector<48x48xbf16>, vector<320x48xf32> -> vector<320x48xf32>
    %12 = arith.addf %6, %11 : vector<320x48xf32>
    %c2 = arith.constant 2 : index
    %c0_10 = arith.constant 0 : index
    %13 = vector.load %arg0[%c2, %c0_10] : memref<352x48xf32, #tpu.memory_space<vmem>>, vector<320x48xf32>
    %14 = arith.truncf %13 : vector<320x48xf32> to vector<320x48xbf16>
    %c2_11 = arith.constant 2 : index
    %c0_12 = arith.constant 0 : index
    %c0_13 = arith.constant 0 : index
    %15 = vector.load %arg1[%c2_11, %c0_12, %c0_13] : memref<9x48x48xbf16, #tpu.memory_space<vmem>>, vector<1x48x48xbf16>
    %16 = vector.shape_cast %15 : vector<1x48x48xbf16> to vector<48x48xbf16>
    %cst_14 = arith.constant dense<0.000000e+00> : vector<320x48xf32>
    %17 = tpu.matmul %14, %16, %cst_14 {dimension_numbers = #tpu.dot_dimension_numbers<[1], [0], [0], [1], [0, 0, 1, 1], [], []>} : vector<320x48xbf16>, vector<48x48xbf16>, vector<320x48xf32> -> vector<320x48xf32>
    %18 = arith.addf %12, %17 : vector<320x48xf32>
    %c13 = arith.constant 13 : index
    %c0_15 = arith.constant 0 : index
    %19 = vector.load %arg0[%c13, %c0_15] : memref<352x48xf32, #tpu.memory_space<vmem>>, vector<320x48xf32>
    %20 = arith.truncf %19 : vector<320x48xf32> to vector<320x48xbf16>
    %c3 = arith.constant 3 : index
    %c0_16 = arith.constant 0 : index
    %c0_17 = arith.constant 0 : index
    %21 = vector.load %arg1[%c3, %c0_16, %c0_17] : memref<9x48x48xbf16, #tpu.memory_space<vmem>>, vector<1x48x48xbf16>
    %22 = vector.shape_cast %21 : vector<1x48x48xbf16> to vector<48x48xbf16>
    %cst_18 = arith.constant dense<0.000000e+00> : vector<320x48xf32>
    %23 = tpu.matmul %20, %22, %cst_18 {dimension_numbers = #tpu.dot_dimension_numbers<[1], [0], [0], [1], [0, 0, 1, 1], [], []>} : vector<320x48xbf16>, vector<48x48xbf16>, vector<320x48xf32> -> vector<320x48xf32>
    %24 = arith.addf %18, %23 : vector<320x48xf32>
    %c14 = arith.constant 14 : index
    %c0_19 = arith.constant 0 : index
    %25 = vector.load %arg0[%c14, %c0_19] : memref<352x48xf32, #tpu.memory_space<vmem>>, vector<320x48xf32>
    %26 = arith.truncf %25 : vector<320x48xf32> to vector<320x48xbf16>
    %c4 = arith.constant 4 : index
    %c0_20 = arith.constant 0 : index
    %c0_21 = arith.constant 0 : index
    %27 = vector.load %arg1[%c4, %c0_20, %c0_21] : memref<9x48x48xbf16, #tpu.memory_space<vmem>>, vector<1x48x48xbf16>
    %28 = vector.shape_cast %27 : vector<1x48x48xbf16> to vector<48x48xbf16>
    %cst_22 = arith.constant dense<0.000000e+00> : vector<320x48xf32>
    %29 = tpu.matmul %26, %28, %cst_22 {dimension_numbers = #tpu.dot_dimension_numbers<[1], [0], [0], [1], [0, 0, 1, 1], [], []>} : vector<320x48xbf16>, vector<48x48xbf16>, vector<320x48xf32> -> vector<320x48xf32>
    %30 = arith.addf %24, %29 : vector<320x48xf32>
    %c15 = arith.constant 15 : index
    %c0_23 = arith.constant 0 : index
    %31 = vector.load %arg0[%c15, %c0_23] : memref<352x48xf32, #tpu.memory_space<vmem>>, vector<320x48xf32>
    %32 = arith.truncf %31 : vector<320x48xf32> to vector<320x48xbf16>
    %c5 = arith.constant 5 : index
    %c0_24 = arith.constant 0 : index
    %c0_25 = arith.constant 0 : index
    %33 = vector.load %arg1[%c5, %c0_24, %c0_25] : memref<9x48x48xbf16, #tpu.memory_space<vmem>>, vector<1x48x48xbf16>
    %34 = vector.shape_cast %33 : vector<1x48x48xbf16> to vector<48x48xbf16>
    %cst_26 = arith.constant dense<0.000000e+00> : vector<320x48xf32>
    %35 = tpu.matmul %32, %34, %cst_26 {dimension_numbers = #tpu.dot_dimension_numbers<[1], [0], [0], [1], [0, 0, 1, 1], [], []>} : vector<320x48xbf16>, vector<48x48xbf16>, vector<320x48xf32> -> vector<320x48xf32>
    %36 = arith.addf %30, %35 : vector<320x48xf32>
    %c26 = arith.constant 26 : index
    %c0_27 = arith.constant 0 : index
    %37 = vector.load %arg0[%c26, %c0_27] : memref<352x48xf32, #tpu.memory_space<vmem>>, vector<320x48xf32>
    %38 = arith.truncf %37 : vector<320x48xf32> to vector<320x48xbf16>
    %c6 = arith.constant 6 : index
    %c0_28 = arith.constant 0 : index
    %c0_29 = arith.constant 0 : index
    %39 = vector.load %arg1[%c6, %c0_28, %c0_29] : memref<9x48x48xbf16, #tpu.memory_space<vmem>>, vector<1x48x48xbf16>
    %40 = vector.shape_cast %39 : vector<1x48x48xbf16> to vector<48x48xbf16>
    %cst_30 = arith.constant dense<0.000000e+00> : vector<320x48xf32>
    %41 = tpu.matmul %38, %40, %cst_30 {dimension_numbers = #tpu.dot_dimension_numbers<[1], [0], [0], [1], [0, 0, 1, 1], [], []>} : vector<320x48xbf16>, vector<48x48xbf16>, vector<320x48xf32> -> vector<320x48xf32>
    %42 = arith.addf %36, %41 : vector<320x48xf32>
    %c27 = arith.constant 27 : index
    %c0_31 = arith.constant 0 : index
    %43 = vector.load %arg0[%c27, %c0_31] : memref<352x48xf32, #tpu.memory_space<vmem>>, vector<320x48xf32>
    %44 = arith.truncf %43 : vector<320x48xf32> to vector<320x48xbf16>
    %c7 = arith.constant 7 : index
    %c0_32 = arith.constant 0 : index
    %c0_33 = arith.constant 0 : index
    %45 = vector.load %arg1[%c7, %c0_32, %c0_33] : memref<9x48x48xbf16, #tpu.memory_space<vmem>>, vector<1x48x48xbf16>
    %46 = vector.shape_cast %45 : vector<1x48x48xbf16> to vector<48x48xbf16>
    %cst_34 = arith.constant dense<0.000000e+00> : vector<320x48xf32>
    %47 = tpu.matmul %44, %46, %cst_34 {dimension_numbers = #tpu.dot_dimension_numbers<[1], [0], [0], [1], [0, 0, 1, 1], [], []>} : vector<320x48xbf16>, vector<48x48xbf16>, vector<320x48xf32> -> vector<320x48xf32>
    %48 = arith.addf %42, %47 : vector<320x48xf32>
    %c28 = arith.constant 28 : index
    %c0_35 = arith.constant 0 : index
    %49 = vector.load %arg0[%c28, %c0_35] : memref<352x48xf32, #tpu.memory_space<vmem>>, vector<320x48xf32>
    %50 = arith.truncf %49 : vector<320x48xf32> to vector<320x48xbf16>
    %c8 = arith.constant 8 : index
    %c0_36 = arith.constant 0 : index
    %c0_37 = arith.constant 0 : index
    %51 = vector.load %arg1[%c8, %c0_36, %c0_37] : memref<9x48x48xbf16, #tpu.memory_space<vmem>>, vector<1x48x48xbf16>
    %52 = vector.shape_cast %51 : vector<1x48x48xbf16> to vector<48x48xbf16>
    %cst_38 = arith.constant dense<0.000000e+00> : vector<320x48xf32>
    %53 = tpu.matmul %50, %52, %cst_38 {dimension_numbers = #tpu.dot_dimension_numbers<[1], [0], [0], [1], [0, 0, 1, 1], [], []>} : vector<320x48xbf16>, vector<48x48xbf16>, vector<320x48xf32> -> vector<320x48xf32>
    %54 = arith.addf %48, %53 : vector<320x48xf32>
    %c0_39 = arith.constant 0 : index
    %c0_40 = arith.constant 0 : index
    %55 = vector.load %arg2[%c0_39, %c0_40] : memref<1x48xf32, #tpu.memory_space<vmem>>, vector<1x48xf32>
    %56 = vector.broadcast %55 : vector<1x48xf32> to vector<320x48xf32>
    %57 = arith.addf %54, %56 : vector<320x48xf32>
    %cst_41 = arith.constant 0.000000e+00 : f32
    %58 = vector.broadcast %cst_41 : f32 to vector<320x48xf32>
    %59 = arith.maximumf %57, %58 : vector<320x48xf32>
    %60 = vector.extract_strided_slice %59 {offsets = [0, 0], sizes = [309, 48], strides = [1, 1]} : vector<320x48xf32> to vector<309x48xf32>
    %61 = vector.extract_strided_slice %59 {offsets = [1, 0], sizes = [309, 48], strides = [1, 1]} : vector<320x48xf32> to vector<309x48xf32>
    %62 = arith.maximumf %60, %61 : vector<309x48xf32>
    %63 = vector.extract_strided_slice %62 {offsets = [0, 0], sizes = [296, 48], strides = [1, 1]} : vector<309x48xf32> to vector<296x48xf32>
    %64 = vector.extract_strided_slice %62 {offsets = [13, 0], sizes = [296, 48], strides = [1, 1]} : vector<309x48xf32> to vector<296x48xf32>
    %65 = arith.maximumf %63, %64 : vector<296x48xf32>
    %c0_42 = arith.constant 0 : index
    %c0_43 = arith.constant 0 : index
    %66 = vector.load %arg6[%c0_42, %c0_43] : memref<296x48xf32, #tpu.memory_space<vmem>>, vector<296x48xf32>
    tpu.vector_store %arg6[%c0_42, %c0_43], %65 {strides = array<i32>} : memref<296x48xf32, #tpu.memory_space<vmem>>, vector<296x48xf32>,
    %cst_44 = arith.constant 0.000000e+00 : f32
    %67 = vector.broadcast %cst_44 : f32 to vector<176x48xf32>
    %c0_45 = arith.constant 0 : index
    %c0_46 = arith.constant 0 : index
    %68 = vector.load %arg7[%c0_45, %c0_46] : memref<176x48xf32, #tpu.memory_space<vmem>>, vector<176x48xf32>
    tpu.vector_store %arg7[%c0_45, %c0_46], %67 {strides = array<i32>} : memref<176x48xf32, #tpu.memory_space<vmem>>, vector<176x48xf32>,
    %c0_47 = arith.constant 0 : index
    %c0_48 = arith.constant 0 : index
    %69 = tpu.strided_load %arg6[%c0_47, %c0_48] {strides = array<i32: 2, 1>} : memref<296x48xf32, #tpu.memory_space<vmem>>, vector<5x48xf32>
    %c20 = arith.constant 20 : index
    %c0_49 = arith.constant 0 : index
    %70 = vector.load %arg7[%c20, %c0_49] : memref<176x48xf32, #tpu.memory_space<vmem>>, vector<5x48xf32>
    tpu.vector_store %arg7[%c20, %c0_49], %69 {strides = array<i32>} : memref<176x48xf32, #tpu.memory_space<vmem>>, vector<5x48xf32>,
    %c26_50 = arith.constant 26 : index
    %c0_51 = arith.constant 0 : index
    %71 = tpu.strided_load %arg6[%c26_50, %c0_51] {strides = array<i32: 2, 1>} : memref<296x48xf32, #tpu.memory_space<vmem>>, vector<5x48xf32>
    %c29 = arith.constant 29 : index
    %c0_52 = arith.constant 0 : index
    %72 = vector.load %arg7[%c29, %c0_52] : memref<176x48xf32, #tpu.memory_space<vmem>>, vector<5x48xf32>
    tpu.vector_store %arg7[%c29, %c0_52], %71 {strides = array<i32>} : memref<176x48xf32, #tpu.memory_space<vmem>>, vector<5x48xf32>,
    %c52 = arith.constant 52 : index
    %c0_53 = arith.constant 0 : index
    %73 = tpu.strided_load %arg6[%c52, %c0_53] {strides = array<i32: 2, 1>} : memref<296x48xf32, #tpu.memory_space<vmem>>, vector<5x48xf32>
    %c38 = arith.constant 38 : index
    %c0_54 = arith.constant 0 : index
    %74 = vector.load %arg7[%c38, %c0_54] : memref<176x48xf32, #tpu.memory_space<vmem>>, vector<5x48xf32>
    tpu.vector_store %arg7[%c38, %c0_54], %73 {strides = array<i32>} : memref<176x48xf32, #tpu.memory_space<vmem>>, vector<5x48xf32>,
    %c78 = arith.constant 78 : index
    %c0_55 = arith.constant 0 : index
    %75 = tpu.strided_load %arg6[%c78, %c0_55] {strides = array<i32: 2, 1>} : memref<296x48xf32, #tpu.memory_space<vmem>>, vector<5x48xf32>
    %c47 = arith.constant 47 : index
    %c0_56 = arith.constant 0 : index
    %76 = vector.load %arg7[%c47, %c0_56] : memref<176x48xf32, #tpu.memory_space<vmem>>, vector<5x48xf32>
    tpu.vector_store %arg7[%c47, %c0_56], %75 {strides = array<i32>} : memref<176x48xf32, #tpu.memory_space<vmem>>, vector<5x48xf32>,
    %c104 = arith.constant 104 : index
    %c0_57 = arith.constant 0 : index
    %77 = tpu.strided_load %arg6[%c104, %c0_57] {strides = array<i32: 2, 1>} : memref<296x48xf32, #tpu.memory_space<vmem>>, vector<5x48xf32>
    %c56 = arith.constant 56 : index
    %c0_58 = arith.constant 0 : index
    %78 = vector.load %arg7[%c56, %c0_58] : memref<176x48xf32, #tpu.memory_space<vmem>>, vector<5x48xf32>
    tpu.vector_store %arg7[%c56, %c0_58], %77 {strides = array<i32>} : memref<176x48xf32, #tpu.memory_space<vmem>>, vector<5x48xf32>,
    %c176 = arith.constant 176 : index
    %c0_59 = arith.constant 0 : index
    %79 = tpu.strided_load %arg6[%c176, %c0_59] {strides = array<i32: 2, 1>} : memref<296x48xf32, #tpu.memory_space<vmem>>, vector<5x48xf32>
    %c108 = arith.constant 108 : index
    %c0_60 = arith.constant 0 : index
    %80 = vector.load %arg7[%c108, %c0_60] : memref<176x48xf32, #tpu.memory_space<vmem>>, vector<5x48xf32>
    tpu.vector_store %arg7[%c108, %c0_60], %79 {strides = array<i32>} : memref<176x48xf32, #tpu.memory_space<vmem>>, vector<5x48xf32>,
    %c202 = arith.constant 202 : index
    %c0_61 = arith.constant 0 : index
    %81 = tpu.strided_load %arg6[%c202, %c0_61] {strides = array<i32: 2, 1>} : memref<296x48xf32, #tpu.memory_space<vmem>>, vector<5x48xf32>
    %c117 = arith.constant 117 : index
    %c0_62 = arith.constant 0 : index
    %82 = vector.load %arg7[%c117, %c0_62] : memref<176x48xf32, #tpu.memory_space<vmem>>, vector<5x48xf32>
    tpu.vector_store %arg7[%c117, %c0_62], %81 {strides = array<i32>} : memref<176x48xf32, #tpu.memory_space<vmem>>, vector<5x48xf32>,
    %c228 = arith.constant 228 : index
    %c0_63 = arith.constant 0 : index
    %83 = tpu.strided_load %arg6[%c228, %c0_63] {strides = array<i32: 2, 1>} : memref<296x48xf32, #tpu.memory_space<vmem>>, vector<5x48xf32>
    %c126 = arith.constant 126 : index
    %c0_64 = arith.constant 0 : index
    %84 = vector.load %arg7[%c126, %c0_64] : memref<176x48xf32, #tpu.memory_space<vmem>>, vector<5x48xf32>
    tpu.vector_store %arg7[%c126, %c0_64], %83 {strides = array<i32>} : memref<176x48xf32, #tpu.memory_space<vmem>>, vector<5x48xf32>,
    %c254 = arith.constant 254 : index
    %c0_65 = arith.constant 0 : index
    %85 = tpu.strided_load %arg6[%c254, %c0_65] {strides = array<i32: 2, 1>} : memref<296x48xf32, #tpu.memory_space<vmem>>, vector<5x48xf32>
    %c135 = arith.constant 135 : index
    %c0_66 = arith.constant 0 : index
    %86 = vector.load %arg7[%c135, %c0_66] : memref<176x48xf32, #tpu.memory_space<vmem>>, vector<5x48xf32>
    tpu.vector_store %arg7[%c135, %c0_66], %85 {strides = array<i32>} : memref<176x48xf32, #tpu.memory_space<vmem>>, vector<5x48xf32>,
    %c280 = arith.constant 280 : index
    %c0_67 = arith.constant 0 : index
    %87 = tpu.strided_load %arg6[%c280, %c0_67] {strides = array<i32: 2, 1>} : memref<296x48xf32, #tpu.memory_space<vmem>>, vector<5x48xf32>
    %c144 = arith.constant 144 : index
    %c0_68 = arith.constant 0 : index
    %88 = vector.load %arg7[%c144, %c0_68] : memref<176x48xf32, #tpu.memory_space<vmem>>, vector<5x48xf32>
    tpu.vector_store %arg7[%c144, %c0_68], %87 {strides = array<i32>} : memref<176x48xf32, #tpu.memory_space<vmem>>, vector<5x48xf32>,
    %cst_69 = arith.constant 0.000000e+00 : f32
    %89 = vector.broadcast %cst_69 : f32 to vector<120x128xf32>
    %c0_70 = arith.constant 0 : index
    %c0_71 = arith.constant 0 : index
    %90 = vector.load %arg7[%c0_70, %c0_71] : memref<176x48xf32, #tpu.memory_space<vmem>>, vector<120x48xf32>
    %91 = arith.truncf %90 : vector<120x48xf32> to vector<120x48xbf16>
    %c0_72 = arith.constant 0 : index
    %c0_73 = arith.constant 0 : index
    %c0_74 = arith.constant 0 : index
    %92 = vector.load %arg3[%c0_72, %c0_73, %c0_74] : memref<25x48x128xbf16, #tpu.memory_space<vmem>>, vector<1x48x128xbf16>
    %93 = vector.shape_cast %92 : vector<1x48x128xbf16> to vector<48x128xbf16>
    %cst_75 = arith.constant dense<0.000000e+00> : vector<120x128xf32>
    %94 = tpu.matmul %91, %93, %cst_75 {dimension_numbers = #tpu.dot_dimension_numbers<[1], [0], [0], [1], [0, 0, 1, 1], [], []>} : vector<120x48xbf16>, vector<48x128xbf16>, vector<120x128xf32> -> vector<120x128xf32>
    %95 = arith.addf %89, %94 : vector<120x128xf32>
    %c1_76 = arith.constant 1 : index
    %c0_77 = arith.constant 0 : index
    %96 = vector.load %arg7[%c1_76, %c0_77] : memref<176x48xf32, #tpu.memory_space<vmem>>, vector<120x48xf32>
    %97 = arith.truncf %96 : vector<120x48xf32> to vector<120x48xbf16>
    %c1_78 = arith.constant 1 : index
    %c0_79 = arith.constant 0 : index
    %c0_80 = arith.constant 0 : index
    %98 = vector.load %arg3[%c1_78, %c0_79, %c0_80] : memref<25x48x128xbf16, #tpu.memory_space<vmem>>, vector<1x48x128xbf16>
    %99 = vector.shape_cast %98 : vector<1x48x128xbf16> to vector<48x128xbf16>
    %cst_81 = arith.constant dense<0.000000e+00> : vector<120x128xf32>
    %100 = tpu.matmul %97, %99, %cst_81 {dimension_numbers = #tpu.dot_dimension_numbers<[1], [0], [0], [1], [0, 0, 1, 1], [], []>} : vector<120x48xbf16>, vector<48x128xbf16>, vector<120x128xf32> -> vector<120x128xf32>
    %101 = arith.addf %95, %100 : vector<120x128xf32>
    %c2_82 = arith.constant 2 : index
    %c0_83 = arith.constant 0 : index
    %102 = vector.load %arg7[%c2_82, %c0_83] : memref<176x48xf32, #tpu.memory_space<vmem>>, vector<120x48xf32>
    %103 = arith.truncf %102 : vector<120x48xf32> to vector<120x48xbf16>
    %c2_84 = arith.constant 2 : index
    %c0_85 = arith.constant 0 : index
    %c0_86 = arith.constant 0 : index
    %104 = vector.load %arg3[%c2_84, %c0_85, %c0_86] : memref<25x48x128xbf16, #tpu.memory_space<vmem>>, vector<1x48x128xbf16>
    %105 = vector.shape_cast %104 : vector<1x48x128xbf16> to vector<48x128xbf16>
    %cst_87 = arith.constant dense<0.000000e+00> : vector<120x128xf32>
    %106 = tpu.matmul %103, %105, %cst_87 {dimension_numbers = #tpu.dot_dimension_numbers<[1], [0], [0], [1], [0, 0, 1, 1], [], []>} : vector<120x48xbf16>, vector<48x128xbf16>, vector<120x128xf32> -> vector<120x128xf32>
    %107 = arith.addf %101, %106 : vector<120x128xf32>
    %c3_88 = arith.constant 3 : index
    %c0_89 = arith.constant 0 : index
    %108 = vector.load %arg7[%c3_88, %c0_89] : memref<176x48xf32, #tpu.memory_space<vmem>>, vector<120x48xf32>
    %109 = arith.truncf %108 : vector<120x48xf32> to vector<120x48xbf16>
    %c3_90 = arith.constant 3 : index
    %c0_91 = arith.constant 0 : index
    %c0_92 = arith.constant 0 : index
    %110 = vector.load %arg3[%c3_90, %c0_91, %c0_92] : memref<25x48x128xbf16, #tpu.memory_space<vmem>>, vector<1x48x128xbf16>
    %111 = vector.shape_cast %110 : vector<1x48x128xbf16> to vector<48x128xbf16>
    %cst_93 = arith.constant dense<0.000000e+00> : vector<120x128xf32>
    %112 = tpu.matmul %109, %111, %cst_93 {dimension_numbers = #tpu.dot_dimension_numbers<[1], [0], [0], [1], [0, 0, 1, 1], [], []>} : vector<120x48xbf16>, vector<48x128xbf16>, vector<120x128xf32> -> vector<120x128xf32>
    %113 = arith.addf %107, %112 : vector<120x128xf32>
    %c4_94 = arith.constant 4 : index
    %c0_95 = arith.constant 0 : index
    %114 = vector.load %arg7[%c4_94, %c0_95] : memref<176x48xf32, #tpu.memory_space<vmem>>, vector<120x48xf32>
    %115 = arith.truncf %114 : vector<120x48xf32> to vector<120x48xbf16>
    %c4_96 = arith.constant 4 : index
    %c0_97 = arith.constant 0 : index
    %c0_98 = arith.constant 0 : index
    %116 = vector.load %arg3[%c4_96, %c0_97, %c0_98] : memref<25x48x128xbf16, #tpu.memory_space<vmem>>, vector<1x48x128xbf16>
    %117 = vector.shape_cast %116 : vector<1x48x128xbf16> to vector<48x128xbf16>
    %cst_99 = arith.constant dense<0.000000e+00> : vector<120x128xf32>
    %118 = tpu.matmul %115, %117, %cst_99 {dimension_numbers = #tpu.dot_dimension_numbers<[1], [0], [0], [1], [0, 0, 1, 1], [], []>} : vector<120x48xbf16>, vector<48x128xbf16>, vector<120x128xf32> -> vector<120x128xf32>
    %119 = arith.addf %113, %118 : vector<120x128xf32>
    %c9 = arith.constant 9 : index
    %c0_100 = arith.constant 0 : index
    %120 = vector.load %arg7[%c9, %c0_100] : memref<176x48xf32, #tpu.memory_space<vmem>>, vector<120x48xf32>
    %121 = arith.truncf %120 : vector<120x48xf32> to vector<120x48xbf16>
    %c5_101 = arith.constant 5 : index
    %c0_102 = arith.constant 0 : index
    %c0_103 = arith.constant 0 : index
    %122 = vector.load %arg3[%c5_101, %c0_102, %c0_103] : memref<25x48x128xbf16, #tpu.memory_space<vmem>>, vector<1x48x128xbf16>
    %123 = vector.shape_cast %122 : vector<1x48x128xbf16> to vector<48x128xbf16>
    %cst_104 = arith.constant dense<0.000000e+00> : vector<120x128xf32>
    %124 = tpu.matmul %121, %123, %cst_104 {dimension_numbers = #tpu.dot_dimension_numbers<[1], [0], [0], [1], [0, 0, 1, 1], [], []>} : vector<120x48xbf16>, vector<48x128xbf16>, vector<120x128xf32> -> vector<120x128xf32>
    %125 = arith.addf %119, %124 : vector<120x128xf32>
    %c10 = arith.constant 10 : index
    %c0_105 = arith.constant 0 : index
    %126 = vector.load %arg7[%c10, %c0_105] : memref<176x48xf32, #tpu.memory_space<vmem>>, vector<120x48xf32>
    %127 = arith.truncf %126 : vector<120x48xf32> to vector<120x48xbf16>
    %c6_106 = arith.constant 6 : index
    %c0_107 = arith.constant 0 : index
    %c0_108 = arith.constant 0 : index
    %128 = vector.load %arg3[%c6_106, %c0_107, %c0_108] : memref<25x48x128xbf16, #tpu.memory_space<vmem>>, vector<1x48x128xbf16>
    %129 = vector.shape_cast %128 : vector<1x48x128xbf16> to vector<48x128xbf16>
    %cst_109 = arith.constant dense<0.000000e+00> : vector<120x128xf32>
    %130 = tpu.matmul %127, %129, %cst_109 {dimension_numbers = #tpu.dot_dimension_numbers<[1], [0], [0], [1], [0, 0, 1, 1], [], []>} : vector<120x48xbf16>, vector<48x128xbf16>, vector<120x128xf32> -> vector<120x128xf32>
    %131 = arith.addf %125, %130 : vector<120x128xf32>
    %c11 = arith.constant 11 : index
    %c0_110 = arith.constant 0 : index
    %132 = vector.load %arg7[%c11, %c0_110] : memref<176x48xf32, #tpu.memory_space<vmem>>, vector<120x48xf32>
    %133 = arith.truncf %132 : vector<120x48xf32> to vector<120x48xbf16>
    %c7_111 = arith.constant 7 : index
    %c0_112 = arith.constant 0 : index
    %c0_113 = arith.constant 0 : index
    %134 = vector.load %arg3[%c7_111, %c0_112, %c0_113] : memref<25x48x128xbf16, #tpu.memory_space<vmem>>, vector<1x48x128xbf16>
    %135 = vector.shape_cast %134 : vector<1x48x128xbf16> to vector<48x128xbf16>
    %cst_114 = arith.constant dense<0.000000e+00> : vector<120x128xf32>
    %136 = tpu.matmul %133, %135, %cst_114 {dimension_numbers = #tpu.dot_dimension_numbers<[1], [0], [0], [1], [0, 0, 1, 1], [], []>} : vector<120x48xbf16>, vector<48x128xbf16>, vector<120x128xf32> -> vector<120x128xf32>
    %137 = arith.addf %131, %136 : vector<120x128xf32>
    %c12 = arith.constant 12 : index
    %c0_115 = arith.constant 0 : index
    %138 = vector.load %arg7[%c12, %c0_115] : memref<176x48xf32, #tpu.memory_space<vmem>>, vector<120x48xf32>
    %139 = arith.truncf %138 : vector<120x48xf32> to vector<120x48xbf16>
    %c8_116 = arith.constant 8 : index
    %c0_117 = arith.constant 0 : index
    %c0_118 = arith.constant 0 : index
    %140 = vector.load %arg3[%c8_116, %c0_117, %c0_118] : memref<25x48x128xbf16, #tpu.memory_space<vmem>>, vector<1x48x128xbf16>
    %141 = vector.shape_cast %140 : vector<1x48x128xbf16> to vector<48x128xbf16>
    %cst_119 = arith.constant dense<0.000000e+00> : vector<120x128xf32>
    %142 = tpu.matmul %139, %141, %cst_119 {dimension_numbers = #tpu.dot_dimension_numbers<[1], [0], [0], [1], [0, 0, 1, 1], [], []>} : vector<120x48xbf16>, vector<48x128xbf16>, vector<120x128xf32> -> vector<120x128xf32>
    %143 = arith.addf %137, %142 : vector<120x128xf32>
    %c13_120 = arith.constant 13 : index
    %c0_121 = arith.constant 0 : index
    %144 = vector.load %arg7[%c13_120, %c0_121] : memref<176x48xf32, #tpu.memory_space<vmem>>, vector<120x48xf32>
    %145 = arith.truncf %144 : vector<120x48xf32> to vector<120x48xbf16>
    %c9_122 = arith.constant 9 : index
    %c0_123 = arith.constant 0 : index
    %c0_124 = arith.constant 0 : index
    %146 = vector.load %arg3[%c9_122, %c0_123, %c0_124] : memref<25x48x128xbf16, #tpu.memory_space<vmem>>, vector<1x48x128xbf16>
    %147 = vector.shape_cast %146 : vector<1x48x128xbf16> to vector<48x128xbf16>
    %cst_125 = arith.constant dense<0.000000e+00> : vector<120x128xf32>
    %148 = tpu.matmul %145, %147, %cst_125 {dimension_numbers = #tpu.dot_dimension_numbers<[1], [0], [0], [1], [0, 0, 1, 1], [], []>} : vector<120x48xbf16>, vector<48x128xbf16>, vector<120x128xf32> -> vector<120x128xf32>
    %149 = arith.addf %143, %148 : vector<120x128xf32>
    %c18 = arith.constant 18 : index
    %c0_126 = arith.constant 0 : index
    %150 = vector.load %arg7[%c18, %c0_126] : memref<176x48xf32, #tpu.memory_space<vmem>>, vector<120x48xf32>
    %151 = arith.truncf %150 : vector<120x48xf32> to vector<120x48xbf16>
    %c10_127 = arith.constant 10 : index
    %c0_128 = arith.constant 0 : index
    %c0_129 = arith.constant 0 : index
    %152 = vector.load %arg3[%c10_127, %c0_128, %c0_129] : memref<25x48x128xbf16, #tpu.memory_space<vmem>>, vector<1x48x128xbf16>
    %153 = vector.shape_cast %152 : vector<1x48x128xbf16> to vector<48x128xbf16>
    %cst_130 = arith.constant dense<0.000000e+00> : vector<120x128xf32>
    %154 = tpu.matmul %151, %153, %cst_130 {dimension_numbers = #tpu.dot_dimension_numbers<[1], [0], [0], [1], [0, 0, 1, 1], [], []>} : vector<120x48xbf16>, vector<48x128xbf16>, vector<120x128xf32> -> vector<120x128xf32>
    %155 = arith.addf %149, %154 : vector<120x128xf32>
    %c19 = arith.constant 19 : index
    %c0_131 = arith.constant 0 : index
    %156 = vector.load %arg7[%c19, %c0_131] : memref<176x48xf32, #tpu.memory_space<vmem>>, vector<120x48xf32>
    %157 = arith.truncf %156 : vector<120x48xf32> to vector<120x48xbf16>
    %c11_132 = arith.constant 11 : index
    %c0_133 = arith.constant 0 : index
    %c0_134 = arith.constant 0 : index
    %158 = vector.load %arg3[%c11_132, %c0_133, %c0_134] : memref<25x48x128xbf16, #tpu.memory_space<vmem>>, vector<1x48x128xbf16>
    %159 = vector.shape_cast %158 : vector<1x48x128xbf16> to vector<48x128xbf16>
    %cst_135 = arith.constant dense<0.000000e+00> : vector<120x128xf32>
    %160 = tpu.matmul %157, %159, %cst_135 {dimension_numbers = #tpu.dot_dimension_numbers<[1], [0], [0], [1], [0, 0, 1, 1], [], []>} : vector<120x48xbf16>, vector<48x128xbf16>, vector<120x128xf32> -> vector<120x128xf32>
    %161 = arith.addf %155, %160 : vector<120x128xf32>
    %c20_136 = arith.constant 20 : index
    %c0_137 = arith.constant 0 : index
    %162 = vector.load %arg7[%c20_136, %c0_137] : memref<176x48xf32, #tpu.memory_space<vmem>>, vector<120x48xf32>
    %163 = arith.truncf %162 : vector<120x48xf32> to vector<120x48xbf16>
    %c12_138 = arith.constant 12 : index
    %c0_139 = arith.constant 0 : index
    %c0_140 = arith.constant 0 : index
    %164 = vector.load %arg3[%c12_138, %c0_139, %c0_140] : memref<25x48x128xbf16, #tpu.memory_space<vmem>>, vector<1x48x128xbf16>
    %165 = vector.shape_cast %164 : vector<1x48x128xbf16> to vector<48x128xbf16>
    %cst_141 = arith.constant dense<0.000000e+00> : vector<120x128xf32>
    %166 = tpu.matmul %163, %165, %cst_141 {dimension_numbers = #tpu.dot_dimension_numbers<[1], [0], [0], [1], [0, 0, 1, 1], [], []>} : vector<120x48xbf16>, vector<48x128xbf16>, vector<120x128xf32> -> vector<120x128xf32>
    %167 = arith.addf %161, %166 : vector<120x128xf32>
    %c21 = arith.constant 21 : index
    %c0_142 = arith.constant 0 : index
    %168 = vector.load %arg7[%c21, %c0_142] : memref<176x48xf32, #tpu.memory_space<vmem>>, vector<120x48xf32>
    %169 = arith.truncf %168 : vector<120x48xf32> to vector<120x48xbf16>
    %c13_143 = arith.constant 13 : index
    %c0_144 = arith.constant 0 : index
    %c0_145 = arith.constant 0 : index
    %170 = vector.load %arg3[%c13_143, %c0_144, %c0_145] : memref<25x48x128xbf16, #tpu.memory_space<vmem>>, vector<1x48x128xbf16>
    %171 = vector.shape_cast %170 : vector<1x48x128xbf16> to vector<48x128xbf16>
    %cst_146 = arith.constant dense<0.000000e+00> : vector<120x128xf32>
    %172 = tpu.matmul %169, %171, %cst_146 {dimension_numbers = #tpu.dot_dimension_numbers<[1], [0], [0], [1], [0, 0, 1, 1], [], []>} : vector<120x48xbf16>, vector<48x128xbf16>, vector<120x128xf32> -> vector<120x128xf32>
    %173 = arith.addf %167, %172 : vector<120x128xf32>
    %c22 = arith.constant 22 : index
    %c0_147 = arith.constant 0 : index
    %174 = vector.load %arg7[%c22, %c0_147] : memref<176x48xf32, #tpu.memory_space<vmem>>, vector<120x48xf32>
    %175 = arith.truncf %174 : vector<120x48xf32> to vector<120x48xbf16>
    %c14_148 = arith.constant 14 : index
    %c0_149 = arith.constant 0 : index
    %c0_150 = arith.constant 0 : index
    %176 = vector.load %arg3[%c14_148, %c0_149, %c0_150] : memref<25x48x128xbf16, #tpu.memory_space<vmem>>, vector<1x48x128xbf16>
    %177 = vector.shape_cast %176 : vector<1x48x128xbf16> to vector<48x128xbf16>
    %cst_151 = arith.constant dense<0.000000e+00> : vector<120x128xf32>
    %178 = tpu.matmul %175, %177, %cst_151 {dimension_numbers = #tpu.dot_dimension_numbers<[1], [0], [0], [1], [0, 0, 1, 1], [], []>} : vector<120x48xbf16>, vector<48x128xbf16>, vector<120x128xf32> -> vector<120x128xf32>
    %179 = arith.addf %173, %178 : vector<120x128xf32>
    %c27_152 = arith.constant 27 : index
    %c0_153 = arith.constant 0 : index
    %180 = vector.load %arg7[%c27_152, %c0_153] : memref<176x48xf32, #tpu.memory_space<vmem>>, vector<120x48xf32>
    %181 = arith.truncf %180 : vector<120x48xf32> to vector<120x48xbf16>
    %c15_154 = arith.constant 15 : index
    %c0_155 = arith.constant 0 : index
    %c0_156 = arith.constant 0 : index
    %182 = vector.load %arg3[%c15_154, %c0_155, %c0_156] : memref<25x48x128xbf16, #tpu.memory_space<vmem>>, vector<1x48x128xbf16>
    %183 = vector.shape_cast %182 : vector<1x48x128xbf16> to vector<48x128xbf16>
    %cst_157 = arith.constant dense<0.000000e+00> : vector<120x128xf32>
    %184 = tpu.matmul %181, %183, %cst_157 {dimension_numbers = #tpu.dot_dimension_numbers<[1], [0], [0], [1], [0, 0, 1, 1], [], []>} : vector<120x48xbf16>, vector<48x128xbf16>, vector<120x128xf32> -> vector<120x128xf32>
    %185 = arith.addf %179, %184 : vector<120x128xf32>
    %c28_158 = arith.constant 28 : index
    %c0_159 = arith.constant 0 : index
    %186 = vector.load %arg7[%c28_158, %c0_159] : memref<176x48xf32, #tpu.memory_space<vmem>>, vector<120x48xf32>
    %187 = arith.truncf %186 : vector<120x48xf32> to vector<120x48xbf16>
    %c16 = arith.constant 16 : index
    %c0_160 = arith.constant 0 : index
    %c0_161 = arith.constant 0 : index
    %188 = vector.load %arg3[%c16, %c0_160, %c0_161] : memref<25x48x128xbf16, #tpu.memory_space<vmem>>, vector<1x48x128xbf16>
    %189 = vector.shape_cast %188 : vector<1x48x128xbf16> to vector<48x128xbf16>
    %cst_162 = arith.constant dense<0.000000e+00> : vector<120x128xf32>
    %190 = tpu.matmul %187, %189, %cst_162 {dimension_numbers = #tpu.dot_dimension_numbers<[1], [0], [0], [1], [0, 0, 1, 1], [], []>} : vector<120x48xbf16>, vector<48x128xbf16>, vector<120x128xf32> -> vector<120x128xf32>
    %191 = arith.addf %185, %190 : vector<120x128xf32>
    %c29_163 = arith.constant 29 : index
    %c0_164 = arith.constant 0 : index
    %192 = vector.load %arg7[%c29_163, %c0_164] : memref<176x48xf32, #tpu.memory_space<vmem>>, vector<120x48xf32>
    %193 = arith.truncf %192 : vector<120x48xf32> to vector<120x48xbf16>
    %c17 = arith.constant 17 : index
    %c0_165 = arith.constant 0 : index
    %c0_166 = arith.constant 0 : index
    %194 = vector.load %arg3[%c17, %c0_165, %c0_166] : memref<25x48x128xbf16, #tpu.memory_space<vmem>>, vector<1x48x128xbf16>
    %195 = vector.shape_cast %194 : vector<1x48x128xbf16> to vector<48x128xbf16>
    %cst_167 = arith.constant dense<0.000000e+00> : vector<120x128xf32>
    %196 = tpu.matmul %193, %195, %cst_167 {dimension_numbers = #tpu.dot_dimension_numbers<[1], [0], [0], [1], [0, 0, 1, 1], [], []>} : vector<120x48xbf16>, vector<48x128xbf16>, vector<120x128xf32> -> vector<120x128xf32>
    %197 = arith.addf %191, %196 : vector<120x128xf32>
    %c30 = arith.constant 30 : index
    %c0_168 = arith.constant 0 : index
    %198 = vector.load %arg7[%c30, %c0_168] : memref<176x48xf32, #tpu.memory_space<vmem>>, vector<120x48xf32>
    %199 = arith.truncf %198 : vector<120x48xf32> to vector<120x48xbf16>
    %c18_169 = arith.constant 18 : index
    %c0_170 = arith.constant 0 : index
    %c0_171 = arith.constant 0 : index
    %200 = vector.load %arg3[%c18_169, %c0_170, %c0_171] : memref<25x48x128xbf16, #tpu.memory_space<vmem>>, vector<1x48x128xbf16>
    %201 = vector.shape_cast %200 : vector<1x48x128xbf16> to vector<48x128xbf16>
    %cst_172 = arith.constant dense<0.000000e+00> : vector<120x128xf32>
    %202 = tpu.matmul %199, %201, %cst_172 {dimension_numbers = #tpu.dot_dimension_numbers<[1], [0], [0], [1], [0, 0, 1, 1], [], []>} : vector<120x48xbf16>, vector<48x128xbf16>, vector<120x128xf32> -> vector<120x128xf32>
    %203 = arith.addf %197, %202 : vector<120x128xf32>
    %c31 = arith.constant 31 : index
    %c0_173 = arith.constant 0 : index
    %204 = vector.load %arg7[%c31, %c0_173] : memref<176x48xf32, #tpu.memory_space<vmem>>, vector<120x48xf32>
    %205 = arith.truncf %204 : vector<120x48xf32> to vector<120x48xbf16>
    %c19_174 = arith.constant 19 : index
    %c0_175 = arith.constant 0 : index
    %c0_176 = arith.constant 0 : index
    %206 = vector.load %arg3[%c19_174, %c0_175, %c0_176] : memref<25x48x128xbf16, #tpu.memory_space<vmem>>, vector<1x48x128xbf16>
    %207 = vector.shape_cast %206 : vector<1x48x128xbf16> to vector<48x128xbf16>
    %cst_177 = arith.constant dense<0.000000e+00> : vector<120x128xf32>
    %208 = tpu.matmul %205, %207, %cst_177 {dimension_numbers = #tpu.dot_dimension_numbers<[1], [0], [0], [1], [0, 0, 1, 1], [], []>} : vector<120x48xbf16>, vector<48x128xbf16>, vector<120x128xf32> -> vector<120x128xf32>
    %209 = arith.addf %203, %208 : vector<120x128xf32>
    %c36 = arith.constant 36 : index
    %c0_178 = arith.constant 0 : index
    %210 = vector.load %arg7[%c36, %c0_178] : memref<176x48xf32, #tpu.memory_space<vmem>>, vector<120x48xf32>
    %211 = arith.truncf %210 : vector<120x48xf32> to vector<120x48xbf16>
    %c20_179 = arith.constant 20 : index
    %c0_180 = arith.constant 0 : index
    %c0_181 = arith.constant 0 : index
    %212 = vector.load %arg3[%c20_179, %c0_180, %c0_181] : memref<25x48x128xbf16, #tpu.memory_space<vmem>>, vector<1x48x128xbf16>
    %213 = vector.shape_cast %212 : vector<1x48x128xbf16> to vector<48x128xbf16>
    %cst_182 = arith.constant dense<0.000000e+00> : vector<120x128xf32>
    %214 = tpu.matmul %211, %213, %cst_182 {dimension_numbers = #tpu.dot_dimension_numbers<[1], [0], [0], [1], [0, 0, 1, 1], [], []>} : vector<120x48xbf16>, vector<48x128xbf16>, vector<120x128xf32> -> vector<120x128xf32>
    %215 = arith.addf %209, %214 : vector<120x128xf32>
    %c37 = arith.constant 37 : index
    %c0_183 = arith.constant 0 : index
    %216 = vector.load %arg7[%c37, %c0_183] : memref<176x48xf32, #tpu.memory_space<vmem>>, vector<120x48xf32>
    %217 = arith.truncf %216 : vector<120x48xf32> to vector<120x48xbf16>
    %c21_184 = arith.constant 21 : index
    %c0_185 = arith.constant 0 : index
    %c0_186 = arith.constant 0 : index
    %218 = vector.load %arg3[%c21_184, %c0_185, %c0_186] : memref<25x48x128xbf16, #tpu.memory_space<vmem>>, vector<1x48x128xbf16>
    %219 = vector.shape_cast %218 : vector<1x48x128xbf16> to vector<48x128xbf16>
    %cst_187 = arith.constant dense<0.000000e+00> : vector<120x128xf32>
    %220 = tpu.matmul %217, %219, %cst_187 {dimension_numbers = #tpu.dot_dimension_numbers<[1], [0], [0], [1], [0, 0, 1, 1], [], []>} : vector<120x48xbf16>, vector<48x128xbf16>, vector<120x128xf32> -> vector<120x128xf32>
    %221 = arith.addf %215, %220 : vector<120x128xf32>
    %c38_188 = arith.constant 38 : index
    %c0_189 = arith.constant 0 : index
    %222 = vector.load %arg7[%c38_188, %c0_189] : memref<176x48xf32, #tpu.memory_space<vmem>>, vector<120x48xf32>
    %223 = arith.truncf %222 : vector<120x48xf32> to vector<120x48xbf16>
    %c22_190 = arith.constant 22 : index
    %c0_191 = arith.constant 0 : index
    %c0_192 = arith.constant 0 : index
    %224 = vector.load %arg3[%c22_190, %c0_191, %c0_192] : memref<25x48x128xbf16, #tpu.memory_space<vmem>>, vector<1x48x128xbf16>
    %225 = vector.shape_cast %224 : vector<1x48x128xbf16> to vector<48x128xbf16>
    %cst_193 = arith.constant dense<0.000000e+00> : vector<120x128xf32>
    %226 = tpu.matmul %223, %225, %cst_193 {dimension_numbers = #tpu.dot_dimension_numbers<[1], [0], [0], [1], [0, 0, 1, 1], [], []>} : vector<120x48xbf16>, vector<48x128xbf16>, vector<120x128xf32> -> vector<120x128xf32>
    %227 = arith.addf %221, %226 : vector<120x128xf32>
    %c39 = arith.constant 39 : index
    %c0_194 = arith.constant 0 : index
    %228 = vector.load %arg7[%c39, %c0_194] : memref<176x48xf32, #tpu.memory_space<vmem>>, vector<120x48xf32>
    %229 = arith.truncf %228 : vector<120x48xf32> to vector<120x48xbf16>
    %c23 = arith.constant 23 : index
    %c0_195 = arith.constant 0 : index
    %c0_196 = arith.constant 0 : index
    %230 = vector.load %arg3[%c23, %c0_195, %c0_196] : memref<25x48x128xbf16, #tpu.memory_space<vmem>>, vector<1x48x128xbf16>
    %231 = vector.shape_cast %230 : vector<1x48x128xbf16> to vector<48x128xbf16>
    %cst_197 = arith.constant dense<0.000000e+00> : vector<120x128xf32>
    %232 = tpu.matmul %229, %231, %cst_197 {dimension_numbers = #tpu.dot_dimension_numbers<[1], [0], [0], [1], [0, 0, 1, 1], [], []>} : vector<120x48xbf16>, vector<48x128xbf16>, vector<120x128xf32> -> vector<120x128xf32>
    %233 = arith.addf %227, %232 : vector<120x128xf32>
    %c40 = arith.constant 40 : index
    %c0_198 = arith.constant 0 : index
    %234 = vector.load %arg7[%c40, %c0_198] : memref<176x48xf32, #tpu.memory_space<vmem>>, vector<120x48xf32>
    %235 = arith.truncf %234 : vector<120x48xf32> to vector<120x48xbf16>
    %c24 = arith.constant 24 : index
    %c0_199 = arith.constant 0 : index
    %c0_200 = arith.constant 0 : index
    %236 = vector.load %arg3[%c24, %c0_199, %c0_200] : memref<25x48x128xbf16, #tpu.memory_space<vmem>>, vector<1x48x128xbf16>
    %237 = vector.shape_cast %236 : vector<1x48x128xbf16> to vector<48x128xbf16>
    %cst_201 = arith.constant dense<0.000000e+00> : vector<120x128xf32>
    %238 = tpu.matmul %235, %237, %cst_201 {dimension_numbers = #tpu.dot_dimension_numbers<[1], [0], [0], [1], [0, 0, 1, 1], [], []>} : vector<120x48xbf16>, vector<48x128xbf16>, vector<120x128xf32> -> vector<120x128xf32>
    %239 = arith.addf %233, %238 : vector<120x128xf32>
    %c0_202 = arith.constant 0 : index
    %c0_203 = arith.constant 0 : index
    %240 = vector.load %arg4[%c0_202, %c0_203] : memref<1x128xf32, #tpu.memory_space<vmem>>, vector<1x128xf32>
    %241 = vector.broadcast %240 : vector<1x128xf32> to vector<120x128xf32>
    %242 = arith.addf %239, %241 : vector<120x128xf32>
    %cst_204 = arith.constant 0.000000e+00 : f32
    %243 = vector.broadcast %cst_204 : f32 to vector<120x128xf32>
    %244 = arith.maximumf %242, %243 : vector<120x128xf32>
    %245 = vector.extract_strided_slice %244 {offsets = [0, 0], sizes = [118, 128], strides = [1, 1]} : vector<120x128xf32> to vector<118x128xf32>
    %246 = vector.extract_strided_slice %244 {offsets = [1, 0], sizes = [118, 128], strides = [1, 1]} : vector<120x128xf32> to vector<118x128xf32>
    %247 = arith.maximumf %245, %246 : vector<118x128xf32>
    %248 = vector.extract_strided_slice %247 {offsets = [0, 0], sizes = [109, 128], strides = [1, 1]} : vector<118x128xf32> to vector<109x128xf32>
    %249 = vector.extract_strided_slice %247 {offsets = [9, 0], sizes = [109, 128], strides = [1, 1]} : vector<118x128xf32> to vector<109x128xf32>
    %250 = arith.maximumf %248, %249 : vector<109x128xf32>
    %251 = vector.extract_strided_slice %250 {offsets = [0, 0], sizes = [1, 128], strides = [1, 1]} : vector<109x128xf32> to vector<1x128xf32>
    %252 = vector.extract_strided_slice %250 {offsets = [2, 0], sizes = [1, 128], strides = [1, 1]} : vector<109x128xf32> to vector<1x128xf32>
    %253 = vector.extract_strided_slice %250 {offsets = [18, 0], sizes = [1, 128], strides = [1, 1]} : vector<109x128xf32> to vector<1x128xf32>
    %254 = vector.extract_strided_slice %250 {offsets = [20, 0], sizes = [1, 128], strides = [1, 1]} : vector<109x128xf32> to vector<1x128xf32>
    %255 = vector.extract_strided_slice %250 {offsets = [88, 0], sizes = [1, 128], strides = [1, 1]} : vector<109x128xf32> to vector<1x128xf32>
    %256 = vector.extract_strided_slice %250 {offsets = [90, 0], sizes = [1, 128], strides = [1, 1]} : vector<109x128xf32> to vector<1x128xf32>
    %257 = vector.extract_strided_slice %250 {offsets = [106, 0], sizes = [1, 128], strides = [1, 1]} : vector<109x128xf32> to vector<1x128xf32>
    %258 = vector.extract_strided_slice %250 {offsets = [108, 0], sizes = [1, 128], strides = [1, 1]} : vector<109x128xf32> to vector<1x128xf32>
    %259 = tpu.concatenate %251, %252, %253, %254, %255, %256, %257, %258 in 0 : vector<1x128xf32>, vector<1x128xf32>, vector<1x128xf32>, vector<1x128xf32>, vector<1x128xf32>, vector<1x128xf32>, vector<1x128xf32>, vector<1x128xf32> -> vector<8x128xf32>
    %c0_205 = arith.constant 0 : index
    %c0_206 = arith.constant 0 : index
    %260 = vector.load %arg5[%c0_205, %c0_206] : memref<8x128xf32, #tpu.memory_space<vmem>>, vector<8x128xf32>
    tpu.vector_store %arg5[%c0_205, %c0_206], %259 {strides = array<i32>} : memref<8x128xf32, #tpu.memory_space<vmem>>, vector<8x128xf32>,
    return
  }
}

</mosaic_0001>

<llo_original>
// kernel: module1_forward.1
$region0: #{module1_forward.1}
  #allocation0 [shape = 'u32[]', space=smem, size = 0x4, offset = 0x4, fixed_abs, tag = 'smem constant byte address 0x4 - core index']
  #allocation1 [shape = 'u32[144,128]{1,0:T(1,128)}', space=vmem, size = 0x12000, scoped, tag = 'internal scratch']
  #allocation2 [shape = 'f32[296,48]{1,0:T(8,128)}', space=vmem, size = 0x25000, scoped, tag = 'scratch operand']
  #allocation3 [shape = 'f32[176,48]{1,0:T(8,128)}', space=vmem, size = 0x16000, scoped, tag = 'scratch operand']
  %s0 = inlined_call_operand.vmem [shape: f32[352,48], index: 0, kind: input, shape index: {}]
  %s1 = inlined_call_operand.vmem [shape: bf16[9,48,48], index: 1, kind: input, shape index: {}]
  %s2 = inlined_call_operand.vmem [shape: f32[1,48], index: 2, kind: input, shape index: {}]
  %s3 = inlined_call_operand.vmem [shape: bf16[25,48,128], index: 3, kind: input, shape index: {}]
  %s4 = inlined_call_operand.vmem [shape: f32[1,128], index: 4, kind: input, shape index: {}]
  %s5 = inlined_call_operand.hbm [shape: f32[8,128], index: 5, kind: output, shape index: {}]
  %s6 = sld [smem:[#allocation0]]
  $region30: #{module1_forward.1} parent=0
    _
  %s8 = ssub.s32 1, %s6
  %s9 = scalar_select 0, %s8, %s6
  $region1: #{module1_forward.1} parent=0
    #allocation4 [shape = 'u8[4096]{0}', space=vmem, size = 0x1000, scoped, tag = 'output window, operand 0, single buffered']
    #allocation5 [shape = 's32[1]{0}', space=sflag, size = 0x4, scoped, tag = 'scoped memory for module1_forward.1']
    %10 = vsyncpa [#allocation5], 0
    // Predicated region
    $region2: #{module1_forward.1} parent=1 // pred_check
      _
    $region3: #{module1_forward.1} parent=1 // pred_check_branch
      %12 = sbr.rel (0) target = $region5
    $region4: #{module1_forward.1} parent=1 // pred_region
      _
    $region5: #{module1_forward.1} parent=1 // pred_fallthru
      _
    // Predicated region
    $region6: #{module1_forward.1} parent=1 // pred_check
      _
    $region7: #{module1_forward.1} parent=1 // pred_check_branch
      %14 = sbr.rel (0) target = $region9
    $region8: #{module1_forward.1} parent=1 // pred_region
      _
    $region9: #{module1_forward.1} parent=1 // pred_fallthru
      _
    // Predicated region
    $region10: #{module1_forward.1} parent=1 // pred_check
      _
    $region11: #{module1_forward.1} parent=1 // pred_check_branch
      %16 = sbr.rel (0) target = $region13
    $region12: #{module1_forward.1} parent=1 // pred_region
      _
    $region13: #{module1_forward.1} parent=1 // pred_fallthru
      _
    // Predicated region
    $region14: #{module1_forward.1} parent=1 // pred_check
      _
    $region15: #{module1_forward.1} parent=1 // pred_check_branch
      %18 = sbr.rel (0) target = $region17
    $region16: #{module1_forward.1} parent=1 // pred_region
      _
    $region17: #{module1_forward.1} parent=1 // pred_fallthru
      _
    // Predicated region
    $region18: #{module1_forward.1} parent=1 // pred_check
      _
    $region19: #{module1_forward.1} parent=1 // pred_check_branch
      %20 = sbr.rel (0) target = $region21
    $region20: #{module1_forward.1} parent=1 // pred_region
      _
    $region21: #{module1_forward.1} parent=1 // pred_fallthru
      _
    %v22 = vld [vmem:[%s0] sm:$0xff]
    %v23 = vld [vmem:[%s0 + $0x8] sm:$0xff]
    %v24 = vld [vmem:[%s0 + $0x10] sm:$0xff]
    %v25 = vld [vmem:[%s0 + $0x18] sm:$0xff]
    %v26 = vld [vmem:[%s0 + $0x20] sm:$0xff]
    %v27 = vld [vmem:[%s0 + $0x28] sm:$0xff]
    %v28 = vld [vmem:[%s0 + $0x30] sm:$0xff]
    %v29 = vld [vmem:[%s0 + $0x38] sm:$0xff]
    %v30 = vld [vmem:[%s0 + $0x40] sm:$0xff]
    %v31 = vld [vmem:[%s0 + $0x48] sm:$0xff]
    %v32 = vld [vmem:[%s0 + $0x50] sm:$0xff]
    %v33 = vld [vmem:[%s0 + $0x58] sm:$0xff]
    %v34 = vld [vmem:[%s0 + $0x60] sm:$0xff]
    %v35 = vld [vmem:[%s0 + $0x68] sm:$0xff]
    %v36 = vld [vmem:[%s0 + $0x70] sm:$0xff]
    %v37 = vld [vmem:[%s0 + $0x78] sm:$0xff]
    %v38 = vld [vmem:[%s0 + $0x80] sm:$0xff]
    %v39 = vld [vmem:[%s0 + $0x88] sm:$0xff]
    %v40 = vld [vmem:[%s0 + $0x90] sm:$0xff]
    %v41 = vld [vmem:[%s0 + $0x98] sm:$0xff]
    %v42 = vld [vmem:[%s0 + $0xa0] sm:$0xff]
    %v43 = vld [vmem:[%s0 + $0xa8] sm:$0xff]
    %v44 = vld [vmem:[%s0 + $0xb0] sm:$0xff]
    %v45 = vld [vmem:[%s0 + $0xb8] sm:$0xff]
    %v46 = vld [vmem:[%s0 + $0xc0] sm:$0xff]
    %v47 = vld [vmem:[%s0 + $0xc8] sm:$0xff]
    %v48 = vld [vmem:[%s0 + $0xd0] sm:$0xff]
    %v49 = vld [vmem:[%s0 + $0xd8] sm:$0xff]
    %v50 = vld [vmem:[%s0 + $0xe0] sm:$0xff]
    %v51 = vld [vmem:[%s0 + $0xe8] sm:$0xff]
    %v52 = vld [vmem:[%s0 + $0xf0] sm:$0xff]
    %v53 = vld [vmem:[%s0 + $0xf8] sm:$0xff]
    %v54 = vld [vmem:[%s0 + $0x100] sm:$0xff]
    %v55 = vld [vmem:[%s0 + $0x108] sm:$0xff]
    %v56 = vld [vmem:[%s0 + $0x110] sm:$0xff]
    %v57 = vld [vmem:[%s0 + $0x118] sm:$0xff]
    %v58 = vld [vmem:[%s0 + $0x120] sm:$0xff]
    %v59 = vld [vmem:[%s0 + $0x128] sm:$0xff]
    %v60 = vld [vmem:[%s0 + $0x130] sm:$0xff]
    %v61 = vld [vmem:[%s0 + $0x138] sm:$0xff]
    %v62 = vpack.c.bf16 %v23, %v22
    %v63 = vpack.c.bf16 %v25, %v24
    %v64 = vpack.c.bf16 %v27, %v26
    %v65 = vpack.c.bf16 %v29, %v28
    %v66 = vpack.c.bf16 %v31, %v30
    %v67 = vpack.c.bf16 %v33, %v32
    %v68 = vpack.c.bf16 %v35, %v34
    %v69 = vpack.c.bf16 %v37, %v36
    %v70 = vpack.c.bf16 %v39, %v38
    %v71 = vpack.c.bf16 %v41, %v40
    %v72 = vpack.c.bf16 %v43, %v42
    %v73 = vpack.c.bf16 %v45, %v44
    %v74 = vpack.c.bf16 %v47, %v46
    %v75 = vpack.c.bf16 %v49, %v48
    %v76 = vpack.c.bf16 %v51, %v50
    %v77 = vpack.c.bf16 %v53, %v52
    %v78 = vpack.c.bf16 %v55, %v54
    %v79 = vpack.c.bf16 %v57, %v56
    %v80 = vpack.c.bf16 %v59, %v58
    %v81 = vpack.c.bf16 %v61, %v60
    %v82 = vld [vmem:[%s1] sm:$0xf]
    %v83 = vld [vmem:[%s1 + $0x4] sm:$0xf]
    %v84 = vld [vmem:[%s1 + $0x8] sm:$0xf]
    %v85 = vld [vmem:[%s1 + $0xc] sm:$0xf]
    %v86 = vld [vmem:[%s1 + $0x10] sm:$0xf]
    %v87 = vld [vmem:[%s1 + $0x14] sm:$0xf]
    %v88 = vld [vmem:[%s0 + $0x1] sm:$0xff]
    %v89 = vld [vmem:[%s0 + $0x9] sm:$0xff]
    %v90 = vld [vmem:[%s0 + $0x11] sm:$0xff]
    %v91 = vld [vmem:[%s0 + $0x19] sm:$0xff]
    %v92 = vld [vmem:[%s0 + $0x21] sm:$0xff]
    %v93 = vld [vmem:[%s0 + $0x29] sm:$0xff]
    %v94 = vld [vmem:[%s0 + $0x31] sm:$0xff]
    %v95 = vld [vmem:[%s0 + $0x39] sm:$0xff]
    %v96 = vld [vmem:[%s0 + $0x41] sm:$0xff]
    %v97 = vld [vmem:[%s0 + $0x49] sm:$0xff]
    %v98 = vld [vmem:[%s0 + $0x51] sm:$0xff]
    %v99 = vld [vmem:[%s0 + $0x59] sm:$0xff]
    %v100 = vld [vmem:[%s0 + $0x61] sm:$0xff]
    %v101 = vld [vmem:[%s0 + $0x69] sm:$0xff]
    %v102 = vld [vmem:[%s0 + $0x71] sm:$0xff]
    %v103 = vld [vmem:[%s0 + $0x79] sm:$0xff]
    %v104 = vld [vmem:[%s0 + $0x81] sm:$0xff]
    %v105 = vld [vmem:[%s0 + $0x89] sm:$0xff]
    %v106 = vld [vmem:[%s0 + $0x91] sm:$0xff]
    %v107 = vld [vmem:[%s0 + $0x99] sm:$0xff]
    %v108 = vld [vmem:[%s0 + $0xa1] sm:$0xff]
    %v109 = vld [vmem:[%s0 + $0xa9] sm:$0xff]
    %v110 = vld [vmem:[%s0 + $0xb1] sm:$0xff]
    %v111 = vld [vmem:[%s0 + $0xb9] sm:$0xff]
    %v112 = vld [vmem:[%s0 + $0xc1] sm:$0xff]
    %v113 = vld [vmem:[%s0 + $0xc9] sm:$0xff]
    %v114 = vld [vmem:[%s0 + $0xd1] sm:$0xff]
    %v115 = vld [vmem:[%s0 + $0xd9] sm:$0xff]
    %v116 = vld [vmem:[%s0 + $0xe1] sm:$0xff]
    %v117 = vld [vmem:[%s0 + $0xe9] sm:$0xff]
    %v118 = vld [vmem:[%s0 + $0xf1] sm:$0xff]
    %v119 = vld [vmem:[%s0 + $0xf9] sm:$0xff]
    %v120 = vld [vmem:[%s0 + $0x101] sm:$0xff]
    %v121 = vld [vmem:[%s0 + $0x109] sm:$0xff]
    %v122 = vld [vmem:[%s0 + $0x111] sm:$0xff]
    %v123 = vld [vmem:[%s0 + $0x119] sm:$0xff]
    %v124 = vld [vmem:[%s0 + $0x121] sm:$0xff]
    %v125 = vld [vmem:[%s0 + $0x129] sm:$0xff]
    %v126 = vld [vmem:[%s0 + $0x131] sm:$0xff]
    %v127 = vld [vmem:[%s0 + $0x139] sm:$0xff]
    %v128 = vpack.c.bf16 %v89, %v88
    %v129 = vpack.c.bf16 %v91, %v90
    %v130 = vpack.c.bf16 %v93, %v92
    %v131 = vpack.c.bf16 %v95, %v94
    %v132 = vpack.c.bf16 %v97, %v96
    %v133 = vpack.c.bf16 %v99, %v98
    %v134 = vpack.c.bf16 %v101, %v100
    %v135 = vpack.c.bf16 %v103, %v102
    %v136 = vpack.c.bf16 %v105, %v104
    %v137 = vpack.c.bf16 %v107, %v106
    %v138 = vpack.c.bf16 %v109, %v108
    %v139 = vpack.c.bf16 %v111, %v110
    %v140 = vpack.c.bf16 %v113, %v112
    %v141 = vpack.c.bf16 %v115, %v114
    %v142 = vpack.c.bf16 %v117, %v116
    %v143 = vpack.c.bf16 %v119, %v118
    %v144 = vpack.c.bf16 %v121, %v120
    %v145 = vpack.c.bf16 %v123, %v122
    %v146 = vpack.c.bf16 %v125, %v124
    %v147 = vpack.c.bf16 %v127, %v126
    %s148 = scalar_lea.vmem %s1, 24
    %v149 = vld [vmem:[%s148] sm:$0xf]
    %v150 = vld [vmem:[%s148 + $0x4] sm:$0xf]
    %v151 = vld [vmem:[%s148 + $0x8] sm:$0xf]
    %v152 = vld [vmem:[%s148 + $0xc] sm:$0xf]
    %v153 = vld [vmem:[%s148 + $0x10] sm:$0xf]
    %v154 = vld [vmem:[%s148 + $0x14] sm:$0xf]
    %v161 = vunpack.c.l.b16 %v149
    %v162 = vunpack.c.l.b16 %v150
    %v163 = vunpack.c.l.b16 %v151
    %v164 = vunpack.c.l.b16 %v152
    %v165 = vunpack.c.l.b16 %v153
    %v166 = vunpack.c.l.b16 %v154
    %v167 = vpack.c.b16 %v162, %v161
    %v168 = vpack.c.b16 %v164, %v163
    %v169 = vpack.c.b16 %v166, %v165
    %vm173 = vcmask 392192
    %v175 = vsel %vm173, %v128, 0
    %v178 = vsel %vm173, %v129, 0
    %v181 = vsel %vm173, %v130, 0
    %v184 = vsel %vm173, %v131, 0
    %v187 = vsel %vm173, %v132, 0
    %v190 = vsel %vm173, %v133, 0
    %v193 = vsel %vm173, %v134, 0
    %v196 = vsel %vm173, %v135, 0
    %v199 = vsel %vm173, %v136, 0
    %v202 = vsel %vm173, %v137, 0
    %v205 = vsel %vm173, %v138, 0
    %v208 = vsel %vm173, %v139, 0
    %v211 = vsel %vm173, %v140, 0
    %v214 = vsel %vm173, %v141, 0
    %v217 = vsel %vm173, %v142, 0
    %v220 = vsel %vm173, %v143, 0
    %v223 = vsel %vm173, %v144, 0
    %v226 = vsel %vm173, %v145, 0
    %v229 = vsel %vm173, %v146, 0
    %v232 = vsel %vm173, %v147, 0
    %234 = vmatprep.subr.bf16.mxu0 0
    %235 = vmatpush1.bf16.msra.mxu0 0
    %236 = vmatprep.subr.bf16.mxu0 0
    %237 = vmatpush1.bf16.msra.mxu0 0
    %238 = vmatprep.subr.bf16.mxu0 0
    %239 = vmatpush1.bf16.msra.mxu0 0
    %240 = vmatprep.subr.bf16.mxu0 0
    %241 = vmatpush1.bf16.msra.mxu0 0
    %242 = vmatprep.subr.bf16.mxu0 0
    %243 = vmatpush1.bf16.msra.mxu0 0
    %244 = vmatprep.subr.bf16.mxu0 0
    %245 = vmatpush1.bf16.msra.mxu0 %v169
    %246 = vmatprep.subr.bf16.mxu0 0
    %247 = vmatpush1.bf16.msra.mxu0 %v168
    %248 = vmatprep.subr.bf16.mxu0 0
    %249 = vmatpush1.bf16.msra.mxu0 %v167
    %250 = vmatprep.subr.bf16.mxu0 0
    %251 = vmatpush2.bf16.msra.mxu0 0
    %252 = vmatprep.subr.bf16.mxu0 0
    %253 = vmatpush2.bf16.msra.mxu0 0
    %254 = vmatprep.subr.bf16.mxu0 0
    %255 = vmatpush2.bf16.msra.mxu0 0
    %256 = vmatprep.subr.bf16.mxu0 0
    %257 = vmatpush2.bf16.msra.mxu0 0
    %258 = vmatprep.subr.bf16.mxu0 0
    %259 = vmatpush2.bf16.msra.mxu0 0
    %260 = vmatprep.subr.bf16.mxu0 0
    %261 = vmatpush2.bf16.msra.mxu0 0
    %262 = vmatprep.subr.bf16.mxu0 0
    %263 = vmatpush2.bf16.msra.mxu0 0
    %264 = vmatprep.subr.bf16.mxu0 0
    %265 = vmatpush2.bf16.msra.mxu0 0
    %266 = vmatprep.mubr.bf16.mxu0 0
    %267 = vmatmul.mubr.bf16.gmra.mxu0 %v175
    %v268 = vpop.f32.mrf.mxu0
    %v269 = vadd.f32 0.0, %v268
    %v270 = vpop.f32.mrf.mxu0
    %v271 = vpop.f32.mrf.mxu0
    %v272 = vadd.f32 0.0, %v271
    %v273 = vpop.f32.mrf.mxu0
    %274 = vmatprep.mubr.bf16.mxu0 0
    %275 = vmatmul.mubr.bf16.gmra.mxu0 %v178
    %v276 = vpop.f32.mrf.mxu0
    %v277 = vadd.f32 0.0, %v276
    %v278 = vpop.f32.mrf.mxu0
    %v279 = vpop.f32.mrf.mxu0
    %v280 = vadd.f32 0.0, %v279
    %v281 = vpop.f32.mrf.mxu0
    %282 = vmatprep.mubr.bf16.mxu0 0
    %283 = vmatmul.mubr.bf16.gmra.mxu0 %v181
    %v284 = vpop.f32.mrf.mxu0
    %v285 = vadd.f32 0.0, %v284
    %v286 = vpop.f32.mrf.mxu0
    %v287 = vpop.f32.mrf.mxu0
    %v288 = vadd.f32 0.0, %v287
    %v289 = vpop.f32.mrf.mxu0
    %290 = vmatprep.mubr.bf16.mxu0 0
    %291 = vmatmul.mubr.bf16.gmra.mxu0 %v184
    %v292 = vpop.f32.mrf.mxu0
    %v293 = vadd.f32 0.0, %v292
    %v294 = vpop.f32.mrf.mxu0
    %v295 = vpop.f32.mrf.mxu0
    %v296 = vadd.f32 0.0, %v295
    %v297 = vpop.f32.mrf.mxu0
    %298 = vmatprep.mubr.bf16.mxu0 0
    %299 = vmatmul.mubr.bf16.gmra.mxu0 %v187
    %v300 = vpop.f32.mrf.mxu0
    %v301 = vadd.f32 0.0, %v300
    %v302 = vpop.f32.mrf.mxu0
    %v303 = vpop.f32.mrf.mxu0
    %v304 = vadd.f32 0.0, %v303
    %v305 = vpop.f32.mrf.mxu0
    %306 = vmatprep.mubr.bf16.mxu0 0
    %307 = vmatmul.mubr.bf16.gmra.mxu0 %v190
    %v308 = vpop.f32.mrf.mxu0
    %v309 = vadd.f32 0.0, %v308
    %v310 = vpop.f32.mrf.mxu0
    %v311 = vpop.f32.mrf.mxu0
    %v312 = vadd.f32 0.0, %v311
    %v313 = vpop.f32.mrf.mxu0
    %314 = vmatprep.mubr.bf16.mxu0 0
    %315 = vmatmul.mubr.bf16.gmra.mxu0 %v193
    %v316 = vpop.f32.mrf.mxu0
    %v317 = vadd.f32 0.0, %v316
    %v318 = vpop.f32.mrf.mxu0
    %v319 = vpop.f32.mrf.mxu0
    %v320 = vadd.f32 0.0, %v319
    %v321 = vpop.f32.mrf.mxu0
    %322 = vmatprep.mubr.bf16.mxu0 0
    %323 = vmatmul.mubr.bf16.gmra.mxu0 %v196
    %v324 = vpop.f32.mrf.mxu0
    %v325 = vadd.f32 0.0, %v324
    %v326 = vpop.f32.mrf.mxu0
    %v327 = vpop.f32.mrf.mxu0
    %v328 = vadd.f32 0.0, %v327
    %v329 = vpop.f32.mrf.mxu0
    %330 = vmatprep.mubr.bf16.mxu0 0
    %331 = vmatmul.mubr.bf16.gmra.mxu0 %v199
    %v332 = vpop.f32.mrf.mxu0
    %v333 = vadd.f32 0.0, %v332
    %v334 = vpop.f32.mrf.mxu0
    %v335 = vpop.f32.mrf.mxu0
    %v336 = vadd.f32 0.0, %v335
    %v337 = vpop.f32.mrf.mxu0
    %338 = vmatprep.mubr.bf16.mxu0 0
    %339 = vmatmul.mubr.bf16.gmra.mxu0 %v202
    %v340 = vpop.f32.mrf.mxu0
    %v341 = vadd.f32 0.0, %v340
    %v342 = vpop.f32.mrf.mxu0
    %v343 = vpop.f32.mrf.mxu0
    %v344 = vadd.f32 0.0, %v343
    %v345 = vpop.f32.mrf.mxu0
    %346 = vmatprep.mubr.bf16.mxu0 0
    %347 = vmatmul.mubr.bf16.gmra.mxu0 %v205
    %v348 = vpop.f32.mrf.mxu0
    %v349 = vadd.f32 0.0, %v348
    %v350 = vpop.f32.mrf.mxu0
    %v351 = vpop.f32.mrf.mxu0
    %v352 = vadd.f32 0.0, %v351
    %v353 = vpop.f32.mrf.mxu0
    %354 = vmatprep.mubr.bf16.mxu0 0
    %355 = vmatmul.mubr.bf16.gmra.mxu0 %v208
    %v356 = vpop.f32.mrf.mxu0
    %v357 = vadd.f32 0.0, %v356
    %v358 = vpop.f32.mrf.mxu0
    %v359 = vpop.f32.mrf.mxu0
    %v360 = vadd.f32 0.0, %v359
    %v361 = vpop.f32.mrf.mxu0
    %362 = vmatprep.mubr.bf16.mxu0 0
    %363 = vmatmul.mubr.bf16.gmra.mxu0 %v211
    %v364 = vpop.f32.mrf.mxu0
    %v365 = vadd.f32 0.0, %v364
    %v366 = vpop.f32.mrf.mxu0
    %v367 = vpop.f32.mrf.mxu0
    %v368 = vadd.f32 0.0, %v367
    %v369 = vpop.f32.mrf.mxu0
    %370 = vmatprep.mubr.bf16.mxu0 0
    %371 = vmatmul.mubr.bf16.gmra.mxu0 %v214
    %v372 = vpop.f32.mrf.mxu0
    %v373 = vadd.f32 0.0, %v372
    %v374 = vpop.f32.mrf.mxu0
    %v375 = vpop.f32.mrf.mxu0
    %v376 = vadd.f32 0.0, %v375
    %v377 = vpop.f32.mrf.mxu0
    %378 = vmatprep.mubr.bf16.mxu0 0
    %379 = vmatmul.mubr.bf16.gmra.mxu0 %v217
    %v380 = vpop.f32.mrf.mxu0
    %v381 = vadd.f32 0.0, %v380
    %v382 = vpop.f32.mrf.mxu0
    %v383 = vpop.f32.mrf.mxu0
    %v384 = vadd.f32 0.0, %v383
    %v385 = vpop.f32.mrf.mxu0
    %386 = vmatprep.mubr.bf16.mxu0 0
    %387 = vmatmul.mubr.bf16.gmra.mxu0 %v220
    %v388 = vpop.f32.mrf.mxu0
    %v389 = vadd.f32 0.0, %v388
    %v390 = vpop.f32.mrf.mxu0
    %v391 = vpop.f32.mrf.mxu0
    %v392 = vadd.f32 0.0, %v391
    %v393 = vpop.f32.mrf.mxu0
    %394 = vmatprep.mubr.bf16.mxu0 0
    %395 = vmatmul.mubr.bf16.gmra.mxu0 %v223
    %v396 = vpop.f32.mrf.mxu0
    %v397 = vadd.f32 0.0, %v396
    %v398 = vpop.f32.mrf.mxu0
    %v399 = vpop.f32.mrf.mxu0
    %v400 = vadd.f32 0.0, %v399
    %v401 = vpop.f32.mrf.mxu0
    %402 = vmatprep.mubr.bf16.mxu0 0
    %403 = vmatmul.mubr.bf16.gmra.mxu0 %v226
    %v404 = vpop.f32.mrf.mxu0
    %v405 = vadd.f32 0.0, %v404
    %v406 = vpop.f32.mrf.mxu0
    %v407 = vpop.f32.mrf.mxu0
    %v408 = vadd.f32 0.0, %v407
    %v409 = vpop.f32.mrf.mxu0
    %410 = vmatprep.mubr.bf16.mxu0 0
    %411 = vmatmul.mubr.bf16.gmra.mxu0 %v229
    %v412 = vpop.f32.mrf.mxu0
    %v413 = vadd.f32 0.0, %v412
    %v414 = vpop.f32.mrf.mxu0
    %v415 = vpop.f32.mrf.mxu0
    %v416 = vadd.f32 0.0, %v415
    %v417 = vpop.f32.mrf.mxu0
    %418 = vmatprep.mubr.bf16.mxu0 0
    %419 = vmatmul.mubr.bf16.gmra.mxu0 %v232
    %v420 = vpop.f32.mrf.mxu0
    %v421 = vadd.f32 0.0, %v420
    %v422 = vpop.f32.mrf.mxu0
    %v423 = vpop.f32.mrf.mxu0
    %v424 = vpop.f32.mrf.mxu0
    %425 = vdwg.mxu0
    %v432 = vunpack.c.l.b16 %v82
    %v433 = vunpack.c.l.b16 %v83
    %v434 = vunpack.c.l.b16 %v84
    %v435 = vunpack.c.l.b16 %v85
    %v436 = vunpack.c.l.b16 %v86
    %v437 = vunpack.c.l.b16 %v87
    %v438 = vpack.c.b16 %v433, %v432
    %v439 = vpack.c.b16 %v435, %v434
    %v440 = vpack.c.b16 %v437, %v436
    %v445 = vsel %vm173, %v62, 0
    %v448 = vsel %vm173, %v63, 0
    %v451 = vsel %vm173, %v64, 0
    %v454 = vsel %vm173, %v65, 0
    %v457 = vsel %vm173, %v66, 0
    %v460 = vsel %vm173, %v67, 0
    %v463 = vsel %vm173, %v68, 0
    %v466 = vsel %vm173, %v69, 0
    %v469 = vsel %vm173, %v70, 0
    %v472 = vsel %vm173, %v71, 0
    %v475 = vsel %vm173, %v72, 0
    %v478 = vsel %vm173, %v73, 0
    %v481 = vsel %vm173, %v74, 0
    %v484 = vsel %vm173, %v75, 0
    %v487 = vsel %vm173, %v76, 0
    %v490 = vsel %vm173, %v77, 0
    %v493 = vsel %vm173, %v78, 0
    %v496 = vsel %vm173, %v79, 0
    %v499 = vsel %vm173, %v80, 0
    %v502 = vsel %vm173, %v81, 0
    %504 = vmatprep.subr.bf16.mxu0 0
    %505 = vmatpush1.bf16.msra.mxu0 0
    %506 = vmatprep.subr.bf16.mxu0 0
    %507 = vmatpush1.bf16.msra.mxu0 0
    %508 = vmatprep.subr.bf16.mxu0 0
    %509 = vmatpush1.bf16.msra.mxu0 0
    %510 = vmatprep.subr.bf16.mxu0 0
    %511 = vmatpush1.bf16.msra.mxu0 0
    %512 = vmatprep.subr.bf16.mxu0 0
    %513 = vmatpush1.bf16.msra.mxu0 0
    %514 = vmatprep.subr.bf16.mxu0 0
    %515 = vmatpush1.bf16.msra.mxu0 %v440
    %516 = vmatprep.subr.bf16.mxu0 0
    %517 = vmatpush1.bf16.msra.mxu0 %v439
    %518 = vmatprep.subr.bf16.mxu0 0
    %519 = vmatpush1.bf16.msra.mxu0 %v438
    %520 = vmatprep.subr.bf16.mxu0 0
    %521 = vmatpush2.bf16.msra.mxu0 0
    %522 = vmatprep.subr.bf16.mxu0 0
    %523 = vmatpush2.bf16.msra.mxu0 0
    %524 = vmatprep.subr.bf16.mxu0 0
    %525 = vmatpush2.bf16.msra.mxu0 0
    %526 = vmatprep.subr.bf16.mxu0 0
    %527 = vmatpush2.bf16.msra.mxu0 0
    %528 = vmatprep.subr.bf16.mxu0 0
    %529 = vmatpush2.bf16.msra.mxu0 0
    %530 = vmatprep.subr.bf16.mxu0 0
    %531 = vmatpush2.bf16.msra.mxu0 0
    %532 = vmatprep.subr.bf16.mxu0 0
    %533 = vmatpush2.bf16.msra.mxu0 0
    %534 = vmatprep.subr.bf16.mxu0 0
    %535 = vmatpush2.bf16.msra.mxu0 0
    %536 = vmatprep.mubr.bf16.mxu0 0
    %537 = vmatmul.mubr.bf16.gmra.mxu0 %v445
    %v538 = vpop.f32.mrf.mxu0
    %v539 = vadd.f32 %v269, %v538
    %v540 = vpop.f32.mrf.mxu0
    %v541 = vpop.f32.mrf.mxu0
    %v542 = vadd.f32 %v272, %v541
    %v543 = vpop.f32.mrf.mxu0
    %544 = vmatprep.mubr.bf16.mxu0 0
    %545 = vmatmul.mubr.bf16.gmra.mxu0 %v448
    %v546 = vpop.f32.mrf.mxu0
    %v547 = vadd.f32 %v277, %v546
    %v548 = vpop.f32.mrf.mxu0
    %v549 = vpop.f32.mrf.mxu0
    %v550 = vadd.f32 %v280, %v549
    %v551 = vpop.f32.mrf.mxu0
    %552 = vmatprep.mubr.bf16.mxu0 0
    %553 = vmatmul.mubr.bf16.gmra.mxu0 %v451
    %v554 = vpop.f32.mrf.mxu0
    %v555 = vadd.f32 %v285, %v554
    %v556 = vpop.f32.mrf.mxu0
    %v557 = vpop.f32.mrf.mxu0
    %v558 = vadd.f32 %v288, %v557
    %v559 = vpop.f32.mrf.mxu0
    %560 = vmatprep.mubr.bf16.mxu0 0
    %561 = vmatmul.mubr.bf16.gmra.mxu0 %v454
    %v562 = vpop.f32.mrf.mxu0
    %v563 = vadd.f32 %v293, %v562
    %v564 = vpop.f32.mrf.mxu0
    %v565 = vpop.f32.mrf.mxu0
    %v566 = vadd.f32 %v296, %v565
    %v567 = vpop.f32.mrf.mxu0
    %568 = vmatprep.mubr.bf16.mxu0 0
    %569 = vmatmul.mubr.bf16.gmra.mxu0 %v457
    %v570 = vpop.f32.mrf.mxu0
    %v571 = vadd.f32 %v301, %v570
    %v572 = vpop.f32.mrf.mxu0
    %v573 = vpop.f32.mrf.mxu0
    %v574 = vadd.f32 %v304, %v573
    %v575 = vpop.f32.mrf.mxu0
    %576 = vmatprep.mubr.bf16.mxu0 0
    %577 = vmatmul.mubr.bf16.gmra.mxu0 %v460
    %v578 = vpop.f32.mrf.mxu0
    %v579 = vadd.f32 %v309, %v578
    %v580 = vpop.f32.mrf.mxu0
    %v581 = vpop.f32.mrf.mxu0
    %v582 = vadd.f32 %v312, %v581
    %v583 = vpop.f32.mrf.mxu0
    %584 = vmatprep.mubr.bf16.mxu0 0
    %585 = vmatmul.mubr.bf16.gmra.mxu0 %v463
    %v586 = vpop.f32.mrf.mxu0
    %v587 = vadd.f32 %v317, %v586
    %v588 = vpop.f32.mrf.mxu0
    %v589 = vpop.f32.mrf.mxu0
    %v590 = vadd.f32 %v320, %v589
    %v591 = vpop.f32.mrf.mxu0
    %592 = vmatprep.mubr.bf16.mxu0 0
    %593 = vmatmul.mubr.bf16.gmra.mxu0 %v466
    %v594 = vpop.f32.mrf.mxu0
    %v595 = vadd.f32 %v325, %v594
    %v596 = vpop.f32.mrf.mxu0
    %v597 = vpop.f32.mrf.mxu0
    %v598 = vadd.f32 %v328, %v597
    %v599 = vpop.f32.mrf.mxu0
    %600 = vmatprep.mubr.bf16.mxu0 0
    %601 = vmatmul.mubr.bf16.gmra.mxu0 %v469
    %v602 = vpop.f32.mrf.mxu0
    %v603 = vadd.f32 %v333, %v602
    %v604 = vpop.f32.mrf.mxu0
    %v605 = vpop.f32.mrf.mxu0
    %v606 = vadd.f32 %v336, %v605
    %v607 = vpop.f32.mrf.mxu0
    %608 = vmatprep.mubr.bf16.mxu0 0
    %609 = vmatmul.mubr.bf16.gmra.mxu0 %v472
    %v610 = vpop.f32.mrf.mxu0
    %v611 = vadd.f32 %v341, %v610
    %v612 = vpop.f32.mrf.mxu0
    %v613 = vpop.f32.mrf.mxu0
    %v614 = vadd.f32 %v344, %v613
    %v615 = vpop.f32.mrf.mxu0
    %616 = vmatprep.mubr.bf16.mxu0 0
    %617 = vmatmul.mubr.bf16.gmra.mxu0 %v475
    %v618 = vpop.f32.mrf.mxu0
    %v619 = vadd.f32 %v349, %v618
    %v620 = vpop.f32.mrf.mxu0
    %v621 = vpop.f32.mrf.mxu0
    %v622 = vadd.f32 %v352, %v621
    %v623 = vpop.f32.mrf.mxu0
    %624 = vmatprep.mubr.bf16.mxu0 0
    %625 = vmatmul.mubr.bf16.gmra.mxu0 %v478
    %v626 = vpop.f32.mrf.mxu0
    %v627 = vadd.f32 %v357, %v626
    %v628 = vpop.f32.mrf.mxu0
    %v629 = vpop.f32.mrf.mxu0
    %v630 = vadd.f32 %v360, %v629
    %v631 = vpop.f32.mrf.mxu0
    %632 = vmatprep.mubr.bf16.mxu0 0
    %633 = vmatmul.mubr.bf16.gmra.mxu0 %v481
    %v634 = vpop.f32.mrf.mxu0
    %v635 = vadd.f32 %v365, %v634
    %v636 = vpop.f32.mrf.mxu0
    %v637 = vpop.f32.mrf.mxu0
    %v638 = vadd.f32 %v368, %v637
    %v639 = vpop.f32.mrf.mxu0
    %640 = vmatprep.mubr.bf16.mxu0 0
    %641 = vmatmul.mubr.bf16.gmra.mxu0 %v484
    %v642 = vpop.f32.mrf.mxu0
    %v643 = vadd.f32 %v373, %v642
    %v644 = vpop.f32.mrf.mxu0
    %v645 = vpop.f32.mrf.mxu0
    %v646 = vadd.f32 %v376, %v645
    %v647 = vpop.f32.mrf.mxu0
    %648 = vmatprep.mubr.bf16.mxu0 0
    %649 = vmatmul.mubr.bf16.gmra.mxu0 %v487
    %v650 = vpop.f32.mrf.mxu0
    %v651 = vadd.f32 %v381, %v650
    %v652 = vpop.f32.mrf.mxu0
    %v653 = vpop.f32.mrf.mxu0
    %v654 = vadd.f32 %v384, %v653
    %v655 = vpop.f32.mrf.mxu0
    %656 = vmatprep.mubr.bf16.mxu0 0
    %657 = vmatmul.mubr.bf16.gmra.mxu0 %v490
    %v658 = vpop.f32.mrf.mxu0
    %v659 = vadd.f32 %v389, %v658
    %v660 = vpop.f32.mrf.mxu0
    %v661 = vpop.f32.mrf.mxu0
    %v662 = vadd.f32 %v392, %v661
    %v663 = vpop.f32.mrf.mxu0
    %664 = vmatprep.mubr.bf16.mxu0 0
    %665 = vmatmul.mubr.bf16.gmra.mxu0 %v493
    %v666 = vpop.f32.mrf.mxu0
    %v667 = vadd.f32 %v397, %v666
    %v668 = vpop.f32.mrf.mxu0
    %v669 = vpop.f32.mrf.mxu0
    %v670 = vadd.f32 %v400, %v669
    %v671 = vpop.f32.mrf.mxu0
    %672 = vmatprep.mubr.bf16.mxu0 0
    %673 = vmatmul.mubr.bf16.gmra.mxu0 %v496
    %v674 = vpop.f32.mrf.mxu0
    %v675 = vadd.f32 %v405, %v674
    %v676 = vpop.f32.mrf.mxu0
    %v677 = vpop.f32.mrf.mxu0
    %v678 = vadd.f32 %v408, %v677
    %v679 = vpop.f32.mrf.mxu0
    %680 = vmatprep.mubr.bf16.mxu0 0
    %681 = vmatmul.mubr.bf16.gmra.mxu0 %v499
    %v682 = vpop.f32.mrf.mxu0
    %v683 = vadd.f32 %v413, %v682
    %v684 = vpop.f32.mrf.mxu0
    %v685 = vpop.f32.mrf.mxu0
    %v686 = vadd.f32 %v416, %v685
    %v687 = vpop.f32.mrf.mxu0
    %688 = vmatprep.mubr.bf16.mxu0 0
    %689 = vmatmul.mubr.bf16.gmra.mxu0 %v502
    %v690 = vpop.f32.mrf.mxu0
    %v691 = vadd.f32 %v421, %v690
    %v692 = vpop.f32.mrf.mxu0
    %v693 = vpop.f32.mrf.mxu0
    %v694 = vpop.f32.mrf.mxu0
    %695 = vdwg.mxu0
    %v696 = vld [vmem:[%s0 + $0x2] sm:$0xff]
    %v697 = vld [vmem:[%s0 + $0xa] sm:$0xff]
    %v698 = vld [vmem:[%s0 + $0x12] sm:$0xff]
    %v699 = vld [vmem:[%s0 + $0x1a] sm:$0xff]
    %v700 = vld [vmem:[%s0 + $0x22] sm:$0xff]
    %v701 = vld [vmem:[%s0 + $0x2a] sm:$0xff]
    %v702 = vld [vmem:[%s0 + $0x32] sm:$0xff]
    %v703 = vld [vmem:[%s0 + $0x3a] sm:$0xff]
    %v704 = vld [vmem:[%s0 + $0x42] sm:$0xff]
    %v705 = vld [vmem:[%s0 + $0x4a] sm:$0xff]
    %v706 = vld [vmem:[%s0 + $0x52] sm:$0xff]
    %v707 = vld [vmem:[%s0 + $0x5a] sm:$0xff]
    %v708 = vld [vmem:[%s0 + $0x62] sm:$0xff]
    %v709 = vld [vmem:[%s0 + $0x6a] sm:$0xff]
    %v710 = vld [vmem:[%s0 + $0x72] sm:$0xff]
    %v711 = vld [vmem:[%s0 + $0x7a] sm:$0xff]
    %v712 = vld [vmem:[%s0 + $0x82] sm:$0xff]
    %v713 = vld [vmem:[%s0 + $0x8a] sm:$0xff]
    %v714 = vld [vmem:[%s0 + $0x92] sm:$0xff]
    %v715 = vld [vmem:[%s0 + $0x9a] sm:$0xff]
    %v716 = vld [vmem:[%s0 + $0xa2] sm:$0xff]
    %v717 = vld [vmem:[%s0 + $0xaa] sm:$0xff]
    %v718 = vld [vmem:[%s0 + $0xb2] sm:$0xff]
    %v719 = vld [vmem:[%s0 + $0xba] sm:$0xff]
    %v720 = vld [vmem:[%s0 + $0xc2] sm:$0xff]
    %v721 = vld [vmem:[%s0 + $0xca] sm:$0xff]
    %v722 = vld [vmem:[%s0 + $0xd2] sm:$0xff]
    %v723 = vld [vmem:[%s0 + $0xda] sm:$0xff]
    %v724 = vld [vmem:[%s0 + $0xe2] sm:$0xff]
    %v725 = vld [vmem:[%s0 + $0xea] sm:$0xff]
    %v726 = vld [vmem:[%s0 + $0xf2] sm:$0xff]
    %v727 = vld [vmem:[%s0 + $0xfa] sm:$0xff]
    %v728 = vld [vmem:[%s0 + $0x102] sm:$0xff]
    %v729 = vld [vmem:[%s0 + $0x10a] sm:$0xff]
    %v730 = vld [vmem:[%s0 + $0x112] sm:$0xff]
    %v731 = vld [vmem:[%s0 + $0x11a] sm:$0xff]
    %v732 = vld [vmem:[%s0 + $0x122] sm:$0xff]
    %v733 = vld [vmem:[%s0 + $0x12a] sm:$0xff]
    %v734 = vld [vmem:[%s0 + $0x132] sm:$0xff]
    %v735 = vld [vmem:[%s0 + $0x13a] sm:$0xff]
    %v736 = vpack.c.bf16 %v697, %v696
    %v737 = vpack.c.bf16 %v699, %v698
    %v738 = vpack.c.bf16 %v701, %v700
    %v739 = vpack.c.bf16 %v703, %v702
    %v740 = vpack.c.bf16 %v705, %v704
    %v741 = vpack.c.bf16 %v707, %v706
    %v742 = vpack.c.bf16 %v709, %v708
    %v743 = vpack.c.bf16 %v711, %v710
    %v744 = vpack.c.bf16 %v713, %v712
    %v745 = vpack.c.bf16 %v715, %v714
    %v746 = vpack.c.bf16 %v717, %v716
    %v747 = vpack.c.bf16 %v719, %v718
    %v748 = vpack.c.bf16 %v721, %v720
    %v749 = vpack.c.bf16 %v723, %v722
    %v750 = vpack.c.bf16 %v725, %v724
    %v751 = vpack.c.bf16 %v727, %v726
    %v752 = vpack.c.bf16 %v729, %v728
    %v753 = vpack.c.bf16 %v731, %v730
    %v754 = vpack.c.bf16 %v733, %v732
    %v755 = vpack.c.bf16 %v735, %v734
    %s756 = scalar_lea.vmem %s1, 48
    %v757 = vld [vmem:[%s756] sm:$0xf]
    %v758 = vld [vmem:[%s756 + $0x4] sm:$0xf]
    %v759 = vld [vmem:[%s756 + $0x8] sm:$0xf]
    %v760 = vld [vmem:[%s756 + $0xc] sm:$0xf]
    %v761 = vld [vmem:[%s756 + $0x10] sm:$0xf]
    %v762 = vld [vmem:[%s756 + $0x14] sm:$0xf]
    %v769 = vunpack.c.l.b16 %v757
    %v770 = vunpack.c.l.b16 %v758
    %v771 = vunpack.c.l.b16 %v759
    %v772 = vunpack.c.l.b16 %v760
    %v773 = vunpack.c.l.b16 %v761
    %v774 = vunpack.c.l.b16 %v762
    %v775 = vpack.c.b16 %v770, %v769
    %v776 = vpack.c.b16 %v772, %v771
    %v777 = vpack.c.b16 %v774, %v773
    %v782 = vsel %vm173, %v736, 0
    %v785 = vsel %vm173, %v737, 0
    %v788 = vsel %vm173, %v738, 0
    %v791 = vsel %vm173, %v739, 0
    %v794 = vsel %vm173, %v740, 0
    %v797 = vsel %vm173, %v741, 0
    %v800 = vsel %vm173, %v742, 0
    %v803 = vsel %vm173, %v743, 0
    %v806 = vsel %vm173, %v744, 0
    %v809 = vsel %vm173, %v745, 0
    %v812 = vsel %vm173, %v746, 0
    %v815 = vsel %vm173, %v747, 0
    %v818 = vsel %vm173, %v748, 0
    %v821 = vsel %vm173, %v749, 0
    %v824 = vsel %vm173, %v750, 0
    %v827 = vsel %vm173, %v751, 0
    %v830 = vsel %vm173, %v752, 0
    %v833 = vsel %vm173, %v753, 0
    %v836 = vsel %vm173, %v754, 0
    %v839 = vsel %vm173, %v755, 0
    %841 = vmatprep.subr.bf16.mxu0 0
    %842 = vmatpush1.bf16.msra.mxu0 0
    %843 = vmatprep.subr.bf16.mxu0 0
    %844 = vmatpush1.bf16.msra.mxu0 0
    %845 = vmatprep.subr.bf16.mxu0 0
    %846 = vmatpush1.bf16.msra.mxu0 0
    %847 = vmatprep.subr.bf16.mxu0 0
    %848 = vmatpush1.bf16.msra.mxu0 0
    %849 = vmatprep.subr.bf16.mxu0 0
    %850 = vmatpush1.bf16.msra.mxu0 0
    %851 = vmatprep.subr.bf16.mxu0 0
    %852 = vmatpush1.bf16.msra.mxu0 %v777
    %853 = vmatprep.subr.bf16.mxu0 0
    %854 = vmatpush1.bf16.msra.mxu0 %v776
    %855 = vmatprep.subr.bf16.mxu0 0
    %856 = vmatpush1.bf16.msra.mxu0 %v775
    %857 = vmatprep.subr.bf16.mxu0 0
    %858 = vmatpush2.bf16.msra.mxu0 0
    %859 = vmatprep.subr.bf16.mxu0 0
    %860 = vmatpush2.bf16.msra.mxu0 0
    %861 = vmatprep.subr.bf16.mxu0 0
    %862 = vmatpush2.bf16.msra.mxu0 0
    %863 = vmatprep.subr.bf16.mxu0 0
    %864 = vmatpush2.bf16.msra.mxu0 0
    %865 = vmatprep.subr.bf16.mxu0 0
    %866 = vmatpush2.bf16.msra.mxu0 0
    %867 = vmatprep.subr.bf16.mxu0 0
    %868 = vmatpush2.bf16.msra.mxu0 0
    %869 = vmatprep.subr.bf16.mxu0 0
    %870 = vmatpush2.bf16.msra.mxu0 0
    %871 = vmatprep.subr.bf16.mxu0 0
    %872 = vmatpush2.bf16.msra.mxu0 0
    %873 = vmatprep.mubr.bf16.mxu0 0
    %874 = vmatmul.mubr.bf16.gmra.mxu0 %v782
    %v875 = vpop.f32.mrf.mxu0
    %v876 = vadd.f32 0.0, %v875
    %v877 = vpop.f32.mrf.mxu0
    %v878 = vpop.f32.mrf.mxu0
    %v879 = vadd.f32 0.0, %v878
    %v880 = vpop.f32.mrf.mxu0
    %881 = vmatprep.mubr.bf16.mxu0 0
    %882 = vmatmul.mubr.bf16.gmra.mxu0 %v785
    %v883 = vpop.f32.mrf.mxu0
    %v884 = vadd.f32 0.0, %v883
    %v885 = vpop.f32.mrf.mxu0
    %v886 = vpop.f32.mrf.mxu0
    %v887 = vadd.f32 0.0, %v886
    %v888 = vpop.f32.mrf.mxu0
    %889 = vmatprep.mubr.bf16.mxu0 0
    %890 = vmatmul.mubr.bf16.gmra.mxu0 %v788
    %v891 = vpop.f32.mrf.mxu0
    %v892 = vadd.f32 0.0, %v891
    %v893 = vpop.f32.mrf.mxu0
    %v894 = vpop.f32.mrf.mxu0
    %v895 = vadd.f32 0.0, %v894
    %v896 = vpop.f32.mrf.mxu0
    %897 = vmatprep.mubr.bf16.mxu0 0
    %898 = vmatmul.mubr.bf16.gmra.mxu0 %v791
    %v899 = vpop.f32.mrf.mxu0
    %v900 = vadd.f32 0.0, %v899
    %v901 = vpop.f32.mrf.mxu0
    %v902 = vpop.f32.mrf.mxu0
    %v903 = vadd.f32 0.0, %v902
    %v904 = vpop.f32.mrf.mxu0
    %905 = vmatprep.mubr.bf16.mxu0 0
    %906 = vmatmul.mubr.bf16.gmra.mxu0 %v794
    %v907 = vpop.f32.mrf.mxu0
    %v908 = vadd.f32 0.0, %v907
    %v909 = vpop.f32.mrf.mxu0
    %v910 = vpop.f32.mrf.mxu0
    %v911 = vadd.f32 0.0, %v910
    %v912 = vpop.f32.mrf.mxu0
    %913 = vmatprep.mubr.bf16.mxu0 0
    %914 = vmatmul.mubr.bf16.gmra.mxu0 %v797
    %v915 = vpop.f32.mrf.mxu0
    %v916 = vadd.f32 0.0, %v915
    %v917 = vpop.f32.mrf.mxu0
    %v918 = vpop.f32.mrf.mxu0
    %v919 = vadd.f32 0.0, %v918
    %v920 = vpop.f32.mrf.mxu0
    %921 = vmatprep.mubr.bf16.mxu0 0
    %922 = vmatmul.mubr.bf16.gmra.mxu0 %v800
    %v923 = vpop.f32.mrf.mxu0
    %v924 = vadd.f32 0.0, %v923
    %v925 = vpop.f32.mrf.mxu0
    %v926 = vpop.f32.mrf.mxu0
    %v927 = vadd.f32 0.0, %v926
    %v928 = vpop.f32.mrf.mxu0
    %929 = vmatprep.mubr.bf16.mxu0 0
    %930 = vmatmul.mubr.bf16.gmra.mxu0 %v803
    %v931 = vpop.f32.mrf.mxu0
    %v932 = vadd.f32 0.0, %v931
    %v933 = vpop.f32.mrf.mxu0
    %v934 = vpop.f32.mrf.mxu0
    %v935 = vadd.f32 0.0, %v934
    %v936 = vpop.f32.mrf.mxu0
    %937 = vmatprep.mubr.bf16.mxu0 0
    %938 = vmatmul.mubr.bf16.gmra.mxu0 %v806
    %v939 = vpop.f32.mrf.mxu0
    %v940 = vadd.f32 0.0, %v939
    %v941 = vpop.f32.mrf.mxu0
    %v942 = vpop.f32.mrf.mxu0
    %v943 = vadd.f32 0.0, %v942
    %v944 = vpop.f32.mrf.mxu0
    %945 = vmatprep.mubr.bf16.mxu0 0
    %946 = vmatmul.mubr.bf16.gmra.mxu0 %v809
    %v947 = vpop.f32.mrf.mxu0
    %v948 = vadd.f32 0.0, %v947
    %v949 = vpop.f32.mrf.mxu0
    %v950 = vpop.f32.mrf.mxu0
    %v951 = vadd.f32 0.0, %v950
    %v952 = vpop.f32.mrf.mxu0
    %953 = vmatprep.mubr.bf16.mxu0 0
    %954 = vmatmul.mubr.bf16.gmra.mxu0 %v812
    %v955 = vpop.f32.mrf.mxu0
    %v956 = vadd.f32 0.0, %v955
    %v957 = vpop.f32.mrf.mxu0
    %v958 = vpop.f32.mrf.mxu0
    %v959 = vadd.f32 0.0, %v958
    %v960 = vpop.f32.mrf.mxu0
    %961 = vmatprep.mubr.bf16.mxu0 0
    %962 = vmatmul.mubr.bf16.gmra.mxu0 %v815
    %v963 = vpop.f32.mrf.mxu0
    %v964 = vadd.f32 0.0, %v963
    %v965 = vpop.f32.mrf.mxu0
    %v966 = vpop.f32.mrf.mxu0
    %v967 = vadd.f32 0.0, %v966
    %v968 = vpop.f32.mrf.mxu0
    %969 = vmatprep.mubr.bf16.mxu0 0
    %970 = vmatmul.mubr.bf16.gmra.mxu0 %v818
    %v971 = vpop.f32.mrf.mxu0
    %v972 = vadd.f32 0.0, %v971
    %v973 = vpop.f32.mrf.mxu0
    %v974 = vpop.f32.mrf.mxu0
    %v975 = vadd.f32 0.0, %v974
    %v976 = vpop.f32.mrf.mxu0
    %977 = vmatprep.mubr.bf16.mxu0 0
    %978 = vmatmul.mubr.bf16.gmra.mxu0 %v821
    %v979 = vpop.f32.mrf.mxu0
    %v980 = vadd.f32 0.0, %v979
    %v981 = vpop.f32.mrf.mxu0
    %v982 = vpop.f32.mrf.mxu0
    %v983 = vadd.f32 0.0, %v982
    %v984 = vpop.f32.mrf.mxu0
    %985 = vmatprep.mubr.bf16.mxu0 0
    %986 = vmatmul.mubr.bf16.gmra.mxu0 %v824
    %v987 = vpop.f32.mrf.mxu0
    %v988 = vadd.f32 0.0, %v987
    %v989 = vpop.f32.mrf.mxu0
    %v990 = vpop.f32.mrf.mxu0
    %v991 = vadd.f32 0.0, %v990
    %v992 = vpop.f32.mrf.mxu0
    %993 = vmatprep.mubr.bf16.mxu0 0
    %994 = vmatmul.mubr.bf16.gmra.mxu0 %v827
    %v995 = vpop.f32.mrf.mxu0
    %v996 = vadd.f32 0.0, %v995
    %v997 = vpop.f32.mrf.mxu0
    %v998 = vpop.f32.mrf.mxu0
    %v999 = vadd.f32 0.0, %v998
    %v1000 = vpop.f32.mrf.mxu0
    %1001 = vmatprep.mubr.bf16.mxu0 0
    %1002 = vmatmul.mubr.bf16.gmra.mxu0 %v830
    %v1003 = vpop.f32.mrf.mxu0
    %v1004 = vadd.f32 0.0, %v1003
    %v1005 = vpop.f32.mrf.mxu0
    %v1006 = vpop.f32.mrf.mxu0
    %v1007 = vadd.f32 0.0, %v1006
    %v1008 = vpop.f32.mrf.mxu0
    %1009 = vmatprep.mubr.bf16.mxu0 0
    %1010 = vmatmul.mubr.bf16.gmra.mxu0 %v833
    %v1011 = vpop.f32.mrf.mxu0
    %v1012 = vadd.f32 0.0, %v1011
    %v1013 = vpop.f32.mrf.mxu0
    %v1014 = vpop.f32.mrf.mxu0
    %v1015 = vadd.f32 0.0, %v1014
    %v1016 = vpop.f32.mrf.mxu0
    %1017 = vmatprep.mubr.bf16.mxu0 0
    %1018 = vmatmul.mubr.bf16.gmra.mxu0 %v836
    %v1019 = vpop.f32.mrf.mxu0
    %v1020 = vadd.f32 0.0, %v1019
    %v1021 = vpop.f32.mrf.mxu0
    %v1022 = vpop.f32.mrf.mxu0
    %v1023 = vadd.f32 0.0, %v1022
    %v1024 = vpop.f32.mrf.mxu0
    %1025 = vmatprep.mubr.bf16.mxu0 0
    %1026 = vmatmul.mubr.bf16.gmra.mxu0 %v839
    %v1027 = vpop.f32.mrf.mxu0
    %v1028 = vadd.f32 0.0, %v1027
    %v1029 = vpop.f32.mrf.mxu0
    %v1030 = vpop.f32.mrf.mxu0
    %v1031 = vpop.f32.mrf.mxu0
    %1032 = vdwg.mxu0
    %v1033 = vadd.f32 %v539, %v876
    %v1034 = vadd.f32 %v542, %v879
    %v1035 = vadd.f32 %v547, %v884
    %v1036 = vadd.f32 %v550, %v887
    %v1037 = vadd.f32 %v555, %v892
    %v1038 = vadd.f32 %v558, %v895
    %v1039 = vadd.f32 %v563, %v900
    %v1040 = vadd.f32 %v566, %v903
    %v1041 = vadd.f32 %v571, %v908
    %v1042 = vadd.f32 %v574, %v911
    %v1043 = vadd.f32 %v579, %v916
    %v1044 = vadd.f32 %v582, %v919
    %v1045 = vadd.f32 %v587, %v924
    %v1046 = vadd.f32 %v590, %v927
    %v1047 = vadd.f32 %v595, %v932
    %v1048 = vadd.f32 %v598, %v935
    %v1049 = vadd.f32 %v603, %v940
    %v1050 = vadd.f32 %v606, %v943
    %v1051 = vadd.f32 %v611, %v948
    %v1052 = vadd.f32 %v614, %v951
    %v1053 = vadd.f32 %v619, %v956
    %v1054 = vadd.f32 %v622, %v959
    %v1055 = vadd.f32 %v627, %v964
    %v1056 = vadd.f32 %v630, %v967
    %v1057 = vadd.f32 %v635, %v972
    %v1058 = vadd.f32 %v638, %v975
    %v1059 = vadd.f32 %v643, %v980
    %v1060 = vadd.f32 %v646, %v983
    %v1061 = vadd.f32 %v651, %v988
    %v1062 = vadd.f32 %v654, %v991
    %v1063 = vadd.f32 %v659, %v996
    %v1064 = vadd.f32 %v662, %v999
    %v1065 = vadd.f32 %v667, %v1004
    %v1066 = vadd.f32 %v670, %v1007
    %v1067 = vadd.f32 %v675, %v1012
    %v1068 = vadd.f32 %v678, %v1015
    %v1069 = vadd.f32 %v683, %v1020
    %v1070 = vadd.f32 %v686, %v1023
    %v1071 = vadd.f32 %v691, %v1028
    %v1072 = vld [vmem:[%s0 + $0xd] sm:$0xff]
    %v1073 = vld [vmem:[%s0 + $0x15] sm:$0xff]
    %v1074 = vld [vmem:[%s0 + $0x1d] sm:$0xff]
    %v1075 = vld [vmem:[%s0 + $0x25] sm:$0xff]
    %v1076 = vld [vmem:[%s0 + $0x2d] sm:$0xff]
    %v1077 = vld [vmem:[%s0 + $0x35] sm:$0xff]
    %v1078 = vld [vmem:[%s0 + $0x3d] sm:$0xff]
    %v1079 = vld [vmem:[%s0 + $0x45] sm:$0xff]
    %v1080 = vld [vmem:[%s0 + $0x4d] sm:$0xff]
    %v1081 = vld [vmem:[%s0 + $0x55] sm:$0xff]
    %v1082 = vld [vmem:[%s0 + $0x5d] sm:$0xff]
    %v1083 = vld [vmem:[%s0 + $0x65] sm:$0xff]
    %v1084 = vld [vmem:[%s0 + $0x6d] sm:$0xff]
    %v1085 = vld [vmem:[%s0 + $0x75] sm:$0xff]
    %v1086 = vld [vmem:[%s0 + $0x7d] sm:$0xff]
    %v1087 = vld [vmem:[%s0 + $0x85] sm:$0xff]
    %v1088 = vld [vmem:[%s0 + $0x8d] sm:$0xff]
    %v1089 = vld [vmem:[%s0 + $0x95] sm:$0xff]
    %v1090 = vld [vmem:[%s0 + $0x9d] sm:$0xff]
    %v1091 = vld [vmem:[%s0 + $0xa5] sm:$0xff]
    %v1092 = vld [vmem:[%s0 + $0xad] sm:$0xff]
    %v1093 = vld [vmem:[%s0 + $0xb5] sm:$0xff]
    %v1094 = vld [vmem:[%s0 + $0xbd] sm:$0xff]
    %v1095 = vld [vmem:[%s0 + $0xc5] sm:$0xff]
    %v1096 = vld [vmem:[%s0 + $0xcd] sm:$0xff]
    %v1097 = vld [vmem:[%s0 + $0xd5] sm:$0xff]
    %v1098 = vld [vmem:[%s0 + $0xdd] sm:$0xff]
    %v1099 = vld [vmem:[%s0 + $0xe5] sm:$0xff]
    %v1100 = vld [vmem:[%s0 + $0xed] sm:$0xff]
    %v1101 = vld [vmem:[%s0 + $0xf5] sm:$0xff]
    %v1102 = vld [vmem:[%s0 + $0xfd] sm:$0xff]
    %v1103 = vld [vmem:[%s0 + $0x105] sm:$0xff]
    %v1104 = vld [vmem:[%s0 + $0x10d] sm:$0xff]
    %v1105 = vld [vmem:[%s0 + $0x115] sm:$0xff]
    %v1106 = vld [vmem:[%s0 + $0x11d] sm:$0xff]
    %v1107 = vld [vmem:[%s0 + $0x125] sm:$0xff]
    %v1108 = vld [vmem:[%s0 + $0x12d] sm:$0xff]
    %v1109 = vld [vmem:[%s0 + $0x135] sm:$0xff]
    %v1110 = vld [vmem:[%s0 + $0x13d] sm:$0xff]
    %v1111 = vld [vmem:[%s0 + $0x145] sm:$0xff]
    %v1112 = vpack.c.bf16 %v1073, %v1072
    %v1113 = vpack.c.bf16 %v1075, %v1074
    %v1114 = vpack.c.bf16 %v1077, %v1076
    %v1115 = vpack.c.bf16 %v1079, %v1078
    %v1116 = vpack.c.bf16 %v1081, %v1080
    %v1117 = vpack.c.bf16 %v1083, %v1082
    %v1118 = vpack.c.bf16 %v1085, %v1084
    %v1119 = vpack.c.bf16 %v1087, %v1086
    %v1120 = vpack.c.bf16 %v1089, %v1088
    %v1121 = vpack.c.bf16 %v1091, %v1090
    %v1122 = vpack.c.bf16 %v1093, %v1092
    %v1123 = vpack.c.bf16 %v1095, %v1094
    %v1124 = vpack.c.bf16 %v1097, %v1096
    %v1125 = vpack.c.bf16 %v1099, %v1098
    %v1126 = vpack.c.bf16 %v1101, %v1100
    %v1127 = vpack.c.bf16 %v1103, %v1102
    %v1128 = vpack.c.bf16 %v1105, %v1104
    %v1129 = vpack.c.bf16 %v1107, %v1106
    %v1130 = vpack.c.bf16 %v1109, %v1108
    %v1131 = vpack.c.bf16 %v1111, %v1110
    %s1132 = scalar_lea.vmem %s1, 72
    %v1133 = vld [vmem:[%s1132] sm:$0xf]
    %v1134 = vld [vmem:[%s1132 + $0x4] sm:$0xf]
    %v1135 = vld [vmem:[%s1132 + $0x8] sm:$0xf]
    %v1136 = vld [vmem:[%s1132 + $0xc] sm:$0xf]
    %v1137 = vld [vmem:[%s1132 + $0x10] sm:$0xf]
    %v1138 = vld [vmem:[%s1132 + $0x14] sm:$0xf]
    %v1145 = vunpack.c.l.b16 %v1133
    %v1146 = vunpack.c.l.b16 %v1134
    %v1147 = vunpack.c.l.b16 %v1135
    %v1148 = vunpack.c.l.b16 %v1136
    %v1149 = vunpack.c.l.b16 %v1137
    %v1150 = vunpack.c.l.b16 %v1138
    %v1151 = vpack.c.b16 %v1146, %v1145
    %v1152 = vpack.c.b16 %v1148, %v1147
    %v1153 = vpack.c.b16 %v1150, %v1149
    %v1158 = vsel %vm173, %v1112, 0
    %v1161 = vsel %vm173, %v1113, 0
    %v1164 = vsel %vm173, %v1114, 0
    %v1167 = vsel %vm173, %v1115, 0
    %v1170 = vsel %vm173, %v1116, 0
    %v1173 = vsel %vm173, %v1117, 0
    %v1176 = vsel %vm173, %v1118, 0
    %v1179 = vsel %vm173, %v1119, 0
    %v1182 = vsel %vm173, %v1120, 0
    %v1185 = vsel %vm173, %v1121, 0
    %v1188 = vsel %vm173, %v1122, 0
    %v1191 = vsel %vm173, %v1123, 0
    %v1194 = vsel %vm173, %v1124, 0
    %v1197 = vsel %vm173, %v1125, 0
    %v1200 = vsel %vm173, %v1126, 0
    %v1203 = vsel %vm173, %v1127, 0
    %v1206 = vsel %vm173, %v1128, 0
    %v1209 = vsel %vm173, %v1129, 0
    %v1212 = vsel %vm173, %v1130, 0
    %v1215 = vsel %vm173, %v1131, 0
    %1217 = vmatprep.subr.bf16.mxu0 0
    %1218 = vmatpush1.bf16.msra.mxu0 0
    %1219 = vmatprep.subr.bf16.mxu0 0
    %1220 = vmatpush1.bf16.msra.mxu0 0
    %1221 = vmatprep.subr.bf16.mxu0 0
    %1222 = vmatpush1.bf16.msra.mxu0 0
    %1223 = vmatprep.subr.bf16.mxu0 0
    %1224 = vmatpush1.bf16.msra.mxu0 0
    %1225 = vmatprep.subr.bf16.mxu0 0
    %1226 = vmatpush1.bf16.msra.mxu0 0
    %1227 = vmatprep.subr.bf16.mxu0 0
    %1228 = vmatpush1.bf16.msra.mxu0 %v1153
    %1229 = vmatprep.subr.bf16.mxu0 0
    %1230 = vmatpush1.bf16.msra.mxu0 %v1152
    %1231 = vmatprep.subr.bf16.mxu0 0
    %1232 = vmatpush1.bf16.msra.mxu0 %v1151
    %1233 = vmatprep.subr.bf16.mxu0 0
    %1234 = vmatpush2.bf16.msra.mxu0 0
    %1235 = vmatprep.subr.bf16.mxu0 0
    %1236 = vmatpush2.bf16.msra.mxu0 0
    %1237 = vmatprep.subr.bf16.mxu0 0
    %1238 = vmatpush2.bf16.msra.mxu0 0
    %1239 = vmatprep.subr.bf16.mxu0 0
    %1240 = vmatpush2.bf16.msra.mxu0 0
    %1241 = vmatprep.subr.bf16.mxu0 0
    %1242 = vmatpush2.bf16.msra.mxu0 0
    %1243 = vmatprep.subr.bf16.mxu0 0
    %1244 = vmatpush2.bf16.msra.mxu0 0
    %1245 = vmatprep.subr.bf16.mxu0 0
    %1246 = vmatpush2.bf16.msra.mxu0 0
    %1247 = vmatprep.subr.bf16.mxu0 0
    %1248 = vmatpush2.bf16.msra.mxu0 0
    %1249 = vmatprep.mubr.bf16.mxu0 0
    %1250 = vmatmul.mubr.bf16.gmra.mxu0 %v1158
    %v1251 = vpop.f32.mrf.mxu0
    %v1252 = vadd.f32 0.0, %v1251
    %v1253 = vpop.f32.mrf.mxu0
    %v1254 = vpop.f32.mrf.mxu0
    %v1255 = vadd.f32 0.0, %v1254
    %v1256 = vpop.f32.mrf.mxu0
    %1257 = vmatprep.mubr.bf16.mxu0 0
    %1258 = vmatmul.mubr.bf16.gmra.mxu0 %v1161
    %v1259 = vpop.f32.mrf.mxu0
    %v1260 = vadd.f32 0.0, %v1259
    %v1261 = vpop.f32.mrf.mxu0
    %v1262 = vpop.f32.mrf.mxu0
    %v1263 = vadd.f32 0.0, %v1262
    %v1264 = vpop.f32.mrf.mxu0
    %1265 = vmatprep.mubr.bf16.mxu0 0
    %1266 = vmatmul.mubr.bf16.gmra.mxu0 %v1164
    %v1267 = vpop.f32.mrf.mxu0
    %v1268 = vadd.f32 0.0, %v1267
    %v1269 = vpop.f32.mrf.mxu0
    %v1270 = vpop.f32.mrf.mxu0
    %v1271 = vadd.f32 0.0, %v1270
    %v1272 = vpop.f32.mrf.mxu0
    %1273 = vmatprep.mubr.bf16.mxu0 0
    %1274 = vmatmul.mubr.bf16.gmra.mxu0 %v1167
    %v1275 = vpop.f32.mrf.mxu0
    %v1276 = vadd.f32 0.0, %v1275
    %v1277 = vpop.f32.mrf.mxu0
    %v1278 = vpop.f32.mrf.mxu0
    %v1279 = vadd.f32 0.0, %v1278
    %v1280 = vpop.f32.mrf.mxu0
    %1281 = vmatprep.mubr.bf16.mxu0 0
    %1282 = vmatmul.mubr.bf16.gmra.mxu0 %v1170
    %v1283 = vpop.f32.mrf.mxu0
    %v1284 = vadd.f32 0.0, %v1283
    %v1285 = vpop.f32.mrf.mxu0
    %v1286 = vpop.f32.mrf.mxu0
    %v1287 = vadd.f32 0.0, %v1286
    %v1288 = vpop.f32.mrf.mxu0
    %1289 = vmatprep.mubr.bf16.mxu0 0
    %1290 = vmatmul.mubr.bf16.gmra.mxu0 %v1173
    %v1291 = vpop.f32.mrf.mxu0
    %v1292 = vadd.f32 0.0, %v1291
    %v1293 = vpop.f32.mrf.mxu0
    %v1294 = vpop.f32.mrf.mxu0
    %v1295 = vadd.f32 0.0, %v1294
    %v1296 = vpop.f32.mrf.mxu0
    %1297 = vmatprep.mubr.bf16.mxu0 0
    %1298 = vmatmul.mubr.bf16.gmra.mxu0 %v1176
    %v1299 = vpop.f32.mrf.mxu0
    %v1300 = vadd.f32 0.0, %v1299
    %v1301 = vpop.f32.mrf.mxu0
    %v1302 = vpop.f32.mrf.mxu0
    %v1303 = vadd.f32 0.0, %v1302
    %v1304 = vpop.f32.mrf.mxu0
    %1305 = vmatprep.mubr.bf16.mxu0 0
    %1306 = vmatmul.mubr.bf16.gmra.mxu0 %v1179
    %v1307 = vpop.f32.mrf.mxu0
    %v1308 = vadd.f32 0.0, %v1307
    %v1309 = vpop.f32.mrf.mxu0
    %v1310 = vpop.f32.mrf.mxu0
    %v1311 = vadd.f32 0.0, %v1310
    %v1312 = vpop.f32.mrf.mxu0
    %1313 = vmatprep.mubr.bf16.mxu0 0
    %1314 = vmatmul.mubr.bf16.gmra.mxu0 %v1182
    %v1315 = vpop.f32.mrf.mxu0
    %v1316 = vadd.f32 0.0, %v1315
    %v1317 = vpop.f32.mrf.mxu0
    %v1318 = vpop.f32.mrf.mxu0
    %v1319 = vadd.f32 0.0, %v1318
    %v1320 = vpop.f32.mrf.mxu0
    %1321 = vmatprep.mubr.bf16.mxu0 0
    %1322 = vmatmul.mubr.bf16.gmra.mxu0 %v1185
    %v1323 = vpop.f32.mrf.mxu0
    %v1324 = vadd.f32 0.0, %v1323
    %v1325 = vpop.f32.mrf.mxu0
    %v1326 = vpop.f32.mrf.mxu0
    %v1327 = vadd.f32 0.0, %v1326
    %v1328 = vpop.f32.mrf.mxu0
    %1329 = vmatprep.mubr.bf16.mxu0 0
    %1330 = vmatmul.mubr.bf16.gmra.mxu0 %v1188
    %v1331 = vpop.f32.mrf.mxu0
    %v1332 = vadd.f32 0.0, %v1331
    %v1333 = vpop.f32.mrf.mxu0
    %v1334 = vpop.f32.mrf.mxu0
    %v1335 = vadd.f32 0.0, %v1334
    %v1336 = vpop.f32.mrf.mxu0
    %1337 = vmatprep.mubr.bf16.mxu0 0
    %1338 = vmatmul.mubr.bf16.gmra.mxu0 %v1191
    %v1339 = vpop.f32.mrf.mxu0
    %v1340 = vadd.f32 0.0, %v1339
    %v1341 = vpop.f32.mrf.mxu0
    %v1342 = vpop.f32.mrf.mxu0
    %v1343 = vadd.f32 0.0, %v1342
    %v1344 = vpop.f32.mrf.mxu0
    %1345 = vmatprep.mubr.bf16.mxu0 0
    %1346 = vmatmul.mubr.bf16.gmra.mxu0 %v1194
    %v1347 = vpop.f32.mrf.mxu0
    %v1348 = vadd.f32 0.0, %v1347
    %v1349 = vpop.f32.mrf.mxu0
    %v1350 = vpop.f32.mrf.mxu0
    %v1351 = vadd.f32 0.0, %v1350
    %v1352 = vpop.f32.mrf.mxu0
    %1353 = vmatprep.mubr.bf16.mxu0 0
    %1354 = vmatmul.mubr.bf16.gmra.mxu0 %v1197
    %v1355 = vpop.f32.mrf.mxu0
    %v1356 = vadd.f32 0.0, %v1355
    %v1357 = vpop.f32.mrf.mxu0
    %v1358 = vpop.f32.mrf.mxu0
    %v1359 = vadd.f32 0.0, %v1358
    %v1360 = vpop.f32.mrf.mxu0
    %1361 = vmatprep.mubr.bf16.mxu0 0
    %1362 = vmatmul.mubr.bf16.gmra.mxu0 %v1200
    %v1363 = vpop.f32.mrf.mxu0
    %v1364 = vadd.f32 0.0, %v1363
    %v1365 = vpop.f32.mrf.mxu0
    %v1366 = vpop.f32.mrf.mxu0
    %v1367 = vadd.f32 0.0, %v1366
    %v1368 = vpop.f32.mrf.mxu0
    %1369 = vmatprep.mubr.bf16.mxu0 0
    %1370 = vmatmul.mubr.bf16.gmra.mxu0 %v1203
    %v1371 = vpop.f32.mrf.mxu0
    %v1372 = vadd.f32 0.0, %v1371
    %v1373 = vpop.f32.mrf.mxu0
    %v1374 = vpop.f32.mrf.mxu0
    %v1375 = vadd.f32 0.0, %v1374
    %v1376 = vpop.f32.mrf.mxu0
    %1377 = vmatprep.mubr.bf16.mxu0 0
    %1378 = vmatmul.mubr.bf16.gmra.mxu0 %v1206
    %v1379 = vpop.f32.mrf.mxu0
    %v1380 = vadd.f32 0.0, %v1379
    %v1381 = vpop.f32.mrf.mxu0
    %v1382 = vpop.f32.mrf.mxu0
    %v1383 = vadd.f32 0.0, %v1382
    %v1384 = vpop.f32.mrf.mxu0
    %1385 = vmatprep.mubr.bf16.mxu0 0
    %1386 = vmatmul.mubr.bf16.gmra.mxu0 %v1209
    %v1387 = vpop.f32.mrf.mxu0
    %v1388 = vadd.f32 0.0, %v1387
    %v1389 = vpop.f32.mrf.mxu0
    %v1390 = vpop.f32.mrf.mxu0
    %v1391 = vadd.f32 0.0, %v1390
    %v1392 = vpop.f32.mrf.mxu0
    %1393 = vmatprep.mubr.bf16.mxu0 0
    %1394 = vmatmul.mubr.bf16.gmra.mxu0 %v1212
    %v1395 = vpop.f32.mrf.mxu0
    %v1396 = vadd.f32 0.0, %v1395
    %v1397 = vpop.f32.mrf.mxu0
    %v1398 = vpop.f32.mrf.mxu0
    %v1399 = vadd.f32 0.0, %v1398
    %v1400 = vpop.f32.mrf.mxu0
    %1401 = vmatprep.mubr.bf16.mxu0 0
    %1402 = vmatmul.mubr.bf16.gmra.mxu0 %v1215
    %v1403 = vpop.f32.mrf.mxu0
    %v1404 = vadd.f32 0.0, %v1403
    %v1405 = vpop.f32.mrf.mxu0
    %v1406 = vpop.f32.mrf.mxu0
    %v1407 = vpop.f32.mrf.mxu0
    %1408 = vdwg.mxu0
    %v1409 = vadd.f32 %v1033, %v1252
    %v1410 = vadd.f32 %v1034, %v1255
    %v1411 = vadd.f32 %v1035, %v1260
    %v1412 = vadd.f32 %v1036, %v1263
    %v1413 = vadd.f32 %v1037, %v1268
    %v1414 = vadd.f32 %v1038, %v1271
    %v1415 = vadd.f32 %v1039, %v1276
    %v1416 = vadd.f32 %v1040, %v1279
    %v1417 = vadd.f32 %v1041, %v1284
    %v1418 = vadd.f32 %v1042, %v1287
    %v1419 = vadd.f32 %v1043, %v1292
    %v1420 = vadd.f32 %v1044, %v1295
    %v1421 = vadd.f32 %v1045, %v1300
    %v1422 = vadd.f32 %v1046, %v1303
    %v1423 = vadd.f32 %v1047, %v1308
    %v1424 = vadd.f32 %v1048, %v1311
    %v1425 = vadd.f32 %v1049, %v1316
    %v1426 = vadd.f32 %v1050, %v1319
    %v1427 = vadd.f32 %v1051, %v1324
    %v1428 = vadd.f32 %v1052, %v1327
    %v1429 = vadd.f32 %v1053, %v1332
    %v1430 = vadd.f32 %v1054, %v1335
    %v1431 = vadd.f32 %v1055, %v1340
    %v1432 = vadd.f32 %v1056, %v1343
    %v1433 = vadd.f32 %v1057, %v1348
    %v1434 = vadd.f32 %v1058, %v1351
    %v1435 = vadd.f32 %v1059, %v1356
    %v1436 = vadd.f32 %v1060, %v1359
    %v1437 = vadd.f32 %v1061, %v1364
    %v1438 = vadd.f32 %v1062, %v1367
    %v1439 = vadd.f32 %v1063, %v1372
    %v1440 = vadd.f32 %v1064, %v1375
    %v1441 = vadd.f32 %v1065, %v1380
    %v1442 = vadd.f32 %v1066, %v1383
    %v1443 = vadd.f32 %v1067, %v1388
    %v1444 = vadd.f32 %v1068, %v1391
    %v1445 = vadd.f32 %v1069, %v1396
    %v1446 = vadd.f32 %v1070, %v1399
    %v1447 = vadd.f32 %v1071, %v1404
    %v1448 = vld [vmem:[%s0 + $0xe] sm:$0xff]
    %v1449 = vld [vmem:[%s0 + $0x16] sm:$0xff]
    %v1450 = vld [vmem:[%s0 + $0x1e] sm:$0xff]
    %v1451 = vld [vmem:[%s0 + $0x26] sm:$0xff]
    %v1452 = vld [vmem:[%s0 + $0x2e] sm:$0xff]
    %v1453 = vld [vmem:[%s0 + $0x36] sm:$0xff]
    %v1454 = vld [vmem:[%s0 + $0x3e] sm:$0xff]
    %v1455 = vld [vmem:[%s0 + $0x46] sm:$0xff]
    %v1456 = vld [vmem:[%s0 + $0x4e] sm:$0xff]
    %v1457 = vld [vmem:[%s0 + $0x56] sm:$0xff]
    %v1458 = vld [vmem:[%s0 + $0x5e] sm:$0xff]
    %v1459 = vld [vmem:[%s0 + $0x66] sm:$0xff]
    %v1460 = vld [vmem:[%s0 + $0x6e] sm:$0xff]
    %v1461 = vld [vmem:[%s0 + $0x76] sm:$0xff]
    %v1462 = vld [vmem:[%s0 + $0x7e] sm:$0xff]
    %v1463 = vld [vmem:[%s0 + $0x86] sm:$0xff]
    %v1464 = vld [vmem:[%s0 + $0x8e] sm:$0xff]
    %v1465 = vld [vmem:[%s0 + $0x96] sm:$0xff]
    %v1466 = vld [vmem:[%s0 + $0x9e] sm:$0xff]
    %v1467 = vld [vmem:[%s0 + $0xa6] sm:$0xff]
    %v1468 = vld [vmem:[%s0 + $0xae] sm:$0xff]
    %v1469 = vld [vmem:[%s0 + $0xb6] sm:$0xff]
    %v1470 = vld [vmem:[%s0 + $0xbe] sm:$0xff]
    %v1471 = vld [vmem:[%s0 + $0xc6] sm:$0xff]
    %v1472 = vld [vmem:[%s0 + $0xce] sm:$0xff]
    %v1473 = vld [vmem:[%s0 + $0xd6] sm:$0xff]
    %v1474 = vld [vmem:[%s0 + $0xde] sm:$0xff]
    %v1475 = vld [vmem:[%s0 + $0xe6] sm:$0xff]
    %v1476 = vld [vmem:[%s0 + $0xee] sm:$0xff]
    %v1477 = vld [vmem:[%s0 + $0xf6] sm:$0xff]
    %v1478 = vld [vmem:[%s0 + $0xfe] sm:$0xff]
    %v1479 = vld [vmem:[%s0 + $0x106] sm:$0xff]
    %v1480 = vld [vmem:[%s0 + $0x10e] sm:$0xff]
    %v1481 = vld [vmem:[%s0 + $0x116] sm:$0xff]
    %v1482 = vld [vmem:[%s0 + $0x11e] sm:$0xff]
    %v1483 = vld [vmem:[%s0 + $0x126] sm:$0xff]
    %v1484 = vld [vmem:[%s0 + $0x12e] sm:$0xff]
    %v1485 = vld [vmem:[%s0 + $0x136] sm:$0xff]
    %v1486 = vld [vmem:[%s0 + $0x13e] sm:$0xff]
    %v1487 = vld [vmem:[%s0 + $0x146] sm:$0xff]
    %v1488 = vpack.c.bf16 %v1449, %v1448
    %v1489 = vpack.c.bf16 %v1451, %v1450
    %v1490 = vpack.c.bf16 %v1453, %v1452
    %v1491 = vpack.c.bf16 %v1455, %v1454
    %v1492 = vpack.c.bf16 %v1457, %v1456
    %v1493 = vpack.c.bf16 %v1459, %v1458
    %v1494 = vpack.c.bf16 %v1461, %v1460
    %v1495 = vpack.c.bf16 %v1463, %v1462
    %v1496 = vpack.c.bf16 %v1465, %v1464
    %v1497 = vpack.c.bf16 %v1467, %v1466
    %v1498 = vpack.c.bf16 %v1469, %v1468
    %v1499 = vpack.c.bf16 %v1471, %v1470
    %v1500 = vpack.c.bf16 %v1473, %v1472
    %v1501 = vpack.c.bf16 %v1475, %v1474
    %v1502 = vpack.c.bf16 %v1477, %v1476
    %v1503 = vpack.c.bf16 %v1479, %v1478
    %v1504 = vpack.c.bf16 %v1481, %v1480
    %v1505 = vpack.c.bf16 %v1483, %v1482
    %v1506 = vpack.c.bf16 %v1485, %v1484
    %v1507 = vpack.c.bf16 %v1487, %v1486
    %s1508 = scalar_lea.vmem %s1, 96
    %v1509 = vld [vmem:[%s1508] sm:$0xf]
    %v1510 = vld [vmem:[%s1508 + $0x4] sm:$0xf]
    %v1511 = vld [vmem:[%s1508 + $0x8] sm:$0xf]
    %v1512 = vld [vmem:[%s1508 + $0xc] sm:$0xf]
    %v1513 = vld [vmem:[%s1508 + $0x10] sm:$0xf]
    %v1514 = vld [vmem:[%s1508 + $0x14] sm:$0xf]
    %v1521 = vunpack.c.l.b16 %v1509
    %v1522 = vunpack.c.l.b16 %v1510
    %v1523 = vunpack.c.l.b16 %v1511
    %v1524 = vunpack.c.l.b16 %v1512
    %v1525 = vunpack.c.l.b16 %v1513
    %v1526 = vunpack.c.l.b16 %v1514
    %v1527 = vpack.c.b16 %v1522, %v1521
    %v1528 = vpack.c.b16 %v1524, %v1523
    %v1529 = vpack.c.b16 %v1526, %v1525
    %v1534 = vsel %vm173, %v1488, 0
    %v1537 = vsel %vm173, %v1489, 0
    %v1540 = vsel %vm173, %v1490, 0
    %v1543 = vsel %vm173, %v1491, 0
    %v1546 = vsel %vm173, %v1492, 0
    %v1549 = vsel %vm173, %v1493, 0
    %v1552 = vsel %vm173, %v1494, 0
    %v1555 = vsel %vm173, %v1495, 0
    %v1558 = vsel %vm173, %v1496, 0
    %v1561 = vsel %vm173, %v1497, 0
    %v1564 = vsel %vm173, %v1498, 0
    %v1567 = vsel %vm173, %v1499, 0
    %v1570 = vsel %vm173, %v1500, 0
    %v1573 = vsel %vm173, %v1501, 0
    %v1576 = vsel %vm173, %v1502, 0
    %v1579 = vsel %vm173, %v1503, 0
    %v1582 = vsel %vm173, %v1504, 0
    %v1585 = vsel %vm173, %v1505, 0
    %v1588 = vsel %vm173, %v1506, 0
    %v1591 = vsel %vm173, %v1507, 0
    %1593 = vmatprep.subr.bf16.mxu0 0
    %1594 = vmatpush1.bf16.msra.mxu0 0
    %1595 = vmatprep.subr.bf16.mxu0 0
    %1596 = vmatpush1.bf16.msra.mxu0 0
    %1597 = vmatprep.subr.bf16.mxu0 0
    %1598 = vmatpush1.bf16.msra.mxu0 0
    %1599 = vmatprep.subr.bf16.mxu0 0
    %1600 = vmatpush1.bf16.msra.mxu0 0
    %1601 = vmatprep.subr.bf16.mxu0 0
    %1602 = vmatpush1.bf16.msra.mxu0 0
    %1603 = vmatprep.subr.bf16.mxu0 0
    %1604 = vmatpush1.bf16.msra.mxu0 %v1529
    %1605 = vmatprep.subr.bf16.mxu0 0
    %1606 = vmatpush1.bf16.msra.mxu0 %v1528
    %1607 = vmatprep.subr.bf16.mxu0 0
    %1608 = vmatpush1.bf16.msra.mxu0 %v1527
    %1609 = vmatprep.subr.bf16.mxu0 0
    %1610 = vmatpush2.bf16.msra.mxu0 0
    %1611 = vmatprep.subr.bf16.mxu0 0
    %1612 = vmatpush2.bf16.msra.mxu0 0
    %1613 = vmatprep.subr.bf16.mxu0 0
    %1614 = vmatpush2.bf16.msra.mxu0 0
    %1615 = vmatprep.subr.bf16.mxu0 0
    %1616 = vmatpush2.bf16.msra.mxu0 0
    %1617 = vmatprep.subr.bf16.mxu0 0
    %1618 = vmatpush2.bf16.msra.mxu0 0
    %1619 = vmatprep.subr.bf16.mxu0 0
    %1620 = vmatpush2.bf16.msra.mxu0 0
    %1621 = vmatprep.subr.bf16.mxu0 0
    %1622 = vmatpush2.bf16.msra.mxu0 0
    %1623 = vmatprep.subr.bf16.mxu0 0
    %1624 = vmatpush2.bf16.msra.mxu0 0
    %1625 = vmatprep.mubr.bf16.mxu0 0
    %1626 = vmatmul.mubr.bf16.gmra.mxu0 %v1534
    %v1627 = vpop.f32.mrf.mxu0
    %v1628 = vadd.f32 0.0, %v1627
    %v1629 = vpop.f32.mrf.mxu0
    %v1630 = vpop.f32.mrf.mxu0
    %v1631 = vadd.f32 0.0, %v1630
    %v1632 = vpop.f32.mrf.mxu0
    %1633 = vmatprep.mubr.bf16.mxu0 0
    %1634 = vmatmul.mubr.bf16.gmra.mxu0 %v1537
    %v1635 = vpop.f32.mrf.mxu0
    %v1636 = vadd.f32 0.0, %v1635
    %v1637 = vpop.f32.mrf.mxu0
    %v1638 = vpop.f32.mrf.mxu0
    %v1639 = vadd.f32 0.0, %v1638
    %v1640 = vpop.f32.mrf.mxu0
    %1641 = vmatprep.mubr.bf16.mxu0 0
    %1642 = vmatmul.mubr.bf16.gmra.mxu0 %v1540
    %v1643 = vpop.f32.mrf.mxu0
    %v1644 = vadd.f32 0.0, %v1643
    %v1645 = vpop.f32.mrf.mxu0
    %v1646 = vpop.f32.mrf.mxu0
    %v1647 = vadd.f32 0.0, %v1646
    %v1648 = vpop.f32.mrf.mxu0
    %1649 = vmatprep.mubr.bf16.mxu0 0
    %1650 = vmatmul.mubr.bf16.gmra.mxu0 %v1543
    %v1651 = vpop.f32.mrf.mxu0
    %v1652 = vadd.f32 0.0, %v1651
    %v1653 = vpop.f32.mrf.mxu0
    %v1654 = vpop.f32.mrf.mxu0
    %v1655 = vadd.f32 0.0, %v1654
    %v1656 = vpop.f32.mrf.mxu0
    %1657 = vmatprep.mubr.bf16.mxu0 0
    %1658 = vmatmul.mubr.bf16.gmra.mxu0 %v1546
    %v1659 = vpop.f32.mrf.mxu0
    %v1660 = vadd.f32 0.0, %v1659
    %v1661 = vpop.f32.mrf.mxu0
    %v1662 = vpop.f32.mrf.mxu0
    %v1663 = vadd.f32 0.0, %v1662
    %v1664 = vpop.f32.mrf.mxu0
    %1665 = vmatprep.mubr.bf16.mxu0 0
    %1666 = vmatmul.mubr.bf16.gmra.mxu0 %v1549
    %v1667 = vpop.f32.mrf.mxu0
    %v1668 = vadd.f32 0.0, %v1667
    %v1669 = vpop.f32.mrf.mxu0
    %v1670 = vpop.f32.mrf.mxu0
    %v1671 = vadd.f32 0.0, %v1670
    %v1672 = vpop.f32.mrf.mxu0
    %1673 = vmatprep.mubr.bf16.mxu0 0
    %1674 = vmatmul.mubr.bf16.gmra.mxu0 %v1552
    %v1675 = vpop.f32.mrf.mxu0
    %v1676 = vadd.f32 0.0, %v1675
    %v1677 = vpop.f32.mrf.mxu0
    %v1678 = vpop.f32.mrf.mxu0
    %v1679 = vadd.f32 0.0, %v1678
    %v1680 = vpop.f32.mrf.mxu0
    %1681 = vmatprep.mubr.bf16.mxu0 0
    %1682 = vmatmul.mubr.bf16.gmra.mxu0 %v1555
    %v1683 = vpop.f32.mrf.mxu0
    %v1684 = vadd.f32 0.0, %v1683
    %v1685 = vpop.f32.mrf.mxu0
    %v1686 = vpop.f32.mrf.mxu0
    %v1687 = vadd.f32 0.0, %v1686
    %v1688 = vpop.f32.mrf.mxu0
    %1689 = vmatprep.mubr.bf16.mxu0 0
    %1690 = vmatmul.mubr.bf16.gmra.mxu0 %v1558
    %v1691 = vpop.f32.mrf.mxu0
    %v1692 = vadd.f32 0.0, %v1691
    %v1693 = vpop.f32.mrf.mxu0
    %v1694 = vpop.f32.mrf.mxu0
    %v1695 = vadd.f32 0.0, %v1694
    %v1696 = vpop.f32.mrf.mxu0
    %1697 = vmatprep.mubr.bf16.mxu0 0
    %1698 = vmatmul.mubr.bf16.gmra.mxu0 %v1561
    %v1699 = vpop.f32.mrf.mxu0
    %v1700 = vadd.f32 0.0, %v1699
    %v1701 = vpop.f32.mrf.mxu0
    %v1702 = vpop.f32.mrf.mxu0
    %v1703 = vadd.f32 0.0, %v1702
    %v1704 = vpop.f32.mrf.mxu0
    %1705 = vmatprep.mubr.bf16.mxu0 0
    %1706 = vmatmul.mubr.bf16.gmra.mxu0 %v1564
    %v1707 = vpop.f32.mrf.mxu0
    %v1708 = vadd.f32 0.0, %v1707
    %v1709 = vpop.f32.mrf.mxu0
    %v1710 = vpop.f32.mrf.mxu0
    %v1711 = vadd.f32 0.0, %v1710
    %v1712 = vpop.f32.mrf.mxu0
    %1713 = vmatprep.mubr.bf16.mxu0 0
    %1714 = vmatmul.mubr.bf16.gmra.mxu0 %v1567
    %v1715 = vpop.f32.mrf.mxu0
    %v1716 = vadd.f32 0.0, %v1715
    %v1717 = vpop.f32.mrf.mxu0
    %v1718 = vpop.f32.mrf.mxu0
    %v1719 = vadd.f32 0.0, %v1718
    %v1720 = vpop.f32.mrf.mxu0
    %1721 = vmatprep.mubr.bf16.mxu0 0
    %1722 = vmatmul.mubr.bf16.gmra.mxu0 %v1570
    %v1723 = vpop.f32.mrf.mxu0
    %v1724 = vadd.f32 0.0, %v1723
    %v1725 = vpop.f32.mrf.mxu0
    %v1726 = vpop.f32.mrf.mxu0
    %v1727 = vadd.f32 0.0, %v1726
    %v1728 = vpop.f32.mrf.mxu0
    %1729 = vmatprep.mubr.bf16.mxu0 0
    %1730 = vmatmul.mubr.bf16.gmra.mxu0 %v1573
    %v1731 = vpop.f32.mrf.mxu0
    %v1732 = vadd.f32 0.0, %v1731
    %v1733 = vpop.f32.mrf.mxu0
    %v1734 = vpop.f32.mrf.mxu0
    %v1735 = vadd.f32 0.0, %v1734
    %v1736 = vpop.f32.mrf.mxu0
    %1737 = vmatprep.mubr.bf16.mxu0 0
    %1738 = vmatmul.mubr.bf16.gmra.mxu0 %v1576
    %v1739 = vpop.f32.mrf.mxu0
    %v1740 = vadd.f32 0.0, %v1739
    %v1741 = vpop.f32.mrf.mxu0
    %v1742 = vpop.f32.mrf.mxu0
    %v1743 = vadd.f32 0.0, %v1742
    %v1744 = vpop.f32.mrf.mxu0
    %1745 = vmatprep.mubr.bf16.mxu0 0
    %1746 = vmatmul.mubr.bf16.gmra.mxu0 %v1579
    %v1747 = vpop.f32.mrf.mxu0
    %v1748 = vadd.f32 0.0, %v1747
    %v1749 = vpop.f32.mrf.mxu0
    %v1750 = vpop.f32.mrf.mxu0
    %v1751 = vadd.f32 0.0, %v1750
    %v1752 = vpop.f32.mrf.mxu0
    %1753 = vmatprep.mubr.bf16.mxu0 0
    %1754 = vmatmul.mubr.bf16.gmra.mxu0 %v1582
    %v1755 = vpop.f32.mrf.mxu0
    %v1756 = vadd.f32 0.0, %v1755
    %v1757 = vpop.f32.mrf.mxu0
    %v1758 = vpop.f32.mrf.mxu0
    %v1759 = vadd.f32 0.0, %v1758
    %v1760 = vpop.f32.mrf.mxu0
    %1761 = vmatprep.mubr.bf16.mxu0 0
    %1762 = vmatmul.mubr.bf16.gmra.mxu0 %v1585
    %v1763 = vpop.f32.mrf.mxu0
    %v1764 = vadd.f32 0.0, %v1763
    %v1765 = vpop.f32.mrf.mxu0
    %v1766 = vpop.f32.mrf.mxu0
    %v1767 = vadd.f32 0.0, %v1766
    %v1768 = vpop.f32.mrf.mxu0
    %1769 = vmatprep.mubr.bf16.mxu0 0
    %1770 = vmatmul.mubr.bf16.gmra.mxu0 %v1588
    %v1771 = vpop.f32.mrf.mxu0
    %v1772 = vadd.f32 0.0, %v1771
    %v1773 = vpop.f32.mrf.mxu0
    %v1774 = vpop.f32.mrf.mxu0
    %v1775 = vadd.f32 0.0, %v1774
    %v1776 = vpop.f32.mrf.mxu0
    %1777 = vmatprep.mubr.bf16.mxu0 0
    %1778 = vmatmul.mubr.bf16.gmra.mxu0 %v1591
    %v1779 = vpop.f32.mrf.mxu0
    %v1780 = vadd.f32 0.0, %v1779
    %v1781 = vpop.f32.mrf.mxu0
    %v1782 = vpop.f32.mrf.mxu0
    %v1783 = vpop.f32.mrf.mxu0
    %1784 = vdwg.mxu0
    %v1785 = vadd.f32 %v1409, %v1628
    %v1786 = vadd.f32 %v1410, %v1631
    %v1787 = vadd.f32 %v1411, %v1636
    %v1788 = vadd.f32 %v1412, %v1639
    %v1789 = vadd.f32 %v1413, %v1644
    %v1790 = vadd.f32 %v1414, %v1647
    %v1791 = vadd.f32 %v1415, %v1652
    %v1792 = vadd.f32 %v1416, %v1655
    %v1793 = vadd.f32 %v1417, %v1660
    %v1794 = vadd.f32 %v1418, %v1663
    %v1795 = vadd.f32 %v1419, %v1668
    %v1796 = vadd.f32 %v1420, %v1671
    %v1797 = vadd.f32 %v1421, %v1676
    %v1798 = vadd.f32 %v1422, %v1679
    %v1799 = vadd.f32 %v1423, %v1684
    %v1800 = vadd.f32 %v1424, %v1687
    %v1801 = vadd.f32 %v1425, %v1692
    %v1802 = vadd.f32 %v1426, %v1695
    %v1803 = vadd.f32 %v1427, %v1700
    %v1804 = vadd.f32 %v1428, %v1703
    %v1805 = vadd.f32 %v1429, %v1708
    %v1806 = vadd.f32 %v1430, %v1711
    %v1807 = vadd.f32 %v1431, %v1716
    %v1808 = vadd.f32 %v1432, %v1719
    %v1809 = vadd.f32 %v1433, %v1724
    %v1810 = vadd.f32 %v1434, %v1727
    %v1811 = vadd.f32 %v1435, %v1732
    %v1812 = vadd.f32 %v1436, %v1735
    %v1813 = vadd.f32 %v1437, %v1740
    %v1814 = vadd.f32 %v1438, %v1743
    %v1815 = vadd.f32 %v1439, %v1748
    %v1816 = vadd.f32 %v1440, %v1751
    %v1817 = vadd.f32 %v1441, %v1756
    %v1818 = vadd.f32 %v1442, %v1759
    %v1819 = vadd.f32 %v1443, %v1764
    %v1820 = vadd.f32 %v1444, %v1767
    %v1821 = vadd.f32 %v1445, %v1772
    %v1822 = vadd.f32 %v1446, %v1775
    %v1823 = vadd.f32 %v1447, %v1780
    %v1824 = vld [vmem:[%s0 + $0xf] sm:$0xff]
    %v1825 = vld [vmem:[%s0 + $0x17] sm:$0xff]
    %v1826 = vld [vmem:[%s0 + $0x1f] sm:$0xff]
    %v1827 = vld [vmem:[%s0 + $0x27] sm:$0xff]
    %v1828 = vld [vmem:[%s0 + $0x2f] sm:$0xff]
    %v1829 = vld [vmem:[%s0 + $0x37] sm:$0xff]
    %v1830 = vld [vmem:[%s0 + $0x3f] sm:$0xff]
    %v1831 = vld [vmem:[%s0 + $0x47] sm:$0xff]
    %v1832 = vld [vmem:[%s0 + $0x4f] sm:$0xff]
    %v1833 = vld [vmem:[%s0 + $0x57] sm:$0xff]
    %v1834 = vld [vmem:[%s0 + $0x5f] sm:$0xff]
    %v1835 = vld [vmem:[%s0 + $0x67] sm:$0xff]
    %v1836 = vld [vmem:[%s0 + $0x6f] sm:$0xff]
    %v1837 = vld [vmem:[%s0 + $0x77] sm:$0xff]
    %v1838 = vld [vmem:[%s0 + $0x7f] sm:$0xff]
    %v1839 = vld [vmem:[%s0 + $0x87] sm:$0xff]
    %v1840 = vld [vmem:[%s0 + $0x8f] sm:$0xff]
    %v1841 = vld [vmem:[%s0 + $0x97] sm:$0xff]
    %v1842 = vld [vmem:[%s0 + $0x9f] sm:$0xff]
    %v1843 = vld [vmem:[%s0 + $0xa7] sm:$0xff]
    %v1844 = vld [vmem:[%s0 + $0xaf] sm:$0xff]
    %v1845 = vld [vmem:[%s0 + $0xb7] sm:$0xff]
    %v1846 = vld [vmem:[%s0 + $0xbf] sm:$0xff]
    %v1847 = vld [vmem:[%s0 + $0xc7] sm:$0xff]
    %v1848 = vld [vmem:[%s0 + $0xcf] sm:$0xff]
    %v1849 = vld [vmem:[%s0 + $0xd7] sm:$0xff]
    %v1850 = vld [vmem:[%s0 + $0xdf] sm:$0xff]
    %v1851 = vld [vmem:[%s0 + $0xe7] sm:$0xff]
    %v1852 = vld [vmem:[%s0 + $0xef] sm:$0xff]
    %v1853 = vld [vmem:[%s0 + $0xf7] sm:$0xff]
    %v1854 = vld [vmem:[%s0 + $0xff] sm:$0xff]
    %v1855 = vld [vmem:[%s0 + $0x107] sm:$0xff]
    %v1856 = vld [vmem:[%s0 + $0x10f] sm:$0xff]
    %v1857 = vld [vmem:[%s0 + $0x117] sm:$0xff]
    %v1858 = vld [vmem:[%s0 + $0x11f] sm:$0xff]
    %v1859 = vld [vmem:[%s0 + $0x127] sm:$0xff]
    %v1860 = vld [vmem:[%s0 + $0x12f] sm:$0xff]
    %v1861 = vld [vmem:[%s0 + $0x137] sm:$0xff]
    %v1862 = vld [vmem:[%s0 + $0x13f] sm:$0xff]
    %v1863 = vld [vmem:[%s0 + $0x147] sm:$0xff]
    %v1864 = vpack.c.bf16 %v1825, %v1824
    %v1865 = vpack.c.bf16 %v1827, %v1826
    %v1866 = vpack.c.bf16 %v1829, %v1828
    %v1867 = vpack.c.bf16 %v1831, %v1830
    %v1868 = vpack.c.bf16 %v1833, %v1832
    %v1869 = vpack.c.bf16 %v1835, %v1834
    %v1870 = vpack.c.bf16 %v1837, %v1836
    %v1871 = vpack.c.bf16 %v1839, %v1838
    %v1872 = vpack.c.bf16 %v1841, %v1840
    %v1873 = vpack.c.bf16 %v1843, %v1842
    %v1874 = vpack.c.bf16 %v1845, %v1844
    %v1875 = vpack.c.bf16 %v1847, %v1846
    %v1876 = vpack.c.bf16 %v1849, %v1848
    %v1877 = vpack.c.bf16 %v1851, %v1850
    %v1878 = vpack.c.bf16 %v1853, %v1852
    %v1879 = vpack.c.bf16 %v1855, %v1854
    %v1880 = vpack.c.bf16 %v1857, %v1856
    %v1881 = vpack.c.bf16 %v1859, %v1858
    %v1882 = vpack.c.bf16 %v1861, %v1860
    %v1883 = vpack.c.bf16 %v1863, %v1862
    %s1884 = scalar_lea.vmem %s1, 120
    %v1885 = vld [vmem:[%s1884] sm:$0xf]
    %v1886 = vld [vmem:[%s1884 + $0x4] sm:$0xf]
    %v1887 = vld [vmem:[%s1884 + $0x8] sm:$0xf]
    %v1888 = vld [vmem:[%s1884 + $0xc] sm:$0xf]
    %v1889 = vld [vmem:[%s1884 + $0x10] sm:$0xf]
    %v1890 = vld [vmem:[%s1884 + $0x14] sm:$0xf]
    %v1897 = vunpack.c.l.b16 %v1885
    %v1898 = vunpack.c.l.b16 %v1886
    %v1899 = vunpack.c.l.b16 %v1887
    %v1900 = vunpack.c.l.b16 %v1888
    %v1901 = vunpack.c.l.b16 %v1889
    %v1902 = vunpack.c.l.b16 %v1890
    %v1903 = vpack.c.b16 %v1898, %v1897
    %v1904 = vpack.c.b16 %v1900, %v1899
    %v1905 = vpack.c.b16 %v1902, %v1901
    %v1910 = vsel %vm173, %v1864, 0
    %v1913 = vsel %vm173, %v1865, 0
    %v1916 = vsel %vm173, %v1866, 0
    %v1919 = vsel %vm173, %v1867, 0
    %v1922 = vsel %vm173, %v1868, 0
    %v1925 = vsel %vm173, %v1869, 0
    %v1928 = vsel %vm173, %v1870, 0
    %v1931 = vsel %vm173, %v1871, 0
    %v1934 = vsel %vm173, %v1872, 0
    %v1937 = vsel %vm173, %v1873, 0
    %v1940 = vsel %vm173, %v1874, 0
    %v1943 = vsel %vm173, %v1875, 0
    %v1946 = vsel %vm173, %v1876, 0
    %v1949 = vsel %vm173, %v1877, 0
    %v1952 = vsel %vm173, %v1878, 0
    %v1955 = vsel %vm173, %v1879, 0
    %v1958 = vsel %vm173, %v1880, 0
    %v1961 = vsel %vm173, %v1881, 0
    %v1964 = vsel %vm173, %v1882, 0
    %v1967 = vsel %vm173, %v1883, 0
    %1969 = vmatprep.subr.bf16.mxu0 0
    %1970 = vmatpush1.bf16.msra.mxu0 0
    %1971 = vmatprep.subr.bf16.mxu0 0
    %1972 = vmatpush1.bf16.msra.mxu0 0
    %1973 = vmatprep.subr.bf16.mxu0 0
    %1974 = vmatpush1.bf16.msra.mxu0 0
    %1975 = vmatprep.subr.bf16.mxu0 0
    %1976 = vmatpush1.bf16.msra.mxu0 0
    %1977 = vmatprep.subr.bf16.mxu0 0
    %1978 = vmatpush1.bf16.msra.mxu0 0
    %1979 = vmatprep.subr.bf16.mxu0 0
    %1980 = vmatpush1.bf16.msra.mxu0 %v1905
    %1981 = vmatprep.subr.bf16.mxu0 0
    %1982 = vmatpush1.bf16.msra.mxu0 %v1904
    %1983 = vmatprep.subr.bf16.mxu0 0
    %1984 = vmatpush1.bf16.msra.mxu0 %v1903
    %1985 = vmatprep.subr.bf16.mxu0 0
    %1986 = vmatpush2.bf16.msra.mxu0 0
    %1987 = vmatprep.subr.bf16.mxu0 0
    %1988 = vmatpush2.bf16.msra.mxu0 0
    %1989 = vmatprep.subr.bf16.mxu0 0
    %1990 = vmatpush2.bf16.msra.mxu0 0
    %1991 = vmatprep.subr.bf16.mxu0 0
    %1992 = vmatpush2.bf16.msra.mxu0 0
    %1993 = vmatprep.subr.bf16.mxu0 0
    %1994 = vmatpush2.bf16.msra.mxu0 0
    %1995 = vmatprep.subr.bf16.mxu0 0
    %1996 = vmatpush2.bf16.msra.mxu0 0
    %1997 = vmatprep.subr.bf16.mxu0 0
    %1998 = vmatpush2.bf16.msra.mxu0 0
    %1999 = vmatprep.subr.bf16.mxu0 0
    %2000 = vmatpush2.bf16.msra.mxu0 0
    %2001 = vmatprep.mubr.bf16.mxu0 0
    %2002 = vmatmul.mubr.bf16.gmra.mxu0 %v1910
    %v2003 = vpop.f32.mrf.mxu0
    %v2004 = vadd.f32 0.0, %v2003
    %v2005 = vpop.f32.mrf.mxu0
    %v2006 = vpop.f32.mrf.mxu0
    %v2007 = vadd.f32 0.0, %v2006
    %v2008 = vpop.f32.mrf.mxu0
    %2009 = vmatprep.mubr.bf16.mxu0 0
    %2010 = vmatmul.mubr.bf16.gmra.mxu0 %v1913
    %v2011 = vpop.f32.mrf.mxu0
    %v2012 = vadd.f32 0.0, %v2011
    %v2013 = vpop.f32.mrf.mxu0
    %v2014 = vpop.f32.mrf.mxu0
    %v2015 = vadd.f32 0.0, %v2014
    %v2016 = vpop.f32.mrf.mxu0
    %2017 = vmatprep.mubr.bf16.mxu0 0
    %2018 = vmatmul.mubr.bf16.gmra.mxu0 %v1916
    %v2019 = vpop.f32.mrf.mxu0
    %v2020 = vadd.f32 0.0, %v2019
    %v2021 = vpop.f32.mrf.mxu0
    %v2022 = vpop.f32.mrf.mxu0
    %v2023 = vadd.f32 0.0, %v2022
    %v2024 = vpop.f32.mrf.mxu0
    %2025 = vmatprep.mubr.bf16.mxu0 0
    %2026 = vmatmul.mubr.bf16.gmra.mxu0 %v1919
    %v2027 = vpop.f32.mrf.mxu0
    %v2028 = vadd.f32 0.0, %v2027
    %v2029 = vpop.f32.mrf.mxu0
    %v2030 = vpop.f32.mrf.mxu0
    %v2031 = vadd.f32 0.0, %v2030
    %v2032 = vpop.f32.mrf.mxu0
    %2033 = vmatprep.mubr.bf16.mxu0 0
    %2034 = vmatmul.mubr.bf16.gmra.mxu0 %v1922
    %v2035 = vpop.f32.mrf.mxu0
    %v2036 = vadd.f32 0.0, %v2035
    %v2037 = vpop.f32.mrf.mxu0
    %v2038 = vpop.f32.mrf.mxu0
    %v2039 = vadd.f32 0.0, %v2038
    %v2040 = vpop.f32.mrf.mxu0
    %2041 = vmatprep.mubr.bf16.mxu0 0
    %2042 = vmatmul.mubr.bf16.gmra.mxu0 %v1925
    %v2043 = vpop.f32.mrf.mxu0
    %v2044 = vadd.f32 0.0, %v2043
    %v2045 = vpop.f32.mrf.mxu0
    %v2046 = vpop.f32.mrf.mxu0
    %v2047 = vadd.f32 0.0, %v2046
    %v2048 = vpop.f32.mrf.mxu0
    %2049 = vmatprep.mubr.bf16.mxu0 0
    %2050 = vmatmul.mubr.bf16.gmra.mxu0 %v1928
    %v2051 = vpop.f32.mrf.mxu0
    %v2052 = vadd.f32 0.0, %v2051
    %v2053 = vpop.f32.mrf.mxu0
    %v2054 = vpop.f32.mrf.mxu0
    %v2055 = vadd.f32 0.0, %v2054
    %v2056 = vpop.f32.mrf.mxu0
    %2057 = vmatprep.mubr.bf16.mxu0 0
    %2058 = vmatmul.mubr.bf16.gmra.mxu0 %v1931
    %v2059 = vpop.f32.mrf.mxu0
    %v2060 = vadd.f32 0.0, %v2059
    %v2061 = vpop.f32.mrf.mxu0
    %v2062 = vpop.f32.mrf.mxu0
    %v2063 = vadd.f32 0.0, %v2062
    %v2064 = vpop.f32.mrf.mxu0
    %2065 = vmatprep.mubr.bf16.mxu0 0
    %2066 = vmatmul.mubr.bf16.gmra.mxu0 %v1934
    %v2067 = vpop.f32.mrf.mxu0
    %v2068 = vadd.f32 0.0, %v2067
    %v2069 = vpop.f32.mrf.mxu0
    %v2070 = vpop.f32.mrf.mxu0
    %v2071 = vadd.f32 0.0, %v2070
    %v2072 = vpop.f32.mrf.mxu0
    %2073 = vmatprep.mubr.bf16.mxu0 0
    %2074 = vmatmul.mubr.bf16.gmra.mxu0 %v1937
    %v2075 = vpop.f32.mrf.mxu0
    %v2076 = vadd.f32 0.0, %v2075
    %v2077 = vpop.f32.mrf.mxu0
    %v2078 = vpop.f32.mrf.mxu0
    %v2079 = vadd.f32 0.0, %v2078
    %v2080 = vpop.f32.mrf.mxu0
    %2081 = vmatprep.mubr.bf16.mxu0 0
    %2082 = vmatmul.mubr.bf16.gmra.mxu0 %v1940
    %v2083 = vpop.f32.mrf.mxu0
    %v2084 = vadd.f32 0.0, %v2083
    %v2085 = vpop.f32.mrf.mxu0
    %v2086 = vpop.f32.mrf.mxu0
    %v2087 = vadd.f32 0.0, %v2086
    %v2088 = vpop.f32.mrf.mxu0
    %2089 = vmatprep.mubr.bf16.mxu0 0
    %2090 = vmatmul.mubr.bf16.gmra.mxu0 %v1943
    %v2091 = vpop.f32.mrf.mxu0
    %v2092 = vadd.f32 0.0, %v2091
    %v2093 = vpop.f32.mrf.mxu0
    %v2094 = vpop.f32.mrf.mxu0
    %v2095 = vadd.f32 0.0, %v2094
    %v2096 = vpop.f32.mrf.mxu0
    %2097 = vmatprep.mubr.bf16.mxu0 0
    %2098 = vmatmul.mubr.bf16.gmra.mxu0 %v1946
    %v2099 = vpop.f32.mrf.mxu0
    %v2100 = vadd.f32 0.0, %v2099
    %v2101 = vpop.f32.mrf.mxu0
    %v2102 = vpop.f32.mrf.mxu0
    %v2103 = vadd.f32 0.0, %v2102
    %v2104 = vpop.f32.mrf.mxu0
    %2105 = vmatprep.mubr.bf16.mxu0 0
    %2106 = vmatmul.mubr.bf16.gmra.mxu0 %v1949
    %v2107 = vpop.f32.mrf.mxu0
    %v2108 = vadd.f32 0.0, %v2107
    %v2109 = vpop.f32.mrf.mxu0
    %v2110 = vpop.f32.mrf.mxu0
    %v2111 = vadd.f32 0.0, %v2110
    %v2112 = vpop.f32.mrf.mxu0
    %2113 = vmatprep.mubr.bf16.mxu0 0
    %2114 = vmatmul.mubr.bf16.gmra.mxu0 %v1952
    %v2115 = vpop.f32.mrf.mxu0
    %v2116 = vadd.f32 0.0, %v2115
    %v2117 = vpop.f32.mrf.mxu0
    %v2118 = vpop.f32.mrf.mxu0
    %v2119 = vadd.f32 0.0, %v2118
    %v2120 = vpop.f32.mrf.mxu0
    %2121 = vmatprep.mubr.bf16.mxu0 0
    %2122 = vmatmul.mubr.bf16.gmra.mxu0 %v1955
    %v2123 = vpop.f32.mrf.mxu0
    %v2124 = vadd.f32 0.0, %v2123
    %v2125 = vpop.f32.mrf.mxu0
    %v2126 = vpop.f32.mrf.mxu0
    %v2127 = vadd.f32 0.0, %v2126
    %v2128 = vpop.f32.mrf.mxu0
    %2129 = vmatprep.mubr.bf16.mxu0 0
    %2130 = vmatmul.mubr.bf16.gmra.mxu0 %v1958
    %v2131 = vpop.f32.mrf.mxu0
    %v2132 = vadd.f32 0.0, %v2131
    %v2133 = vpop.f32.mrf.mxu0
    %v2134 = vpop.f32.mrf.mxu0
    %v2135 = vadd.f32 0.0, %v2134
    %v2136 = vpop.f32.mrf.mxu0
    %2137 = vmatprep.mubr.bf16.mxu0 0
    %2138 = vmatmul.mubr.bf16.gmra.mxu0 %v1961
    %v2139 = vpop.f32.mrf.mxu0
    %v2140 = vadd.f32 0.0, %v2139
    %v2141 = vpop.f32.mrf.mxu0
    %v2142 = vpop.f32.mrf.mxu0
    %v2143 = vadd.f32 0.0, %v2142
    %v2144 = vpop.f32.mrf.mxu0
    %2145 = vmatprep.mubr.bf16.mxu0 0
    %2146 = vmatmul.mubr.bf16.gmra.mxu0 %v1964
    %v2147 = vpop.f32.mrf.mxu0
    %v2148 = vadd.f32 0.0, %v2147
    %v2149 = vpop.f32.mrf.mxu0
    %v2150 = vpop.f32.mrf.mxu0
    %v2151 = vadd.f32 0.0, %v2150
    %v2152 = vpop.f32.mrf.mxu0
    %2153 = vmatprep.mubr.bf16.mxu0 0
    %2154 = vmatmul.mubr.bf16.gmra.mxu0 %v1967
    %v2155 = vpop.f32.mrf.mxu0
    %v2156 = vadd.f32 0.0, %v2155
    %v2157 = vpop.f32.mrf.mxu0
    %v2158 = vpop.f32.mrf.mxu0
    %v2159 = vpop.f32.mrf.mxu0
    %2160 = vdwg.mxu0
    %v2161 = vadd.f32 %v1785, %v2004
    %v2162 = vadd.f32 %v1786, %v2007
    %v2163 = vadd.f32 %v1787, %v2012
    %v2164 = vadd.f32 %v1788, %v2015
    %v2165 = vadd.f32 %v1789, %v2020
    %v2166 = vadd.f32 %v1790, %v2023
    %v2167 = vadd.f32 %v1791, %v2028
    %v2168 = vadd.f32 %v1792, %v2031
    %v2169 = vadd.f32 %v1793, %v2036
    %v2170 = vadd.f32 %v1794, %v2039
    %v2171 = vadd.f32 %v1795, %v2044
    %v2172 = vadd.f32 %v1796, %v2047
    %v2173 = vadd.f32 %v1797, %v2052
    %v2174 = vadd.f32 %v1798, %v2055
    %v2175 = vadd.f32 %v1799, %v2060
    %v2176 = vadd.f32 %v1800, %v2063
    %v2177 = vadd.f32 %v1801, %v2068
    %v2178 = vadd.f32 %v1802, %v2071
    %v2179 = vadd.f32 %v1803, %v2076
    %v2180 = vadd.f32 %v1804, %v2079
    %v2181 = vadd.f32 %v1805, %v2084
    %v2182 = vadd.f32 %v1806, %v2087
    %v2183 = vadd.f32 %v1807, %v2092
    %v2184 = vadd.f32 %v1808, %v2095
    %v2185 = vadd.f32 %v1809, %v2100
    %v2186 = vadd.f32 %v1810, %v2103
    %v2187 = vadd.f32 %v1811, %v2108
    %v2188 = vadd.f32 %v1812, %v2111
    %v2189 = vadd.f32 %v1813, %v2116
    %v2190 = vadd.f32 %v1814, %v2119
    %v2191 = vadd.f32 %v1815, %v2124
    %v2192 = vadd.f32 %v1816, %v2127
    %v2193 = vadd.f32 %v1817, %v2132
    %v2194 = vadd.f32 %v1818, %v2135
    %v2195 = vadd.f32 %v1819, %v2140
    %v2196 = vadd.f32 %v1820, %v2143
    %v2197 = vadd.f32 %v1821, %v2148
    %v2198 = vadd.f32 %v1822, %v2151
    %v2199 = vadd.f32 %v1823, %v2156
    %v2200 = vld [vmem:[%s0 + $0x1a] sm:$0xff]
    %v2201 = vld [vmem:[%s0 + $0x22] sm:$0xff]
    %v2202 = vld [vmem:[%s0 + $0x2a] sm:$0xff]
    %v2203 = vld [vmem:[%s0 + $0x32] sm:$0xff]
    %v2204 = vld [vmem:[%s0 + $0x3a] sm:$0xff]
    %v2205 = vld [vmem:[%s0 + $0x42] sm:$0xff]
    %v2206 = vld [vmem:[%s0 + $0x4a] sm:$0xff]
    %v2207 = vld [vmem:[%s0 + $0x52] sm:$0xff]
    %v2208 = vld [vmem:[%s0 + $0x5a] sm:$0xff]
    %v2209 = vld [vmem:[%s0 + $0x62] sm:$0xff]
    %v2210 = vld [vmem:[%s0 + $0x6a] sm:$0xff]
    %v2211 = vld [vmem:[%s0 + $0x72] sm:$0xff]
    %v2212 = vld [vmem:[%s0 + $0x7a] sm:$0xff]
    %v2213 = vld [vmem:[%s0 + $0x82] sm:$0xff]
    %v2214 = vld [vmem:[%s0 + $0x8a] sm:$0xff]
    %v2215 = vld [vmem:[%s0 + $0x92] sm:$0xff]
    %v2216 = vld [vmem:[%s0 + $0x9a] sm:$0xff]
    %v2217 = vld [vmem:[%s0 + $0xa2] sm:$0xff]
    %v2218 = vld [vmem:[%s0 + $0xaa] sm:$0xff]
    %v2219 = vld [vmem:[%s0 + $0xb2] sm:$0xff]
    %v2220 = vld [vmem:[%s0 + $0xba] sm:$0xff]
    %v2221 = vld [vmem:[%s0 + $0xc2] sm:$0xff]
    %v2222 = vld [vmem:[%s0 + $0xca] sm:$0xff]
    %v2223 = vld [vmem:[%s0 + $0xd2] sm:$0xff]
    %v2224 = vld [vmem:[%s0 + $0xda] sm:$0xff]
    %v2225 = vld [vmem:[%s0 + $0xe2] sm:$0xff]
    %v2226 = vld [vmem:[%s0 + $0xea] sm:$0xff]
    %v2227 = vld [vmem:[%s0 + $0xf2] sm:$0xff]
    %v2228 = vld [vmem:[%s0 + $0xfa] sm:$0xff]
    %v2229 = vld [vmem:[%s0 + $0x102] sm:$0xff]
    %v2230 = vld [vmem:[%s0 + $0x10a] sm:$0xff]
    %v2231 = vld [vmem:[%s0 + $0x112] sm:$0xff]
    %v2232 = vld [vmem:[%s0 + $0x11a] sm:$0xff]
    %v2233 = vld [vmem:[%s0 + $0x122] sm:$0xff]
    %v2234 = vld [vmem:[%s0 + $0x12a] sm:$0xff]
    %v2235 = vld [vmem:[%s0 + $0x132] sm:$0xff]
    %v2236 = vld [vmem:[%s0 + $0x13a] sm:$0xff]
    %v2237 = vld [vmem:[%s0 + $0x142] sm:$0xff]
    %v2238 = vld [vmem:[%s0 + $0x14a] sm:$0xff]
    %v2239 = vld [vmem:[%s0 + $0x152] sm:$0xff]
    %v2240 = vpack.c.bf16 %v2201, %v2200
    %v2241 = vpack.c.bf16 %v2203, %v2202
    %v2242 = vpack.c.bf16 %v2205, %v2204
    %v2243 = vpack.c.bf16 %v2207, %v2206
    %v2244 = vpack.c.bf16 %v2209, %v2208
    %v2245 = vpack.c.bf16 %v2211, %v2210
    %v2246 = vpack.c.bf16 %v2213, %v2212
    %v2247 = vpack.c.bf16 %v2215, %v2214
    %v2248 = vpack.c.bf16 %v2217, %v2216
    %v2249 = vpack.c.bf16 %v2219, %v2218
    %v2250 = vpack.c.bf16 %v2221, %v2220
    %v2251 = vpack.c.bf16 %v2223, %v2222
    %v2252 = vpack.c.bf16 %v2225, %v2224
    %v2253 = vpack.c.bf16 %v2227, %v2226
    %v2254 = vpack.c.bf16 %v2229, %v2228
    %v2255 = vpack.c.bf16 %v2231, %v2230
    %v2256 = vpack.c.bf16 %v2233, %v2232
    %v2257 = vpack.c.bf16 %v2235, %v2234
    %v2258 = vpack.c.bf16 %v2237, %v2236
    %v2259 = vpack.c.bf16 %v2239, %v2238
    %s2260 = scalar_lea.vmem %s1, 144
    %v2261 = vld [vmem:[%s2260] sm:$0xf]
    %v2262 = vld [vmem:[%s2260 + $0x4] sm:$0xf]
    %v2263 = vld [vmem:[%s2260 + $0x8] sm:$0xf]
    %v2264 = vld [vmem:[%s2260 + $0xc] sm:$0xf]
    %v2265 = vld [vmem:[%s2260 + $0x10] sm:$0xf]
    %v2266 = vld [vmem:[%s2260 + $0x14] sm:$0xf]
    %v2273 = vunpack.c.l.b16 %v2261
    %v2274 = vunpack.c.l.b16 %v2262
    %v2275 = vunpack.c.l.b16 %v2263
    %v2276 = vunpack.c.l.b16 %v2264
    %v2277 = vunpack.c.l.b16 %v2265
    %v2278 = vunpack.c.l.b16 %v2266
    %v2279 = vpack.c.b16 %v2274, %v2273
    %v2280 = vpack.c.b16 %v2276, %v2275
    %v2281 = vpack.c.b16 %v2278, %v2277
    %v2286 = vsel %vm173, %v2240, 0
    %v2289 = vsel %vm173, %v2241, 0
    %v2292 = vsel %vm173, %v2242, 0
    %v2295 = vsel %vm173, %v2243, 0
    %v2298 = vsel %vm173, %v2244, 0
    %v2301 = vsel %vm173, %v2245, 0
    %v2304 = vsel %vm173, %v2246, 0
    %v2307 = vsel %vm173, %v2247, 0
    %v2310 = vsel %vm173, %v2248, 0
    %v2313 = vsel %vm173, %v2249, 0
    %v2316 = vsel %vm173, %v2250, 0
    %v2319 = vsel %vm173, %v2251, 0
    %v2322 = vsel %vm173, %v2252, 0
    %v2325 = vsel %vm173, %v2253, 0
    %v2328 = vsel %vm173, %v2254, 0
    %v2331 = vsel %vm173, %v2255, 0
    %v2334 = vsel %vm173, %v2256, 0
    %v2337 = vsel %vm173, %v2257, 0
    %v2340 = vsel %vm173, %v2258, 0
    %v2343 = vsel %vm173, %v2259, 0
    %2345 = vmatprep.subr.bf16.mxu0 0
    %2346 = vmatpush1.bf16.msra.mxu0 0
    %2347 = vmatprep.subr.bf16.mxu0 0
    %2348 = vmatpush1.bf16.msra.mxu0 0
    %2349 = vmatprep.subr.bf16.mxu0 0
    %2350 = vmatpush1.bf16.msra.mxu0 0
    %2351 = vmatprep.subr.bf16.mxu0 0
    %2352 = vmatpush1.bf16.msra.mxu0 0
    %2353 = vmatprep.subr.bf16.mxu0 0
    %2354 = vmatpush1.bf16.msra.mxu0 0
    %2355 = vmatprep.subr.bf16.mxu0 0
    %2356 = vmatpush1.bf16.msra.mxu0 %v2281
    %2357 = vmatprep.subr.bf16.mxu0 0
    %2358 = vmatpush1.bf16.msra.mxu0 %v2280
    %2359 = vmatprep.subr.bf16.mxu0 0
    %2360 = vmatpush1.bf16.msra.mxu0 %v2279
    %2361 = vmatprep.subr.bf16.mxu0 0
    %2362 = vmatpush2.bf16.msra.mxu0 0
    %2363 = vmatprep.subr.bf16.mxu0 0
    %2364 = vmatpush2.bf16.msra.mxu0 0
    %2365 = vmatprep.subr.bf16.mxu0 0
    %2366 = vmatpush2.bf16.msra.mxu0 0
    %2367 = vmatprep.subr.bf16.mxu0 0
    %2368 = vmatpush2.bf16.msra.mxu0 0
    %2369 = vmatprep.subr.bf16.mxu0 0
    %2370 = vmatpush2.bf16.msra.mxu0 0
    %2371 = vmatprep.subr.bf16.mxu0 0
    %2372 = vmatpush2.bf16.msra.mxu0 0
    %2373 = vmatprep.subr.bf16.mxu0 0
    %2374 = vmatpush2.bf16.msra.mxu0 0
    %2375 = vmatprep.subr.bf16.mxu0 0
    %2376 = vmatpush2.bf16.msra.mxu0 0
    %2377 = vmatprep.mubr.bf16.mxu0 0
    %2378 = vmatmul.mubr.bf16.gmra.mxu0 %v2286
    %v2379 = vpop.f32.mrf.mxu0
    %v2380 = vadd.f32 0.0, %v2379
    %v2381 = vpop.f32.mrf.mxu0
    %v2382 = vpop.f32.mrf.mxu0
    %v2383 = vadd.f32 0.0, %v2382
    %v2384 = vpop.f32.mrf.mxu0
    %2385 = vmatprep.mubr.bf16.mxu0 0
    %2386 = vmatmul.mubr.bf16.gmra.mxu0 %v2289
    %v2387 = vpop.f32.mrf.mxu0
    %v2388 = vadd.f32 0.0, %v2387
    %v2389 = vpop.f32.mrf.mxu0
    %v2390 = vpop.f32.mrf.mxu0
    %v2391 = vadd.f32 0.0, %v2390
    %v2392 = vpop.f32.mrf.mxu0
    %2393 = vmatprep.mubr.bf16.mxu0 0
    %2394 = vmatmul.mubr.bf16.gmra.mxu0 %v2292
    %v2395 = vpop.f32.mrf.mxu0
    %v2396 = vadd.f32 0.0, %v2395
    %v2397 = vpop.f32.mrf.mxu0
    %v2398 = vpop.f32.mrf.mxu0
    %v2399 = vadd.f32 0.0, %v2398
    %v2400 = vpop.f32.mrf.mxu0
    %2401 = vmatprep.mubr.bf16.mxu0 0
    %2402 = vmatmul.mubr.bf16.gmra.mxu0 %v2295
    %v2403 = vpop.f32.mrf.mxu0
    %v2404 = vadd.f32 0.0, %v2403
    %v2405 = vpop.f32.mrf.mxu0
    %v2406 = vpop.f32.mrf.mxu0
    %v2407 = vadd.f32 0.0, %v2406
    %v2408 = vpop.f32.mrf.mxu0
    %2409 = vmatprep.mubr.bf16.mxu0 0
    %2410 = vmatmul.mubr.bf16.gmra.mxu0 %v2298
    %v2411 = vpop.f32.mrf.mxu0
    %v2412 = vadd.f32 0.0, %v2411
    %v2413 = vpop.f32.mrf.mxu0
    %v2414 = vpop.f32.mrf.mxu0
    %v2415 = vadd.f32 0.0, %v2414
    %v2416 = vpop.f32.mrf.mxu0
    %2417 = vmatprep.mubr.bf16.mxu0 0
    %2418 = vmatmul.mubr.bf16.gmra.mxu0 %v2301
    %v2419 = vpop.f32.mrf.mxu0
    %v2420 = vadd.f32 0.0, %v2419
    %v2421 = vpop.f32.mrf.mxu0
    %v2422 = vpop.f32.mrf.mxu0
    %v2423 = vadd.f32 0.0, %v2422
    %v2424 = vpop.f32.mrf.mxu0
    %2425 = vmatprep.mubr.bf16.mxu0 0
    %2426 = vmatmul.mubr.bf16.gmra.mxu0 %v2304
    %v2427 = vpop.f32.mrf.mxu0
    %v2428 = vadd.f32 0.0, %v2427
    %v2429 = vpop.f32.mrf.mxu0
    %v2430 = vpop.f32.mrf.mxu0
    %v2431 = vadd.f32 0.0, %v2430
    %v2432 = vpop.f32.mrf.mxu0
    %2433 = vmatprep.mubr.bf16.mxu0 0
    %2434 = vmatmul.mubr.bf16.gmra.mxu0 %v2307
    %v2435 = vpop.f32.mrf.mxu0
    %v2436 = vadd.f32 0.0, %v2435
    %v2437 = vpop.f32.mrf.mxu0
    %v2438 = vpop.f32.mrf.mxu0
    %v2439 = vadd.f32 0.0, %v2438
    %v2440 = vpop.f32.mrf.mxu0
    %2441 = vmatprep.mubr.bf16.mxu0 0
    %2442 = vmatmul.mubr.bf16.gmra.mxu0 %v2310
    %v2443 = vpop.f32.mrf.mxu0
    %v2444 = vadd.f32 0.0, %v2443
    %v2445 = vpop.f32.mrf.mxu0
    %v2446 = vpop.f32.mrf.mxu0
    %v2447 = vadd.f32 0.0, %v2446
    %v2448 = vpop.f32.mrf.mxu0
    %2449 = vmatprep.mubr.bf16.mxu0 0
    %2450 = vmatmul.mubr.bf16.gmra.mxu0 %v2313
    %v2451 = vpop.f32.mrf.mxu0
    %v2452 = vadd.f32 0.0, %v2451
    %v2453 = vpop.f32.mrf.mxu0
    %v2454 = vpop.f32.mrf.mxu0
    %v2455 = vadd.f32 0.0, %v2454
    %v2456 = vpop.f32.mrf.mxu0
    %2457 = vmatprep.mubr.bf16.mxu0 0
    %2458 = vmatmul.mubr.bf16.gmra.mxu0 %v2316
    %v2459 = vpop.f32.mrf.mxu0
    %v2460 = vadd.f32 0.0, %v2459
    %v2461 = vpop.f32.mrf.mxu0
    %v2462 = vpop.f32.mrf.mxu0
    %v2463 = vadd.f32 0.0, %v2462
    %v2464 = vpop.f32.mrf.mxu0
    %2465 = vmatprep.mubr.bf16.mxu0 0
    %2466 = vmatmul.mubr.bf16.gmra.mxu0 %v2319
    %v2467 = vpop.f32.mrf.mxu0
    %v2468 = vadd.f32 0.0, %v2467
    %v2469 = vpop.f32.mrf.mxu0
    %v2470 = vpop.f32.mrf.mxu0
    %v2471 = vadd.f32 0.0, %v2470
    %v2472 = vpop.f32.mrf.mxu0
    %2473 = vmatprep.mubr.bf16.mxu0 0
    %2474 = vmatmul.mubr.bf16.gmra.mxu0 %v2322
    %v2475 = vpop.f32.mrf.mxu0
    %v2476 = vadd.f32 0.0, %v2475
    %v2477 = vpop.f32.mrf.mxu0
    %v2478 = vpop.f32.mrf.mxu0
    %v2479 = vadd.f32 0.0, %v2478
    %v2480 = vpop.f32.mrf.mxu0
    %2481 = vmatprep.mubr.bf16.mxu0 0
    %2482 = vmatmul.mubr.bf16.gmra.mxu0 %v2325
    %v2483 = vpop.f32.mrf.mxu0
    %v2484 = vadd.f32 0.0, %v2483
    %v2485 = vpop.f32.mrf.mxu0
    %v2486 = vpop.f32.mrf.mxu0
    %v2487 = vadd.f32 0.0, %v2486
    %v2488 = vpop.f32.mrf.mxu0
    %2489 = vmatprep.mubr.bf16.mxu0 0
    %2490 = vmatmul.mubr.bf16.gmra.mxu0 %v2328
    %v2491 = vpop.f32.mrf.mxu0
    %v2492 = vadd.f32 0.0, %v2491
    %v2493 = vpop.f32.mrf.mxu0
    %v2494 = vpop.f32.mrf.mxu0
    %v2495 = vadd.f32 0.0, %v2494
    %v2496 = vpop.f32.mrf.mxu0
    %2497 = vmatprep.mubr.bf16.mxu0 0
    %2498 = vmatmul.mubr.bf16.gmra.mxu0 %v2331
    %v2499 = vpop.f32.mrf.mxu0
    %v2500 = vadd.f32 0.0, %v2499
    %v2501 = vpop.f32.mrf.mxu0
    %v2502 = vpop.f32.mrf.mxu0
    %v2503 = vadd.f32 0.0, %v2502
    %v2504 = vpop.f32.mrf.mxu0
    %2505 = vmatprep.mubr.bf16.mxu0 0
    %2506 = vmatmul.mubr.bf16.gmra.mxu0 %v2334
    %v2507 = vpop.f32.mrf.mxu0
    %v2508 = vadd.f32 0.0, %v2507
    %v2509 = vpop.f32.mrf.mxu0
    %v2510 = vpop.f32.mrf.mxu0
    %v2511 = vadd.f32 0.0, %v2510
    %v2512 = vpop.f32.mrf.mxu0
    %2513 = vmatprep.mubr.bf16.mxu0 0
    %2514 = vmatmul.mubr.bf16.gmra.mxu0 %v2337
    %v2515 = vpop.f32.mrf.mxu0
    %v2516 = vadd.f32 0.0, %v2515
    %v2517 = vpop.f32.mrf.mxu0
    %v2518 = vpop.f32.mrf.mxu0
    %v2519 = vadd.f32 0.0, %v2518
    %v2520 = vpop.f32.mrf.mxu0
    %2521 = vmatprep.mubr.bf16.mxu0 0
    %2522 = vmatmul.mubr.bf16.gmra.mxu0 %v2340
    %v2523 = vpop.f32.mrf.mxu0
    %v2524 = vadd.f32 0.0, %v2523
    %v2525 = vpop.f32.mrf.mxu0
    %v2526 = vpop.f32.mrf.mxu0
    %v2527 = vadd.f32 0.0, %v2526
    %v2528 = vpop.f32.mrf.mxu0
    %2529 = vmatprep.mubr.bf16.mxu0 0
    %2530 = vmatmul.mubr.bf16.gmra.mxu0 %v2343
    %v2531 = vpop.f32.mrf.mxu0
    %v2532 = vadd.f32 0.0, %v2531
    %v2533 = vpop.f32.mrf.mxu0
    %v2534 = vpop.f32.mrf.mxu0
    %v2535 = vpop.f32.mrf.mxu0
    %2536 = vdwg.mxu0
    %v2537 = vadd.f32 %v2161, %v2380
    %v2538 = vadd.f32 %v2162, %v2383
    %v2539 = vadd.f32 %v2163, %v2388
    %v2540 = vadd.f32 %v2164, %v2391
    %v2541 = vadd.f32 %v2165, %v2396
    %v2542 = vadd.f32 %v2166, %v2399
    %v2543 = vadd.f32 %v2167, %v2404
    %v2544 = vadd.f32 %v2168, %v2407
    %v2545 = vadd.f32 %v2169, %v2412
    %v2546 = vadd.f32 %v2170, %v2415
    %v2547 = vadd.f32 %v2171, %v2420
    %v2548 = vadd.f32 %v2172, %v2423
    %v2549 = vadd.f32 %v2173, %v2428
    %v2550 = vadd.f32 %v2174, %v2431
    %v2551 = vadd.f32 %v2175, %v2436
    %v2552 = vadd.f32 %v2176, %v2439
    %v2553 = vadd.f32 %v2177, %v2444
    %v2554 = vadd.f32 %v2178, %v2447
    %v2555 = vadd.f32 %v2179, %v2452
    %v2556 = vadd.f32 %v2180, %v2455
    %v2557 = vadd.f32 %v2181, %v2460
    %v2558 = vadd.f32 %v2182, %v2463
    %v2559 = vadd.f32 %v2183, %v2468
    %v2560 = vadd.f32 %v2184, %v2471
    %v2561 = vadd.f32 %v2185, %v2476
    %v2562 = vadd.f32 %v2186, %v2479
    %v2563 = vadd.f32 %v2187, %v2484
    %v2564 = vadd.f32 %v2188, %v2487
    %v2565 = vadd.f32 %v2189, %v2492
    %v2566 = vadd.f32 %v2190, %v2495
    %v2567 = vadd.f32 %v2191, %v2500
    %v2568 = vadd.f32 %v2192, %v2503
    %v2569 = vadd.f32 %v2193, %v2508
    %v2570 = vadd.f32 %v2194, %v2511
    %v2571 = vadd.f32 %v2195, %v2516
    %v2572 = vadd.f32 %v2196, %v2519
    %v2573 = vadd.f32 %v2197, %v2524
    %v2574 = vadd.f32 %v2198, %v2527
    %v2575 = vadd.f32 %v2199, %v2532
    %v2576 = vld [vmem:[%s0 + $0x1b] sm:$0xff]
    %v2577 = vld [vmem:[%s0 + $0x23] sm:$0xff]
    %v2578 = vld [vmem:[%s0 + $0x2b] sm:$0xff]
    %v2579 = vld [vmem:[%s0 + $0x33] sm:$0xff]
    %v2580 = vld [vmem:[%s0 + $0x3b] sm:$0xff]
    %v2581 = vld [vmem:[%s0 + $0x43] sm:$0xff]
    %v2582 = vld [vmem:[%s0 + $0x4b] sm:$0xff]
    %v2583 = vld [vmem:[%s0 + $0x53] sm:$0xff]
    %v2584 = vld [vmem:[%s0 + $0x5b] sm:$0xff]
    %v2585 = vld [vmem:[%s0 + $0x63] sm:$0xff]
    %v2586 = vld [vmem:[%s0 + $0x6b] sm:$0xff]
    %v2587 = vld [vmem:[%s0 + $0x73] sm:$0xff]
    %v2588 = vld [vmem:[%s0 + $0x7b] sm:$0xff]
    %v2589 = vld [vmem:[%s0 + $0x83] sm:$0xff]
    %v2590 = vld [vmem:[%s0 + $0x8b] sm:$0xff]
    %v2591 = vld [vmem:[%s0 + $0x93] sm:$0xff]
    %v2592 = vld [vmem:[%s0 + $0x9b] sm:$0xff]
    %v2593 = vld [vmem:[%s0 + $0xa3] sm:$0xff]
    %v2594 = vld [vmem:[%s0 + $0xab] sm:$0xff]
    %v2595 = vld [vmem:[%s0 + $0xb3] sm:$0xff]
    %v2596 = vld [vmem:[%s0 + $0xbb] sm:$0xff]
    %v2597 = vld [vmem:[%s0 + $0xc3] sm:$0xff]
    %v2598 = vld [vmem:[%s0 + $0xcb] sm:$0xff]
    %v2599 = vld [vmem:[%s0 + $0xd3] sm:$0xff]
    %v2600 = vld [vmem:[%s0 + $0xdb] sm:$0xff]
    %v2601 = vld [vmem:[%s0 + $0xe3] sm:$0xff]
    %v2602 = vld [vmem:[%s0 + $0xeb] sm:$0xff]
    %v2603 = vld [vmem:[%s0 + $0xf3] sm:$0xff]
    %v2604 = vld [vmem:[%s0 + $0xfb] sm:$0xff]
    %v2605 = vld [vmem:[%s0 + $0x103] sm:$0xff]
    %v2606 = vld [vmem:[%s0 + $0x10b] sm:$0xff]
    %v2607 = vld [vmem:[%s0 + $0x113] sm:$0xff]
    %v2608 = vld [vmem:[%s0 + $0x11b] sm:$0xff]
    %v2609 = vld [vmem:[%s0 + $0x123] sm:$0xff]
    %v2610 = vld [vmem:[%s0 + $0x12b] sm:$0xff]
    %v2611 = vld [vmem:[%s0 + $0x133] sm:$0xff]
    %v2612 = vld [vmem:[%s0 + $0x13b] sm:$0xff]
    %v2613 = vld [vmem:[%s0 + $0x143] sm:$0xff]
    %v2614 = vld [vmem:[%s0 + $0x14b] sm:$0xff]
    %v2615 = vld [vmem:[%s0 + $0x153] sm:$0xff]
    %v2616 = vpack.c.bf16 %v2577, %v2576
    %v2617 = vpack.c.bf16 %v2579, %v2578
    %v2618 = vpack.c.bf16 %v2581, %v2580
    %v2619 = vpack.c.bf16 %v2583, %v2582
    %v2620 = vpack.c.bf16 %v2585, %v2584
    %v2621 = vpack.c.bf16 %v2587, %v2586
    %v2622 = vpack.c.bf16 %v2589, %v2588
    %v2623 = vpack.c.bf16 %v2591, %v2590
    %v2624 = vpack.c.bf16 %v2593, %v2592
    %v2625 = vpack.c.bf16 %v2595, %v2594
    %v2626 = vpack.c.bf16 %v2597, %v2596
    %v2627 = vpack.c.bf16 %v2599, %v2598
    %v2628 = vpack.c.bf16 %v2601, %v2600
    %v2629 = vpack.c.bf16 %v2603, %v2602
    %v2630 = vpack.c.bf16 %v2605, %v2604
    %v2631 = vpack.c.bf16 %v2607, %v2606
    %v2632 = vpack.c.bf16 %v2609, %v2608
    %v2633 = vpack.c.bf16 %v2611, %v2610
    %v2634 = vpack.c.bf16 %v2613, %v2612
    %v2635 = vpack.c.bf16 %v2615, %v2614
    %s2636 = scalar_lea.vmem %s1, 168
    %v2637 = vld [vmem:[%s2636] sm:$0xf]
    %v2638 = vld [vmem:[%s2636 + $0x4] sm:$0xf]
    %v2639 = vld [vmem:[%s2636 + $0x8] sm:$0xf]
    %v2640 = vld [vmem:[%s2636 + $0xc] sm:$0xf]
    %v2641 = vld [vmem:[%s2636 + $0x10] sm:$0xf]
    %v2642 = vld [vmem:[%s2636 + $0x14] sm:$0xf]
    %v2649 = vunpack.c.l.b16 %v2637
    %v2650 = vunpack.c.l.b16 %v2638
    %v2651 = vunpack.c.l.b16 %v2639
    %v2652 = vunpack.c.l.b16 %v2640
    %v2653 = vunpack.c.l.b16 %v2641
    %v2654 = vunpack.c.l.b16 %v2642
    %v2655 = vpack.c.b16 %v2650, %v2649
    %v2656 = vpack.c.b16 %v2652, %v2651
    %v2657 = vpack.c.b16 %v2654, %v2653
    %v2662 = vsel %vm173, %v2616, 0
    %v2665 = vsel %vm173, %v2617, 0
    %v2668 = vsel %vm173, %v2618, 0
    %v2671 = vsel %vm173, %v2619, 0
    %v2674 = vsel %vm173, %v2620, 0
    %v2677 = vsel %vm173, %v2621, 0
    %v2680 = vsel %vm173, %v2622, 0
    %v2683 = vsel %vm173, %v2623, 0
    %v2686 = vsel %vm173, %v2624, 0
    %v2689 = vsel %vm173, %v2625, 0
    %v2692 = vsel %vm173, %v2626, 0
    %v2695 = vsel %vm173, %v2627, 0
    %v2698 = vsel %vm173, %v2628, 0
    %v2701 = vsel %vm173, %v2629, 0
    %v2704 = vsel %vm173, %v2630, 0
    %v2707 = vsel %vm173, %v2631, 0
    %v2710 = vsel %vm173, %v2632, 0
    %v2713 = vsel %vm173, %v2633, 0
    %v2716 = vsel %vm173, %v2634, 0
    %v2719 = vsel %vm173, %v2635, 0
    %2721 = vmatprep.subr.bf16.mxu0 0
    %2722 = vmatpush1.bf16.msra.mxu0 0
    %2723 = vmatprep.subr.bf16.mxu0 0
    %2724 = vmatpush1.bf16.msra.mxu0 0
    %2725 = vmatprep.subr.bf16.mxu0 0
    %2726 = vmatpush1.bf16.msra.mxu0 0
    %2727 = vmatprep.subr.bf16.mxu0 0
    %2728 = vmatpush1.bf16.msra.mxu0 0
    %2729 = vmatprep.subr.bf16.mxu0 0
    %2730 = vmatpush1.bf16.msra.mxu0 0
    %2731 = vmatprep.subr.bf16.mxu0 0
    %2732 = vmatpush1.bf16.msra.mxu0 %v2657
    %2733 = vmatprep.subr.bf16.mxu0 0
    %2734 = vmatpush1.bf16.msra.mxu0 %v2656
    %2735 = vmatprep.subr.bf16.mxu0 0
    %2736 = vmatpush1.bf16.msra.mxu0 %v2655
    %2737 = vmatprep.subr.bf16.mxu0 0
    %2738 = vmatpush2.bf16.msra.mxu0 0
    %2739 = vmatprep.subr.bf16.mxu0 0
    %2740 = vmatpush2.bf16.msra.mxu0 0
    %2741 = vmatprep.subr.bf16.mxu0 0
    %2742 = vmatpush2.bf16.msra.mxu0 0
    %2743 = vmatprep.subr.bf16.mxu0 0
    %2744 = vmatpush2.bf16.msra.mxu0 0
    %2745 = vmatprep.subr.bf16.mxu0 0
    %2746 = vmatpush2.bf16.msra.mxu0 0
    %2747 = vmatprep.subr.bf16.mxu0 0
    %2748 = vmatpush2.bf16.msra.mxu0 0
    %2749 = vmatprep.subr.bf16.mxu0 0
    %2750 = vmatpush2.bf16.msra.mxu0 0
    %2751 = vmatprep.subr.bf16.mxu0 0
    %2752 = vmatpush2.bf16.msra.mxu0 0
    %2753 = vmatprep.mubr.bf16.mxu0 0
    %2754 = vmatmul.mubr.bf16.gmra.mxu0 %v2662
    %v2755 = vpop.f32.mrf.mxu0
    %v2756 = vadd.f32 0.0, %v2755
    %v2757 = vpop.f32.mrf.mxu0
    %v2758 = vpop.f32.mrf.mxu0
    %v2759 = vadd.f32 0.0, %v2758
    %v2760 = vpop.f32.mrf.mxu0
    %2761 = vmatprep.mubr.bf16.mxu0 0
    %2762 = vmatmul.mubr.bf16.gmra.mxu0 %v2665
    %v2763 = vpop.f32.mrf.mxu0
    %v2764 = vadd.f32 0.0, %v2763
    %v2765 = vpop.f32.mrf.mxu0
    %v2766 = vpop.f32.mrf.mxu0
    %v2767 = vadd.f32 0.0, %v2766
    %v2768 = vpop.f32.mrf.mxu0
    %2769 = vmatprep.mubr.bf16.mxu0 0
    %2770 = vmatmul.mubr.bf16.gmra.mxu0 %v2668
    %v2771 = vpop.f32.mrf.mxu0
    %v2772 = vadd.f32 0.0, %v2771
    %v2773 = vpop.f32.mrf.mxu0
    %v2774 = vpop.f32.mrf.mxu0
    %v2775 = vadd.f32 0.0, %v2774
    %v2776 = vpop.f32.mrf.mxu0
    %2777 = vmatprep.mubr.bf16.mxu0 0
    %2778 = vmatmul.mubr.bf16.gmra.mxu0 %v2671
    %v2779 = vpop.f32.mrf.mxu0
    %v2780 = vadd.f32 0.0, %v2779
    %v2781 = vpop.f32.mrf.mxu0
    %v2782 = vpop.f32.mrf.mxu0
    %v2783 = vadd.f32 0.0, %v2782
    %v2784 = vpop.f32.mrf.mxu0
    %2785 = vmatprep.mubr.bf16.mxu0 0
    %2786 = vmatmul.mubr.bf16.gmra.mxu0 %v2674
    %v2787 = vpop.f32.mrf.mxu0
    %v2788 = vadd.f32 0.0, %v2787
    %v2789 = vpop.f32.mrf.mxu0
    %v2790 = vpop.f32.mrf.mxu0
    %v2791 = vadd.f32 0.0, %v2790
    %v2792 = vpop.f32.mrf.mxu0
    %2793 = vmatprep.mubr.bf16.mxu0 0
    %2794 = vmatmul.mubr.bf16.gmra.mxu0 %v2677
    %v2795 = vpop.f32.mrf.mxu0
    %v2796 = vadd.f32 0.0, %v2795
    %v2797 = vpop.f32.mrf.mxu0
    %v2798 = vpop.f32.mrf.mxu0
    %v2799 = vadd.f32 0.0, %v2798
    %v2800 = vpop.f32.mrf.mxu0
    %2801 = vmatprep.mubr.bf16.mxu0 0
    %2802 = vmatmul.mubr.bf16.gmra.mxu0 %v2680
    %v2803 = vpop.f32.mrf.mxu0
    %v2804 = vadd.f32 0.0, %v2803
    %v2805 = vpop.f32.mrf.mxu0
    %v2806 = vpop.f32.mrf.mxu0
    %v2807 = vadd.f32 0.0, %v2806
    %v2808 = vpop.f32.mrf.mxu0
    %2809 = vmatprep.mubr.bf16.mxu0 0
    %2810 = vmatmul.mubr.bf16.gmra.mxu0 %v2683
    %v2811 = vpop.f32.mrf.mxu0
    %v2812 = vadd.f32 0.0, %v2811
    %v2813 = vpop.f32.mrf.mxu0
    %v2814 = vpop.f32.mrf.mxu0
    %v2815 = vadd.f32 0.0, %v2814
    %v2816 = vpop.f32.mrf.mxu0
    %2817 = vmatprep.mubr.bf16.mxu0 0
    %2818 = vmatmul.mubr.bf16.gmra.mxu0 %v2686
    %v2819 = vpop.f32.mrf.mxu0
    %v2820 = vadd.f32 0.0, %v2819
    %v2821 = vpop.f32.mrf.mxu0
    %v2822 = vpop.f32.mrf.mxu0
    %v2823 = vadd.f32 0.0, %v2822
    %v2824 = vpop.f32.mrf.mxu0
    %2825 = vmatprep.mubr.bf16.mxu0 0
    %2826 = vmatmul.mubr.bf16.gmra.mxu0 %v2689
    %v2827 = vpop.f32.mrf.mxu0
    %v2828 = vadd.f32 0.0, %v2827
    %v2829 = vpop.f32.mrf.mxu0
    %v2830 = vpop.f32.mrf.mxu0
    %v2831 = vadd.f32 0.0, %v2830
    %v2832 = vpop.f32.mrf.mxu0
    %2833 = vmatprep.mubr.bf16.mxu0 0
    %2834 = vmatmul.mubr.bf16.gmra.mxu0 %v2692
    %v2835 = vpop.f32.mrf.mxu0
    %v2836 = vadd.f32 0.0, %v2835
    %v2837 = vpop.f32.mrf.mxu0
    %v2838 = vpop.f32.mrf.mxu0
    %v2839 = vadd.f32 0.0, %v2838
    %v2840 = vpop.f32.mrf.mxu0
    %2841 = vmatprep.mubr.bf16.mxu0 0
    %2842 = vmatmul.mubr.bf16.gmra.mxu0 %v2695
    %v2843 = vpop.f32.mrf.mxu0
    %v2844 = vadd.f32 0.0, %v2843
    %v2845 = vpop.f32.mrf.mxu0
    %v2846 = vpop.f32.mrf.mxu0
    %v2847 = vadd.f32 0.0, %v2846
    %v2848 = vpop.f32.mrf.mxu0
    %2849 = vmatprep.mubr.bf16.mxu0 0
    %2850 = vmatmul.mubr.bf16.gmra.mxu0 %v2698
    %v2851 = vpop.f32.mrf.mxu0
    %v2852 = vadd.f32 0.0, %v2851
    %v2853 = vpop.f32.mrf.mxu0
    %v2854 = vpop.f32.mrf.mxu0
    %v2855 = vadd.f32 0.0, %v2854
    %v2856 = vpop.f32.mrf.mxu0
    %2857 = vmatprep.mubr.bf16.mxu0 0
    %2858 = vmatmul.mubr.bf16.gmra.mxu0 %v2701
    %v2859 = vpop.f32.mrf.mxu0
    %v2860 = vadd.f32 0.0, %v2859
    %v2861 = vpop.f32.mrf.mxu0
    %v2862 = vpop.f32.mrf.mxu0
    %v2863 = vadd.f32 0.0, %v2862
    %v2864 = vpop.f32.mrf.mxu0
    %2865 = vmatprep.mubr.bf16.mxu0 0
    %2866 = vmatmul.mubr.bf16.gmra.mxu0 %v2704
    %v2867 = vpop.f32.mrf.mxu0
    %v2868 = vadd.f32 0.0, %v2867
    %v2869 = vpop.f32.mrf.mxu0
    %v2870 = vpop.f32.mrf.mxu0
    %v2871 = vadd.f32 0.0, %v2870
    %v2872 = vpop.f32.mrf.mxu0
    %2873 = vmatprep.mubr.bf16.mxu0 0
    %2874 = vmatmul.mubr.bf16.gmra.mxu0 %v2707
    %v2875 = vpop.f32.mrf.mxu0
    %v2876 = vadd.f32 0.0, %v2875
    %v2877 = vpop.f32.mrf.mxu0
    %v2878 = vpop.f32.mrf.mxu0
    %v2879 = vadd.f32 0.0, %v2878
    %v2880 = vpop.f32.mrf.mxu0
    %2881 = vmatprep.mubr.bf16.mxu0 0
    %2882 = vmatmul.mubr.bf16.gmra.mxu0 %v2710
    %v2883 = vpop.f32.mrf.mxu0
    %v2884 = vadd.f32 0.0, %v2883
    %v2885 = vpop.f32.mrf.mxu0
    %v2886 = vpop.f32.mrf.mxu0
    %v2887 = vadd.f32 0.0, %v2886
    %v2888 = vpop.f32.mrf.mxu0
    %2889 = vmatprep.mubr.bf16.mxu0 0
    %2890 = vmatmul.mubr.bf16.gmra.mxu0 %v2713
    %v2891 = vpop.f32.mrf.mxu0
    %v2892 = vadd.f32 0.0, %v2891
    %v2893 = vpop.f32.mrf.mxu0
    %v2894 = vpop.f32.mrf.mxu0
    %v2895 = vadd.f32 0.0, %v2894
    %v2896 = vpop.f32.mrf.mxu0
    %2897 = vmatprep.mubr.bf16.mxu0 0
    %2898 = vmatmul.mubr.bf16.gmra.mxu0 %v2716
    %v2899 = vpop.f32.mrf.mxu0
    %v2900 = vadd.f32 0.0, %v2899
    %v2901 = vpop.f32.mrf.mxu0
    %v2902 = vpop.f32.mrf.mxu0
    %v2903 = vadd.f32 0.0, %v2902
    %v2904 = vpop.f32.mrf.mxu0
    %2905 = vmatprep.mubr.bf16.mxu0 0
    %2906 = vmatmul.mubr.bf16.gmra.mxu0 %v2719
    %v2907 = vpop.f32.mrf.mxu0
    %v2908 = vadd.f32 0.0, %v2907
    %v2909 = vpop.f32.mrf.mxu0
    %v2910 = vpop.f32.mrf.mxu0
    %v2911 = vpop.f32.mrf.mxu0
    %2912 = vdwg.mxu0
    %v2913 = vadd.f32 %v2537, %v2756
    %v2914 = vadd.f32 %v2538, %v2759
    %v2915 = vadd.f32 %v2539, %v2764
    %v2916 = vadd.f32 %v2540, %v2767
    %v2917 = vadd.f32 %v2541, %v2772
    %v2918 = vadd.f32 %v2542, %v2775
    %v2919 = vadd.f32 %v2543, %v2780
    %v2920 = vadd.f32 %v2544, %v2783
    %v2921 = vadd.f32 %v2545, %v2788
    %v2922 = vadd.f32 %v2546, %v2791
    %v2923 = vadd.f32 %v2547, %v2796
    %v2924 = vadd.f32 %v2548, %v2799
    %v2925 = vadd.f32 %v2549, %v2804
    %v2926 = vadd.f32 %v2550, %v2807
    %v2927 = vadd.f32 %v2551, %v2812
    %v2928 = vadd.f32 %v2552, %v2815
    %v2929 = vadd.f32 %v2553, %v2820
    %v2930 = vadd.f32 %v2554, %v2823
    %v2931 = vadd.f32 %v2555, %v2828
    %v2932 = vadd.f32 %v2556, %v2831
    %v2933 = vadd.f32 %v2557, %v2836
    %v2934 = vadd.f32 %v2558, %v2839
    %v2935 = vadd.f32 %v2559, %v2844
    %v2936 = vadd.f32 %v2560, %v2847
    %v2937 = vadd.f32 %v2561, %v2852
    %v2938 = vadd.f32 %v2562, %v2855
    %v2939 = vadd.f32 %v2563, %v2860
    %v2940 = vadd.f32 %v2564, %v2863
    %v2941 = vadd.f32 %v2565, %v2868
    %v2942 = vadd.f32 %v2566, %v2871
    %v2943 = vadd.f32 %v2567, %v2876
    %v2944 = vadd.f32 %v2568, %v2879
    %v2945 = vadd.f32 %v2569, %v2884
    %v2946 = vadd.f32 %v2570, %v2887
    %v2947 = vadd.f32 %v2571, %v2892
    %v2948 = vadd.f32 %v2572, %v2895
    %v2949 = vadd.f32 %v2573, %v2900
    %v2950 = vadd.f32 %v2574, %v2903
    %v2951 = vadd.f32 %v2575, %v2908
    %v2952 = vld [vmem:[%s0 + $0x1c] sm:$0xff]
    %v2953 = vld [vmem:[%s0 + $0x24] sm:$0xff]
    %v2954 = vld [vmem:[%s0 + $0x2c] sm:$0xff]
    %v2955 = vld [vmem:[%s0 + $0x34] sm:$0xff]
    %v2956 = vld [vmem:[%s0 + $0x3c] sm:$0xff]
    %v2957 = vld [vmem:[%s0 + $0x44] sm:$0xff]
    %v2958 = vld [vmem:[%s0 + $0x4c] sm:$0xff]
    %v2959 = vld [vmem:[%s0 + $0x54] sm:$0xff]
    %v2960 = vld [vmem:[%s0 + $0x5c] sm:$0xff]
    %v2961 = vld [vmem:[%s0 + $0x64] sm:$0xff]
    %v2962 = vld [vmem:[%s0 + $0x6c] sm:$0xff]
    %v2963 = vld [vmem:[%s0 + $0x74] sm:$0xff]
    %v2964 = vld [vmem:[%s0 + $0x7c] sm:$0xff]
    %v2965 = vld [vmem:[%s0 + $0x84] sm:$0xff]
    %v2966 = vld [vmem:[%s0 + $0x8c] sm:$0xff]
    %v2967 = vld [vmem:[%s0 + $0x94] sm:$0xff]
    %v2968 = vld [vmem:[%s0 + $0x9c] sm:$0xff]
    %v2969 = vld [vmem:[%s0 + $0xa4] sm:$0xff]
    %v2970 = vld [vmem:[%s0 + $0xac] sm:$0xff]
    %v2971 = vld [vmem:[%s0 + $0xb4] sm:$0xff]
    %v2972 = vld [vmem:[%s0 + $0xbc] sm:$0xff]
    %v2973 = vld [vmem:[%s0 + $0xc4] sm:$0xff]
    %v2974 = vld [vmem:[%s0 + $0xcc] sm:$0xff]
    %v2975 = vld [vmem:[%s0 + $0xd4] sm:$0xff]
    %v2976 = vld [vmem:[%s0 + $0xdc] sm:$0xff]
    %v2977 = vld [vmem:[%s0 + $0xe4] sm:$0xff]
    %v2978 = vld [vmem:[%s0 + $0xec] sm:$0xff]
    %v2979 = vld [vmem:[%s0 + $0xf4] sm:$0xff]
    %v2980 = vld [vmem:[%s0 + $0xfc] sm:$0xff]
    %v2981 = vld [vmem:[%s0 + $0x104] sm:$0xff]
    %v2982 = vld [vmem:[%s0 + $0x10c] sm:$0xff]
    %v2983 = vld [vmem:[%s0 + $0x114] sm:$0xff]
    %v2984 = vld [vmem:[%s0 + $0x11c] sm:$0xff]
    %v2985 = vld [vmem:[%s0 + $0x124] sm:$0xff]
    %v2986 = vld [vmem:[%s0 + $0x12c] sm:$0xff]
    %v2987 = vld [vmem:[%s0 + $0x134] sm:$0xff]
    %v2988 = vld [vmem:[%s0 + $0x13c] sm:$0xff]
    %v2989 = vld [vmem:[%s0 + $0x144] sm:$0xff]
    %v2990 = vld [vmem:[%s0 + $0x14c] sm:$0xff]
    %v2991 = vld [vmem:[%s0 + $0x154] sm:$0xff]
    %v2992 = vpack.c.bf16 %v2953, %v2952
    %v2993 = vpack.c.bf16 %v2955, %v2954
    %v2994 = vpack.c.bf16 %v2957, %v2956
    %v2995 = vpack.c.bf16 %v2959, %v2958
    %v2996 = vpack.c.bf16 %v2961, %v2960
    %v2997 = vpack.c.bf16 %v2963, %v2962
    %v2998 = vpack.c.bf16 %v2965, %v2964
    %v2999 = vpack.c.bf16 %v2967, %v2966
    %v3000 = vpack.c.bf16 %v2969, %v2968
    %v3001 = vpack.c.bf16 %v2971, %v2970
    %v3002 = vpack.c.bf16 %v2973, %v2972
    %v3003 = vpack.c.bf16 %v2975, %v2974
    %v3004 = vpack.c.bf16 %v2977, %v2976
    %v3005 = vpack.c.bf16 %v2979, %v2978
    %v3006 = vpack.c.bf16 %v2981, %v2980
    %v3007 = vpack.c.bf16 %v2983, %v2982
    %v3008 = vpack.c.bf16 %v2985, %v2984
    %v3009 = vpack.c.bf16 %v2987, %v2986
    %v3010 = vpack.c.bf16 %v2989, %v2988
    %v3011 = vpack.c.bf16 %v2991, %v2990
    %s3012 = scalar_lea.vmem %s1, 192
    %v3013 = vld [vmem:[%s3012] sm:$0xf]
    %v3014 = vld [vmem:[%s3012 + $0x4] sm:$0xf]
    %v3015 = vld [vmem:[%s3012 + $0x8] sm:$0xf]
    %v3016 = vld [vmem:[%s3012 + $0xc] sm:$0xf]
    %v3017 = vld [vmem:[%s3012 + $0x10] sm:$0xf]
    %v3018 = vld [vmem:[%s3012 + $0x14] sm:$0xf]
    %v3025 = vunpack.c.l.b16 %v3013
    %v3026 = vunpack.c.l.b16 %v3014
    %v3027 = vunpack.c.l.b16 %v3015
    %v3028 = vunpack.c.l.b16 %v3016
    %v3029 = vunpack.c.l.b16 %v3017
    %v3030 = vunpack.c.l.b16 %v3018
    %v3031 = vpack.c.b16 %v3026, %v3025
    %v3032 = vpack.c.b16 %v3028, %v3027
    %v3033 = vpack.c.b16 %v3030, %v3029
    %v3038 = vsel %vm173, %v2992, 0
    %v3041 = vsel %vm173, %v2993, 0
    %v3044 = vsel %vm173, %v2994, 0
    %v3047 = vsel %vm173, %v2995, 0
    %v3050 = vsel %vm173, %v2996, 0
    %v3053 = vsel %vm173, %v2997, 0
    %v3056 = vsel %vm173, %v2998, 0
    %v3059 = vsel %vm173, %v2999, 0
    %v3062 = vsel %vm173, %v3000, 0
    %v3065 = vsel %vm173, %v3001, 0
    %v3068 = vsel %vm173, %v3002, 0
    %v3071 = vsel %vm173, %v3003, 0
    %v3074 = vsel %vm173, %v3004, 0
    %v3077 = vsel %vm173, %v3005, 0
    %v3080 = vsel %vm173, %v3006, 0
    %v3083 = vsel %vm173, %v3007, 0
    %v3086 = vsel %vm173, %v3008, 0
    %v3089 = vsel %vm173, %v3009, 0
    %v3092 = vsel %vm173, %v3010, 0
    %v3095 = vsel %vm173, %v3011, 0
    %3097 = vmatprep.subr.bf16.mxu0 0
    %3098 = vmatpush1.bf16.msra.mxu0 0
    %3099 = vmatprep.subr.bf16.mxu0 0
    %3100 = vmatpush1.bf16.msra.mxu0 0
    %3101 = vmatprep.subr.bf16.mxu0 0
    %3102 = vmatpush1.bf16.msra.mxu0 0
    %3103 = vmatprep.subr.bf16.mxu0 0
    %3104 = vmatpush1.bf16.msra.mxu0 0
    %3105 = vmatprep.subr.bf16.mxu0 0
    %3106 = vmatpush1.bf16.msra.mxu0 0
    %3107 = vmatprep.subr.bf16.mxu0 0
    %3108 = vmatpush1.bf16.msra.mxu0 %v3033
    %3109 = vmatprep.subr.bf16.mxu0 0
    %3110 = vmatpush1.bf16.msra.mxu0 %v3032
    %3111 = vmatprep.subr.bf16.mxu0 0
    %3112 = vmatpush1.bf16.msra.mxu0 %v3031
    %3113 = vmatprep.subr.bf16.mxu0 0
    %3114 = vmatpush2.bf16.msra.mxu0 0
    %3115 = vmatprep.subr.bf16.mxu0 0
    %3116 = vmatpush2.bf16.msra.mxu0 0
    %3117 = vmatprep.subr.bf16.mxu0 0
    %3118 = vmatpush2.bf16.msra.mxu0 0
    %3119 = vmatprep.subr.bf16.mxu0 0
    %3120 = vmatpush2.bf16.msra.mxu0 0
    %3121 = vmatprep.subr.bf16.mxu0 0
    %3122 = vmatpush2.bf16.msra.mxu0 0
    %3123 = vmatprep.subr.bf16.mxu0 0
    %3124 = vmatpush2.bf16.msra.mxu0 0
    %3125 = vmatprep.subr.bf16.mxu0 0
    %3126 = vmatpush2.bf16.msra.mxu0 0
    %3127 = vmatprep.subr.bf16.mxu0 0
    %3128 = vmatpush2.bf16.msra.mxu0 0
    %3129 = vmatprep.mubr.bf16.mxu0 0
    %3130 = vmatmul.mubr.bf16.gmra.mxu0 %v3038
    %v3131 = vpop.f32.mrf.mxu0
    %v3132 = vadd.f32 0.0, %v3131
    %v3133 = vpop.f32.mrf.mxu0
    %v3134 = vpop.f32.mrf.mxu0
    %v3135 = vadd.f32 0.0, %v3134
    %v3136 = vpop.f32.mrf.mxu0
    %3137 = vmatprep.mubr.bf16.mxu0 0
    %3138 = vmatmul.mubr.bf16.gmra.mxu0 %v3041
    %v3139 = vpop.f32.mrf.mxu0
    %v3140 = vadd.f32 0.0, %v3139
    %v3141 = vpop.f32.mrf.mxu0
    %v3142 = vpop.f32.mrf.mxu0
    %v3143 = vadd.f32 0.0, %v3142
    %v3144 = vpop.f32.mrf.mxu0
    %3145 = vmatprep.mubr.bf16.mxu0 0
    %3146 = vmatmul.mubr.bf16.gmra.mxu0 %v3044
    %v3147 = vpop.f32.mrf.mxu0
    %v3148 = vadd.f32 0.0, %v3147
    %v3149 = vpop.f32.mrf.mxu0
    %v3150 = vpop.f32.mrf.mxu0
    %v3151 = vadd.f32 0.0, %v3150
    %v3152 = vpop.f32.mrf.mxu0
    %3153 = vmatprep.mubr.bf16.mxu0 0
    %3154 = vmatmul.mubr.bf16.gmra.mxu0 %v3047
    %v3155 = vpop.f32.mrf.mxu0
    %v3156 = vadd.f32 0.0, %v3155
    %v3157 = vpop.f32.mrf.mxu0
    %v3158 = vpop.f32.mrf.mxu0
    %v3159 = vadd.f32 0.0, %v3158
    %v3160 = vpop.f32.mrf.mxu0
    %3161 = vmatprep.mubr.bf16.mxu0 0
    %3162 = vmatmul.mubr.bf16.gmra.mxu0 %v3050
    %v3163 = vpop.f32.mrf.mxu0
    %v3164 = vadd.f32 0.0, %v3163
    %v3165 = vpop.f32.mrf.mxu0
    %v3166 = vpop.f32.mrf.mxu0
    %v3167 = vadd.f32 0.0, %v3166
    %v3168 = vpop.f32.mrf.mxu0
    %3169 = vmatprep.mubr.bf16.mxu0 0
    %3170 = vmatmul.mubr.bf16.gmra.mxu0 %v3053
    %v3171 = vpop.f32.mrf.mxu0
    %v3172 = vadd.f32 0.0, %v3171
    %v3173 = vpop.f32.mrf.mxu0
    %v3174 = vpop.f32.mrf.mxu0
    %v3175 = vadd.f32 0.0, %v3174
    %v3176 = vpop.f32.mrf.mxu0
    %3177 = vmatprep.mubr.bf16.mxu0 0
    %3178 = vmatmul.mubr.bf16.gmra.mxu0 %v3056
    %v3179 = vpop.f32.mrf.mxu0
    %v3180 = vadd.f32 0.0, %v3179
    %v3181 = vpop.f32.mrf.mxu0
    %v3182 = vpop.f32.mrf.mxu0
    %v3183 = vadd.f32 0.0, %v3182
    %v3184 = vpop.f32.mrf.mxu0
    %3185 = vmatprep.mubr.bf16.mxu0 0
    %3186 = vmatmul.mubr.bf16.gmra.mxu0 %v3059
    %v3187 = vpop.f32.mrf.mxu0
    %v3188 = vadd.f32 0.0, %v3187
    %v3189 = vpop.f32.mrf.mxu0
    %v3190 = vpop.f32.mrf.mxu0
    %v3191 = vadd.f32 0.0, %v3190
    %v3192 = vpop.f32.mrf.mxu0
    %3193 = vmatprep.mubr.bf16.mxu0 0
    %3194 = vmatmul.mubr.bf16.gmra.mxu0 %v3062
    %v3195 = vpop.f32.mrf.mxu0
    %v3196 = vadd.f32 0.0, %v3195
    %v3197 = vpop.f32.mrf.mxu0
    %v3198 = vpop.f32.mrf.mxu0
    %v3199 = vadd.f32 0.0, %v3198
    %v3200 = vpop.f32.mrf.mxu0
    %3201 = vmatprep.mubr.bf16.mxu0 0
    %3202 = vmatmul.mubr.bf16.gmra.mxu0 %v3065
    %v3203 = vpop.f32.mrf.mxu0
    %v3204 = vadd.f32 0.0, %v3203
    %v3205 = vpop.f32.mrf.mxu0
    %v3206 = vpop.f32.mrf.mxu0
    %v3207 = vadd.f32 0.0, %v3206
    %v3208 = vpop.f32.mrf.mxu0
    %3209 = vmatprep.mubr.bf16.mxu0 0
    %3210 = vmatmul.mubr.bf16.gmra.mxu0 %v3068
    %v3211 = vpop.f32.mrf.mxu0
    %v3212 = vadd.f32 0.0, %v3211
    %v3213 = vpop.f32.mrf.mxu0
    %v3214 = vpop.f32.mrf.mxu0
    %v3215 = vadd.f32 0.0, %v3214
    %v3216 = vpop.f32.mrf.mxu0
    %3217 = vmatprep.mubr.bf16.mxu0 0
    %3218 = vmatmul.mubr.bf16.gmra.mxu0 %v3071
    %v3219 = vpop.f32.mrf.mxu0
    %v3220 = vadd.f32 0.0, %v3219
    %v3221 = vpop.f32.mrf.mxu0
    %v3222 = vpop.f32.mrf.mxu0
    %v3223 = vadd.f32 0.0, %v3222
    %v3224 = vpop.f32.mrf.mxu0
    %3225 = vmatprep.mubr.bf16.mxu0 0
    %3226 = vmatmul.mubr.bf16.gmra.mxu0 %v3074
    %v3227 = vpop.f32.mrf.mxu0
    %v3228 = vadd.f32 0.0, %v3227
    %v3229 = vpop.f32.mrf.mxu0
    %v3230 = vpop.f32.mrf.mxu0
    %v3231 = vadd.f32 0.0, %v3230
    %v3232 = vpop.f32.mrf.mxu0
    %3233 = vmatprep.mubr.bf16.mxu0 0
    %3234 = vmatmul.mubr.bf16.gmra.mxu0 %v3077
    %v3235 = vpop.f32.mrf.mxu0
    %v3236 = vadd.f32 0.0, %v3235
    %v3237 = vpop.f32.mrf.mxu0
    %v3238 = vpop.f32.mrf.mxu0
    %v3239 = vadd.f32 0.0, %v3238
    %v3240 = vpop.f32.mrf.mxu0
    %3241 = vmatprep.mubr.bf16.mxu0 0
    %3242 = vmatmul.mubr.bf16.gmra.mxu0 %v3080
    %v3243 = vpop.f32.mrf.mxu0
    %v3244 = vadd.f32 0.0, %v3243
    %v3245 = vpop.f32.mrf.mxu0
    %v3246 = vpop.f32.mrf.mxu0
    %v3247 = vadd.f32 0.0, %v3246
    %v3248 = vpop.f32.mrf.mxu0
    %3249 = vmatprep.mubr.bf16.mxu0 0
    %3250 = vmatmul.mubr.bf16.gmra.mxu0 %v3083
    %v3251 = vpop.f32.mrf.mxu0
    %v3252 = vadd.f32 0.0, %v3251
    %v3253 = vpop.f32.mrf.mxu0
    %v3254 = vpop.f32.mrf.mxu0
    %v3255 = vadd.f32 0.0, %v3254
    %v3256 = vpop.f32.mrf.mxu0
    %3257 = vmatprep.mubr.bf16.mxu0 0
    %3258 = vmatmul.mubr.bf16.gmra.mxu0 %v3086
    %v3259 = vpop.f32.mrf.mxu0
    %v3260 = vadd.f32 0.0, %v3259
    %v3261 = vpop.f32.mrf.mxu0
    %v3262 = vpop.f32.mrf.mxu0
    %v3263 = vadd.f32 0.0, %v3262
    %v3264 = vpop.f32.mrf.mxu0
    %3265 = vmatprep.mubr.bf16.mxu0 0
    %3266 = vmatmul.mubr.bf16.gmra.mxu0 %v3089
    %v3267 = vpop.f32.mrf.mxu0
    %v3268 = vadd.f32 0.0, %v3267
    %v3269 = vpop.f32.mrf.mxu0
    %v3270 = vpop.f32.mrf.mxu0
    %v3271 = vadd.f32 0.0, %v3270
    %v3272 = vpop.f32.mrf.mxu0
    %3273 = vmatprep.mubr.bf16.mxu0 0
    %3274 = vmatmul.mubr.bf16.gmra.mxu0 %v3092
    %v3275 = vpop.f32.mrf.mxu0
    %v3276 = vadd.f32 0.0, %v3275
    %v3277 = vpop.f32.mrf.mxu0
    %v3278 = vpop.f32.mrf.mxu0
    %v3279 = vadd.f32 0.0, %v3278
    %v3280 = vpop.f32.mrf.mxu0
    %3281 = vmatprep.mubr.bf16.mxu0 0
    %3282 = vmatmul.mubr.bf16.gmra.mxu0 %v3095
    %v3283 = vpop.f32.mrf.mxu0
    %v3284 = vadd.f32 0.0, %v3283
    %v3285 = vpop.f32.mrf.mxu0
    %v3286 = vpop.f32.mrf.mxu0
    %v3287 = vpop.f32.mrf.mxu0
    %3288 = vdwg.mxu0
    %v3289 = vadd.f32 %v2913, %v3132
    %v3290 = vadd.f32 %v2914, %v3135
    %v3291 = vadd.f32 %v2915, %v3140
    %v3292 = vadd.f32 %v2916, %v3143
    %v3293 = vadd.f32 %v2917, %v3148
    %v3294 = vadd.f32 %v2918, %v3151
    %v3295 = vadd.f32 %v2919, %v3156
    %v3296 = vadd.f32 %v2920, %v3159
    %v3297 = vadd.f32 %v2921, %v3164
    %v3298 = vadd.f32 %v2922, %v3167
    %v3299 = vadd.f32 %v2923, %v3172
    %v3300 = vadd.f32 %v2924, %v3175
    %v3301 = vadd.f32 %v2925, %v3180
    %v3302 = vadd.f32 %v2926, %v3183
    %v3303 = vadd.f32 %v2927, %v3188
    %v3304 = vadd.f32 %v2928, %v3191
    %v3305 = vadd.f32 %v2929, %v3196
    %v3306 = vadd.f32 %v2930, %v3199
    %v3307 = vadd.f32 %v2931, %v3204
    %v3308 = vadd.f32 %v2932, %v3207
    %v3309 = vadd.f32 %v2933, %v3212
    %v3310 = vadd.f32 %v2934, %v3215
    %v3311 = vadd.f32 %v2935, %v3220
    %v3312 = vadd.f32 %v2936, %v3223
    %v3313 = vadd.f32 %v2937, %v3228
    %v3314 = vadd.f32 %v2938, %v3231
    %v3315 = vadd.f32 %v2939, %v3236
    %v3316 = vadd.f32 %v2940, %v3239
    %v3317 = vadd.f32 %v2941, %v3244
    %v3318 = vadd.f32 %v2942, %v3247
    %v3319 = vadd.f32 %v2943, %v3252
    %v3320 = vadd.f32 %v2944, %v3255
    %v3321 = vadd.f32 %v2945, %v3260
    %v3322 = vadd.f32 %v2946, %v3263
    %v3323 = vadd.f32 %v2947, %v3268
    %v3324 = vadd.f32 %v2948, %v3271
    %v3325 = vadd.f32 %v2949, %v3276
    %v3326 = vadd.f32 %v2950, %v3279
    %v3327 = vadd.f32 %v2951, %v3284
    %v3328 = vld [vmem:[%s2] sm:$0x1]
    %v3330 = vlaneseq
    %v3331 = vshrl.u32 %v3330, 7
    %v3332 = vsub.s32 0, %v3331
    %v3333 = vrot.slane %v3328, %v3332
    %v3335 = vadd.f32 %v3289, %v3333
    %v3336 = vadd.f32 %v3290, %v3333
    %v3337 = vadd.f32 %v3291, %v3333
    %v3338 = vadd.f32 %v3292, %v3333
    %v3339 = vadd.f32 %v3293, %v3333
    %v3340 = vadd.f32 %v3294, %v3333
    %v3341 = vadd.f32 %v3295, %v3333
    %v3342 = vadd.f32 %v3296, %v3333
    %v3343 = vadd.f32 %v3297, %v3333
    %v3344 = vadd.f32 %v3298, %v3333
    %v3345 = vadd.f32 %v3299, %v3333
    %v3346 = vadd.f32 %v3300, %v3333
    %v3347 = vadd.f32 %v3301, %v3333
    %v3348 = vadd.f32 %v3302, %v3333
    %v3349 = vadd.f32 %v3303, %v3333
    %v3350 = vadd.f32 %v3304, %v3333
    %v3351 = vadd.f32 %v3305, %v3333
    %v3352 = vadd.f32 %v3306, %v3333
    %v3353 = vadd.f32 %v3307, %v3333
    %v3354 = vadd.f32 %v3308, %v3333
    %v3355 = vadd.f32 %v3309, %v3333
    %v3356 = vadd.f32 %v3310, %v3333
    %v3357 = vadd.f32 %v3311, %v3333
    %v3358 = vadd.f32 %v3312, %v3333
    %v3359 = vadd.f32 %v3313, %v3333
    %v3360 = vadd.f32 %v3314, %v3333
    %v3361 = vadd.f32 %v3315, %v3333
    %v3362 = vadd.f32 %v3316, %v3333
    %v3363 = vadd.f32 %v3317, %v3333
    %v3364 = vadd.f32 %v3318, %v3333
    %v3365 = vadd.f32 %v3319, %v3333
    %v3366 = vadd.f32 %v3320, %v3333
    %v3367 = vadd.f32 %v3321, %v3333
    %v3368 = vadd.f32 %v3322, %v3333
    %v3369 = vadd.f32 %v3323, %v3333
    %v3370 = vadd.f32 %v3324, %v3333
    %v3371 = vadd.f32 %v3325, %v3333
    %v3372 = vadd.f32 %v3326, %v3333
    %v3373 = vadd.f32 %v3327, %v3333
    %v3374 = vmax.f32 %v3335, 0.0
    %v3375 = vmax.f32 %v3336, 0.0
    %v3376 = vmax.f32 %v3337, 0.0
    %v3377 = vmax.f32 %v3338, 0.0
    %v3378 = vmax.f32 %v3339, 0.0
    %v3379 = vmax.f32 %v3340, 0.0
    %v3380 = vmax.f32 %v3341, 0.0
    %v3381 = vmax.f32 %v3342, 0.0
    %v3382 = vmax.f32 %v3343, 0.0
    %v3383 = vmax.f32 %v3344, 0.0
    %v3384 = vmax.f32 %v3345, 0.0
    %v3385 = vmax.f32 %v3346, 0.0
    %v3386 = vmax.f32 %v3347, 0.0
    %v3387 = vmax.f32 %v3348, 0.0
    %v3388 = vmax.f32 %v3349, 0.0
    %v3389 = vmax.f32 %v3350, 0.0
    %v3390 = vmax.f32 %v3351, 0.0
    %v3391 = vmax.f32 %v3352, 0.0
    %v3392 = vmax.f32 %v3353, 0.0
    %v3393 = vmax.f32 %v3354, 0.0
    %v3394 = vmax.f32 %v3355, 0.0
    %v3395 = vmax.f32 %v3356, 0.0
    %v3396 = vmax.f32 %v3357, 0.0
    %v3397 = vmax.f32 %v3358, 0.0
    %v3398 = vmax.f32 %v3359, 0.0
    %v3399 = vmax.f32 %v3360, 0.0
    %v3400 = vmax.f32 %v3361, 0.0
    %v3401 = vmax.f32 %v3362, 0.0
    %v3402 = vmax.f32 %v3363, 0.0
    %v3403 = vmax.f32 %v3364, 0.0
    %v3404 = vmax.f32 %v3365, 0.0
    %v3405 = vmax.f32 %v3366, 0.0
    %v3406 = vmax.f32 %v3367, 0.0
    %v3407 = vmax.f32 %v3368, 0.0
    %v3408 = vmax.f32 %v3369, 0.0
    %v3409 = vmax.f32 %v3370, 0.0
    %v3410 = vmax.f32 %v3371, 0.0
    %v3411 = vmax.f32 %v3372, 0.0
    %v3412 = vmax.f32 %v3373, 0.0
    %vm3452 = vcmask 1046528
    %v3453 = vrot.slane %v3374, 1
    %v3454 = vrot.slane %v3375, 1
    %v3455 = vsel %vm3452, %v3453, %v3454
    %v3456 = vrot.slane %v3376, 1
    %v3457 = vsel %vm3452, %v3454, %v3456
    %v3458 = vrot.slane %v3377, 1
    %v3459 = vsel %vm3452, %v3456, %v3458
    %v3460 = vrot.slane %v3378, 1
    %v3461 = vsel %vm3452, %v3458, %v3460
    %v3462 = vrot.slane %v3379, 1
    %v3463 = vsel %vm3452, %v3460, %v3462
    %v3464 = vrot.slane %v3380, 1
    %v3465 = vsel %vm3452, %v3462, %v3464
    %v3466 = vrot.slane %v3381, 1
    %v3467 = vsel %vm3452, %v3464, %v3466
    %v3468 = vrot.slane %v3382, 1
    %v3469 = vsel %vm3452, %v3466, %v3468
    %v3470 = vrot.slane %v3383, 1
    %v3471 = vsel %vm3452, %v3468, %v3470
    %v3472 = vrot.slane %v3384, 1
    %v3473 = vsel %vm3452, %v3470, %v3472
    %v3474 = vrot.slane %v3385, 1
    %v3475 = vsel %vm3452, %v3472, %v3474
    %v3476 = vrot.slane %v3386, 1
    %v3477 = vsel %vm3452, %v3474, %v3476
    %v3478 = vrot.slane %v3387, 1
    %v3479 = vsel %vm3452, %v3476, %v3478
    %v3480 = vrot.slane %v3388, 1
    %v3481 = vsel %vm3452, %v3478, %v3480
    %v3482 = vrot.slane %v3389, 1
    %v3483 = vsel %vm3452, %v3480, %v3482
    %v3484 = vrot.slane %v3390, 1
    %v3485 = vsel %vm3452, %v3482, %v3484
    %v3486 = vrot.slane %v3391, 1
    %v3487 = vsel %vm3452, %v3484, %v3486
    %v3488 = vrot.slane %v3392, 1
    %v3489 = vsel %vm3452, %v3486, %v3488
    %v3490 = vrot.slane %v3393, 1
    %v3491 = vsel %vm3452, %v3488, %v3490
    %v3492 = vrot.slane %v3394, 1
    %v3493 = vsel %vm3452, %v3490, %v3492
    %v3494 = vrot.slane %v3395, 1
    %v3495 = vsel %vm3452, %v3492, %v3494
    %v3496 = vrot.slane %v3396, 1
    %v3497 = vsel %vm3452, %v3494, %v3496
    %v3498 = vrot.slane %v3397, 1
    %v3499 = vsel %vm3452, %v3496, %v3498
    %v3500 = vrot.slane %v3398, 1
    %v3501 = vsel %vm3452, %v3498, %v3500
    %v3502 = vrot.slane %v3399, 1
    %v3503 = vsel %vm3452, %v3500, %v3502
    %v3504 = vrot.slane %v3400, 1
    %v3505 = vsel %vm3452, %v3502, %v3504
    %v3506 = vrot.slane %v3401, 1
    %v3507 = vsel %vm3452, %v3504, %v3506
    %v3508 = vrot.slane %v3402, 1
    %v3509 = vsel %vm3452, %v3506, %v3508
    %v3510 = vrot.slane %v3403, 1
    %v3511 = vsel %vm3452, %v3508, %v3510
    %v3512 = vrot.slane %v3404, 1
    %v3513 = vsel %vm3452, %v3510, %v3512
    %v3514 = vrot.slane %v3405, 1
    %v3515 = vsel %vm3452, %v3512, %v3514
    %v3516 = vrot.slane %v3406, 1
    %v3517 = vsel %vm3452, %v3514, %v3516
    %v3518 = vrot.slane %v3407, 1
    %v3519 = vsel %vm3452, %v3516, %v3518
    %v3520 = vrot.slane %v3408, 1
    %v3521 = vsel %vm3452, %v3518, %v3520
    %v3522 = vrot.slane %v3409, 1
    %v3523 = vsel %vm3452, %v3520, %v3522
    %v3524 = vrot.slane %v3410, 1
    %v3525 = vsel %vm3452, %v3522, %v3524
    %v3526 = vrot.slane %v3411, 1
    %v3527 = vsel %vm3452, %v3524, %v3526
    %v3528 = vrot.slane %v3412, 1
    %v3529 = vsel %vm3452, %v3526, %v3528
    %v3569 = vmax.f32 %v3374, %v3455
    %v3570 = vmax.f32 %v3375, %v3457
    %v3571 = vmax.f32 %v3376, %v3459
    %v3572 = vmax.f32 %v3377, %v3461
    %v3573 = vmax.f32 %v3378, %v3463
    %v3574 = vmax.f32 %v3379, %v3465
    %v3575 = vmax.f32 %v3380, %v3467
    %v3576 = vmax.f32 %v3381, %v3469
    %v3577 = vmax.f32 %v3382, %v3471
    %v3578 = vmax.f32 %v3383, %v3473
    %v3579 = vmax.f32 %v3384, %v3475
    %v3580 = vmax.f32 %v3385, %v3477
    %v3581 = vmax.f32 %v3386, %v3479
    %v3582 = vmax.f32 %v3387, %v3481
    %v3583 = vmax.f32 %v3388, %v3483
    %v3584 = vmax.f32 %v3389, %v3485
    %v3585 = vmax.f32 %v3390, %v3487
    %v3586 = vmax.f32 %v3391, %v3489
    %v3587 = vmax.f32 %v3392, %v3491
    %v3588 = vmax.f32 %v3393, %v3493
    %v3589 = vmax.f32 %v3394, %v3495
    %v3590 = vmax.f32 %v3395, %v3497
    %v3591 = vmax.f32 %v3396, %v3499
    %v3592 = vmax.f32 %v3397, %v3501
    %v3593 = vmax.f32 %v3398, %v3503
    %v3594 = vmax.f32 %v3399, %v3505
    %v3595 = vmax.f32 %v3400, %v3507
    %v3596 = vmax.f32 %v3401, %v3509
    %v3597 = vmax.f32 %v3402, %v3511
    %v3598 = vmax.f32 %v3403, %v3513
    %v3599 = vmax.f32 %v3404, %v3515
    %v3600 = vmax.f32 %v3405, %v3517
    %v3601 = vmax.f32 %v3406, %v3519
    %v3602 = vmax.f32 %v3407, %v3521
    %v3603 = vmax.f32 %v3408, %v3523
    %v3604 = vmax.f32 %v3409, %v3525
    %v3605 = vmax.f32 %v3410, %v3527
    %v3606 = vmax.f32 %v3411, %v3529
    %v3607 = vmax.f32 %v3412, %v3528
    %vm3646 = vcmask 1042432
    %v3647 = vrot.slane %v3570, 5
    %v3648 = vrot.slane %v3571, 5
    %v3649 = vsel %vm3646, %v3647, %v3648
    %v3650 = vrot.slane %v3572, 5
    %v3651 = vsel %vm3646, %v3648, %v3650
    %v3652 = vrot.slane %v3573, 5
    %v3653 = vsel %vm3646, %v3650, %v3652
    %v3654 = vrot.slane %v3574, 5
    %v3655 = vsel %vm3646, %v3652, %v3654
    %v3656 = vrot.slane %v3575, 5
    %v3657 = vsel %vm3646, %v3654, %v3656
    %v3658 = vrot.slane %v3576, 5
    %v3659 = vsel %vm3646, %v3656, %v3658
    %v3660 = vrot.slane %v3577, 5
    %v3661 = vsel %vm3646, %v3658, %v3660
    %v3662 = vrot.slane %v3578, 5
    %v3663 = vsel %vm3646, %v3660, %v3662
    %v3664 = vrot.slane %v3579, 5
    %v3665 = vsel %vm3646, %v3662, %v3664
    %v3666 = vrot.slane %v3580, 5
    %v3667 = vsel %vm3646, %v3664, %v3666
    %v3668 = vrot.slane %v3581, 5
    %v3669 = vsel %vm3646, %v3666, %v3668
    %v3670 = vrot.slane %v3582, 5
    %v3671 = vsel %vm3646, %v3668, %v3670
    %v3672 = vrot.slane %v3583, 5
    %v3673 = vsel %vm3646, %v3670, %v3672
    %v3674 = vrot.slane %v3584, 5
    %v3675 = vsel %vm3646, %v3672, %v3674
    %v3676 = vrot.slane %v3585, 5
    %v3677 = vsel %vm3646, %v3674, %v3676
    %v3678 = vrot.slane %v3586, 5
    %v3679 = vsel %vm3646, %v3676, %v3678
    %v3680 = vrot.slane %v3587, 5
    %v3681 = vsel %vm3646, %v3678, %v3680
    %v3682 = vrot.slane %v3588, 5
    %v3683 = vsel %vm3646, %v3680, %v3682
    %v3684 = vrot.slane %v3589, 5
    %v3685 = vsel %vm3646, %v3682, %v3684
    %v3686 = vrot.slane %v3590, 5
    %v3687 = vsel %vm3646, %v3684, %v3686
    %v3688 = vrot.slane %v3591, 5
    %v3689 = vsel %vm3646, %v3686, %v3688
    %v3690 = vrot.slane %v3592, 5
    %v3691 = vsel %vm3646, %v3688, %v3690
    %v3692 = vrot.slane %v3593, 5
    %v3693 = vsel %vm3646, %v3690, %v3692
    %v3694 = vrot.slane %v3594, 5
    %v3695 = vsel %vm3646, %v3692, %v3694
    %v3696 = vrot.slane %v3595, 5
    %v3697 = vsel %vm3646, %v3694, %v3696
    %v3698 = vrot.slane %v3596, 5
    %v3699 = vsel %vm3646, %v3696, %v3698
    %v3700 = vrot.slane %v3597, 5
    %v3701 = vsel %vm3646, %v3698, %v3700
    %v3702 = vrot.slane %v3598, 5
    %v3703 = vsel %vm3646, %v3700, %v3702
    %v3704 = vrot.slane %v3599, 5
    %v3705 = vsel %vm3646, %v3702, %v3704
    %v3706 = vrot.slane %v3600, 5
    %v3707 = vsel %vm3646, %v3704, %v3706
    %v3708 = vrot.slane %v3601, 5
    %v3709 = vsel %vm3646, %v3706, %v3708
    %v3710 = vrot.slane %v3602, 5
    %v3711 = vsel %vm3646, %v3708, %v3710
    %v3712 = vrot.slane %v3603, 5
    %v3713 = vsel %vm3646, %v3710, %v3712
    %v3714 = vrot.slane %v3604, 5
    %v3715 = vsel %vm3646, %v3712, %v3714
    %v3716 = vrot.slane %v3605, 5
    %v3717 = vsel %vm3646, %v3714, %v3716
    %v3718 = vrot.slane %v3606, 5
    %v3719 = vsel %vm3646, %v3716, %v3718
    %v3720 = vrot.slane %v3607, 5
    %v3721 = vsel %vm3646, %v3718, %v3720
    %v3759 = vmax.f32 %v3569, %v3649
    %v3760 = vmax.f32 %v3570, %v3651
    %v3761 = vmax.f32 %v3571, %v3653
    %v3762 = vmax.f32 %v3572, %v3655
    %v3763 = vmax.f32 %v3573, %v3657
    %v3764 = vmax.f32 %v3574, %v3659
    %v3765 = vmax.f32 %v3575, %v3661
    %v3766 = vmax.f32 %v3576, %v3663
    %v3767 = vmax.f32 %v3577, %v3665
    %v3768 = vmax.f32 %v3578, %v3667
    %v3769 = vmax.f32 %v3579, %v3669
    %v3770 = vmax.f32 %v3580, %v3671
    %v3771 = vmax.f32 %v3581, %v3673
    %v3772 = vmax.f32 %v3582, %v3675
    %v3773 = vmax.f32 %v3583, %v3677
    %v3774 = vmax.f32 %v3584, %v3679
    %v3775 = vmax.f32 %v3585, %v3681
    %v3776 = vmax.f32 %v3586, %v3683
    %v3777 = vmax.f32 %v3587, %v3685
    %v3778 = vmax.f32 %v3588, %v3687
    %v3779 = vmax.f32 %v3589, %v3689
    %v3780 = vmax.f32 %v3590, %v3691
    %v3781 = vmax.f32 %v3591, %v3693
    %v3782 = vmax.f32 %v3592, %v3695
    %v3783 = vmax.f32 %v3593, %v3697
    %v3784 = vmax.f32 %v3594, %v3699
    %v3785 = vmax.f32 %v3595, %v3701
    %v3786 = vmax.f32 %v3596, %v3703
    %v3787 = vmax.f32 %v3597, %v3705
    %v3788 = vmax.f32 %v3598, %v3707
    %v3789 = vmax.f32 %v3599, %v3709
    %v3790 = vmax.f32 %v3600, %v3711
    %v3791 = vmax.f32 %v3601, %v3713
    %v3792 = vmax.f32 %v3602, %v3715
    %v3793 = vmax.f32 %v3603, %v3717
    %v3794 = vmax.f32 %v3604, %v3719
    %v3795 = vmax.f32 %v3605, %v3721
    %3796 = vst.msk [vmem:[#allocation2] sm:$0xff] %vm173, %v3759
    %3797 = vst.msk [vmem:[#allocation2 + $0x8] sm:$0xff] %vm173, %v3760
    %3798 = vst.msk [vmem:[#allocation2 + $0x10] sm:$0xff] %vm173, %v3761
    %3799 = vst.msk [vmem:[#allocation2 + $0x18] sm:$0xff] %vm173, %v3762
    %3800 = vst.msk [vmem:[#allocation2 + $0x20] sm:$0xff] %vm173, %v3763
    %3801 = vst.msk [vmem:[#allocation2 + $0x28] sm:$0xff] %vm173, %v3764
    %3802 = vst.msk [vmem:[#allocation2 + $0x30] sm:$0xff] %vm173, %v3765
    %3803 = vst.msk [vmem:[#allocation2 + $0x38] sm:$0xff] %vm173, %v3766
    %3804 = vst.msk [vmem:[#allocation2 + $0x40] sm:$0xff] %vm173, %v3767
    %3805 = vst.msk [vmem:[#allocation2 + $0x48] sm:$0xff] %vm173, %v3768
    %3806 = vst.msk [vmem:[#allocation2 + $0x50] sm:$0xff] %vm173, %v3769
    %3807 = vst.msk [vmem:[#allocation2 + $0x58] sm:$0xff] %vm173, %v3770
    %3808 = vst.msk [vmem:[#allocation2 + $0x60] sm:$0xff] %vm173, %v3771
    %3809 = vst.msk [vmem:[#allocation2 + $0x68] sm:$0xff] %vm173, %v3772
    %3810 = vst.msk [vmem:[#allocation2 + $0x70] sm:$0xff] %vm173, %v3773
    %3811 = vst.msk [vmem:[#allocation2 + $0x78] sm:$0xff] %vm173, %v3774
    %3812 = vst.msk [vmem:[#allocation2 + $0x80] sm:$0xff] %vm173, %v3775
    %3813 = vst.msk [vmem:[#allocation2 + $0x88] sm:$0xff] %vm173, %v3776
    %3814 = vst.msk [vmem:[#allocation2 + $0x90] sm:$0xff] %vm173, %v3777
    %3815 = vst.msk [vmem:[#allocation2 + $0x98] sm:$0xff] %vm173, %v3778
    %3816 = vst.msk [vmem:[#allocation2 + $0xa0] sm:$0xff] %vm173, %v3779
    %3817 = vst.msk [vmem:[#allocation2 + $0xa8] sm:$0xff] %vm173, %v3780
    %3818 = vst.msk [vmem:[#allocation2 + $0xb0] sm:$0xff] %vm173, %v3781
    %3819 = vst.msk [vmem:[#allocation2 + $0xb8] sm:$0xff] %vm173, %v3782
    %3820 = vst.msk [vmem:[#allocation2 + $0xc0] sm:$0xff] %vm173, %v3783
    %3821 = vst.msk [vmem:[#allocation2 + $0xc8] sm:$0xff] %vm173, %v3784
    %3822 = vst.msk [vmem:[#allocation2 + $0xd0] sm:$0xff] %vm173, %v3785
    %3823 = vst.msk [vmem:[#allocation2 + $0xd8] sm:$0xff] %vm173, %v3786
    %3824 = vst.msk [vmem:[#allocation2 + $0xe0] sm:$0xff] %vm173, %v3787
    %3825 = vst.msk [vmem:[#allocation2 + $0xe8] sm:$0xff] %vm173, %v3788
    %3826 = vst.msk [vmem:[#allocation2 + $0xf0] sm:$0xff] %vm173, %v3789
    %3827 = vst.msk [vmem:[#allocation2 + $0xf8] sm:$0xff] %vm173, %v3790
    %3828 = vst.msk [vmem:[#allocation2 + $0x100] sm:$0xff] %vm173, %v3791
    %3829 = vst.msk [vmem:[#allocation2 + $0x108] sm:$0xff] %vm173, %v3792
    %3830 = vst.msk [vmem:[#allocation2 + $0x110] sm:$0xff] %vm173, %v3793
    %3831 = vst.msk [vmem:[#allocation2 + $0x118] sm:$0xff] %vm173, %v3794
    %3832 = vst.msk [vmem:[#allocation2 + $0x120] sm:$0xff] %vm173, %v3795
    %3833 = vst.msk [vmem:[#allocation3] sm:$0xff] %vm173, 0.0
    %3834 = vst.msk [vmem:[#allocation3 + $0x8] sm:$0xff] %vm173, 0.0
    %3835 = vst.msk [vmem:[#allocation3 + $0x10] sm:$0xff] %vm173, 0.0
    %3836 = vst.msk [vmem:[#allocation3 + $0x18] sm:$0xff] %vm173, 0.0
    %3837 = vst.msk [vmem:[#allocation3 + $0x20] sm:$0xff] %vm173, 0.0
    %3838 = vst.msk [vmem:[#allocation3 + $0x28] sm:$0xff] %vm173, 0.0
    %3839 = vst.msk [vmem:[#allocation3 + $0x30] sm:$0xff] %vm173, 0.0
    %3840 = vst.msk [vmem:[#allocation3 + $0x38] sm:$0xff] %vm173, 0.0
    %3841 = vst.msk [vmem:[#allocation3 + $0x40] sm:$0xff] %vm173, 0.0
    %3842 = vst.msk [vmem:[#allocation3 + $0x48] sm:$0xff] %vm173, 0.0
    %3843 = vst.msk [vmem:[#allocation3 + $0x50] sm:$0xff] %vm173, 0.0
    %3844 = vst.msk [vmem:[#allocation3 + $0x58] sm:$0xff] %vm173, 0.0
    %3845 = vst.msk [vmem:[#allocation3 + $0x60] sm:$0xff] %vm173, 0.0
    %3846 = vst.msk [vmem:[#allocation3 + $0x68] sm:$0xff] %vm173, 0.0
    %3847 = vst.msk [vmem:[#allocation3 + $0x70] sm:$0xff] %vm173, 0.0
    %3848 = vst.msk [vmem:[#allocation3 + $0x78] sm:$0xff] %vm173, 0.0
    %3849 = vst.msk [vmem:[#allocation3 + $0x80] sm:$0xff] %vm173, 0.0
    %3850 = vst.msk [vmem:[#allocation3 + $0x88] sm:$0xff] %vm173, 0.0
    %3851 = vst.msk [vmem:[#allocation3 + $0x90] sm:$0xff] %vm173, 0.0
    %3852 = vst.msk [vmem:[#allocation3 + $0x98] sm:$0xff] %vm173, 0.0
    %3853 = vst.msk [vmem:[#allocation3 + $0xa0] sm:$0xff] %vm173, 0.0
    %3854 = vst.msk [vmem:[#allocation3 + $0xa8] sm:$0xff] %vm173, 0.0
    %v3855 = vld [vmem:[#allocation2] ss:$2 sm:$0x1f]
    %vm3856 = vcmask 389120
    %3857 = vst.msk [vmem:[#allocation3 + $0x14] sm:$0x1f] %vm3856, %v3855
    %s3858 = scalar_lea.vmem [#allocation2], 26
    %v3859 = vld [vmem:[%s3858] ss:$2 sm:$0x1f]
    %3860 = vst.msk [vmem:[#allocation3 + $0x1d] sm:$0x1f] %vm3856, %v3859
    %s3861 = scalar_lea.vmem [#allocation2], 52
    %v3862 = vld [vmem:[%s3861] ss:$2 sm:$0x1f]
    %3863 = vst.msk [vmem:[#allocation3 + $0x26] sm:$0x1f] %vm3856, %v3862
    %s3864 = scalar_lea.vmem [#allocation2], 78
    %v3865 = vld [vmem:[%s3864] ss:$2 sm:$0x1f]
    %3866 = vst.msk [vmem:[#allocation3 + $0x2f] sm:$0x1f] %vm3856, %v3865
    %s3867 = scalar_lea.vmem [#allocation2], 104
    %v3868 = vld [vmem:[%s3867] ss:$2 sm:$0x1f]
    %3869 = vst.msk [vmem:[#allocation3 + $0x38] sm:$0x1f] %vm3856, %v3868
    %s3870 = scalar_lea.vmem [#allocation2], 176
    %v3871 = vld [vmem:[%s3870] ss:$2 sm:$0x1f]
    %3872 = vst.msk [vmem:[#allocation3 + $0x6c] sm:$0x1f] %vm3856, %v3871
    %s3873 = scalar_lea.vmem [#allocation2], 202
    %v3874 = vld [vmem:[%s3873] ss:$2 sm:$0x1f]
    %3875 = vst.msk [vmem:[#allocation3 + $0x75] sm:$0x1f] %vm3856, %v3874
    %s3876 = scalar_lea.vmem [#allocation2], 228
    %v3877 = vld [vmem:[%s3876] ss:$2 sm:$0x1f]
    %3878 = vst.msk [vmem:[#allocation3 + $0x7e] sm:$0x1f] %vm3856, %v3877
    %s3879 = scalar_lea.vmem [#allocation2], 254
    %v3880 = vld [vmem:[%s3879] ss:$2 sm:$0x1f]
    %3881 = vst.msk [vmem:[#allocation3 + $0x87] sm:$0x1f] %vm3856, %v3880
    %s3882 = scalar_lea.vmem [#allocation2], 280
    %v3883 = vld [vmem:[%s3882] ss:$2 sm:$0x1f]
    %3884 = vst.msk [vmem:[#allocation3 + $0x90] sm:$0x1f] %vm3856, %v3883
    %v3885 = vld [vmem:[#allocation3] sm:$0xff]
    %v3886 = vld [vmem:[#allocation3 + $0x8] sm:$0xff]
    %v3887 = vld [vmem:[#allocation3 + $0x10] sm:$0xff]
    %v3888 = vld [vmem:[#allocation3 + $0x18] sm:$0xff]
    %v3889 = vld [vmem:[#allocation3 + $0x20] sm:$0xff]
    %v3890 = vld [vmem:[#allocation3 + $0x28] sm:$0xff]
    %v3891 = vld [vmem:[#allocation3 + $0x30] sm:$0xff]
    %v3892 = vld [vmem:[#allocation3 + $0x38] sm:$0xff]
    %v3893 = vld [vmem:[#allocation3 + $0x40] sm:$0xff]
    %v3894 = vld [vmem:[#allocation3 + $0x48] sm:$0xff]
    %v3895 = vld [vmem:[#allocation3 + $0x50] sm:$0xff]
    %v3896 = vld [vmem:[#allocation3 + $0x58] sm:$0xff]
    %v3897 = vld [vmem:[#allocation3 + $0x60] sm:$0xff]
    %v3898 = vld [vmem:[#allocation3 + $0x68] sm:$0xff]
    %v3899 = vld [vmem:[#allocation3 + $0x70] sm:$0xff]
    %v3900 = vpack.c.bf16 %v3886, %v3885
    %v3901 = vpack.c.bf16 %v3888, %v3887
    %v3902 = vpack.c.bf16 %v3890, %v3889
    %v3903 = vpack.c.bf16 %v3892, %v3891
    %v3904 = vpack.c.bf16 %v3894, %v3893
    %v3905 = vpack.c.bf16 %v3896, %v3895
    %v3906 = vpack.c.bf16 %v3898, %v3897
    %v3907 = vpack.c.bf16 %v3899, %v3899
    %v3908 = vld [vmem:[%s3] sm:$0xf]
    %v3909 = vld [vmem:[%s3 + $0x4] sm:$0xf]
    %v3910 = vld [vmem:[%s3 + $0x8] sm:$0xf]
    %v3911 = vld [vmem:[%s3 + $0xc] sm:$0xf]
    %v3912 = vld [vmem:[%s3 + $0x10] sm:$0xf]
    %v3913 = vld [vmem:[%s3 + $0x14] sm:$0xf]
    %v3914 = vld [vmem:[#allocation3 + $0x1] sm:$0xff]
    %v3915 = vld [vmem:[#allocation3 + $0x9] sm:$0xff]
    %v3916 = vld [vmem:[#allocation3 + $0x11] sm:$0xff]
    %v3917 = vld [vmem:[#allocation3 + $0x19] sm:$0xff]
    %v3918 = vld [vmem:[#allocation3 + $0x21] sm:$0xff]
    %v3919 = vld [vmem:[#allocation3 + $0x29] sm:$0xff]
    %v3920 = vld [vmem:[#allocation3 + $0x31] sm:$0xff]
    %v3921 = vld [vmem:[#allocation3 + $0x39] sm:$0xff]
    %v3922 = vld [vmem:[#allocation3 + $0x41] sm:$0xff]
    %v3923 = vld [vmem:[#allocation3 + $0x49] sm:$0xff]
    %v3924 = vld [vmem:[#allocation3 + $0x51] sm:$0xff]
    %v3925 = vld [vmem:[#allocation3 + $0x59] sm:$0xff]
    %v3926 = vld [vmem:[#allocation3 + $0x61] sm:$0xff]
    %v3927 = vld [vmem:[#allocation3 + $0x69] sm:$0xff]
    %v3928 = vld [vmem:[#allocation3 + $0x71] sm:$0xff]
    %v3929 = vpack.c.bf16 %v3915, %v3914
    %v3930 = vpack.c.bf16 %v3917, %v3916
    %v3931 = vpack.c.bf16 %v3919, %v3918
    %v3932 = vpack.c.bf16 %v3921, %v3920
    %v3933 = vpack.c.bf16 %v3923, %v3922
    %v3934 = vpack.c.bf16 %v3925, %v3924
    %v3935 = vpack.c.bf16 %v3927, %v3926
    %v3936 = vpack.c.bf16 %v3928, %v3928
    %s3937 = scalar_lea.vmem %s3, 24
    %v3938 = vld [vmem:[%s3937] sm:$0xf]
    %v3939 = vld [vmem:[%s3937 + $0x4] sm:$0xf]
    %v3940 = vld [vmem:[%s3937 + $0x8] sm:$0xf]
    %v3941 = vld [vmem:[%s3937 + $0xc] sm:$0xf]
    %v3942 = vld [vmem:[%s3937 + $0x10] sm:$0xf]
    %v3943 = vld [vmem:[%s3937 + $0x14] sm:$0xf]
    %v3950 = vunpack.c.l.b16 %v3938
    %v3951 = vunpack.c.l.b16 %v3939
    %v3952 = vunpack.c.l.b16 %v3940
    %v3953 = vunpack.c.l.b16 %v3941
    %v3954 = vunpack.c.l.b16 %v3942
    %v3955 = vunpack.c.l.b16 %v3943
    %v3956 = vpack.c.b16 %v3951, %v3950
    %v3957 = vpack.c.b16 %v3953, %v3952
    %v3958 = vpack.c.b16 %v3955, %v3954
    %v3963 = vsel %vm173, %v3929, 0
    %v3966 = vsel %vm173, %v3930, 0
    %v3969 = vsel %vm173, %v3931, 0
    %v3972 = vsel %vm173, %v3932, 0
    %v3975 = vsel %vm173, %v3933, 0
    %v3978 = vsel %vm173, %v3934, 0
    %v3981 = vsel %vm173, %v3935, 0
    %v3984 = vsel %vm173, %v3936, 0
    %3986 = vmatprep.subr.bf16.mxu0 0
    %3987 = vmatpush1.bf16.msra.mxu0 0
    %3988 = vmatprep.subr.bf16.mxu0 0
    %3989 = vmatpush1.bf16.msra.mxu0 0
    %3990 = vmatprep.subr.bf16.mxu0 0
    %3991 = vmatpush1.bf16.msra.mxu0 0
    %3992 = vmatprep.subr.bf16.mxu0 0
    %3993 = vmatpush1.bf16.msra.mxu0 0
    %3994 = vmatprep.subr.bf16.mxu0 0
    %3995 = vmatpush1.bf16.msra.mxu0 0
    %3996 = vmatprep.subr.bf16.mxu0 0
    %3997 = vmatpush1.bf16.msra.mxu0 %v3958
    %3998 = vmatprep.subr.bf16.mxu0 0
    %3999 = vmatpush1.bf16.msra.mxu0 %v3957
    %4000 = vmatprep.subr.bf16.mxu0 0
    %4001 = vmatpush1.bf16.msra.mxu0 %v3956
    %4002 = vmatprep.subr.bf16.mxu0 0
    %4003 = vmatpush2.bf16.msra.mxu0 0
    %4004 = vmatprep.subr.bf16.mxu0 0
    %4005 = vmatpush2.bf16.msra.mxu0 0
    %4006 = vmatprep.subr.bf16.mxu0 0
    %4007 = vmatpush2.bf16.msra.mxu0 0
    %4008 = vmatprep.subr.bf16.mxu0 0
    %4009 = vmatpush2.bf16.msra.mxu0 0
    %4010 = vmatprep.subr.bf16.mxu0 0
    %4011 = vmatpush2.bf16.msra.mxu0 0
    %4012 = vmatprep.subr.bf16.mxu0 0
    %4013 = vmatpush2.bf16.msra.mxu0 0
    %4014 = vmatprep.subr.bf16.mxu0 0
    %4015 = vmatpush2.bf16.msra.mxu0 0
    %4016 = vmatprep.subr.bf16.mxu0 0
    %4017 = vmatpush2.bf16.msra.mxu0 0
    %4018 = vmatprep.mubr.bf16.mxu0 0
    %4019 = vmatmul.mubr.bf16.gmra.mxu0 %v3963
    %v4020 = vpop.f32.mrf.mxu0
    %v4021 = vadd.f32 0.0, %v4020
    %v4022 = vpop.f32.mrf.mxu0
    %v4023 = vpop.f32.mrf.mxu0
    %v4024 = vadd.f32 0.0, %v4023
    %v4025 = vpop.f32.mrf.mxu0
    %4026 = vmatprep.mubr.bf16.mxu0 0
    %4027 = vmatmul.mubr.bf16.gmra.mxu0 %v3966
    %v4028 = vpop.f32.mrf.mxu0
    %v4029 = vadd.f32 0.0, %v4028
    %v4030 = vpop.f32.mrf.mxu0
    %v4031 = vpop.f32.mrf.mxu0
    %v4032 = vadd.f32 0.0, %v4031
    %v4033 = vpop.f32.mrf.mxu0
    %4034 = vmatprep.mubr.bf16.mxu0 0
    %4035 = vmatmul.mubr.bf16.gmra.mxu0 %v3969
    %v4036 = vpop.f32.mrf.mxu0
    %v4037 = vadd.f32 0.0, %v4036
    %v4038 = vpop.f32.mrf.mxu0
    %v4039 = vpop.f32.mrf.mxu0
    %v4040 = vadd.f32 0.0, %v4039
    %v4041 = vpop.f32.mrf.mxu0
    %4042 = vmatprep.mubr.bf16.mxu0 0
    %4043 = vmatmul.mubr.bf16.gmra.mxu0 %v3972
    %v4044 = vpop.f32.mrf.mxu0
    %v4045 = vpop.f32.mrf.mxu0
    %v4046 = vpop.f32.mrf.mxu0
    %v4047 = vpop.f32.mrf.mxu0
    %4048 = vmatprep.mubr.bf16.mxu0 0
    %4049 = vmatmul.mubr.bf16.gmra.mxu0 %v3975
    %v4050 = vpop.f32.mrf.mxu0
    %v4051 = vpop.f32.mrf.mxu0
    %v4052 = vpop.f32.mrf.mxu0
    %v4053 = vpop.f32.mrf.mxu0
    %4054 = vmatprep.mubr.bf16.mxu0 0
    %4055 = vmatmul.mubr.bf16.gmra.mxu0 %v3978
    %v4056 = vpop.f32.mrf.mxu0
    %v4057 = vpop.f32.mrf.mxu0
    %v4058 = vpop.f32.mrf.mxu0
    %v4059 = vadd.f32 0.0, %v4058
    %v4060 = vpop.f32.mrf.mxu0
    %4061 = vmatprep.mubr.bf16.mxu0 0
    %4062 = vmatmul.mubr.bf16.gmra.mxu0 %v3981
    %v4063 = vpop.f32.mrf.mxu0
    %v4064 = vadd.f32 0.0, %v4063
    %v4065 = vpop.f32.mrf.mxu0
    %v4066 = vpop.f32.mrf.mxu0
    %v4067 = vadd.f32 0.0, %v4066
    %v4068 = vpop.f32.mrf.mxu0
    %4069 = vmatprep.mubr.bf16.mxu0 0
    %4070 = vmatmul.mubr.bf16.gmra.mxu0 %v3984
    %v4071 = vpop.f32.mrf.mxu0
    %v4072 = vadd.f32 0.0, %v4071
    %v4073 = vpop.f32.mrf.mxu0
    %v4074 = vpop.f32.mrf.mxu0
    %v4075 = vpop.f32.mrf.mxu0
    %4076 = vdwg.mxu0
    %v4083 = vunpack.c.l.b16 %v3908
    %v4084 = vunpack.c.l.b16 %v3909
    %v4085 = vunpack.c.l.b16 %v3910
    %v4086 = vunpack.c.l.b16 %v3911
    %v4087 = vunpack.c.l.b16 %v3912
    %v4088 = vunpack.c.l.b16 %v3913
    %v4089 = vpack.c.b16 %v4084, %v4083
    %v4090 = vpack.c.b16 %v4086, %v4085
    %v4091 = vpack.c.b16 %v4088, %v4087
    %v4096 = vsel %vm173, %v3900, 0
    %v4099 = vsel %vm173, %v3901, 0
    %v4102 = vsel %vm173, %v3902, 0
    %v4105 = vsel %vm173, %v3903, 0
    %v4108 = vsel %vm173, %v3904, 0
    %v4111 = vsel %vm173, %v3905, 0
    %v4114 = vsel %vm173, %v3906, 0
    %v4117 = vsel %vm173, %v3907, 0
    %4119 = vmatprep.subr.bf16.mxu0 0
    %4120 = vmatpush1.bf16.msra.mxu0 0
    %4121 = vmatprep.subr.bf16.mxu0 0
    %4122 = vmatpush1.bf16.msra.mxu0 0
    %4123 = vmatprep.subr.bf16.mxu0 0
    %4124 = vmatpush1.bf16.msra.mxu0 0
    %4125 = vmatprep.subr.bf16.mxu0 0
    %4126 = vmatpush1.bf16.msra.mxu0 0
    %4127 = vmatprep.subr.bf16.mxu0 0
    %4128 = vmatpush1.bf16.msra.mxu0 0
    %4129 = vmatprep.subr.bf16.mxu0 0
    %4130 = vmatpush1.bf16.msra.mxu0 %v4091
    %4131 = vmatprep.subr.bf16.mxu0 0
    %4132 = vmatpush1.bf16.msra.mxu0 %v4090
    %4133 = vmatprep.subr.bf16.mxu0 0
    %4134 = vmatpush1.bf16.msra.mxu0 %v4089
    %4135 = vmatprep.subr.bf16.mxu0 0
    %4136 = vmatpush2.bf16.msra.mxu0 0
    %4137 = vmatprep.subr.bf16.mxu0 0
    %4138 = vmatpush2.bf16.msra.mxu0 0
    %4139 = vmatprep.subr.bf16.mxu0 0
    %4140 = vmatpush2.bf16.msra.mxu0 0
    %4141 = vmatprep.subr.bf16.mxu0 0
    %4142 = vmatpush2.bf16.msra.mxu0 0
    %4143 = vmatprep.subr.bf16.mxu0 0
    %4144 = vmatpush2.bf16.msra.mxu0 0
    %4145 = vmatprep.subr.bf16.mxu0 0
    %4146 = vmatpush2.bf16.msra.mxu0 0
    %4147 = vmatprep.subr.bf16.mxu0 0
    %4148 = vmatpush2.bf16.msra.mxu0 0
    %4149 = vmatprep.subr.bf16.mxu0 0
    %4150 = vmatpush2.bf16.msra.mxu0 0
    %4151 = vmatprep.mubr.bf16.mxu0 0
    %4152 = vmatmul.mubr.bf16.gmra.mxu0 %v4096
    %v4153 = vpop.f32.mrf.mxu0
    %v4154 = vadd.f32 %v4021, %v4153
    %v4155 = vpop.f32.mrf.mxu0
    %v4156 = vpop.f32.mrf.mxu0
    %v4157 = vadd.f32 %v4024, %v4156
    %v4158 = vpop.f32.mrf.mxu0
    %4159 = vmatprep.mubr.bf16.mxu0 0
    %4160 = vmatmul.mubr.bf16.gmra.mxu0 %v4099
    %v4161 = vpop.f32.mrf.mxu0
    %v4162 = vadd.f32 %v4029, %v4161
    %v4163 = vpop.f32.mrf.mxu0
    %v4164 = vpop.f32.mrf.mxu0
    %v4165 = vadd.f32 %v4032, %v4164
    %v4166 = vpop.f32.mrf.mxu0
    %4167 = vmatprep.mubr.bf16.mxu0 0
    %4168 = vmatmul.mubr.bf16.gmra.mxu0 %v4102
    %v4169 = vpop.f32.mrf.mxu0
    %v4170 = vadd.f32 %v4037, %v4169
    %v4171 = vpop.f32.mrf.mxu0
    %v4172 = vpop.f32.mrf.mxu0
    %v4173 = vadd.f32 %v4040, %v4172
    %v4174 = vpop.f32.mrf.mxu0
    %4175 = vmatprep.mubr.bf16.mxu0 0
    %4176 = vmatmul.mubr.bf16.gmra.mxu0 %v4105
    %v4177 = vpop.f32.mrf.mxu0
    %v4178 = vpop.f32.mrf.mxu0
    %v4179 = vpop.f32.mrf.mxu0
    %v4180 = vpop.f32.mrf.mxu0
    %4181 = vmatprep.mubr.bf16.mxu0 0
    %4182 = vmatmul.mubr.bf16.gmra.mxu0 %v4108
    %v4183 = vpop.f32.mrf.mxu0
    %v4184 = vpop.f32.mrf.mxu0
    %v4185 = vpop.f32.mrf.mxu0
    %v4186 = vpop.f32.mrf.mxu0
    %4187 = vmatprep.mubr.bf16.mxu0 0
    %4188 = vmatmul.mubr.bf16.gmra.mxu0 %v4111
    %v4189 = vpop.f32.mrf.mxu0
    %v4190 = vpop.f32.mrf.mxu0
    %v4191 = vpop.f32.mrf.mxu0
    %v4192 = vadd.f32 %v4059, %v4191
    %v4193 = vpop.f32.mrf.mxu0
    %4194 = vmatprep.mubr.bf16.mxu0 0
    %4195 = vmatmul.mubr.bf16.gmra.mxu0 %v4114
    %v4196 = vpop.f32.mrf.mxu0
    %v4197 = vadd.f32 %v4064, %v4196
    %v4198 = vpop.f32.mrf.mxu0
    %v4199 = vpop.f32.mrf.mxu0
    %v4200 = vadd.f32 %v4067, %v4199
    %v4201 = vpop.f32.mrf.mxu0
    %4202 = vmatprep.mubr.bf16.mxu0 0
    %4203 = vmatmul.mubr.bf16.gmra.mxu0 %v4117
    %v4204 = vpop.f32.mrf.mxu0
    %v4205 = vadd.f32 %v4072, %v4204
    %v4206 = vpop.f32.mrf.mxu0
    %v4207 = vpop.f32.mrf.mxu0
    %v4208 = vpop.f32.mrf.mxu0
    %4209 = vdwg.mxu0
    %v4210 = vld [vmem:[#allocation3 + $0x2] sm:$0xff]
    %v4211 = vld [vmem:[#allocation3 + $0xa] sm:$0xff]
    %v4212 = vld [vmem:[#allocation3 + $0x12] sm:$0xff]
    %v4213 = vld [vmem:[#allocation3 + $0x1a] sm:$0xff]
    %v4214 = vld [vmem:[#allocation3 + $0x22] sm:$0xff]
    %v4215 = vld [vmem:[#allocation3 + $0x2a] sm:$0xff]
    %v4216 = vld [vmem:[#allocation3 + $0x32] sm:$0xff]
    %v4217 = vld [vmem:[#allocation3 + $0x3a] sm:$0xff]
    %v4218 = vld [vmem:[#allocation3 + $0x42] sm:$0xff]
    %v4219 = vld [vmem:[#allocation3 + $0x4a] sm:$0xff]
    %v4220 = vld [vmem:[#allocation3 + $0x52] sm:$0xff]
    %v4221 = vld [vmem:[#allocation3 + $0x5a] sm:$0xff]
    %v4222 = vld [vmem:[#allocation3 + $0x62] sm:$0xff]
    %v4223 = vld [vmem:[#allocation3 + $0x6a] sm:$0xff]
    %v4224 = vld [vmem:[#allocation3 + $0x72] sm:$0xff]
    %v4225 = vpack.c.bf16 %v4211, %v4210
    %v4226 = vpack.c.bf16 %v4213, %v4212
    %v4227 = vpack.c.bf16 %v4215, %v4214
    %v4228 = vpack.c.bf16 %v4217, %v4216
    %v4229 = vpack.c.bf16 %v4219, %v4218
    %v4230 = vpack.c.bf16 %v4221, %v4220
    %v4231 = vpack.c.bf16 %v4223, %v4222
    %v4232 = vpack.c.bf16 %v4224, %v4224
    %s4233 = scalar_lea.vmem %s3, 48
    %v4234 = vld [vmem:[%s4233] sm:$0xf]
    %v4235 = vld [vmem:[%s4233 + $0x4] sm:$0xf]
    %v4236 = vld [vmem:[%s4233 + $0x8] sm:$0xf]
    %v4237 = vld [vmem:[%s4233 + $0xc] sm:$0xf]
    %v4238 = vld [vmem:[%s4233 + $0x10] sm:$0xf]
    %v4239 = vld [vmem:[%s4233 + $0x14] sm:$0xf]
    %v4246 = vunpack.c.l.b16 %v4234
    %v4247 = vunpack.c.l.b16 %v4235
    %v4248 = vunpack.c.l.b16 %v4236
    %v4249 = vunpack.c.l.b16 %v4237
    %v4250 = vunpack.c.l.b16 %v4238
    %v4251 = vunpack.c.l.b16 %v4239
    %v4252 = vpack.c.b16 %v4247, %v4246
    %v4253 = vpack.c.b16 %v4249, %v4248
    %v4254 = vpack.c.b16 %v4251, %v4250
    %v4259 = vsel %vm173, %v4225, 0
    %v4262 = vsel %vm173, %v4226, 0
    %v4265 = vsel %vm173, %v4227, 0
    %v4268 = vsel %vm173, %v4228, 0
    %v4271 = vsel %vm173, %v4229, 0
    %v4274 = vsel %vm173, %v4230, 0
    %v4277 = vsel %vm173, %v4231, 0
    %v4280 = vsel %vm173, %v4232, 0
    %4282 = vmatprep.subr.bf16.mxu0 0
    %4283 = vmatpush1.bf16.msra.mxu0 0
    %4284 = vmatprep.subr.bf16.mxu0 0
    %4285 = vmatpush1.bf16.msra.mxu0 0
    %4286 = vmatprep.subr.bf16.mxu0 0
    %4287 = vmatpush1.bf16.msra.mxu0 0
    %4288 = vmatprep.subr.bf16.mxu0 0
    %4289 = vmatpush1.bf16.msra.mxu0 0
    %4290 = vmatprep.subr.bf16.mxu0 0
    %4291 = vmatpush1.bf16.msra.mxu0 0
    %4292 = vmatprep.subr.bf16.mxu0 0
    %4293 = vmatpush1.bf16.msra.mxu0 %v4254
    %4294 = vmatprep.subr.bf16.mxu0 0
    %4295 = vmatpush1.bf16.msra.mxu0 %v4253
    %4296 = vmatprep.subr.bf16.mxu0 0
    %4297 = vmatpush1.bf16.msra.mxu0 %v4252
    %4298 = vmatprep.subr.bf16.mxu0 0
    %4299 = vmatpush2.bf16.msra.mxu0 0
    %4300 = vmatprep.subr.bf16.mxu0 0
    %4301 = vmatpush2.bf16.msra.mxu0 0
    %4302 = vmatprep.subr.bf16.mxu0 0
    %4303 = vmatpush2.bf16.msra.mxu0 0
    %4304 = vmatprep.subr.bf16.mxu0 0
    %4305 = vmatpush2.bf16.msra.mxu0 0
    %4306 = vmatprep.subr.bf16.mxu0 0
    %4307 = vmatpush2.bf16.msra.mxu0 0
    %4308 = vmatprep.subr.bf16.mxu0 0
    %4309 = vmatpush2.bf16.msra.mxu0 0
    %4310 = vmatprep.subr.bf16.mxu0 0
    %4311 = vmatpush2.bf16.msra.mxu0 0
    %4312 = vmatprep.subr.bf16.mxu0 0
    %4313 = vmatpush2.bf16.msra.mxu0 0
    %4314 = vmatprep.mubr.bf16.mxu0 0
    %4315 = vmatmul.mubr.bf16.gmra.mxu0 %v4259
    %v4316 = vpop.f32.mrf.mxu0
    %v4317 = vadd.f32 0.0, %v4316
    %v4318 = vpop.f32.mrf.mxu0
    %v4319 = vpop.f32.mrf.mxu0
    %v4320 = vadd.f32 0.0, %v4319
    %v4321 = vpop.f32.mrf.mxu0
    %4322 = vmatprep.mubr.bf16.mxu0 0
    %4323 = vmatmul.mubr.bf16.gmra.mxu0 %v4262
    %v4324 = vpop.f32.mrf.mxu0
    %v4325 = vadd.f32 0.0, %v4324
    %v4326 = vpop.f32.mrf.mxu0
    %v4327 = vpop.f32.mrf.mxu0
    %v4328 = vadd.f32 0.0, %v4327
    %v4329 = vpop.f32.mrf.mxu0
    %4330 = vmatprep.mubr.bf16.mxu0 0
    %4331 = vmatmul.mubr.bf16.gmra.mxu0 %v4265
    %v4332 = vpop.f32.mrf.mxu0
    %v4333 = vadd.f32 0.0, %v4332
    %v4334 = vpop.f32.mrf.mxu0
    %v4335 = vpop.f32.mrf.mxu0
    %v4336 = vadd.f32 0.0, %v4335
    %v4337 = vpop.f32.mrf.mxu0
    %4338 = vmatprep.mubr.bf16.mxu0 0
    %4339 = vmatmul.mubr.bf16.gmra.mxu0 %v4268
    %v4340 = vpop.f32.mrf.mxu0
    %v4341 = vpop.f32.mrf.mxu0
    %v4342 = vpop.f32.mrf.mxu0
    %v4343 = vpop.f32.mrf.mxu0
    %4344 = vmatprep.mubr.bf16.mxu0 0
    %4345 = vmatmul.mubr.bf16.gmra.mxu0 %v4271
    %v4346 = vpop.f32.mrf.mxu0
    %v4347 = vpop.f32.mrf.mxu0
    %v4348 = vpop.f32.mrf.mxu0
    %v4349 = vpop.f32.mrf.mxu0
    %4350 = vmatprep.mubr.bf16.mxu0 0
    %4351 = vmatmul.mubr.bf16.gmra.mxu0 %v4274
    %v4352 = vpop.f32.mrf.mxu0
    %v4353 = vpop.f32.mrf.mxu0
    %v4354 = vpop.f32.mrf.mxu0
    %v4355 = vadd.f32 0.0, %v4354
    %v4356 = vpop.f32.mrf.mxu0
    %4357 = vmatprep.mubr.bf16.mxu0 0
    %4358 = vmatmul.mubr.bf16.gmra.mxu0 %v4277
    %v4359 = vpop.f32.mrf.mxu0
    %v4360 = vadd.f32 0.0, %v4359
    %v4361 = vpop.f32.mrf.mxu0
    %v4362 = vpop.f32.mrf.mxu0
    %v4363 = vadd.f32 0.0, %v4362
    %v4364 = vpop.f32.mrf.mxu0
    %4365 = vmatprep.mubr.bf16.mxu0 0
    %4366 = vmatmul.mubr.bf16.gmra.mxu0 %v4280
    %v4367 = vpop.f32.mrf.mxu0
    %v4368 = vadd.f32 0.0, %v4367
    %v4369 = vpop.f32.mrf.mxu0
    %v4370 = vpop.f32.mrf.mxu0
    %v4371 = vpop.f32.mrf.mxu0
    %4372 = vdwg.mxu0
    %v4373 = vadd.f32 %v4154, %v4317
    %v4374 = vadd.f32 %v4157, %v4320
    %v4375 = vadd.f32 %v4162, %v4325
    %v4376 = vadd.f32 %v4165, %v4328
    %v4377 = vadd.f32 %v4170, %v4333
    %v4378 = vadd.f32 %v4173, %v4336
    %v4379 = vadd.f32 %v4192, %v4355
    %v4380 = vadd.f32 %v4197, %v4360
    %v4381 = vadd.f32 %v4200, %v4363
    %v4382 = vadd.f32 %v4205, %v4368
    %v4383 = vld [vmem:[#allocation3 + $0x3] sm:$0xff]
    %v4384 = vld [vmem:[#allocation3 + $0xb] sm:$0xff]
    %v4385 = vld [vmem:[#allocation3 + $0x13] sm:$0xff]
    %v4386 = vld [vmem:[#allocation3 + $0x1b] sm:$0xff]
    %v4387 = vld [vmem:[#allocation3 + $0x23] sm:$0xff]
    %v4388 = vld [vmem:[#allocation3 + $0x2b] sm:$0xff]
    %v4389 = vld [vmem:[#allocation3 + $0x33] sm:$0xff]
    %v4390 = vld [vmem:[#allocation3 + $0x3b] sm:$0xff]
    %v4391 = vld [vmem:[#allocation3 + $0x43] sm:$0xff]
    %v4392 = vld [vmem:[#allocation3 + $0x4b] sm:$0xff]
    %v4393 = vld [vmem:[#allocation3 + $0x53] sm:$0xff]
    %v4394 = vld [vmem:[#allocation3 + $0x5b] sm:$0xff]
    %v4395 = vld [vmem:[#allocation3 + $0x63] sm:$0xff]
    %v4396 = vld [vmem:[#allocation3 + $0x6b] sm:$0xff]
    %v4397 = vld [vmem:[#allocation3 + $0x73] sm:$0xff]
    %v4398 = vpack.c.bf16 %v4384, %v4383
    %v4399 = vpack.c.bf16 %v4386, %v4385
    %v4400 = vpack.c.bf16 %v4388, %v4387
    %v4401 = vpack.c.bf16 %v4390, %v4389
    %v4402 = vpack.c.bf16 %v4392, %v4391
    %v4403 = vpack.c.bf16 %v4394, %v4393
    %v4404 = vpack.c.bf16 %v4396, %v4395
    %v4405 = vpack.c.bf16 %v4397, %v4397
    %s4406 = scalar_lea.vmem %s3, 72
    %v4407 = vld [vmem:[%s4406] sm:$0xf]
    %v4408 = vld [vmem:[%s4406 + $0x4] sm:$0xf]
    %v4409 = vld [vmem:[%s4406 + $0x8] sm:$0xf]
    %v4410 = vld [vmem:[%s4406 + $0xc] sm:$0xf]
    %v4411 = vld [vmem:[%s4406 + $0x10] sm:$0xf]
    %v4412 = vld [vmem:[%s4406 + $0x14] sm:$0xf]
    %v4419 = vunpack.c.l.b16 %v4407
    %v4420 = vunpack.c.l.b16 %v4408
    %v4421 = vunpack.c.l.b16 %v4409
    %v4422 = vunpack.c.l.b16 %v4410
    %v4423 = vunpack.c.l.b16 %v4411
    %v4424 = vunpack.c.l.b16 %v4412
    %v4425 = vpack.c.b16 %v4420, %v4419
    %v4426 = vpack.c.b16 %v4422, %v4421
    %v4427 = vpack.c.b16 %v4424, %v4423
    %v4432 = vsel %vm173, %v4398, 0
    %v4435 = vsel %vm173, %v4399, 0
    %v4438 = vsel %vm173, %v4400, 0
    %v4441 = vsel %vm173, %v4401, 0
    %v4444 = vsel %vm173, %v4402, 0
    %v4447 = vsel %vm173, %v4403, 0
    %v4450 = vsel %vm173, %v4404, 0
    %v4453 = vsel %vm173, %v4405, 0
    %4455 = vmatprep.subr.bf16.mxu0 0
    %4456 = vmatpush1.bf16.msra.mxu0 0
    %4457 = vmatprep.subr.bf16.mxu0 0
    %4458 = vmatpush1.bf16.msra.mxu0 0
    %4459 = vmatprep.subr.bf16.mxu0 0
    %4460 = vmatpush1.bf16.msra.mxu0 0
    %4461 = vmatprep.subr.bf16.mxu0 0
    %4462 = vmatpush1.bf16.msra.mxu0 0
    %4463 = vmatprep.subr.bf16.mxu0 0
    %4464 = vmatpush1.bf16.msra.mxu0 0
    %4465 = vmatprep.subr.bf16.mxu0 0
    %4466 = vmatpush1.bf16.msra.mxu0 %v4427
    %4467 = vmatprep.subr.bf16.mxu0 0
    %4468 = vmatpush1.bf16.msra.mxu0 %v4426
    %4469 = vmatprep.subr.bf16.mxu0 0
    %4470 = vmatpush1.bf16.msra.mxu0 %v4425
    %4471 = vmatprep.subr.bf16.mxu0 0
    %4472 = vmatpush2.bf16.msra.mxu0 0
    %4473 = vmatprep.subr.bf16.mxu0 0
    %4474 = vmatpush2.bf16.msra.mxu0 0
    %4475 = vmatprep.subr.bf16.mxu0 0
    %4476 = vmatpush2.bf16.msra.mxu0 0
    %4477 = vmatprep.subr.bf16.mxu0 0
    %4478 = vmatpush2.bf16.msra.mxu0 0
    %4479 = vmatprep.subr.bf16.mxu0 0
    %4480 = vmatpush2.bf16.msra.mxu0 0
    %4481 = vmatprep.subr.bf16.mxu0 0
    %4482 = vmatpush2.bf16.msra.mxu0 0
    %4483 = vmatprep.subr.bf16.mxu0 0
    %4484 = vmatpush2.bf16.msra.mxu0 0
    %4485 = vmatprep.subr.bf16.mxu0 0
    %4486 = vmatpush2.bf16.msra.mxu0 0
    %4487 = vmatprep.mubr.bf16.mxu0 0
    %4488 = vmatmul.mubr.bf16.gmra.mxu0 %v4432
    %v4489 = vpop.f32.mrf.mxu0
    %v4490 = vadd.f32 0.0, %v4489
    %v4491 = vpop.f32.mrf.mxu0
    %v4492 = vpop.f32.mrf.mxu0
    %v4493 = vadd.f32 0.0, %v4492
    %v4494 = vpop.f32.mrf.mxu0
    %4495 = vmatprep.mubr.bf16.mxu0 0
    %4496 = vmatmul.mubr.bf16.gmra.mxu0 %v4435
    %v4497 = vpop.f32.mrf.mxu0
    %v4498 = vadd.f32 0.0, %v4497
    %v4499 = vpop.f32.mrf.mxu0
    %v4500 = vpop.f32.mrf.mxu0
    %v4501 = vadd.f32 0.0, %v4500
    %v4502 = vpop.f32.mrf.mxu0
    %4503 = vmatprep.mubr.bf16.mxu0 0
    %4504 = vmatmul.mubr.bf16.gmra.mxu0 %v4438
    %v4505 = vpop.f32.mrf.mxu0
    %v4506 = vadd.f32 0.0, %v4505
    %v4507 = vpop.f32.mrf.mxu0
    %v4508 = vpop.f32.mrf.mxu0
    %v4509 = vadd.f32 0.0, %v4508
    %v4510 = vpop.f32.mrf.mxu0
    %4511 = vmatprep.mubr.bf16.mxu0 0
    %4512 = vmatmul.mubr.bf16.gmra.mxu0 %v4441
    %v4513 = vpop.f32.mrf.mxu0
    %v4514 = vpop.f32.mrf.mxu0
    %v4515 = vpop.f32.mrf.mxu0
    %v4516 = vpop.f32.mrf.mxu0
    %4517 = vmatprep.mubr.bf16.mxu0 0
    %4518 = vmatmul.mubr.bf16.gmra.mxu0 %v4444
    %v4519 = vpop.f32.mrf.mxu0
    %v4520 = vpop.f32.mrf.mxu0
    %v4521 = vpop.f32.mrf.mxu0
    %v4522 = vpop.f32.mrf.mxu0
    %4523 = vmatprep.mubr.bf16.mxu0 0
    %4524 = vmatmul.mubr.bf16.gmra.mxu0 %v4447
    %v4525 = vpop.f32.mrf.mxu0
    %v4526 = vpop.f32.mrf.mxu0
    %v4527 = vpop.f32.mrf.mxu0
    %v4528 = vadd.f32 0.0, %v4527
    %v4529 = vpop.f32.mrf.mxu0
    %4530 = vmatprep.mubr.bf16.mxu0 0
    %4531 = vmatmul.mubr.bf16.gmra.mxu0 %v4450
    %v4532 = vpop.f32.mrf.mxu0
    %v4533 = vadd.f32 0.0, %v4532
    %v4534 = vpop.f32.mrf.mxu0
    %v4535 = vpop.f32.mrf.mxu0
    %v4536 = vadd.f32 0.0, %v4535
    %v4537 = vpop.f32.mrf.mxu0
    %4538 = vmatprep.mubr.bf16.mxu0 0
    %4539 = vmatmul.mubr.bf16.gmra.mxu0 %v4453
    %v4540 = vpop.f32.mrf.mxu0
    %v4541 = vadd.f32 0.0, %v4540
    %v4542 = vpop.f32.mrf.mxu0
    %v4543 = vpop.f32.mrf.mxu0
    %v4544 = vpop.f32.mrf.mxu0
    %4545 = vdwg.mxu0
    %v4546 = vadd.f32 %v4373, %v4490
    %v4547 = vadd.f32 %v4374, %v4493
    %v4548 = vadd.f32 %v4375, %v4498
    %v4549 = vadd.f32 %v4376, %v4501
    %v4550 = vadd.f32 %v4377, %v4506
    %v4551 = vadd.f32 %v4378, %v4509
    %v4552 = vadd.f32 %v4379, %v4528
    %v4553 = vadd.f32 %v4380, %v4533
    %v4554 = vadd.f32 %v4381, %v4536
    %v4555 = vadd.f32 %v4382, %v4541
    %v4556 = vld [vmem:[#allocation3 + $0x4] sm:$0xff]
    %v4557 = vld [vmem:[#allocation3 + $0xc] sm:$0xff]
    %v4558 = vld [vmem:[#allocation3 + $0x14] sm:$0xff]
    %v4559 = vld [vmem:[#allocation3 + $0x1c] sm:$0xff]
    %v4560 = vld [vmem:[#allocation3 + $0x24] sm:$0xff]
    %v4561 = vld [vmem:[#allocation3 + $0x2c] sm:$0xff]
    %v4562 = vld [vmem:[#allocation3 + $0x34] sm:$0xff]
    %v4563 = vld [vmem:[#allocation3 + $0x3c] sm:$0xff]
    %v4564 = vld [vmem:[#allocation3 + $0x44] sm:$0xff]
    %v4565 = vld [vmem:[#allocation3 + $0x4c] sm:$0xff]
    %v4566 = vld [vmem:[#allocation3 + $0x54] sm:$0xff]
    %v4567 = vld [vmem:[#allocation3 + $0x5c] sm:$0xff]
    %v4568 = vld [vmem:[#allocation3 + $0x64] sm:$0xff]
    %v4569 = vld [vmem:[#allocation3 + $0x6c] sm:$0xff]
    %v4570 = vld [vmem:[#allocation3 + $0x74] sm:$0xff]
    %v4571 = vpack.c.bf16 %v4557, %v4556
    %v4572 = vpack.c.bf16 %v4559, %v4558
    %v4573 = vpack.c.bf16 %v4561, %v4560
    %v4574 = vpack.c.bf16 %v4563, %v4562
    %v4575 = vpack.c.bf16 %v4565, %v4564
    %v4576 = vpack.c.bf16 %v4567, %v4566
    %v4577 = vpack.c.bf16 %v4569, %v4568
    %v4578 = vpack.c.bf16 %v4570, %v4570
    %s4579 = scalar_lea.vmem %s3, 96
    %v4580 = vld [vmem:[%s4579] sm:$0xf]
    %v4581 = vld [vmem:[%s4579 + $0x4] sm:$0xf]
    %v4582 = vld [vmem:[%s4579 + $0x8] sm:$0xf]
    %v4583 = vld [vmem:[%s4579 + $0xc] sm:$0xf]
    %v4584 = vld [vmem:[%s4579 + $0x10] sm:$0xf]
    %v4585 = vld [vmem:[%s4579 + $0x14] sm:$0xf]
    %v4592 = vunpack.c.l.b16 %v4580
    %v4593 = vunpack.c.l.b16 %v4581
    %v4594 = vunpack.c.l.b16 %v4582
    %v4595 = vunpack.c.l.b16 %v4583
    %v4596 = vunpack.c.l.b16 %v4584
    %v4597 = vunpack.c.l.b16 %v4585
    %v4598 = vpack.c.b16 %v4593, %v4592
    %v4599 = vpack.c.b16 %v4595, %v4594
    %v4600 = vpack.c.b16 %v4597, %v4596
    %v4605 = vsel %vm173, %v4571, 0
    %v4608 = vsel %vm173, %v4572, 0
    %v4611 = vsel %vm173, %v4573, 0
    %v4614 = vsel %vm173, %v4574, 0
    %v4617 = vsel %vm173, %v4575, 0
    %v4620 = vsel %vm173, %v4576, 0
    %v4623 = vsel %vm173, %v4577, 0
    %v4626 = vsel %vm173, %v4578, 0
    %4628 = vmatprep.subr.bf16.mxu0 0
    %4629 = vmatpush1.bf16.msra.mxu0 0
    %4630 = vmatprep.subr.bf16.mxu0 0
    %4631 = vmatpush1.bf16.msra.mxu0 0
    %4632 = vmatprep.subr.bf16.mxu0 0
    %4633 = vmatpush1.bf16.msra.mxu0 0
    %4634 = vmatprep.subr.bf16.mxu0 0
    %4635 = vmatpush1.bf16.msra.mxu0 0
    %4636 = vmatprep.subr.bf16.mxu0 0
    %4637 = vmatpush1.bf16.msra.mxu0 0
    %4638 = vmatprep.subr.bf16.mxu0 0
    %4639 = vmatpush1.bf16.msra.mxu0 %v4600
    %4640 = vmatprep.subr.bf16.mxu0 0
    %4641 = vmatpush1.bf16.msra.mxu0 %v4599
    %4642 = vmatprep.subr.bf16.mxu0 0
    %4643 = vmatpush1.bf16.msra.mxu0 %v4598
    %4644 = vmatprep.subr.bf16.mxu0 0
    %4645 = vmatpush2.bf16.msra.mxu0 0
    %4646 = vmatprep.subr.bf16.mxu0 0
    %4647 = vmatpush2.bf16.msra.mxu0 0
    %4648 = vmatprep.subr.bf16.mxu0 0
    %4649 = vmatpush2.bf16.msra.mxu0 0
    %4650 = vmatprep.subr.bf16.mxu0 0
    %4651 = vmatpush2.bf16.msra.mxu0 0
    %4652 = vmatprep.subr.bf16.mxu0 0
    %4653 = vmatpush2.bf16.msra.mxu0 0
    %4654 = vmatprep.subr.bf16.mxu0 0
    %4655 = vmatpush2.bf16.msra.mxu0 0
    %4656 = vmatprep.subr.bf16.mxu0 0
    %4657 = vmatpush2.bf16.msra.mxu0 0
    %4658 = vmatprep.subr.bf16.mxu0 0
    %4659 = vmatpush2.bf16.msra.mxu0 0
    %4660 = vmatprep.mubr.bf16.mxu0 0
    %4661 = vmatmul.mubr.bf16.gmra.mxu0 %v4605
    %v4662 = vpop.f32.mrf.mxu0
    %v4663 = vadd.f32 0.0, %v4662
    %v4664 = vpop.f32.mrf.mxu0
    %v4665 = vpop.f32.mrf.mxu0
    %v4666 = vadd.f32 0.0, %v4665
    %v4667 = vpop.f32.mrf.mxu0
    %4668 = vmatprep.mubr.bf16.mxu0 0
    %4669 = vmatmul.mubr.bf16.gmra.mxu0 %v4608
    %v4670 = vpop.f32.mrf.mxu0
    %v4671 = vadd.f32 0.0, %v4670
    %v4672 = vpop.f32.mrf.mxu0
    %v4673 = vpop.f32.mrf.mxu0
    %v4674 = vadd.f32 0.0, %v4673
    %v4675 = vpop.f32.mrf.mxu0
    %4676 = vmatprep.mubr.bf16.mxu0 0
    %4677 = vmatmul.mubr.bf16.gmra.mxu0 %v4611
    %v4678 = vpop.f32.mrf.mxu0
    %v4679 = vadd.f32 0.0, %v4678
    %v4680 = vpop.f32.mrf.mxu0
    %v4681 = vpop.f32.mrf.mxu0
    %v4682 = vadd.f32 0.0, %v4681
    %v4683 = vpop.f32.mrf.mxu0
    %4684 = vmatprep.mubr.bf16.mxu0 0
    %4685 = vmatmul.mubr.bf16.gmra.mxu0 %v4614
    %v4686 = vpop.f32.mrf.mxu0
    %v4687 = vpop.f32.mrf.mxu0
    %v4688 = vpop.f32.mrf.mxu0
    %v4689 = vpop.f32.mrf.mxu0
    %4690 = vmatprep.mubr.bf16.mxu0 0
    %4691 = vmatmul.mubr.bf16.gmra.mxu0 %v4617
    %v4692 = vpop.f32.mrf.mxu0
    %v4693 = vpop.f32.mrf.mxu0
    %v4694 = vpop.f32.mrf.mxu0
    %v4695 = vpop.f32.mrf.mxu0
    %4696 = vmatprep.mubr.bf16.mxu0 0
    %4697 = vmatmul.mubr.bf16.gmra.mxu0 %v4620
    %v4698 = vpop.f32.mrf.mxu0
    %v4699 = vpop.f32.mrf.mxu0
    %v4700 = vpop.f32.mrf.mxu0
    %v4701 = vadd.f32 0.0, %v4700
    %v4702 = vpop.f32.mrf.mxu0
    %4703 = vmatprep.mubr.bf16.mxu0 0
    %4704 = vmatmul.mubr.bf16.gmra.mxu0 %v4623
    %v4705 = vpop.f32.mrf.mxu0
    %v4706 = vadd.f32 0.0, %v4705
    %v4707 = vpop.f32.mrf.mxu0
    %v4708 = vpop.f32.mrf.mxu0
    %v4709 = vadd.f32 0.0, %v4708
    %v4710 = vpop.f32.mrf.mxu0
    %4711 = vmatprep.mubr.bf16.mxu0 0
    %4712 = vmatmul.mubr.bf16.gmra.mxu0 %v4626
    %v4713 = vpop.f32.mrf.mxu0
    %v4714 = vadd.f32 0.0, %v4713
    %v4715 = vpop.f32.mrf.mxu0
    %v4716 = vpop.f32.mrf.mxu0
    %v4717 = vpop.f32.mrf.mxu0
    %4718 = vdwg.mxu0
    %v4719 = vadd.f32 %v4546, %v4663
    %v4720 = vadd.f32 %v4547, %v4666
    %v4721 = vadd.f32 %v4548, %v4671
    %v4722 = vadd.f32 %v4549, %v4674
    %v4723 = vadd.f32 %v4550, %v4679
    %v4724 = vadd.f32 %v4551, %v4682
    %v4725 = vadd.f32 %v4552, %v4701
    %v4726 = vadd.f32 %v4553, %v4706
    %v4727 = vadd.f32 %v4554, %v4709
    %v4728 = vadd.f32 %v4555, %v4714
    %v4729 = vld [vmem:[#allocation3 + $0x9] sm:$0xff]
    %v4730 = vld [vmem:[#allocation3 + $0x11] sm:$0xff]
    %v4731 = vld [vmem:[#allocation3 + $0x19] sm:$0xff]
    %v4732 = vld [vmem:[#allocation3 + $0x21] sm:$0xff]
    %v4733 = vld [vmem:[#allocation3 + $0x29] sm:$0xff]
    %v4734 = vld [vmem:[#allocation3 + $0x31] sm:$0xff]
    %v4735 = vld [vmem:[#allocation3 + $0x39] sm:$0xff]
    %v4736 = vld [vmem:[#allocation3 + $0x41] sm:$0xff]
    %v4737 = vld [vmem:[#allocation3 + $0x49] sm:$0xff]
    %v4738 = vld [vmem:[#allocation3 + $0x51] sm:$0xff]
    %v4739 = vld [vmem:[#allocation3 + $0x59] sm:$0xff]
    %v4740 = vld [vmem:[#allocation3 + $0x61] sm:$0xff]
    %v4741 = vld [vmem:[#allocation3 + $0x69] sm:$0xff]
    %v4742 = vld [vmem:[#allocation3 + $0x71] sm:$0xff]
    %v4743 = vld [vmem:[#allocation3 + $0x79] sm:$0xff]
    %v4744 = vpack.c.bf16 %v4730, %v4729
    %v4745 = vpack.c.bf16 %v4732, %v4731
    %v4746 = vpack.c.bf16 %v4734, %v4733
    %v4747 = vpack.c.bf16 %v4736, %v4735
    %v4748 = vpack.c.bf16 %v4738, %v4737
    %v4749 = vpack.c.bf16 %v4740, %v4739
    %v4750 = vpack.c.bf16 %v4742, %v4741
    %v4751 = vpack.c.bf16 %v4743, %v4743
    %s4752 = scalar_lea.vmem %s3, 120
    %v4753 = vld [vmem:[%s4752] sm:$0xf]
    %v4754 = vld [vmem:[%s4752 + $0x4] sm:$0xf]
    %v4755 = vld [vmem:[%s4752 + $0x8] sm:$0xf]
    %v4756 = vld [vmem:[%s4752 + $0xc] sm:$0xf]
    %v4757 = vld [vmem:[%s4752 + $0x10] sm:$0xf]
    %v4758 = vld [vmem:[%s4752 + $0x14] sm:$0xf]
    %v4765 = vunpack.c.l.b16 %v4753
    %v4766 = vunpack.c.l.b16 %v4754
    %v4767 = vunpack.c.l.b16 %v4755
    %v4768 = vunpack.c.l.b16 %v4756
    %v4769 = vunpack.c.l.b16 %v4757
    %v4770 = vunpack.c.l.b16 %v4758
    %v4771 = vpack.c.b16 %v4766, %v4765
    %v4772 = vpack.c.b16 %v4768, %v4767
    %v4773 = vpack.c.b16 %v4770, %v4769
    %v4778 = vsel %vm173, %v4744, 0
    %v4781 = vsel %vm173, %v4745, 0
    %v4784 = vsel %vm173, %v4746, 0
    %v4787 = vsel %vm173, %v4747, 0
    %v4790 = vsel %vm173, %v4748, 0
    %v4793 = vsel %vm173, %v4749, 0
    %v4796 = vsel %vm173, %v4750, 0
    %v4799 = vsel %vm173, %v4751, 0
    %4801 = vmatprep.subr.bf16.mxu0 0
    %4802 = vmatpush1.bf16.msra.mxu0 0
    %4803 = vmatprep.subr.bf16.mxu0 0
    %4804 = vmatpush1.bf16.msra.mxu0 0
    %4805 = vmatprep.subr.bf16.mxu0 0
    %4806 = vmatpush1.bf16.msra.mxu0 0
    %4807 = vmatprep.subr.bf16.mxu0 0
    %4808 = vmatpush1.bf16.msra.mxu0 0
    %4809 = vmatprep.subr.bf16.mxu0 0
    %4810 = vmatpush1.bf16.msra.mxu0 0
    %4811 = vmatprep.subr.bf16.mxu0 0
    %4812 = vmatpush1.bf16.msra.mxu0 %v4773
    %4813 = vmatprep.subr.bf16.mxu0 0
    %4814 = vmatpush1.bf16.msra.mxu0 %v4772
    %4815 = vmatprep.subr.bf16.mxu0 0
    %4816 = vmatpush1.bf16.msra.mxu0 %v4771
    %4817 = vmatprep.subr.bf16.mxu0 0
    %4818 = vmatpush2.bf16.msra.mxu0 0
    %4819 = vmatprep.subr.bf16.mxu0 0
    %4820 = vmatpush2.bf16.msra.mxu0 0
    %4821 = vmatprep.subr.bf16.mxu0 0
    %4822 = vmatpush2.bf16.msra.mxu0 0
    %4823 = vmatprep.subr.bf16.mxu0 0
    %4824 = vmatpush2.bf16.msra.mxu0 0
    %4825 = vmatprep.subr.bf16.mxu0 0
    %4826 = vmatpush2.bf16.msra.mxu0 0
    %4827 = vmatprep.subr.bf16.mxu0 0
    %4828 = vmatpush2.bf16.msra.mxu0 0
    %4829 = vmatprep.subr.bf16.mxu0 0
    %4830 = vmatpush2.bf16.msra.mxu0 0
    %4831 = vmatprep.subr.bf16.mxu0 0
    %4832 = vmatpush2.bf16.msra.mxu0 0
    %4833 = vmatprep.mubr.bf16.mxu0 0
    %4834 = vmatmul.mubr.bf16.gmra.mxu0 %v4778
    %v4835 = vpop.f32.mrf.mxu0
    %v4836 = vadd.f32 0.0, %v4835
    %v4837 = vpop.f32.mrf.mxu0
    %v4838 = vpop.f32.mrf.mxu0
    %v4839 = vadd.f32 0.0, %v4838
    %v4840 = vpop.f32.mrf.mxu0
    %4841 = vmatprep.mubr.bf16.mxu0 0
    %4842 = vmatmul.mubr.bf16.gmra.mxu0 %v4781
    %v4843 = vpop.f32.mrf.mxu0
    %v4844 = vadd.f32 0.0, %v4843
    %v4845 = vpop.f32.mrf.mxu0
    %v4846 = vpop.f32.mrf.mxu0
    %v4847 = vadd.f32 0.0, %v4846
    %v4848 = vpop.f32.mrf.mxu0
    %4849 = vmatprep.mubr.bf16.mxu0 0
    %4850 = vmatmul.mubr.bf16.gmra.mxu0 %v4784
    %v4851 = vpop.f32.mrf.mxu0
    %v4852 = vadd.f32 0.0, %v4851
    %v4853 = vpop.f32.mrf.mxu0
    %v4854 = vpop.f32.mrf.mxu0
    %v4855 = vadd.f32 0.0, %v4854
    %v4856 = vpop.f32.mrf.mxu0
    %4857 = vmatprep.mubr.bf16.mxu0 0
    %4858 = vmatmul.mubr.bf16.gmra.mxu0 %v4787
    %v4859 = vpop.f32.mrf.mxu0
    %v4860 = vpop.f32.mrf.mxu0
    %v4861 = vpop.f32.mrf.mxu0
    %v4862 = vpop.f32.mrf.mxu0
    %4863 = vmatprep.mubr.bf16.mxu0 0
    %4864 = vmatmul.mubr.bf16.gmra.mxu0 %v4790
    %v4865 = vpop.f32.mrf.mxu0
    %v4866 = vpop.f32.mrf.mxu0
    %v4867 = vpop.f32.mrf.mxu0
    %v4868 = vpop.f32.mrf.mxu0
    %4869 = vmatprep.mubr.bf16.mxu0 0
    %4870 = vmatmul.mubr.bf16.gmra.mxu0 %v4793
    %v4871 = vpop.f32.mrf.mxu0
    %v4872 = vpop.f32.mrf.mxu0
    %v4873 = vpop.f32.mrf.mxu0
    %v4874 = vadd.f32 0.0, %v4873
    %v4875 = vpop.f32.mrf.mxu0
    %4876 = vmatprep.mubr.bf16.mxu0 0
    %4877 = vmatmul.mubr.bf16.gmra.mxu0 %v4796
    %v4878 = vpop.f32.mrf.mxu0
    %v4879 = vadd.f32 0.0, %v4878
    %v4880 = vpop.f32.mrf.mxu0
    %v4881 = vpop.f32.mrf.mxu0
    %v4882 = vadd.f32 0.0, %v4881
    %v4883 = vpop.f32.mrf.mxu0
    %4884 = vmatprep.mubr.bf16.mxu0 0
    %4885 = vmatmul.mubr.bf16.gmra.mxu0 %v4799
    %v4886 = vpop.f32.mrf.mxu0
    %v4887 = vadd.f32 0.0, %v4886
    %v4888 = vpop.f32.mrf.mxu0
    %v4889 = vpop.f32.mrf.mxu0
    %v4890 = vpop.f32.mrf.mxu0
    %4891 = vdwg.mxu0
    %v4892 = vadd.f32 %v4719, %v4836
    %v4893 = vadd.f32 %v4720, %v4839
    %v4894 = vadd.f32 %v4721, %v4844
    %v4895 = vadd.f32 %v4722, %v4847
    %v4896 = vadd.f32 %v4723, %v4852
    %v4897 = vadd.f32 %v4724, %v4855
    %v4898 = vadd.f32 %v4725, %v4874
    %v4899 = vadd.f32 %v4726, %v4879
    %v4900 = vadd.f32 %v4727, %v4882
    %v4901 = vadd.f32 %v4728, %v4887
    %v4902 = vld [vmem:[#allocation3 + $0xa] sm:$0xff]
    %v4903 = vld [vmem:[#allocation3 + $0x12] sm:$0xff]
    %v4904 = vld [vmem:[#allocation3 + $0x1a] sm:$0xff]
    %v4905 = vld [vmem:[#allocation3 + $0x22] sm:$0xff]
    %v4906 = vld [vmem:[#allocation3 + $0x2a] sm:$0xff]
    %v4907 = vld [vmem:[#allocation3 + $0x32] sm:$0xff]
    %v4908 = vld [vmem:[#allocation3 + $0x3a] sm:$0xff]
    %v4909 = vld [vmem:[#allocation3 + $0x42] sm:$0xff]
    %v4910 = vld [vmem:[#allocation3 + $0x4a] sm:$0xff]
    %v4911 = vld [vmem:[#allocation3 + $0x52] sm:$0xff]
    %v4912 = vld [vmem:[#allocation3 + $0x5a] sm:$0xff]
    %v4913 = vld [vmem:[#allocation3 + $0x62] sm:$0xff]
    %v4914 = vld [vmem:[#allocation3 + $0x6a] sm:$0xff]
    %v4915 = vld [vmem:[#allocation3 + $0x72] sm:$0xff]
    %v4916 = vld [vmem:[#allocation3 + $0x7a] sm:$0xff]
    %v4917 = vpack.c.bf16 %v4903, %v4902
    %v4918 = vpack.c.bf16 %v4905, %v4904
    %v4919 = vpack.c.bf16 %v4907, %v4906
    %v4920 = vpack.c.bf16 %v4909, %v4908
    %v4921 = vpack.c.bf16 %v4911, %v4910
    %v4922 = vpack.c.bf16 %v4913, %v4912
    %v4923 = vpack.c.bf16 %v4915, %v4914
    %v4924 = vpack.c.bf16 %v4916, %v4916
    %s4925 = scalar_lea.vmem %s3, 144
    %v4926 = vld [vmem:[%s4925] sm:$0xf]
    %v4927 = vld [vmem:[%s4925 + $0x4] sm:$0xf]
    %v4928 = vld [vmem:[%s4925 + $0x8] sm:$0xf]
    %v4929 = vld [vmem:[%s4925 + $0xc] sm:$0xf]
    %v4930 = vld [vmem:[%s4925 + $0x10] sm:$0xf]
    %v4931 = vld [vmem:[%s4925 + $0x14] sm:$0xf]
    %v4938 = vunpack.c.l.b16 %v4926
    %v4939 = vunpack.c.l.b16 %v4927
    %v4940 = vunpack.c.l.b16 %v4928
    %v4941 = vunpack.c.l.b16 %v4929
    %v4942 = vunpack.c.l.b16 %v4930
    %v4943 = vunpack.c.l.b16 %v4931
    %v4944 = vpack.c.b16 %v4939, %v4938
    %v4945 = vpack.c.b16 %v4941, %v4940
    %v4946 = vpack.c.b16 %v4943, %v4942
    %v4951 = vsel %vm173, %v4917, 0
    %v4954 = vsel %vm173, %v4918, 0
    %v4957 = vsel %vm173, %v4919, 0
    %v4960 = vsel %vm173, %v4920, 0
    %v4963 = vsel %vm173, %v4921, 0
    %v4966 = vsel %vm173, %v4922, 0
    %v4969 = vsel %vm173, %v4923, 0
    %v4972 = vsel %vm173, %v4924, 0
    %4974 = vmatprep.subr.bf16.mxu0 0
    %4975 = vmatpush1.bf16.msra.mxu0 0
    %4976 = vmatprep.subr.bf16.mxu0 0
    %4977 = vmatpush1.bf16.msra.mxu0 0
    %4978 = vmatprep.subr.bf16.mxu0 0
    %4979 = vmatpush1.bf16.msra.mxu0 0
    %4980 = vmatprep.subr.bf16.mxu0 0
    %4981 = vmatpush1.bf16.msra.mxu0 0
    %4982 = vmatprep.subr.bf16.mxu0 0
    %4983 = vmatpush1.bf16.msra.mxu0 0
    %4984 = vmatprep.subr.bf16.mxu0 0
    %4985 = vmatpush1.bf16.msra.mxu0 %v4946
    %4986 = vmatprep.subr.bf16.mxu0 0
    %4987 = vmatpush1.bf16.msra.mxu0 %v4945
    %4988 = vmatprep.subr.bf16.mxu0 0
    %4989 = vmatpush1.bf16.msra.mxu0 %v4944
    %4990 = vmatprep.subr.bf16.mxu0 0
    %4991 = vmatpush2.bf16.msra.mxu0 0
    %4992 = vmatprep.subr.bf16.mxu0 0
    %4993 = vmatpush2.bf16.msra.mxu0 0
    %4994 = vmatprep.subr.bf16.mxu0 0
    %4995 = vmatpush2.bf16.msra.mxu0 0
    %4996 = vmatprep.subr.bf16.mxu0 0
    %4997 = vmatpush2.bf16.msra.mxu0 0
    %4998 = vmatprep.subr.bf16.mxu0 0
    %4999 = vmatpush2.bf16.msra.mxu0 0
    %5000 = vmatprep.subr.bf16.mxu0 0
    %5001 = vmatpush2.bf16.msra.mxu0 0
    %5002 = vmatprep.subr.bf16.mxu0 0
    %5003 = vmatpush2.bf16.msra.mxu0 0
    %5004 = vmatprep.subr.bf16.mxu0 0
    %5005 = vmatpush2.bf16.msra.mxu0 0
    %5006 = vmatprep.mubr.bf16.mxu0 0
    %5007 = vmatmul.mubr.bf16.gmra.mxu0 %v4951
    %v5008 = vpop.f32.mrf.mxu0
    %v5009 = vadd.f32 0.0, %v5008
    %v5010 = vpop.f32.mrf.mxu0
    %v5011 = vpop.f32.mrf.mxu0
    %v5012 = vadd.f32 0.0, %v5011
    %v5013 = vpop.f32.mrf.mxu0
    %5014 = vmatprep.mubr.bf16.mxu0 0
    %5015 = vmatmul.mubr.bf16.gmra.mxu0 %v4954
    %v5016 = vpop.f32.mrf.mxu0
    %v5017 = vadd.f32 0.0, %v5016
    %v5018 = vpop.f32.mrf.mxu0
    %v5019 = vpop.f32.mrf.mxu0
    %v5020 = vadd.f32 0.0, %v5019
    %v5021 = vpop.f32.mrf.mxu0
    %5022 = vmatprep.mubr.bf16.mxu0 0
    %5023 = vmatmul.mubr.bf16.gmra.mxu0 %v4957
    %v5024 = vpop.f32.mrf.mxu0
    %v5025 = vadd.f32 0.0, %v5024
    %v5026 = vpop.f32.mrf.mxu0
    %v5027 = vpop.f32.mrf.mxu0
    %v5028 = vadd.f32 0.0, %v5027
    %v5029 = vpop.f32.mrf.mxu0
    %5030 = vmatprep.mubr.bf16.mxu0 0
    %5031 = vmatmul.mubr.bf16.gmra.mxu0 %v4960
    %v5032 = vpop.f32.mrf.mxu0
    %v5033 = vpop.f32.mrf.mxu0
    %v5034 = vpop.f32.mrf.mxu0
    %v5035 = vpop.f32.mrf.mxu0
    %5036 = vmatprep.mubr.bf16.mxu0 0
    %5037 = vmatmul.mubr.bf16.gmra.mxu0 %v4963
    %v5038 = vpop.f32.mrf.mxu0
    %v5039 = vpop.f32.mrf.mxu0
    %v5040 = vpop.f32.mrf.mxu0
    %v5041 = vpop.f32.mrf.mxu0
    %5042 = vmatprep.mubr.bf16.mxu0 0
    %5043 = vmatmul.mubr.bf16.gmra.mxu0 %v4966
    %v5044 = vpop.f32.mrf.mxu0
    %v5045 = vpop.f32.mrf.mxu0
    %v5046 = vpop.f32.mrf.mxu0
    %v5047 = vadd.f32 0.0, %v5046
    %v5048 = vpop.f32.mrf.mxu0
    %5049 = vmatprep.mubr.bf16.mxu0 0
    %5050 = vmatmul.mubr.bf16.gmra.mxu0 %v4969
    %v5051 = vpop.f32.mrf.mxu0
    %v5052 = vadd.f32 0.0, %v5051
    %v5053 = vpop.f32.mrf.mxu0
    %v5054 = vpop.f32.mrf.mxu0
    %v5055 = vadd.f32 0.0, %v5054
    %v5056 = vpop.f32.mrf.mxu0
    %5057 = vmatprep.mubr.bf16.mxu0 0
    %5058 = vmatmul.mubr.bf16.gmra.mxu0 %v4972
    %v5059 = vpop.f32.mrf.mxu0
    %v5060 = vadd.f32 0.0, %v5059
    %v5061 = vpop.f32.mrf.mxu0
    %v5062 = vpop.f32.mrf.mxu0
    %v5063 = vpop.f32.mrf.mxu0
    %5064 = vdwg.mxu0
    %v5065 = vadd.f32 %v4892, %v5009
    %v5066 = vadd.f32 %v4893, %v5012
    %v5067 = vadd.f32 %v4894, %v5017
    %v5068 = vadd.f32 %v4895, %v5020
    %v5069 = vadd.f32 %v4896, %v5025
    %v5070 = vadd.f32 %v4897, %v5028
    %v5071 = vadd.f32 %v4898, %v5047
    %v5072 = vadd.f32 %v4899, %v5052
    %v5073 = vadd.f32 %v4900, %v5055
    %v5074 = vadd.f32 %v4901, %v5060
    %v5075 = vld [vmem:[#allocation3 + $0xb] sm:$0xff]
    %v5076 = vld [vmem:[#allocation3 + $0x13] sm:$0xff]
    %v5077 = vld [vmem:[#allocation3 + $0x1b] sm:$0xff]
    %v5078 = vld [vmem:[#allocation3 + $0x23] sm:$0xff]
    %v5079 = vld [vmem:[#allocation3 + $0x2b] sm:$0xff]
    %v5080 = vld [vmem:[#allocation3 + $0x33] sm:$0xff]
    %v5081 = vld [vmem:[#allocation3 + $0x3b] sm:$0xff]
    %v5082 = vld [vmem:[#allocation3 + $0x43] sm:$0xff]
    %v5083 = vld [vmem:[#allocation3 + $0x4b] sm:$0xff]
    %v5084 = vld [vmem:[#allocation3 + $0x53] sm:$0xff]
    %v5085 = vld [vmem:[#allocation3 + $0x5b] sm:$0xff]
    %v5086 = vld [vmem:[#allocation3 + $0x63] sm:$0xff]
    %v5087 = vld [vmem:[#allocation3 + $0x6b] sm:$0xff]
    %v5088 = vld [vmem:[#allocation3 + $0x73] sm:$0xff]
    %v5089 = vld [vmem:[#allocation3 + $0x7b] sm:$0xff]
    %v5090 = vpack.c.bf16 %v5076, %v5075
    %v5091 = vpack.c.bf16 %v5078, %v5077
    %v5092 = vpack.c.bf16 %v5080, %v5079
    %v5093 = vpack.c.bf16 %v5082, %v5081
    %v5094 = vpack.c.bf16 %v5084, %v5083
    %v5095 = vpack.c.bf16 %v5086, %v5085
    %v5096 = vpack.c.bf16 %v5088, %v5087
    %v5097 = vpack.c.bf16 %v5089, %v5089
    %s5098 = scalar_lea.vmem %s3, 168
    %v5099 = vld [vmem:[%s5098] sm:$0xf]
    %v5100 = vld [vmem:[%s5098 + $0x4] sm:$0xf]
    %v5101 = vld [vmem:[%s5098 + $0x8] sm:$0xf]
    %v5102 = vld [vmem:[%s5098 + $0xc] sm:$0xf]
    %v5103 = vld [vmem:[%s5098 + $0x10] sm:$0xf]
    %v5104 = vld [vmem:[%s5098 + $0x14] sm:$0xf]
    %v5111 = vunpack.c.l.b16 %v5099
    %v5112 = vunpack.c.l.b16 %v5100
    %v5113 = vunpack.c.l.b16 %v5101
    %v5114 = vunpack.c.l.b16 %v5102
    %v5115 = vunpack.c.l.b16 %v5103
    %v5116 = vunpack.c.l.b16 %v5104
    %v5117 = vpack.c.b16 %v5112, %v5111
    %v5118 = vpack.c.b16 %v5114, %v5113
    %v5119 = vpack.c.b16 %v5116, %v5115
    %v5124 = vsel %vm173, %v5090, 0
    %v5127 = vsel %vm173, %v5091, 0
    %v5130 = vsel %vm173, %v5092, 0
    %v5133 = vsel %vm173, %v5093, 0
    %v5136 = vsel %vm173, %v5094, 0
    %v5139 = vsel %vm173, %v5095, 0
    %v5142 = vsel %vm173, %v5096, 0
    %v5145 = vsel %vm173, %v5097, 0
    %5147 = vmatprep.subr.bf16.mxu0 0
    %5148 = vmatpush1.bf16.msra.mxu0 0
    %5149 = vmatprep.subr.bf16.mxu0 0
    %5150 = vmatpush1.bf16.msra.mxu0 0
    %5151 = vmatprep.subr.bf16.mxu0 0
    %5152 = vmatpush1.bf16.msra.mxu0 0
    %5153 = vmatprep.subr.bf16.mxu0 0
    %5154 = vmatpush1.bf16.msra.mxu0 0
    %5155 = vmatprep.subr.bf16.mxu0 0
    %5156 = vmatpush1.bf16.msra.mxu0 0
    %5157 = vmatprep.subr.bf16.mxu0 0
    %5158 = vmatpush1.bf16.msra.mxu0 %v5119
    %5159 = vmatprep.subr.bf16.mxu0 0
    %5160 = vmatpush1.bf16.msra.mxu0 %v5118
    %5161 = vmatprep.subr.bf16.mxu0 0
    %5162 = vmatpush1.bf16.msra.mxu0 %v5117
    %5163 = vmatprep.subr.bf16.mxu0 0
    %5164 = vmatpush2.bf16.msra.mxu0 0
    %5165 = vmatprep.subr.bf16.mxu0 0
    %5166 = vmatpush2.bf16.msra.mxu0 0
    %5167 = vmatprep.subr.bf16.mxu0 0
    %5168 = vmatpush2.bf16.msra.mxu0 0
    %5169 = vmatprep.subr.bf16.mxu0 0
    %5170 = vmatpush2.bf16.msra.mxu0 0
    %5171 = vmatprep.subr.bf16.mxu0 0
    %5172 = vmatpush2.bf16.msra.mxu0 0
    %5173 = vmatprep.subr.bf16.mxu0 0
    %5174 = vmatpush2.bf16.msra.mxu0 0
    %5175 = vmatprep.subr.bf16.mxu0 0
    %5176 = vmatpush2.bf16.msra.mxu0 0
    %5177 = vmatprep.subr.bf16.mxu0 0
    %5178 = vmatpush2.bf16.msra.mxu0 0
    %5179 = vmatprep.mubr.bf16.mxu0 0
    %5180 = vmatmul.mubr.bf16.gmra.mxu0 %v5124
    %v5181 = vpop.f32.mrf.mxu0
    %v5182 = vadd.f32 0.0, %v5181
    %v5183 = vpop.f32.mrf.mxu0
    %v5184 = vpop.f32.mrf.mxu0
    %v5185 = vadd.f32 0.0, %v5184
    %v5186 = vpop.f32.mrf.mxu0
    %5187 = vmatprep.mubr.bf16.mxu0 0
    %5188 = vmatmul.mubr.bf16.gmra.mxu0 %v5127
    %v5189 = vpop.f32.mrf.mxu0
    %v5190 = vadd.f32 0.0, %v5189
    %v5191 = vpop.f32.mrf.mxu0
    %v5192 = vpop.f32.mrf.mxu0
    %v5193 = vadd.f32 0.0, %v5192
    %v5194 = vpop.f32.mrf.mxu0
    %5195 = vmatprep.mubr.bf16.mxu0 0
    %5196 = vmatmul.mubr.bf16.gmra.mxu0 %v5130
    %v5197 = vpop.f32.mrf.mxu0
    %v5198 = vadd.f32 0.0, %v5197
    %v5199 = vpop.f32.mrf.mxu0
    %v5200 = vpop.f32.mrf.mxu0
    %v5201 = vadd.f32 0.0, %v5200
    %v5202 = vpop.f32.mrf.mxu0
    %5203 = vmatprep.mubr.bf16.mxu0 0
    %5204 = vmatmul.mubr.bf16.gmra.mxu0 %v5133
    %v5205 = vpop.f32.mrf.mxu0
    %v5206 = vpop.f32.mrf.mxu0
    %v5207 = vpop.f32.mrf.mxu0
    %v5208 = vpop.f32.mrf.mxu0
    %5209 = vmatprep.mubr.bf16.mxu0 0
    %5210 = vmatmul.mubr.bf16.gmra.mxu0 %v5136
    %v5211 = vpop.f32.mrf.mxu0
    %v5212 = vpop.f32.mrf.mxu0
    %v5213 = vpop.f32.mrf.mxu0
    %v5214 = vpop.f32.mrf.mxu0
    %5215 = vmatprep.mubr.bf16.mxu0 0
    %5216 = vmatmul.mubr.bf16.gmra.mxu0 %v5139
    %v5217 = vpop.f32.mrf.mxu0
    %v5218 = vpop.f32.mrf.mxu0
    %v5219 = vpop.f32.mrf.mxu0
    %v5220 = vadd.f32 0.0, %v5219
    %v5221 = vpop.f32.mrf.mxu0
    %5222 = vmatprep.mubr.bf16.mxu0 0
    %5223 = vmatmul.mubr.bf16.gmra.mxu0 %v5142
    %v5224 = vpop.f32.mrf.mxu0
    %v5225 = vadd.f32 0.0, %v5224
    %v5226 = vpop.f32.mrf.mxu0
    %v5227 = vpop.f32.mrf.mxu0
    %v5228 = vadd.f32 0.0, %v5227
    %v5229 = vpop.f32.mrf.mxu0
    %5230 = vmatprep.mubr.bf16.mxu0 0
    %5231 = vmatmul.mubr.bf16.gmra.mxu0 %v5145
    %v5232 = vpop.f32.mrf.mxu0
    %v5233 = vadd.f32 0.0, %v5232
    %v5234 = vpop.f32.mrf.mxu0
    %v5235 = vpop.f32.mrf.mxu0
    %v5236 = vpop.f32.mrf.mxu0
    %5237 = vdwg.mxu0
    %v5238 = vadd.f32 %v5065, %v5182
    %v5239 = vadd.f32 %v5066, %v5185
    %v5240 = vadd.f32 %v5067, %v5190
    %v5241 = vadd.f32 %v5068, %v5193
    %v5242 = vadd.f32 %v5069, %v5198
    %v5243 = vadd.f32 %v5070, %v5201
    %v5244 = vadd.f32 %v5071, %v5220
    %v5245 = vadd.f32 %v5072, %v5225
    %v5246 = vadd.f32 %v5073, %v5228
    %v5247 = vadd.f32 %v5074, %v5233
    %v5248 = vld [vmem:[#allocation3 + $0xc] sm:$0xff]
    %v5249 = vld [vmem:[#allocation3 + $0x14] sm:$0xff]
    %v5250 = vld [vmem:[#allocation3 + $0x1c] sm:$0xff]
    %v5251 = vld [vmem:[#allocation3 + $0x24] sm:$0xff]
    %v5252 = vld [vmem:[#allocation3 + $0x2c] sm:$0xff]
    %v5253 = vld [vmem:[#allocation3 + $0x34] sm:$0xff]
    %v5254 = vld [vmem:[#allocation3 + $0x3c] sm:$0xff]
    %v5255 = vld [vmem:[#allocation3 + $0x44] sm:$0xff]
    %v5256 = vld [vmem:[#allocation3 + $0x4c] sm:$0xff]
    %v5257 = vld [vmem:[#allocation3 + $0x54] sm:$0xff]
    %v5258 = vld [vmem:[#allocation3 + $0x5c] sm:$0xff]
    %v5259 = vld [vmem:[#allocation3 + $0x64] sm:$0xff]
    %v5260 = vld [vmem:[#allocation3 + $0x6c] sm:$0xff]
    %v5261 = vld [vmem:[#allocation3 + $0x74] sm:$0xff]
    %v5262 = vld [vmem:[#allocation3 + $0x7c] sm:$0xff]
    %v5263 = vpack.c.bf16 %v5249, %v5248
    %v5264 = vpack.c.bf16 %v5251, %v5250
    %v5265 = vpack.c.bf16 %v5253, %v5252
    %v5266 = vpack.c.bf16 %v5255, %v5254
    %v5267 = vpack.c.bf16 %v5257, %v5256
    %v5268 = vpack.c.bf16 %v5259, %v5258
    %v5269 = vpack.c.bf16 %v5261, %v5260
    %v5270 = vpack.c.bf16 %v5262, %v5262
    %s5271 = scalar_lea.vmem %s3, 192
    %v5272 = vld [vmem:[%s5271] sm:$0xf]
    %v5273 = vld [vmem:[%s5271 + $0x4] sm:$0xf]
    %v5274 = vld [vmem:[%s5271 + $0x8] sm:$0xf]
    %v5275 = vld [vmem:[%s5271 + $0xc] sm:$0xf]
    %v5276 = vld [vmem:[%s5271 + $0x10] sm:$0xf]
    %v5277 = vld [vmem:[%s5271 + $0x14] sm:$0xf]
    %v5284 = vunpack.c.l.b16 %v5272
    %v5285 = vunpack.c.l.b16 %v5273
    %v5286 = vunpack.c.l.b16 %v5274
    %v5287 = vunpack.c.l.b16 %v5275
    %v5288 = vunpack.c.l.b16 %v5276
    %v5289 = vunpack.c.l.b16 %v5277
    %v5290 = vpack.c.b16 %v5285, %v5284
    %v5291 = vpack.c.b16 %v5287, %v5286
    %v5292 = vpack.c.b16 %v5289, %v5288
    %v5297 = vsel %vm173, %v5263, 0
    %v5300 = vsel %vm173, %v5264, 0
    %v5303 = vsel %vm173, %v5265, 0
    %v5306 = vsel %vm173, %v5266, 0
    %v5309 = vsel %vm173, %v5267, 0
    %v5312 = vsel %vm173, %v5268, 0
    %v5315 = vsel %vm173, %v5269, 0
    %v5318 = vsel %vm173, %v5270, 0
    %5320 = vmatprep.subr.bf16.mxu0 0
    %5321 = vmatpush1.bf16.msra.mxu0 0
    %5322 = vmatprep.subr.bf16.mxu0 0
    %5323 = vmatpush1.bf16.msra.mxu0 0
    %5324 = vmatprep.subr.bf16.mxu0 0
    %5325 = vmatpush1.bf16.msra.mxu0 0
    %5326 = vmatprep.subr.bf16.mxu0 0
    %5327 = vmatpush1.bf16.msra.mxu0 0
    %5328 = vmatprep.subr.bf16.mxu0 0
    %5329 = vmatpush1.bf16.msra.mxu0 0
    %5330 = vmatprep.subr.bf16.mxu0 0
    %5331 = vmatpush1.bf16.msra.mxu0 %v5292
    %5332 = vmatprep.subr.bf16.mxu0 0
    %5333 = vmatpush1.bf16.msra.mxu0 %v5291
    %5334 = vmatprep.subr.bf16.mxu0 0
    %5335 = vmatpush1.bf16.msra.mxu0 %v5290
    %5336 = vmatprep.subr.bf16.mxu0 0
    %5337 = vmatpush2.bf16.msra.mxu0 0
    %5338 = vmatprep.subr.bf16.mxu0 0
    %5339 = vmatpush2.bf16.msra.mxu0 0
    %5340 = vmatprep.subr.bf16.mxu0 0
    %5341 = vmatpush2.bf16.msra.mxu0 0
    %5342 = vmatprep.subr.bf16.mxu0 0
    %5343 = vmatpush2.bf16.msra.mxu0 0
    %5344 = vmatprep.subr.bf16.mxu0 0
    %5345 = vmatpush2.bf16.msra.mxu0 0
    %5346 = vmatprep.subr.bf16.mxu0 0
    %5347 = vmatpush2.bf16.msra.mxu0 0
    %5348 = vmatprep.subr.bf16.mxu0 0
    %5349 = vmatpush2.bf16.msra.mxu0 0
    %5350 = vmatprep.subr.bf16.mxu0 0
    %5351 = vmatpush2.bf16.msra.mxu0 0
    %5352 = vmatprep.mubr.bf16.mxu0 0
    %5353 = vmatmul.mubr.bf16.gmra.mxu0 %v5297
    %v5354 = vpop.f32.mrf.mxu0
    %v5355 = vadd.f32 0.0, %v5354
    %v5356 = vpop.f32.mrf.mxu0
    %v5357 = vpop.f32.mrf.mxu0
    %v5358 = vadd.f32 0.0, %v5357
    %v5359 = vpop.f32.mrf.mxu0
    %5360 = vmatprep.mubr.bf16.mxu0 0
    %5361 = vmatmul.mubr.bf16.gmra.mxu0 %v5300
    %v5362 = vpop.f32.mrf.mxu0
    %v5363 = vadd.f32 0.0, %v5362
    %v5364 = vpop.f32.mrf.mxu0
    %v5365 = vpop.f32.mrf.mxu0
    %v5366 = vadd.f32 0.0, %v5365
    %v5367 = vpop.f32.mrf.mxu0
    %5368 = vmatprep.mubr.bf16.mxu0 0
    %5369 = vmatmul.mubr.bf16.gmra.mxu0 %v5303
    %v5370 = vpop.f32.mrf.mxu0
    %v5371 = vadd.f32 0.0, %v5370
    %v5372 = vpop.f32.mrf.mxu0
    %v5373 = vpop.f32.mrf.mxu0
    %v5374 = vadd.f32 0.0, %v5373
    %v5375 = vpop.f32.mrf.mxu0
    %5376 = vmatprep.mubr.bf16.mxu0 0
    %5377 = vmatmul.mubr.bf16.gmra.mxu0 %v5306
    %v5378 = vpop.f32.mrf.mxu0
    %v5379 = vpop.f32.mrf.mxu0
    %v5380 = vpop.f32.mrf.mxu0
    %v5381 = vpop.f32.mrf.mxu0
    %5382 = vmatprep.mubr.bf16.mxu0 0
    %5383 = vmatmul.mubr.bf16.gmra.mxu0 %v5309
    %v5384 = vpop.f32.mrf.mxu0
    %v5385 = vpop.f32.mrf.mxu0
    %v5386 = vpop.f32.mrf.mxu0
    %v5387 = vpop.f32.mrf.mxu0
    %5388 = vmatprep.mubr.bf16.mxu0 0
    %5389 = vmatmul.mubr.bf16.gmra.mxu0 %v5312
    %v5390 = vpop.f32.mrf.mxu0
    %v5391 = vpop.f32.mrf.mxu0
    %v5392 = vpop.f32.mrf.mxu0
    %v5393 = vadd.f32 0.0, %v5392
    %v5394 = vpop.f32.mrf.mxu0
    %5395 = vmatprep.mubr.bf16.mxu0 0
    %5396 = vmatmul.mubr.bf16.gmra.mxu0 %v5315
    %v5397 = vpop.f32.mrf.mxu0
    %v5398 = vadd.f32 0.0, %v5397
    %v5399 = vpop.f32.mrf.mxu0
    %v5400 = vpop.f32.mrf.mxu0
    %v5401 = vadd.f32 0.0, %v5400
    %v5402 = vpop.f32.mrf.mxu0
    %5403 = vmatprep.mubr.bf16.mxu0 0
    %5404 = vmatmul.mubr.bf16.gmra.mxu0 %v5318
    %v5405 = vpop.f32.mrf.mxu0
    %v5406 = vadd.f32 0.0, %v5405
    %v5407 = vpop.f32.mrf.mxu0
    %v5408 = vpop.f32.mrf.mxu0
    %v5409 = vpop.f32.mrf.mxu0
    %5410 = vdwg.mxu0
    %v5411 = vadd.f32 %v5238, %v5355
    %v5412 = vadd.f32 %v5239, %v5358
    %v5413 = vadd.f32 %v5240, %v5363
    %v5414 = vadd.f32 %v5241, %v5366
    %v5415 = vadd.f32 %v5242, %v5371
    %v5416 = vadd.f32 %v5243, %v5374
    %v5417 = vadd.f32 %v5244, %v5393
    %v5418 = vadd.f32 %v5245, %v5398
    %v5419 = vadd.f32 %v5246, %v5401
    %v5420 = vadd.f32 %v5247, %v5406
    %v5421 = vld [vmem:[#allocation3 + $0xd] sm:$0xff]
    %v5422 = vld [vmem:[#allocation3 + $0x15] sm:$0xff]
    %v5423 = vld [vmem:[#allocation3 + $0x1d] sm:$0xff]
    %v5424 = vld [vmem:[#allocation3 + $0x25] sm:$0xff]
    %v5425 = vld [vmem:[#allocation3 + $0x2d] sm:$0xff]
    %v5426 = vld [vmem:[#allocation3 + $0x35] sm:$0xff]
    %v5427 = vld [vmem:[#allocation3 + $0x3d] sm:$0xff]
    %v5428 = vld [vmem:[#allocation3 + $0x45] sm:$0xff]
    %v5429 = vld [vmem:[#allocation3 + $0x4d] sm:$0xff]
    %v5430 = vld [vmem:[#allocation3 + $0x55] sm:$0xff]
    %v5431 = vld [vmem:[#allocation3 + $0x5d] sm:$0xff]
    %v5432 = vld [vmem:[#allocation3 + $0x65] sm:$0xff]
    %v5433 = vld [vmem:[#allocation3 + $0x6d] sm:$0xff]
    %v5434 = vld [vmem:[#allocation3 + $0x75] sm:$0xff]
    %v5435 = vld [vmem:[#allocation3 + $0x7d] sm:$0xff]
    %v5436 = vpack.c.bf16 %v5422, %v5421
    %v5437 = vpack.c.bf16 %v5424, %v5423
    %v5438 = vpack.c.bf16 %v5426, %v5425
    %v5439 = vpack.c.bf16 %v5428, %v5427
    %v5440 = vpack.c.bf16 %v5430, %v5429
    %v5441 = vpack.c.bf16 %v5432, %v5431
    %v5442 = vpack.c.bf16 %v5434, %v5433
    %v5443 = vpack.c.bf16 %v5435, %v5435
    %s5444 = scalar_lea.vmem %s3, 216
    %v5445 = vld [vmem:[%s5444] sm:$0xf]
    %v5446 = vld [vmem:[%s5444 + $0x4] sm:$0xf]
    %v5447 = vld [vmem:[%s5444 + $0x8] sm:$0xf]
    %v5448 = vld [vmem:[%s5444 + $0xc] sm:$0xf]
    %v5449 = vld [vmem:[%s5444 + $0x10] sm:$0xf]
    %v5450 = vld [vmem:[%s5444 + $0x14] sm:$0xf]
    %v5457 = vunpack.c.l.b16 %v5445
    %v5458 = vunpack.c.l.b16 %v5446
    %v5459 = vunpack.c.l.b16 %v5447
    %v5460 = vunpack.c.l.b16 %v5448
    %v5461 = vunpack.c.l.b16 %v5449
    %v5462 = vunpack.c.l.b16 %v5450
    %v5463 = vpack.c.b16 %v5458, %v5457
    %v5464 = vpack.c.b16 %v5460, %v5459
    %v5465 = vpack.c.b16 %v5462, %v5461
    %v5470 = vsel %vm173, %v5436, 0
    %v5473 = vsel %vm173, %v5437, 0
    %v5476 = vsel %vm173, %v5438, 0
    %v5479 = vsel %vm173, %v5439, 0
    %v5482 = vsel %vm173, %v5440, 0
    %v5485 = vsel %vm173, %v5441, 0
    %v5488 = vsel %vm173, %v5442, 0
    %v5491 = vsel %vm173, %v5443, 0
    %5493 = vmatprep.subr.bf16.mxu0 0
    %5494 = vmatpush1.bf16.msra.mxu0 0
    %5495 = vmatprep.subr.bf16.mxu0 0
    %5496 = vmatpush1.bf16.msra.mxu0 0
    %5497 = vmatprep.subr.bf16.mxu0 0
    %5498 = vmatpush1.bf16.msra.mxu0 0
    %5499 = vmatprep.subr.bf16.mxu0 0
    %5500 = vmatpush1.bf16.msra.mxu0 0
    %5501 = vmatprep.subr.bf16.mxu0 0
    %5502 = vmatpush1.bf16.msra.mxu0 0
    %5503 = vmatprep.subr.bf16.mxu0 0
    %5504 = vmatpush1.bf16.msra.mxu0 %v5465
    %5505 = vmatprep.subr.bf16.mxu0 0
    %5506 = vmatpush1.bf16.msra.mxu0 %v5464
    %5507 = vmatprep.subr.bf16.mxu0 0
    %5508 = vmatpush1.bf16.msra.mxu0 %v5463
    %5509 = vmatprep.subr.bf16.mxu0 0
    %5510 = vmatpush2.bf16.msra.mxu0 0
    %5511 = vmatprep.subr.bf16.mxu0 0
    %5512 = vmatpush2.bf16.msra.mxu0 0
    %5513 = vmatprep.subr.bf16.mxu0 0
    %5514 = vmatpush2.bf16.msra.mxu0 0
    %5515 = vmatprep.subr.bf16.mxu0 0
    %5516 = vmatpush2.bf16.msra.mxu0 0
    %5517 = vmatprep.subr.bf16.mxu0 0
    %5518 = vmatpush2.bf16.msra.mxu0 0
    %5519 = vmatprep.subr.bf16.mxu0 0
    %5520 = vmatpush2.bf16.msra.mxu0 0
    %5521 = vmatprep.subr.bf16.mxu0 0
    %5522 = vmatpush2.bf16.msra.mxu0 0
    %5523 = vmatprep.subr.bf16.mxu0 0
    %5524 = vmatpush2.bf16.msra.mxu0 0
    %5525 = vmatprep.mubr.bf16.mxu0 0
    %5526 = vmatmul.mubr.bf16.gmra.mxu0 %v5470
    %v5527 = vpop.f32.mrf.mxu0
    %v5528 = vadd.f32 0.0, %v5527
    %v5529 = vpop.f32.mrf.mxu0
    %v5530 = vpop.f32.mrf.mxu0
    %v5531 = vadd.f32 0.0, %v5530
    %v5532 = vpop.f32.mrf.mxu0
    %5533 = vmatprep.mubr.bf16.mxu0 0
    %5534 = vmatmul.mubr.bf16.gmra.mxu0 %v5473
    %v5535 = vpop.f32.mrf.mxu0
    %v5536 = vadd.f32 0.0, %v5535
    %v5537 = vpop.f32.mrf.mxu0
    %v5538 = vpop.f32.mrf.mxu0
    %v5539 = vadd.f32 0.0, %v5538
    %v5540 = vpop.f32.mrf.mxu0
    %5541 = vmatprep.mubr.bf16.mxu0 0
    %5542 = vmatmul.mubr.bf16.gmra.mxu0 %v5476
    %v5543 = vpop.f32.mrf.mxu0
    %v5544 = vadd.f32 0.0, %v5543
    %v5545 = vpop.f32.mrf.mxu0
    %v5546 = vpop.f32.mrf.mxu0
    %v5547 = vadd.f32 0.0, %v5546
    %v5548 = vpop.f32.mrf.mxu0
    %5549 = vmatprep.mubr.bf16.mxu0 0
    %5550 = vmatmul.mubr.bf16.gmra.mxu0 %v5479
    %v5551 = vpop.f32.mrf.mxu0
    %v5552 = vpop.f32.mrf.mxu0
    %v5553 = vpop.f32.mrf.mxu0
    %v5554 = vpop.f32.mrf.mxu0
    %5555 = vmatprep.mubr.bf16.mxu0 0
    %5556 = vmatmul.mubr.bf16.gmra.mxu0 %v5482
    %v5557 = vpop.f32.mrf.mxu0
    %v5558 = vpop.f32.mrf.mxu0
    %v5559 = vpop.f32.mrf.mxu0
    %v5560 = vpop.f32.mrf.mxu0
    %5561 = vmatprep.mubr.bf16.mxu0 0
    %5562 = vmatmul.mubr.bf16.gmra.mxu0 %v5485
    %v5563 = vpop.f32.mrf.mxu0
    %v5564 = vpop.f32.mrf.mxu0
    %v5565 = vpop.f32.mrf.mxu0
    %v5566 = vadd.f32 0.0, %v5565
    %v5567 = vpop.f32.mrf.mxu0
    %5568 = vmatprep.mubr.bf16.mxu0 0
    %5569 = vmatmul.mubr.bf16.gmra.mxu0 %v5488
    %v5570 = vpop.f32.mrf.mxu0
    %v5571 = vadd.f32 0.0, %v5570
    %v5572 = vpop.f32.mrf.mxu0
    %v5573 = vpop.f32.mrf.mxu0
    %v5574 = vadd.f32 0.0, %v5573
    %v5575 = vpop.f32.mrf.mxu0
    %5576 = vmatprep.mubr.bf16.mxu0 0
    %5577 = vmatmul.mubr.bf16.gmra.mxu0 %v5491
    %v5578 = vpop.f32.mrf.mxu0
    %v5579 = vadd.f32 0.0, %v5578
    %v5580 = vpop.f32.mrf.mxu0
    %v5581 = vpop.f32.mrf.mxu0
    %v5582 = vpop.f32.mrf.mxu0
    %5583 = vdwg.mxu0
    %v5584 = vadd.f32 %v5411, %v5528
    %v5585 = vadd.f32 %v5412, %v5531
    %v5586 = vadd.f32 %v5413, %v5536
    %v5587 = vadd.f32 %v5414, %v5539
    %v5588 = vadd.f32 %v5415, %v5544
    %v5589 = vadd.f32 %v5416, %v5547
    %v5590 = vadd.f32 %v5417, %v5566
    %v5591 = vadd.f32 %v5418, %v5571
    %v5592 = vadd.f32 %v5419, %v5574
    %v5593 = vadd.f32 %v5420, %v5579
    %v5594 = vld [vmem:[#allocation3 + $0x12] sm:$0xff]
    %v5595 = vld [vmem:[#allocation3 + $0x1a] sm:$0xff]
    %v5596 = vld [vmem:[#allocation3 + $0x22] sm:$0xff]
    %v5597 = vld [vmem:[#allocation3 + $0x2a] sm:$0xff]
    %v5598 = vld [vmem:[#allocation3 + $0x32] sm:$0xff]
    %v5599 = vld [vmem:[#allocation3 + $0x3a] sm:$0xff]
    %v5600 = vld [vmem:[#allocation3 + $0x42] sm:$0xff]
    %v5601 = vld [vmem:[#allocation3 + $0x4a] sm:$0xff]
    %v5602 = vld [vmem:[#allocation3 + $0x52] sm:$0xff]
    %v5603 = vld [vmem:[#allocation3 + $0x5a] sm:$0xff]
    %v5604 = vld [vmem:[#allocation3 + $0x62] sm:$0xff]
    %v5605 = vld [vmem:[#allocation3 + $0x6a] sm:$0xff]
    %v5606 = vld [vmem:[#allocation3 + $0x72] sm:$0xff]
    %v5607 = vld [vmem:[#allocation3 + $0x7a] sm:$0xff]
    %v5608 = vld [vmem:[#allocation3 + $0x82] sm:$0xff]
    %v5609 = vpack.c.bf16 %v5595, %v5594
    %v5610 = vpack.c.bf16 %v5597, %v5596
    %v5611 = vpack.c.bf16 %v5599, %v5598
    %v5612 = vpack.c.bf16 %v5601, %v5600
    %v5613 = vpack.c.bf16 %v5603, %v5602
    %v5614 = vpack.c.bf16 %v5605, %v5604
    %v5615 = vpack.c.bf16 %v5607, %v5606
    %v5616 = vpack.c.bf16 %v5608, %v5608
    %s5617 = scalar_lea.vmem %s3, 240
    %v5618 = vld [vmem:[%s5617] sm:$0xf]
    %v5619 = vld [vmem:[%s5617 + $0x4] sm:$0xf]
    %v5620 = vld [vmem:[%s5617 + $0x8] sm:$0xf]
    %v5621 = vld [vmem:[%s5617 + $0xc] sm:$0xf]
    %v5622 = vld [vmem:[%s5617 + $0x10] sm:$0xf]
    %v5623 = vld [vmem:[%s5617 + $0x14] sm:$0xf]
    %v5630 = vunpack.c.l.b16 %v5618
    %v5631 = vunpack.c.l.b16 %v5619
    %v5632 = vunpack.c.l.b16 %v5620
    %v5633 = vunpack.c.l.b16 %v5621
    %v5634 = vunpack.c.l.b16 %v5622
    %v5635 = vunpack.c.l.b16 %v5623
    %v5636 = vpack.c.b16 %v5631, %v5630
    %v5637 = vpack.c.b16 %v5633, %v5632
    %v5638 = vpack.c.b16 %v5635, %v5634
    %v5643 = vsel %vm173, %v5609, 0
    %v5646 = vsel %vm173, %v5610, 0
    %v5649 = vsel %vm173, %v5611, 0
    %v5652 = vsel %vm173, %v5612, 0
    %v5655 = vsel %vm173, %v5613, 0
    %v5658 = vsel %vm173, %v5614, 0
    %v5661 = vsel %vm173, %v5615, 0
    %v5664 = vsel %vm173, %v5616, 0
    %5666 = vmatprep.subr.bf16.mxu0 0
    %5667 = vmatpush1.bf16.msra.mxu0 0
    %5668 = vmatprep.subr.bf16.mxu0 0
    %5669 = vmatpush1.bf16.msra.mxu0 0
    %5670 = vmatprep.subr.bf16.mxu0 0
    %5671 = vmatpush1.bf16.msra.mxu0 0
    %5672 = vmatprep.subr.bf16.mxu0 0
    %5673 = vmatpush1.bf16.msra.mxu0 0
    %5674 = vmatprep.subr.bf16.mxu0 0
    %5675 = vmatpush1.bf16.msra.mxu0 0
    %5676 = vmatprep.subr.bf16.mxu0 0
    %5677 = vmatpush1.bf16.msra.mxu0 %v5638
    %5678 = vmatprep.subr.bf16.mxu0 0
    %5679 = vmatpush1.bf16.msra.mxu0 %v5637
    %5680 = vmatprep.subr.bf16.mxu0 0
    %5681 = vmatpush1.bf16.msra.mxu0 %v5636
    %5682 = vmatprep.subr.bf16.mxu0 0
    %5683 = vmatpush2.bf16.msra.mxu0 0
    %5684 = vmatprep.subr.bf16.mxu0 0
    %5685 = vmatpush2.bf16.msra.mxu0 0
    %5686 = vmatprep.subr.bf16.mxu0 0
    %5687 = vmatpush2.bf16.msra.mxu0 0
    %5688 = vmatprep.subr.bf16.mxu0 0
    %5689 = vmatpush2.bf16.msra.mxu0 0
    %5690 = vmatprep.subr.bf16.mxu0 0
    %5691 = vmatpush2.bf16.msra.mxu0 0
    %5692 = vmatprep.subr.bf16.mxu0 0
    %5693 = vmatpush2.bf16.msra.mxu0 0
    %5694 = vmatprep.subr.bf16.mxu0 0
    %5695 = vmatpush2.bf16.msra.mxu0 0
    %5696 = vmatprep.subr.bf16.mxu0 0
    %5697 = vmatpush2.bf16.msra.mxu0 0
    %5698 = vmatprep.mubr.bf16.mxu0 0
    %5699 = vmatmul.mubr.bf16.gmra.mxu0 %v5643
    %v5700 = vpop.f32.mrf.mxu0
    %v5701 = vadd.f32 0.0, %v5700
    %v5702 = vpop.f32.mrf.mxu0
    %v5703 = vpop.f32.mrf.mxu0
    %v5704 = vadd.f32 0.0, %v5703
    %v5705 = vpop.f32.mrf.mxu0
    %5706 = vmatprep.mubr.bf16.mxu0 0
    %5707 = vmatmul.mubr.bf16.gmra.mxu0 %v5646
    %v5708 = vpop.f32.mrf.mxu0
    %v5709 = vadd.f32 0.0, %v5708
    %v5710 = vpop.f32.mrf.mxu0
    %v5711 = vpop.f32.mrf.mxu0
    %v5712 = vadd.f32 0.0, %v5711
    %v5713 = vpop.f32.mrf.mxu0
    %5714 = vmatprep.mubr.bf16.mxu0 0
    %5715 = vmatmul.mubr.bf16.gmra.mxu0 %v5649
    %v5716 = vpop.f32.mrf.mxu0
    %v5717 = vadd.f32 0.0, %v5716
    %v5718 = vpop.f32.mrf.mxu0
    %v5719 = vpop.f32.mrf.mxu0
    %v5720 = vadd.f32 0.0, %v5719
    %v5721 = vpop.f32.mrf.mxu0
    %5722 = vmatprep.mubr.bf16.mxu0 0
    %5723 = vmatmul.mubr.bf16.gmra.mxu0 %v5652
    %v5724 = vpop.f32.mrf.mxu0
    %v5725 = vpop.f32.mrf.mxu0
    %v5726 = vpop.f32.mrf.mxu0
    %v5727 = vpop.f32.mrf.mxu0
    %5728 = vmatprep.mubr.bf16.mxu0 0
    %5729 = vmatmul.mubr.bf16.gmra.mxu0 %v5655
    %v5730 = vpop.f32.mrf.mxu0
    %v5731 = vpop.f32.mrf.mxu0
    %v5732 = vpop.f32.mrf.mxu0
    %v5733 = vpop.f32.mrf.mxu0
    %5734 = vmatprep.mubr.bf16.mxu0 0
    %5735 = vmatmul.mubr.bf16.gmra.mxu0 %v5658
    %v5736 = vpop.f32.mrf.mxu0
    %v5737 = vpop.f32.mrf.mxu0
    %v5738 = vpop.f32.mrf.mxu0
    %v5739 = vadd.f32 0.0, %v5738
    %v5740 = vpop.f32.mrf.mxu0
    %5741 = vmatprep.mubr.bf16.mxu0 0
    %5742 = vmatmul.mubr.bf16.gmra.mxu0 %v5661
    %v5743 = vpop.f32.mrf.mxu0
    %v5744 = vadd.f32 0.0, %v5743
    %v5745 = vpop.f32.mrf.mxu0
    %v5746 = vpop.f32.mrf.mxu0
    %v5747 = vadd.f32 0.0, %v5746
    %v5748 = vpop.f32.mrf.mxu0
    %5749 = vmatprep.mubr.bf16.mxu0 0
    %5750 = vmatmul.mubr.bf16.gmra.mxu0 %v5664
    %v5751 = vpop.f32.mrf.mxu0
    %v5752 = vadd.f32 0.0, %v5751
    %v5753 = vpop.f32.mrf.mxu0
    %v5754 = vpop.f32.mrf.mxu0
    %v5755 = vpop.f32.mrf.mxu0
    %5756 = vdwg.mxu0
    %v5757 = vadd.f32 %v5584, %v5701
    %v5758 = vadd.f32 %v5585, %v5704
    %v5759 = vadd.f32 %v5586, %v5709
    %v5760 = vadd.f32 %v5587, %v5712
    %v5761 = vadd.f32 %v5588, %v5717
    %v5762 = vadd.f32 %v5589, %v5720
    %v5763 = vadd.f32 %v5590, %v5739
    %v5764 = vadd.f32 %v5591, %v5744
    %v5765 = vadd.f32 %v5592, %v5747
    %v5766 = vadd.f32 %v5593, %v5752
    %v5767 = vld [vmem:[#allocation3 + $0x13] sm:$0xff]
    %v5768 = vld [vmem:[#allocation3 + $0x1b] sm:$0xff]
    %v5769 = vld [vmem:[#allocation3 + $0x23] sm:$0xff]
    %v5770 = vld [vmem:[#allocation3 + $0x2b] sm:$0xff]
    %v5771 = vld [vmem:[#allocation3 + $0x33] sm:$0xff]
    %v5772 = vld [vmem:[#allocation3 + $0x3b] sm:$0xff]
    %v5773 = vld [vmem:[#allocation3 + $0x43] sm:$0xff]
    %v5774 = vld [vmem:[#allocation3 + $0x4b] sm:$0xff]
    %v5775 = vld [vmem:[#allocation3 + $0x53] sm:$0xff]
    %v5776 = vld [vmem:[#allocation3 + $0x5b] sm:$0xff]
    %v5777 = vld [vmem:[#allocation3 + $0x63] sm:$0xff]
    %v5778 = vld [vmem:[#allocation3 + $0x6b] sm:$0xff]
    %v5779 = vld [vmem:[#allocation3 + $0x73] sm:$0xff]
    %v5780 = vld [vmem:[#allocation3 + $0x7b] sm:$0xff]
    %v5781 = vld [vmem:[#allocation3 + $0x83] sm:$0xff]
    %v5782 = vpack.c.bf16 %v5768, %v5767
    %v5783 = vpack.c.bf16 %v5770, %v5769
    %v5784 = vpack.c.bf16 %v5772, %v5771
    %v5785 = vpack.c.bf16 %v5774, %v5773
    %v5786 = vpack.c.bf16 %v5776, %v5775
    %v5787 = vpack.c.bf16 %v5778, %v5777
    %v5788 = vpack.c.bf16 %v5780, %v5779
    %v5789 = vpack.c.bf16 %v5781, %v5781
    %s5790 = scalar_lea.vmem %s3, 264
    %v5791 = vld [vmem:[%s5790] sm:$0xf]
    %v5792 = vld [vmem:[%s5790 + $0x4] sm:$0xf]
    %v5793 = vld [vmem:[%s5790 + $0x8] sm:$0xf]
    %v5794 = vld [vmem:[%s5790 + $0xc] sm:$0xf]
    %v5795 = vld [vmem:[%s5790 + $0x10] sm:$0xf]
    %v5796 = vld [vmem:[%s5790 + $0x14] sm:$0xf]
    %v5803 = vunpack.c.l.b16 %v5791
    %v5804 = vunpack.c.l.b16 %v5792
    %v5805 = vunpack.c.l.b16 %v5793
    %v5806 = vunpack.c.l.b16 %v5794
    %v5807 = vunpack.c.l.b16 %v5795
    %v5808 = vunpack.c.l.b16 %v5796
    %v5809 = vpack.c.b16 %v5804, %v5803
    %v5810 = vpack.c.b16 %v5806, %v5805
    %v5811 = vpack.c.b16 %v5808, %v5807
    %v5816 = vsel %vm173, %v5782, 0
    %v5819 = vsel %vm173, %v5783, 0
    %v5822 = vsel %vm173, %v5784, 0
    %v5825 = vsel %vm173, %v5785, 0
    %v5828 = vsel %vm173, %v5786, 0
    %v5831 = vsel %vm173, %v5787, 0
    %v5834 = vsel %vm173, %v5788, 0
    %v5837 = vsel %vm173, %v5789, 0
    %5839 = vmatprep.subr.bf16.mxu0 0
    %5840 = vmatpush1.bf16.msra.mxu0 0
    %5841 = vmatprep.subr.bf16.mxu0 0
    %5842 = vmatpush1.bf16.msra.mxu0 0
    %5843 = vmatprep.subr.bf16.mxu0 0
    %5844 = vmatpush1.bf16.msra.mxu0 0
    %5845 = vmatprep.subr.bf16.mxu0 0
    %5846 = vmatpush1.bf16.msra.mxu0 0
    %5847 = vmatprep.subr.bf16.mxu0 0
    %5848 = vmatpush1.bf16.msra.mxu0 0
    %5849 = vmatprep.subr.bf16.mxu0 0
    %5850 = vmatpush1.bf16.msra.mxu0 %v5811
    %5851 = vmatprep.subr.bf16.mxu0 0
    %5852 = vmatpush1.bf16.msra.mxu0 %v5810
    %5853 = vmatprep.subr.bf16.mxu0 0
    %5854 = vmatpush1.bf16.msra.mxu0 %v5809
    %5855 = vmatprep.subr.bf16.mxu0 0
    %5856 = vmatpush2.bf16.msra.mxu0 0
    %5857 = vmatprep.subr.bf16.mxu0 0
    %5858 = vmatpush2.bf16.msra.mxu0 0
    %5859 = vmatprep.subr.bf16.mxu0 0
    %5860 = vmatpush2.bf16.msra.mxu0 0
    %5861 = vmatprep.subr.bf16.mxu0 0
    %5862 = vmatpush2.bf16.msra.mxu0 0
    %5863 = vmatprep.subr.bf16.mxu0 0
    %5864 = vmatpush2.bf16.msra.mxu0 0
    %5865 = vmatprep.subr.bf16.mxu0 0
    %5866 = vmatpush2.bf16.msra.mxu0 0
    %5867 = vmatprep.subr.bf16.mxu0 0
    %5868 = vmatpush2.bf16.msra.mxu0 0
    %5869 = vmatprep.subr.bf16.mxu0 0
    %5870 = vmatpush2.bf16.msra.mxu0 0
    %5871 = vmatprep.mubr.bf16.mxu0 0
    %5872 = vmatmul.mubr.bf16.gmra.mxu0 %v5816
    %v5873 = vpop.f32.mrf.mxu0
    %v5874 = vadd.f32 0.0, %v5873
    %v5875 = vpop.f32.mrf.mxu0
    %v5876 = vpop.f32.mrf.mxu0
    %v5877 = vadd.f32 0.0, %v5876
    %v5878 = vpop.f32.mrf.mxu0
    %5879 = vmatprep.mubr.bf16.mxu0 0
    %5880 = vmatmul.mubr.bf16.gmra.mxu0 %v5819
    %v5881 = vpop.f32.mrf.mxu0
    %v5882 = vadd.f32 0.0, %v5881
    %v5883 = vpop.f32.mrf.mxu0
    %v5884 = vpop.f32.mrf.mxu0
    %v5885 = vadd.f32 0.0, %v5884
    %v5886 = vpop.f32.mrf.mxu0
    %5887 = vmatprep.mubr.bf16.mxu0 0
    %5888 = vmatmul.mubr.bf16.gmra.mxu0 %v5822
    %v5889 = vpop.f32.mrf.mxu0
    %v5890 = vadd.f32 0.0, %v5889
    %v5891 = vpop.f32.mrf.mxu0
    %v5892 = vpop.f32.mrf.mxu0
    %v5893 = vadd.f32 0.0, %v5892
    %v5894 = vpop.f32.mrf.mxu0
    %5895 = vmatprep.mubr.bf16.mxu0 0
    %5896 = vmatmul.mubr.bf16.gmra.mxu0 %v5825
    %v5897 = vpop.f32.mrf.mxu0
    %v5898 = vpop.f32.mrf.mxu0
    %v5899 = vpop.f32.mrf.mxu0
    %v5900 = vpop.f32.mrf.mxu0
    %5901 = vmatprep.mubr.bf16.mxu0 0
    %5902 = vmatmul.mubr.bf16.gmra.mxu0 %v5828
    %v5903 = vpop.f32.mrf.mxu0
    %v5904 = vpop.f32.mrf.mxu0
    %v5905 = vpop.f32.mrf.mxu0
    %v5906 = vpop.f32.mrf.mxu0
    %5907 = vmatprep.mubr.bf16.mxu0 0
    %5908 = vmatmul.mubr.bf16.gmra.mxu0 %v5831
    %v5909 = vpop.f32.mrf.mxu0
    %v5910 = vpop.f32.mrf.mxu0
    %v5911 = vpop.f32.mrf.mxu0
    %v5912 = vadd.f32 0.0, %v5911
    %v5913 = vpop.f32.mrf.mxu0
    %5914 = vmatprep.mubr.bf16.mxu0 0
    %5915 = vmatmul.mubr.bf16.gmra.mxu0 %v5834
    %v5916 = vpop.f32.mrf.mxu0
    %v5917 = vadd.f32 0.0, %v5916
    %v5918 = vpop.f32.mrf.mxu0
    %v5919 = vpop.f32.mrf.mxu0
    %v5920 = vadd.f32 0.0, %v5919
    %v5921 = vpop.f32.mrf.mxu0
    %5922 = vmatprep.mubr.bf16.mxu0 0
    %5923 = vmatmul.mubr.bf16.gmra.mxu0 %v5837
    %v5924 = vpop.f32.mrf.mxu0
    %v5925 = vadd.f32 0.0, %v5924
    %v5926 = vpop.f32.mrf.mxu0
    %v5927 = vpop.f32.mrf.mxu0
    %v5928 = vpop.f32.mrf.mxu0
    %5929 = vdwg.mxu0
    %v5930 = vadd.f32 %v5757, %v5874
    %v5931 = vadd.f32 %v5758, %v5877
    %v5932 = vadd.f32 %v5759, %v5882
    %v5933 = vadd.f32 %v5760, %v5885
    %v5934 = vadd.f32 %v5761, %v5890
    %v5935 = vadd.f32 %v5762, %v5893
    %v5936 = vadd.f32 %v5763, %v5912
    %v5937 = vadd.f32 %v5764, %v5917
    %v5938 = vadd.f32 %v5765, %v5920
    %v5939 = vadd.f32 %v5766, %v5925
    %v5940 = vld [vmem:[#allocation3 + $0x14] sm:$0xff]
    %v5941 = vld [vmem:[#allocation3 + $0x1c] sm:$0xff]
    %v5942 = vld [vmem:[#allocation3 + $0x24] sm:$0xff]
    %v5943 = vld [vmem:[#allocation3 + $0x2c] sm:$0xff]
    %v5944 = vld [vmem:[#allocation3 + $0x34] sm:$0xff]
    %v5945 = vld [vmem:[#allocation3 + $0x3c] sm:$0xff]
    %v5946 = vld [vmem:[#allocation3 + $0x44] sm:$0xff]
    %v5947 = vld [vmem:[#allocation3 + $0x4c] sm:$0xff]
    %v5948 = vld [vmem:[#allocation3 + $0x54] sm:$0xff]
    %v5949 = vld [vmem:[#allocation3 + $0x5c] sm:$0xff]
    %v5950 = vld [vmem:[#allocation3 + $0x64] sm:$0xff]
    %v5951 = vld [vmem:[#allocation3 + $0x6c] sm:$0xff]
    %v5952 = vld [vmem:[#allocation3 + $0x74] sm:$0xff]
    %v5953 = vld [vmem:[#allocation3 + $0x7c] sm:$0xff]
    %v5954 = vld [vmem:[#allocation3 + $0x84] sm:$0xff]
    %v5955 = vpack.c.bf16 %v5941, %v5940
    %v5956 = vpack.c.bf16 %v5943, %v5942
    %v5957 = vpack.c.bf16 %v5945, %v5944
    %v5958 = vpack.c.bf16 %v5947, %v5946
    %v5959 = vpack.c.bf16 %v5949, %v5948
    %v5960 = vpack.c.bf16 %v5951, %v5950
    %v5961 = vpack.c.bf16 %v5953, %v5952
    %v5962 = vpack.c.bf16 %v5954, %v5954
    %s5963 = scalar_lea.vmem %s3, 288
    %v5964 = vld [vmem:[%s5963] sm:$0xf]
    %v5965 = vld [vmem:[%s5963 + $0x4] sm:$0xf]
    %v5966 = vld [vmem:[%s5963 + $0x8] sm:$0xf]
    %v5967 = vld [vmem:[%s5963 + $0xc] sm:$0xf]
    %v5968 = vld [vmem:[%s5963 + $0x10] sm:$0xf]
    %v5969 = vld [vmem:[%s5963 + $0x14] sm:$0xf]
    %v5976 = vunpack.c.l.b16 %v5964
    %v5977 = vunpack.c.l.b16 %v5965
    %v5978 = vunpack.c.l.b16 %v5966
    %v5979 = vunpack.c.l.b16 %v5967
    %v5980 = vunpack.c.l.b16 %v5968
    %v5981 = vunpack.c.l.b16 %v5969
    %v5982 = vpack.c.b16 %v5977, %v5976
    %v5983 = vpack.c.b16 %v5979, %v5978
    %v5984 = vpack.c.b16 %v5981, %v5980
    %v5989 = vsel %vm173, %v5955, 0
    %v5992 = vsel %vm173, %v5956, 0
    %v5995 = vsel %vm173, %v5957, 0
    %v5998 = vsel %vm173, %v5958, 0
    %v6001 = vsel %vm173, %v5959, 0
    %v6004 = vsel %vm173, %v5960, 0
    %v6007 = vsel %vm173, %v5961, 0
    %v6010 = vsel %vm173, %v5962, 0
    %6012 = vmatprep.subr.bf16.mxu0 0
    %6013 = vmatpush1.bf16.msra.mxu0 0
    %6014 = vmatprep.subr.bf16.mxu0 0
    %6015 = vmatpush1.bf16.msra.mxu0 0
    %6016 = vmatprep.subr.bf16.mxu0 0
    %6017 = vmatpush1.bf16.msra.mxu0 0
    %6018 = vmatprep.subr.bf16.mxu0 0
    %6019 = vmatpush1.bf16.msra.mxu0 0
    %6020 = vmatprep.subr.bf16.mxu0 0
    %6021 = vmatpush1.bf16.msra.mxu0 0
    %6022 = vmatprep.subr.bf16.mxu0 0
    %6023 = vmatpush1.bf16.msra.mxu0 %v5984
    %6024 = vmatprep.subr.bf16.mxu0 0
    %6025 = vmatpush1.bf16.msra.mxu0 %v5983
    %6026 = vmatprep.subr.bf16.mxu0 0
    %6027 = vmatpush1.bf16.msra.mxu0 %v5982
    %6028 = vmatprep.subr.bf16.mxu0 0
    %6029 = vmatpush2.bf16.msra.mxu0 0
    %6030 = vmatprep.subr.bf16.mxu0 0
    %6031 = vmatpush2.bf16.msra.mxu0 0
    %6032 = vmatprep.subr.bf16.mxu0 0
    %6033 = vmatpush2.bf16.msra.mxu0 0
    %6034 = vmatprep.subr.bf16.mxu0 0
    %6035 = vmatpush2.bf16.msra.mxu0 0
    %6036 = vmatprep.subr.bf16.mxu0 0
    %6037 = vmatpush2.bf16.msra.mxu0 0
    %6038 = vmatprep.subr.bf16.mxu0 0
    %6039 = vmatpush2.bf16.msra.mxu0 0
    %6040 = vmatprep.subr.bf16.mxu0 0
    %6041 = vmatpush2.bf16.msra.mxu0 0
    %6042 = vmatprep.subr.bf16.mxu0 0
    %6043 = vmatpush2.bf16.msra.mxu0 0
    %6044 = vmatprep.mubr.bf16.mxu0 0
    %6045 = vmatmul.mubr.bf16.gmra.mxu0 %v5989
    %v6046 = vpop.f32.mrf.mxu0
    %v6047 = vadd.f32 0.0, %v6046
    %v6048 = vpop.f32.mrf.mxu0
    %v6049 = vpop.f32.mrf.mxu0
    %v6050 = vadd.f32 0.0, %v6049
    %v6051 = vpop.f32.mrf.mxu0
    %6052 = vmatprep.mubr.bf16.mxu0 0
    %6053 = vmatmul.mubr.bf16.gmra.mxu0 %v5992
    %v6054 = vpop.f32.mrf.mxu0
    %v6055 = vadd.f32 0.0, %v6054
    %v6056 = vpop.f32.mrf.mxu0
    %v6057 = vpop.f32.mrf.mxu0
    %v6058 = vadd.f32 0.0, %v6057
    %v6059 = vpop.f32.mrf.mxu0
    %6060 = vmatprep.mubr.bf16.mxu0 0
    %6061 = vmatmul.mubr.bf16.gmra.mxu0 %v5995
    %v6062 = vpop.f32.mrf.mxu0
    %v6063 = vadd.f32 0.0, %v6062
    %v6064 = vpop.f32.mrf.mxu0
    %v6065 = vpop.f32.mrf.mxu0
    %v6066 = vadd.f32 0.0, %v6065
    %v6067 = vpop.f32.mrf.mxu0
    %6068 = vmatprep.mubr.bf16.mxu0 0
    %6069 = vmatmul.mubr.bf16.gmra.mxu0 %v5998
    %v6070 = vpop.f32.mrf.mxu0
    %v6071 = vpop.f32.mrf.mxu0
    %v6072 = vpop.f32.mrf.mxu0
    %v6073 = vpop.f32.mrf.mxu0
    %6074 = vmatprep.mubr.bf16.mxu0 0
    %6075 = vmatmul.mubr.bf16.gmra.mxu0 %v6001
    %v6076 = vpop.f32.mrf.mxu0
    %v6077 = vpop.f32.mrf.mxu0
    %v6078 = vpop.f32.mrf.mxu0
    %v6079 = vpop.f32.mrf.mxu0
    %6080 = vmatprep.mubr.bf16.mxu0 0
    %6081 = vmatmul.mubr.bf16.gmra.mxu0 %v6004
    %v6082 = vpop.f32.mrf.mxu0
    %v6083 = vpop.f32.mrf.mxu0
    %v6084 = vpop.f32.mrf.mxu0
    %v6085 = vadd.f32 0.0, %v6084
    %v6086 = vpop.f32.mrf.mxu0
    %6087 = vmatprep.mubr.bf16.mxu0 0
    %6088 = vmatmul.mubr.bf16.gmra.mxu0 %v6007
    %v6089 = vpop.f32.mrf.mxu0
    %v6090 = vadd.f32 0.0, %v6089
    %v6091 = vpop.f32.mrf.mxu0
    %v6092 = vpop.f32.mrf.mxu0
    %v6093 = vadd.f32 0.0, %v6092
    %v6094 = vpop.f32.mrf.mxu0
    %6095 = vmatprep.mubr.bf16.mxu0 0
    %6096 = vmatmul.mubr.bf16.gmra.mxu0 %v6010
    %v6097 = vpop.f32.mrf.mxu0
    %v6098 = vadd.f32 0.0, %v6097
    %v6099 = vpop.f32.mrf.mxu0
    %v6100 = vpop.f32.mrf.mxu0
    %v6101 = vpop.f32.mrf.mxu0
    %6102 = vdwg.mxu0
    %v6103 = vadd.f32 %v5930, %v6047
    %v6104 = vadd.f32 %v5931, %v6050
    %v6105 = vadd.f32 %v5932, %v6055
    %v6106 = vadd.f32 %v5933, %v6058
    %v6107 = vadd.f32 %v5934, %v6063
    %v6108 = vadd.f32 %v5935, %v6066
    %v6109 = vadd.f32 %v5936, %v6085
    %v6110 = vadd.f32 %v5937, %v6090
    %v6111 = vadd.f32 %v5938, %v6093
    %v6112 = vadd.f32 %v5939, %v6098
    %v6113 = vld [vmem:[#allocation3 + $0x15] sm:$0xff]
    %v6114 = vld [vmem:[#allocation3 + $0x1d] sm:$0xff]
    %v6115 = vld [vmem:[#allocation3 + $0x25] sm:$0xff]
    %v6116 = vld [vmem:[#allocation3 + $0x2d] sm:$0xff]
    %v6117 = vld [vmem:[#allocation3 + $0x35] sm:$0xff]
    %v6118 = vld [vmem:[#allocation3 + $0x3d] sm:$0xff]
    %v6119 = vld [vmem:[#allocation3 + $0x45] sm:$0xff]
    %v6120 = vld [vmem:[#allocation3 + $0x4d] sm:$0xff]
    %v6121 = vld [vmem:[#allocation3 + $0x55] sm:$0xff]
    %v6122 = vld [vmem:[#allocation3 + $0x5d] sm:$0xff]
    %v6123 = vld [vmem:[#allocation3 + $0x65] sm:$0xff]
    %v6124 = vld [vmem:[#allocation3 + $0x6d] sm:$0xff]
    %v6125 = vld [vmem:[#allocation3 + $0x75] sm:$0xff]
    %v6126 = vld [vmem:[#allocation3 + $0x7d] sm:$0xff]
    %v6127 = vld [vmem:[#allocation3 + $0x85] sm:$0xff]
    %v6128 = vpack.c.bf16 %v6114, %v6113
    %v6129 = vpack.c.bf16 %v6116, %v6115
    %v6130 = vpack.c.bf16 %v6118, %v6117
    %v6131 = vpack.c.bf16 %v6120, %v6119
    %v6132 = vpack.c.bf16 %v6122, %v6121
    %v6133 = vpack.c.bf16 %v6124, %v6123
    %v6134 = vpack.c.bf16 %v6126, %v6125
    %v6135 = vpack.c.bf16 %v6127, %v6127
    %s6136 = scalar_lea.vmem %s3, 312
    %v6137 = vld [vmem:[%s6136] sm:$0xf]
    %v6138 = vld [vmem:[%s6136 + $0x4] sm:$0xf]
    %v6139 = vld [vmem:[%s6136 + $0x8] sm:$0xf]
    %v6140 = vld [vmem:[%s6136 + $0xc] sm:$0xf]
    %v6141 = vld [vmem:[%s6136 + $0x10] sm:$0xf]
    %v6142 = vld [vmem:[%s6136 + $0x14] sm:$0xf]
    %v6149 = vunpack.c.l.b16 %v6137
    %v6150 = vunpack.c.l.b16 %v6138
    %v6151 = vunpack.c.l.b16 %v6139
    %v6152 = vunpack.c.l.b16 %v6140
    %v6153 = vunpack.c.l.b16 %v6141
    %v6154 = vunpack.c.l.b16 %v6142
    %v6155 = vpack.c.b16 %v6150, %v6149
    %v6156 = vpack.c.b16 %v6152, %v6151
    %v6157 = vpack.c.b16 %v6154, %v6153
    %v6162 = vsel %vm173, %v6128, 0
    %v6165 = vsel %vm173, %v6129, 0
    %v6168 = vsel %vm173, %v6130, 0
    %v6171 = vsel %vm173, %v6131, 0
    %v6174 = vsel %vm173, %v6132, 0
    %v6177 = vsel %vm173, %v6133, 0
    %v6180 = vsel %vm173, %v6134, 0
    %v6183 = vsel %vm173, %v6135, 0
    %6185 = vmatprep.subr.bf16.mxu0 0
    %6186 = vmatpush1.bf16.msra.mxu0 0
    %6187 = vmatprep.subr.bf16.mxu0 0
    %6188 = vmatpush1.bf16.msra.mxu0 0
    %6189 = vmatprep.subr.bf16.mxu0 0
    %6190 = vmatpush1.bf16.msra.mxu0 0
    %6191 = vmatprep.subr.bf16.mxu0 0
    %6192 = vmatpush1.bf16.msra.mxu0 0
    %6193 = vmatprep.subr.bf16.mxu0 0
    %6194 = vmatpush1.bf16.msra.mxu0 0
    %6195 = vmatprep.subr.bf16.mxu0 0
    %6196 = vmatpush1.bf16.msra.mxu0 %v6157
    %6197 = vmatprep.subr.bf16.mxu0 0
    %6198 = vmatpush1.bf16.msra.mxu0 %v6156
    %6199 = vmatprep.subr.bf16.mxu0 0
    %6200 = vmatpush1.bf16.msra.mxu0 %v6155
    %6201 = vmatprep.subr.bf16.mxu0 0
    %6202 = vmatpush2.bf16.msra.mxu0 0
    %6203 = vmatprep.subr.bf16.mxu0 0
    %6204 = vmatpush2.bf16.msra.mxu0 0
    %6205 = vmatprep.subr.bf16.mxu0 0
    %6206 = vmatpush2.bf16.msra.mxu0 0
    %6207 = vmatprep.subr.bf16.mxu0 0
    %6208 = vmatpush2.bf16.msra.mxu0 0
    %6209 = vmatprep.subr.bf16.mxu0 0
    %6210 = vmatpush2.bf16.msra.mxu0 0
    %6211 = vmatprep.subr.bf16.mxu0 0
    %6212 = vmatpush2.bf16.msra.mxu0 0
    %6213 = vmatprep.subr.bf16.mxu0 0
    %6214 = vmatpush2.bf16.msra.mxu0 0
    %6215 = vmatprep.subr.bf16.mxu0 0
    %6216 = vmatpush2.bf16.msra.mxu0 0
    %6217 = vmatprep.mubr.bf16.mxu0 0
    %6218 = vmatmul.mubr.bf16.gmra.mxu0 %v6162
    %v6219 = vpop.f32.mrf.mxu0
    %v6220 = vadd.f32 0.0, %v6219
    %v6221 = vpop.f32.mrf.mxu0
    %v6222 = vpop.f32.mrf.mxu0
    %v6223 = vadd.f32 0.0, %v6222
    %v6224 = vpop.f32.mrf.mxu0
    %6225 = vmatprep.mubr.bf16.mxu0 0
    %6226 = vmatmul.mubr.bf16.gmra.mxu0 %v6165
    %v6227 = vpop.f32.mrf.mxu0
    %v6228 = vadd.f32 0.0, %v6227
    %v6229 = vpop.f32.mrf.mxu0
    %v6230 = vpop.f32.mrf.mxu0
    %v6231 = vadd.f32 0.0, %v6230
    %v6232 = vpop.f32.mrf.mxu0
    %6233 = vmatprep.mubr.bf16.mxu0 0
    %6234 = vmatmul.mubr.bf16.gmra.mxu0 %v6168
    %v6235 = vpop.f32.mrf.mxu0
    %v6236 = vadd.f32 0.0, %v6235
    %v6237 = vpop.f32.mrf.mxu0
    %v6238 = vpop.f32.mrf.mxu0
    %v6239 = vadd.f32 0.0, %v6238
    %v6240 = vpop.f32.mrf.mxu0
    %6241 = vmatprep.mubr.bf16.mxu0 0
    %6242 = vmatmul.mubr.bf16.gmra.mxu0 %v6171
    %v6243 = vpop.f32.mrf.mxu0
    %v6244 = vpop.f32.mrf.mxu0
    %v6245 = vpop.f32.mrf.mxu0
    %v6246 = vpop.f32.mrf.mxu0
    %6247 = vmatprep.mubr.bf16.mxu0 0
    %6248 = vmatmul.mubr.bf16.gmra.mxu0 %v6174
    %v6249 = vpop.f32.mrf.mxu0
    %v6250 = vpop.f32.mrf.mxu0
    %v6251 = vpop.f32.mrf.mxu0
    %v6252 = vpop.f32.mrf.mxu0
    %6253 = vmatprep.mubr.bf16.mxu0 0
    %6254 = vmatmul.mubr.bf16.gmra.mxu0 %v6177
    %v6255 = vpop.f32.mrf.mxu0
    %v6256 = vpop.f32.mrf.mxu0
    %v6257 = vpop.f32.mrf.mxu0
    %v6258 = vadd.f32 0.0, %v6257
    %v6259 = vpop.f32.mrf.mxu0
    %6260 = vmatprep.mubr.bf16.mxu0 0
    %6261 = vmatmul.mubr.bf16.gmra.mxu0 %v6180
    %v6262 = vpop.f32.mrf.mxu0
    %v6263 = vadd.f32 0.0, %v6262
    %v6264 = vpop.f32.mrf.mxu0
    %v6265 = vpop.f32.mrf.mxu0
    %v6266 = vadd.f32 0.0, %v6265
    %v6267 = vpop.f32.mrf.mxu0
    %6268 = vmatprep.mubr.bf16.mxu0 0
    %6269 = vmatmul.mubr.bf16.gmra.mxu0 %v6183
    %v6270 = vpop.f32.mrf.mxu0
    %v6271 = vadd.f32 0.0, %v6270
    %v6272 = vpop.f32.mrf.mxu0
    %v6273 = vpop.f32.mrf.mxu0
    %v6274 = vpop.f32.mrf.mxu0
    %6275 = vdwg.mxu0
    %v6276 = vadd.f32 %v6103, %v6220
    %v6277 = vadd.f32 %v6104, %v6223
    %v6278 = vadd.f32 %v6105, %v6228
    %v6279 = vadd.f32 %v6106, %v6231
    %v6280 = vadd.f32 %v6107, %v6236
    %v6281 = vadd.f32 %v6108, %v6239
    %v6282 = vadd.f32 %v6109, %v6258
    %v6283 = vadd.f32 %v6110, %v6263
    %v6284 = vadd.f32 %v6111, %v6266
    %v6285 = vadd.f32 %v6112, %v6271
    %v6286 = vld [vmem:[#allocation3 + $0x16] sm:$0xff]
    %v6287 = vld [vmem:[#allocation3 + $0x1e] sm:$0xff]
    %v6288 = vld [vmem:[#allocation3 + $0x26] sm:$0xff]
    %v6289 = vld [vmem:[#allocation3 + $0x2e] sm:$0xff]
    %v6290 = vld [vmem:[#allocation3 + $0x36] sm:$0xff]
    %v6291 = vld [vmem:[#allocation3 + $0x3e] sm:$0xff]
    %v6292 = vld [vmem:[#allocation3 + $0x46] sm:$0xff]
    %v6293 = vld [vmem:[#allocation3 + $0x4e] sm:$0xff]
    %v6294 = vld [vmem:[#allocation3 + $0x56] sm:$0xff]
    %v6295 = vld [vmem:[#allocation3 + $0x5e] sm:$0xff]
    %v6296 = vld [vmem:[#allocation3 + $0x66] sm:$0xff]
    %v6297 = vld [vmem:[#allocation3 + $0x6e] sm:$0xff]
    %v6298 = vld [vmem:[#allocation3 + $0x76] sm:$0xff]
    %v6299 = vld [vmem:[#allocation3 + $0x7e] sm:$0xff]
    %v6300 = vld [vmem:[#allocation3 + $0x86] sm:$0xff]
    %v6301 = vpack.c.bf16 %v6287, %v6286
    %v6302 = vpack.c.bf16 %v6289, %v6288
    %v6303 = vpack.c.bf16 %v6291, %v6290
    %v6304 = vpack.c.bf16 %v6293, %v6292
    %v6305 = vpack.c.bf16 %v6295, %v6294
    %v6306 = vpack.c.bf16 %v6297, %v6296
    %v6307 = vpack.c.bf16 %v6299, %v6298
    %v6308 = vpack.c.bf16 %v6300, %v6300
    %s6309 = scalar_lea.vmem %s3, 336
    %v6310 = vld [vmem:[%s6309] sm:$0xf]
    %v6311 = vld [vmem:[%s6309 + $0x4] sm:$0xf]
    %v6312 = vld [vmem:[%s6309 + $0x8] sm:$0xf]
    %v6313 = vld [vmem:[%s6309 + $0xc] sm:$0xf]
    %v6314 = vld [vmem:[%s6309 + $0x10] sm:$0xf]
    %v6315 = vld [vmem:[%s6309 + $0x14] sm:$0xf]
    %v6322 = vunpack.c.l.b16 %v6310
    %v6323 = vunpack.c.l.b16 %v6311
    %v6324 = vunpack.c.l.b16 %v6312
    %v6325 = vunpack.c.l.b16 %v6313
    %v6326 = vunpack.c.l.b16 %v6314
    %v6327 = vunpack.c.l.b16 %v6315
    %v6328 = vpack.c.b16 %v6323, %v6322
    %v6329 = vpack.c.b16 %v6325, %v6324
    %v6330 = vpack.c.b16 %v6327, %v6326
    %v6335 = vsel %vm173, %v6301, 0
    %v6338 = vsel %vm173, %v6302, 0
    %v6341 = vsel %vm173, %v6303, 0
    %v6344 = vsel %vm173, %v6304, 0
    %v6347 = vsel %vm173, %v6305, 0
    %v6350 = vsel %vm173, %v6306, 0
    %v6353 = vsel %vm173, %v6307, 0
    %v6356 = vsel %vm173, %v6308, 0
    %6358 = vmatprep.subr.bf16.mxu0 0
    %6359 = vmatpush1.bf16.msra.mxu0 0
    %6360 = vmatprep.subr.bf16.mxu0 0
    %6361 = vmatpush1.bf16.msra.mxu0 0
    %6362 = vmatprep.subr.bf16.mxu0 0
    %6363 = vmatpush1.bf16.msra.mxu0 0
    %6364 = vmatprep.subr.bf16.mxu0 0
    %6365 = vmatpush1.bf16.msra.mxu0 0
    %6366 = vmatprep.subr.bf16.mxu0 0
    %6367 = vmatpush1.bf16.msra.mxu0 0
    %6368 = vmatprep.subr.bf16.mxu0 0
    %6369 = vmatpush1.bf16.msra.mxu0 %v6330
    %6370 = vmatprep.subr.bf16.mxu0 0
    %6371 = vmatpush1.bf16.msra.mxu0 %v6329
    %6372 = vmatprep.subr.bf16.mxu0 0
    %6373 = vmatpush1.bf16.msra.mxu0 %v6328
    %6374 = vmatprep.subr.bf16.mxu0 0
    %6375 = vmatpush2.bf16.msra.mxu0 0
    %6376 = vmatprep.subr.bf16.mxu0 0
    %6377 = vmatpush2.bf16.msra.mxu0 0
    %6378 = vmatprep.subr.bf16.mxu0 0
    %6379 = vmatpush2.bf16.msra.mxu0 0
    %6380 = vmatprep.subr.bf16.mxu0 0
    %6381 = vmatpush2.bf16.msra.mxu0 0
    %6382 = vmatprep.subr.bf16.mxu0 0
    %6383 = vmatpush2.bf16.msra.mxu0 0
    %6384 = vmatprep.subr.bf16.mxu0 0
    %6385 = vmatpush2.bf16.msra.mxu0 0
    %6386 = vmatprep.subr.bf16.mxu0 0
    %6387 = vmatpush2.bf16.msra.mxu0 0
    %6388 = vmatprep.subr.bf16.mxu0 0
    %6389 = vmatpush2.bf16.msra.mxu0 0
    %6390 = vmatprep.mubr.bf16.mxu0 0
    %6391 = vmatmul.mubr.bf16.gmra.mxu0 %v6335
    %v6392 = vpop.f32.mrf.mxu0
    %v6393 = vadd.f32 0.0, %v6392
    %v6394 = vpop.f32.mrf.mxu0
    %v6395 = vpop.f32.mrf.mxu0
    %v6396 = vadd.f32 0.0, %v6395
    %v6397 = vpop.f32.mrf.mxu0
    %6398 = vmatprep.mubr.bf16.mxu0 0
    %6399 = vmatmul.mubr.bf16.gmra.mxu0 %v6338
    %v6400 = vpop.f32.mrf.mxu0
    %v6401 = vadd.f32 0.0, %v6400
    %v6402 = vpop.f32.mrf.mxu0
    %v6403 = vpop.f32.mrf.mxu0
    %v6404 = vadd.f32 0.0, %v6403
    %v6405 = vpop.f32.mrf.mxu0
    %6406 = vmatprep.mubr.bf16.mxu0 0
    %6407 = vmatmul.mubr.bf16.gmra.mxu0 %v6341
    %v6408 = vpop.f32.mrf.mxu0
    %v6409 = vadd.f32 0.0, %v6408
    %v6410 = vpop.f32.mrf.mxu0
    %v6411 = vpop.f32.mrf.mxu0
    %v6412 = vadd.f32 0.0, %v6411
    %v6413 = vpop.f32.mrf.mxu0
    %6414 = vmatprep.mubr.bf16.mxu0 0
    %6415 = vmatmul.mubr.bf16.gmra.mxu0 %v6344
    %v6416 = vpop.f32.mrf.mxu0
    %v6417 = vpop.f32.mrf.mxu0
    %v6418 = vpop.f32.mrf.mxu0
    %v6419 = vpop.f32.mrf.mxu0
    %6420 = vmatprep.mubr.bf16.mxu0 0
    %6421 = vmatmul.mubr.bf16.gmra.mxu0 %v6347
    %v6422 = vpop.f32.mrf.mxu0
    %v6423 = vpop.f32.mrf.mxu0
    %v6424 = vpop.f32.mrf.mxu0
    %v6425 = vpop.f32.mrf.mxu0
    %6426 = vmatprep.mubr.bf16.mxu0 0
    %6427 = vmatmul.mubr.bf16.gmra.mxu0 %v6350
    %v6428 = vpop.f32.mrf.mxu0
    %v6429 = vpop.f32.mrf.mxu0
    %v6430 = vpop.f32.mrf.mxu0
    %v6431 = vadd.f32 0.0, %v6430
    %v6432 = vpop.f32.mrf.mxu0
    %6433 = vmatprep.mubr.bf16.mxu0 0
    %6434 = vmatmul.mubr.bf16.gmra.mxu0 %v6353
    %v6435 = vpop.f32.mrf.mxu0
    %v6436 = vadd.f32 0.0, %v6435
    %v6437 = vpop.f32.mrf.mxu0
    %v6438 = vpop.f32.mrf.mxu0
    %v6439 = vadd.f32 0.0, %v6438
    %v6440 = vpop.f32.mrf.mxu0
    %6441 = vmatprep.mubr.bf16.mxu0 0
    %6442 = vmatmul.mubr.bf16.gmra.mxu0 %v6356
    %v6443 = vpop.f32.mrf.mxu0
    %v6444 = vadd.f32 0.0, %v6443
    %v6445 = vpop.f32.mrf.mxu0
    %v6446 = vpop.f32.mrf.mxu0
    %v6447 = vpop.f32.mrf.mxu0
    %6448 = vdwg.mxu0
    %v6449 = vadd.f32 %v6276, %v6393
    %v6450 = vadd.f32 %v6277, %v6396
    %v6451 = vadd.f32 %v6278, %v6401
    %v6452 = vadd.f32 %v6279, %v6404
    %v6453 = vadd.f32 %v6280, %v6409
    %v6454 = vadd.f32 %v6281, %v6412
    %v6455 = vadd.f32 %v6282, %v6431
    %v6456 = vadd.f32 %v6283, %v6436
    %v6457 = vadd.f32 %v6284, %v6439
    %v6458 = vadd.f32 %v6285, %v6444
    %v6459 = vld [vmem:[#allocation3 + $0x1b] sm:$0xff]
    %v6460 = vld [vmem:[#allocation3 + $0x23] sm:$0xff]
    %v6461 = vld [vmem:[#allocation3 + $0x2b] sm:$0xff]
    %v6462 = vld [vmem:[#allocation3 + $0x33] sm:$0xff]
    %v6463 = vld [vmem:[#allocation3 + $0x3b] sm:$0xff]
    %v6464 = vld [vmem:[#allocation3 + $0x43] sm:$0xff]
    %v6465 = vld [vmem:[#allocation3 + $0x4b] sm:$0xff]
    %v6466 = vld [vmem:[#allocation3 + $0x53] sm:$0xff]
    %v6467 = vld [vmem:[#allocation3 + $0x5b] sm:$0xff]
    %v6468 = vld [vmem:[#allocation3 + $0x63] sm:$0xff]
    %v6469 = vld [vmem:[#allocation3 + $0x6b] sm:$0xff]
    %v6470 = vld [vmem:[#allocation3 + $0x73] sm:$0xff]
    %v6471 = vld [vmem:[#allocation3 + $0x7b] sm:$0xff]
    %v6472 = vld [vmem:[#allocation3 + $0x83] sm:$0xff]
    %v6473 = vld [vmem:[#allocation3 + $0x8b] sm:$0xff]
    %v6474 = vpack.c.bf16 %v6460, %v6459
    %v6475 = vpack.c.bf16 %v6462, %v6461
    %v6476 = vpack.c.bf16 %v6464, %v6463
    %v6477 = vpack.c.bf16 %v6466, %v6465
    %v6478 = vpack.c.bf16 %v6468, %v6467
    %v6479 = vpack.c.bf16 %v6470, %v6469
    %v6480 = vpack.c.bf16 %v6472, %v6471
    %v6481 = vpack.c.bf16 %v6473, %v6473
    %s6482 = scalar_lea.vmem %s3, 360
    %v6483 = vld [vmem:[%s6482] sm:$0xf]
    %v6484 = vld [vmem:[%s6482 + $0x4] sm:$0xf]
    %v6485 = vld [vmem:[%s6482 + $0x8] sm:$0xf]
    %v6486 = vld [vmem:[%s6482 + $0xc] sm:$0xf]
    %v6487 = vld [vmem:[%s6482 + $0x10] sm:$0xf]
    %v6488 = vld [vmem:[%s6482 + $0x14] sm:$0xf]
    %v6495 = vunpack.c.l.b16 %v6483
    %v6496 = vunpack.c.l.b16 %v6484
    %v6497 = vunpack.c.l.b16 %v6485
    %v6498 = vunpack.c.l.b16 %v6486
    %v6499 = vunpack.c.l.b16 %v6487
    %v6500 = vunpack.c.l.b16 %v6488
    %v6501 = vpack.c.b16 %v6496, %v6495
    %v6502 = vpack.c.b16 %v6498, %v6497
    %v6503 = vpack.c.b16 %v6500, %v6499
    %v6508 = vsel %vm173, %v6474, 0
    %v6511 = vsel %vm173, %v6475, 0
    %v6514 = vsel %vm173, %v6476, 0
    %v6517 = vsel %vm173, %v6477, 0
    %v6520 = vsel %vm173, %v6478, 0
    %v6523 = vsel %vm173, %v6479, 0
    %v6526 = vsel %vm173, %v6480, 0
    %v6529 = vsel %vm173, %v6481, 0
    %6531 = vmatprep.subr.bf16.mxu0 0
    %6532 = vmatpush1.bf16.msra.mxu0 0
    %6533 = vmatprep.subr.bf16.mxu0 0
    %6534 = vmatpush1.bf16.msra.mxu0 0
    %6535 = vmatprep.subr.bf16.mxu0 0
    %6536 = vmatpush1.bf16.msra.mxu0 0
    %6537 = vmatprep.subr.bf16.mxu0 0
    %6538 = vmatpush1.bf16.msra.mxu0 0
    %6539 = vmatprep.subr.bf16.mxu0 0
    %6540 = vmatpush1.bf16.msra.mxu0 0
    %6541 = vmatprep.subr.bf16.mxu0 0
    %6542 = vmatpush1.bf16.msra.mxu0 %v6503
    %6543 = vmatprep.subr.bf16.mxu0 0
    %6544 = vmatpush1.bf16.msra.mxu0 %v6502
    %6545 = vmatprep.subr.bf16.mxu0 0
    %6546 = vmatpush1.bf16.msra.mxu0 %v6501
    %6547 = vmatprep.subr.bf16.mxu0 0
    %6548 = vmatpush2.bf16.msra.mxu0 0
    %6549 = vmatprep.subr.bf16.mxu0 0
    %6550 = vmatpush2.bf16.msra.mxu0 0
    %6551 = vmatprep.subr.bf16.mxu0 0
    %6552 = vmatpush2.bf16.msra.mxu0 0
    %6553 = vmatprep.subr.bf16.mxu0 0
    %6554 = vmatpush2.bf16.msra.mxu0 0
    %6555 = vmatprep.subr.bf16.mxu0 0
    %6556 = vmatpush2.bf16.msra.mxu0 0
    %6557 = vmatprep.subr.bf16.mxu0 0
    %6558 = vmatpush2.bf16.msra.mxu0 0
    %6559 = vmatprep.subr.bf16.mxu0 0
    %6560 = vmatpush2.bf16.msra.mxu0 0
    %6561 = vmatprep.subr.bf16.mxu0 0
    %6562 = vmatpush2.bf16.msra.mxu0 0
    %6563 = vmatprep.mubr.bf16.mxu0 0
    %6564 = vmatmul.mubr.bf16.gmra.mxu0 %v6508
    %v6565 = vpop.f32.mrf.mxu0
    %v6566 = vadd.f32 0.0, %v6565
    %v6567 = vpop.f32.mrf.mxu0
    %v6568 = vpop.f32.mrf.mxu0
    %v6569 = vadd.f32 0.0, %v6568
    %v6570 = vpop.f32.mrf.mxu0
    %6571 = vmatprep.mubr.bf16.mxu0 0
    %6572 = vmatmul.mubr.bf16.gmra.mxu0 %v6511
    %v6573 = vpop.f32.mrf.mxu0
    %v6574 = vadd.f32 0.0, %v6573
    %v6575 = vpop.f32.mrf.mxu0
    %v6576 = vpop.f32.mrf.mxu0
    %v6577 = vadd.f32 0.0, %v6576
    %v6578 = vpop.f32.mrf.mxu0
    %6579 = vmatprep.mubr.bf16.mxu0 0
    %6580 = vmatmul.mubr.bf16.gmra.mxu0 %v6514
    %v6581 = vpop.f32.mrf.mxu0
    %v6582 = vadd.f32 0.0, %v6581
    %v6583 = vpop.f32.mrf.mxu0
    %v6584 = vpop.f32.mrf.mxu0
    %v6585 = vadd.f32 0.0, %v6584
    %v6586 = vpop.f32.mrf.mxu0
    %6587 = vmatprep.mubr.bf16.mxu0 0
    %6588 = vmatmul.mubr.bf16.gmra.mxu0 %v6517
    %v6589 = vpop.f32.mrf.mxu0
    %v6590 = vpop.f32.mrf.mxu0
    %v6591 = vpop.f32.mrf.mxu0
    %v6592 = vpop.f32.mrf.mxu0
    %6593 = vmatprep.mubr.bf16.mxu0 0
    %6594 = vmatmul.mubr.bf16.gmra.mxu0 %v6520
    %v6595 = vpop.f32.mrf.mxu0
    %v6596 = vpop.f32.mrf.mxu0
    %v6597 = vpop.f32.mrf.mxu0
    %v6598 = vpop.f32.mrf.mxu0
    %6599 = vmatprep.mubr.bf16.mxu0 0
    %6600 = vmatmul.mubr.bf16.gmra.mxu0 %v6523
    %v6601 = vpop.f32.mrf.mxu0
    %v6602 = vpop.f32.mrf.mxu0
    %v6603 = vpop.f32.mrf.mxu0
    %v6604 = vadd.f32 0.0, %v6603
    %v6605 = vpop.f32.mrf.mxu0
    %6606 = vmatprep.mubr.bf16.mxu0 0
    %6607 = vmatmul.mubr.bf16.gmra.mxu0 %v6526
    %v6608 = vpop.f32.mrf.mxu0
    %v6609 = vadd.f32 0.0, %v6608
    %v6610 = vpop.f32.mrf.mxu0
    %v6611 = vpop.f32.mrf.mxu0
    %v6612 = vadd.f32 0.0, %v6611
    %v6613 = vpop.f32.mrf.mxu0
    %6614 = vmatprep.mubr.bf16.mxu0 0
    %6615 = vmatmul.mubr.bf16.gmra.mxu0 %v6529
    %v6616 = vpop.f32.mrf.mxu0
    %v6617 = vadd.f32 0.0, %v6616
    %v6618 = vpop.f32.mrf.mxu0
    %v6619 = vpop.f32.mrf.mxu0
    %v6620 = vpop.f32.mrf.mxu0
    %6621 = vdwg.mxu0
    %v6622 = vadd.f32 %v6449, %v6566
    %v6623 = vadd.f32 %v6450, %v6569
    %v6624 = vadd.f32 %v6451, %v6574
    %v6625 = vadd.f32 %v6452, %v6577
    %v6626 = vadd.f32 %v6453, %v6582
    %v6627 = vadd.f32 %v6454, %v6585
    %v6628 = vadd.f32 %v6455, %v6604
    %v6629 = vadd.f32 %v6456, %v6609
    %v6630 = vadd.f32 %v6457, %v6612
    %v6631 = vadd.f32 %v6458, %v6617
    %v6632 = vld [vmem:[#allocation3 + $0x1c] sm:$0xff]
    %v6633 = vld [vmem:[#allocation3 + $0x24] sm:$0xff]
    %v6634 = vld [vmem:[#allocation3 + $0x2c] sm:$0xff]
    %v6635 = vld [vmem:[#allocation3 + $0x34] sm:$0xff]
    %v6636 = vld [vmem:[#allocation3 + $0x3c] sm:$0xff]
    %v6637 = vld [vmem:[#allocation3 + $0x44] sm:$0xff]
    %v6638 = vld [vmem:[#allocation3 + $0x4c] sm:$0xff]
    %v6639 = vld [vmem:[#allocation3 + $0x54] sm:$0xff]
    %v6640 = vld [vmem:[#allocation3 + $0x5c] sm:$0xff]
    %v6641 = vld [vmem:[#allocation3 + $0x64] sm:$0xff]
    %v6642 = vld [vmem:[#allocation3 + $0x6c] sm:$0xff]
    %v6643 = vld [vmem:[#allocation3 + $0x74] sm:$0xff]
    %v6644 = vld [vmem:[#allocation3 + $0x7c] sm:$0xff]
    %v6645 = vld [vmem:[#allocation3 + $0x84] sm:$0xff]
    %v6646 = vld [vmem:[#allocation3 + $0x8c] sm:$0xff]
    %v6647 = vpack.c.bf16 %v6633, %v6632
    %v6648 = vpack.c.bf16 %v6635, %v6634
    %v6649 = vpack.c.bf16 %v6637, %v6636
    %v6650 = vpack.c.bf16 %v6639, %v6638
    %v6651 = vpack.c.bf16 %v6641, %v6640
    %v6652 = vpack.c.bf16 %v6643, %v6642
    %v6653 = vpack.c.bf16 %v6645, %v6644
    %v6654 = vpack.c.bf16 %v6646, %v6646
    %s6655 = scalar_lea.vmem %s3, 384
    %v6656 = vld [vmem:[%s6655] sm:$0xf]
    %v6657 = vld [vmem:[%s6655 + $0x4] sm:$0xf]
    %v6658 = vld [vmem:[%s6655 + $0x8] sm:$0xf]
    %v6659 = vld [vmem:[%s6655 + $0xc] sm:$0xf]
    %v6660 = vld [vmem:[%s6655 + $0x10] sm:$0xf]
    %v6661 = vld [vmem:[%s6655 + $0x14] sm:$0xf]
    %v6668 = vunpack.c.l.b16 %v6656
    %v6669 = vunpack.c.l.b16 %v6657
    %v6670 = vunpack.c.l.b16 %v6658
    %v6671 = vunpack.c.l.b16 %v6659
    %v6672 = vunpack.c.l.b16 %v6660
    %v6673 = vunpack.c.l.b16 %v6661
    %v6674 = vpack.c.b16 %v6669, %v6668
    %v6675 = vpack.c.b16 %v6671, %v6670
    %v6676 = vpack.c.b16 %v6673, %v6672
    %v6681 = vsel %vm173, %v6647, 0
    %v6684 = vsel %vm173, %v6648, 0
    %v6687 = vsel %vm173, %v6649, 0
    %v6690 = vsel %vm173, %v6650, 0
    %v6693 = vsel %vm173, %v6651, 0
    %v6696 = vsel %vm173, %v6652, 0
    %v6699 = vsel %vm173, %v6653, 0
    %v6702 = vsel %vm173, %v6654, 0
    %6704 = vmatprep.subr.bf16.mxu0 0
    %6705 = vmatpush1.bf16.msra.mxu0 0
    %6706 = vmatprep.subr.bf16.mxu0 0
    %6707 = vmatpush1.bf16.msra.mxu0 0
    %6708 = vmatprep.subr.bf16.mxu0 0
    %6709 = vmatpush1.bf16.msra.mxu0 0
    %6710 = vmatprep.subr.bf16.mxu0 0
    %6711 = vmatpush1.bf16.msra.mxu0 0
    %6712 = vmatprep.subr.bf16.mxu0 0
    %6713 = vmatpush1.bf16.msra.mxu0 0
    %6714 = vmatprep.subr.bf16.mxu0 0
    %6715 = vmatpush1.bf16.msra.mxu0 %v6676
    %6716 = vmatprep.subr.bf16.mxu0 0
    %6717 = vmatpush1.bf16.msra.mxu0 %v6675
    %6718 = vmatprep.subr.bf16.mxu0 0
    %6719 = vmatpush1.bf16.msra.mxu0 %v6674
    %6720 = vmatprep.subr.bf16.mxu0 0
    %6721 = vmatpush2.bf16.msra.mxu0 0
    %6722 = vmatprep.subr.bf16.mxu0 0
    %6723 = vmatpush2.bf16.msra.mxu0 0
    %6724 = vmatprep.subr.bf16.mxu0 0
    %6725 = vmatpush2.bf16.msra.mxu0 0
    %6726 = vmatprep.subr.bf16.mxu0 0
    %6727 = vmatpush2.bf16.msra.mxu0 0
    %6728 = vmatprep.subr.bf16.mxu0 0
    %6729 = vmatpush2.bf16.msra.mxu0 0
    %6730 = vmatprep.subr.bf16.mxu0 0
    %6731 = vmatpush2.bf16.msra.mxu0 0
    %6732 = vmatprep.subr.bf16.mxu0 0
    %6733 = vmatpush2.bf16.msra.mxu0 0
    %6734 = vmatprep.subr.bf16.mxu0 0
    %6735 = vmatpush2.bf16.msra.mxu0 0
    %6736 = vmatprep.mubr.bf16.mxu0 0
    %6737 = vmatmul.mubr.bf16.gmra.mxu0 %v6681
    %v6738 = vpop.f32.mrf.mxu0
    %v6739 = vadd.f32 0.0, %v6738
    %v6740 = vpop.f32.mrf.mxu0
    %v6741 = vpop.f32.mrf.mxu0
    %v6742 = vadd.f32 0.0, %v6741
    %v6743 = vpop.f32.mrf.mxu0
    %6744 = vmatprep.mubr.bf16.mxu0 0
    %6745 = vmatmul.mubr.bf16.gmra.mxu0 %v6684
    %v6746 = vpop.f32.mrf.mxu0
    %v6747 = vadd.f32 0.0, %v6746
    %v6748 = vpop.f32.mrf.mxu0
    %v6749 = vpop.f32.mrf.mxu0
    %v6750 = vadd.f32 0.0, %v6749
    %v6751 = vpop.f32.mrf.mxu0
    %6752 = vmatprep.mubr.bf16.mxu0 0
    %6753 = vmatmul.mubr.bf16.gmra.mxu0 %v6687
    %v6754 = vpop.f32.mrf.mxu0
    %v6755 = vadd.f32 0.0, %v6754
    %v6756 = vpop.f32.mrf.mxu0
    %v6757 = vpop.f32.mrf.mxu0
    %v6758 = vadd.f32 0.0, %v6757
    %v6759 = vpop.f32.mrf.mxu0
    %6760 = vmatprep.mubr.bf16.mxu0 0
    %6761 = vmatmul.mubr.bf16.gmra.mxu0 %v6690
    %v6762 = vpop.f32.mrf.mxu0
    %v6763 = vpop.f32.mrf.mxu0
    %v6764 = vpop.f32.mrf.mxu0
    %v6765 = vpop.f32.mrf.mxu0
    %6766 = vmatprep.mubr.bf16.mxu0 0
    %6767 = vmatmul.mubr.bf16.gmra.mxu0 %v6693
    %v6768 = vpop.f32.mrf.mxu0
    %v6769 = vpop.f32.mrf.mxu0
    %v6770 = vpop.f32.mrf.mxu0
    %v6771 = vpop.f32.mrf.mxu0
    %6772 = vmatprep.mubr.bf16.mxu0 0
    %6773 = vmatmul.mubr.bf16.gmra.mxu0 %v6696
    %v6774 = vpop.f32.mrf.mxu0
    %v6775 = vpop.f32.mrf.mxu0
    %v6776 = vpop.f32.mrf.mxu0
    %v6777 = vadd.f32 0.0, %v6776
    %v6778 = vpop.f32.mrf.mxu0
    %6779 = vmatprep.mubr.bf16.mxu0 0
    %6780 = vmatmul.mubr.bf16.gmra.mxu0 %v6699
    %v6781 = vpop.f32.mrf.mxu0
    %v6782 = vadd.f32 0.0, %v6781
    %v6783 = vpop.f32.mrf.mxu0
    %v6784 = vpop.f32.mrf.mxu0
    %v6785 = vadd.f32 0.0, %v6784
    %v6786 = vpop.f32.mrf.mxu0
    %6787 = vmatprep.mubr.bf16.mxu0 0
    %6788 = vmatmul.mubr.bf16.gmra.mxu0 %v6702
    %v6789 = vpop.f32.mrf.mxu0
    %v6790 = vadd.f32 0.0, %v6789
    %v6791 = vpop.f32.mrf.mxu0
    %v6792 = vpop.f32.mrf.mxu0
    %v6793 = vpop.f32.mrf.mxu0
    %6794 = vdwg.mxu0
    %v6795 = vadd.f32 %v6622, %v6739
    %v6796 = vadd.f32 %v6623, %v6742
    %v6797 = vadd.f32 %v6624, %v6747
    %v6798 = vadd.f32 %v6625, %v6750
    %v6799 = vadd.f32 %v6626, %v6755
    %v6800 = vadd.f32 %v6627, %v6758
    %v6801 = vadd.f32 %v6628, %v6777
    %v6802 = vadd.f32 %v6629, %v6782
    %v6803 = vadd.f32 %v6630, %v6785
    %v6804 = vadd.f32 %v6631, %v6790
    %v6805 = vld [vmem:[#allocation3 + $0x1d] sm:$0xff]
    %v6806 = vld [vmem:[#allocation3 + $0x25] sm:$0xff]
    %v6807 = vld [vmem:[#allocation3 + $0x2d] sm:$0xff]
    %v6808 = vld [vmem:[#allocation3 + $0x35] sm:$0xff]
    %v6809 = vld [vmem:[#allocation3 + $0x3d] sm:$0xff]
    %v6810 = vld [vmem:[#allocation3 + $0x45] sm:$0xff]
    %v6811 = vld [vmem:[#allocation3 + $0x4d] sm:$0xff]
    %v6812 = vld [vmem:[#allocation3 + $0x55] sm:$0xff]
    %v6813 = vld [vmem:[#allocation3 + $0x5d] sm:$0xff]
    %v6814 = vld [vmem:[#allocation3 + $0x65] sm:$0xff]
    %v6815 = vld [vmem:[#allocation3 + $0x6d] sm:$0xff]
    %v6816 = vld [vmem:[#allocation3 + $0x75] sm:$0xff]
    %v6817 = vld [vmem:[#allocation3 + $0x7d] sm:$0xff]
    %v6818 = vld [vmem:[#allocation3 + $0x85] sm:$0xff]
    %v6819 = vld [vmem:[#allocation3 + $0x8d] sm:$0xff]
    %v6820 = vpack.c.bf16 %v6806, %v6805
    %v6821 = vpack.c.bf16 %v6808, %v6807
    %v6822 = vpack.c.bf16 %v6810, %v6809
    %v6823 = vpack.c.bf16 %v6812, %v6811
    %v6824 = vpack.c.bf16 %v6814, %v6813
    %v6825 = vpack.c.bf16 %v6816, %v6815
    %v6826 = vpack.c.bf16 %v6818, %v6817
    %v6827 = vpack.c.bf16 %v6819, %v6819
    %s6828 = scalar_lea.vmem %s3, 408
    %v6829 = vld [vmem:[%s6828] sm:$0xf]
    %v6830 = vld [vmem:[%s6828 + $0x4] sm:$0xf]
    %v6831 = vld [vmem:[%s6828 + $0x8] sm:$0xf]
    %v6832 = vld [vmem:[%s6828 + $0xc] sm:$0xf]
    %v6833 = vld [vmem:[%s6828 + $0x10] sm:$0xf]
    %v6834 = vld [vmem:[%s6828 + $0x14] sm:$0xf]
    %v6841 = vunpack.c.l.b16 %v6829
    %v6842 = vunpack.c.l.b16 %v6830
    %v6843 = vunpack.c.l.b16 %v6831
    %v6844 = vunpack.c.l.b16 %v6832
    %v6845 = vunpack.c.l.b16 %v6833
    %v6846 = vunpack.c.l.b16 %v6834
    %v6847 = vpack.c.b16 %v6842, %v6841
    %v6848 = vpack.c.b16 %v6844, %v6843
    %v6849 = vpack.c.b16 %v6846, %v6845
    %v6854 = vsel %vm173, %v6820, 0
    %v6857 = vsel %vm173, %v6821, 0
    %v6860 = vsel %vm173, %v6822, 0
    %v6863 = vsel %vm173, %v6823, 0
    %v6866 = vsel %vm173, %v6824, 0
    %v6869 = vsel %vm173, %v6825, 0
    %v6872 = vsel %vm173, %v6826, 0
    %v6875 = vsel %vm173, %v6827, 0
    %6877 = vmatprep.subr.bf16.mxu0 0
    %6878 = vmatpush1.bf16.msra.mxu0 0
    %6879 = vmatprep.subr.bf16.mxu0 0
    %6880 = vmatpush1.bf16.msra.mxu0 0
    %6881 = vmatprep.subr.bf16.mxu0 0
    %6882 = vmatpush1.bf16.msra.mxu0 0
    %6883 = vmatprep.subr.bf16.mxu0 0
    %6884 = vmatpush1.bf16.msra.mxu0 0
    %6885 = vmatprep.subr.bf16.mxu0 0
    %6886 = vmatpush1.bf16.msra.mxu0 0
    %6887 = vmatprep.subr.bf16.mxu0 0
    %6888 = vmatpush1.bf16.msra.mxu0 %v6849
    %6889 = vmatprep.subr.bf16.mxu0 0
    %6890 = vmatpush1.bf16.msra.mxu0 %v6848
    %6891 = vmatprep.subr.bf16.mxu0 0
    %6892 = vmatpush1.bf16.msra.mxu0 %v6847
    %6893 = vmatprep.subr.bf16.mxu0 0
    %6894 = vmatpush2.bf16.msra.mxu0 0
    %6895 = vmatprep.subr.bf16.mxu0 0
    %6896 = vmatpush2.bf16.msra.mxu0 0
    %6897 = vmatprep.subr.bf16.mxu0 0
    %6898 = vmatpush2.bf16.msra.mxu0 0
    %6899 = vmatprep.subr.bf16.mxu0 0
    %6900 = vmatpush2.bf16.msra.mxu0 0
    %6901 = vmatprep.subr.bf16.mxu0 0
    %6902 = vmatpush2.bf16.msra.mxu0 0
    %6903 = vmatprep.subr.bf16.mxu0 0
    %6904 = vmatpush2.bf16.msra.mxu0 0
    %6905 = vmatprep.subr.bf16.mxu0 0
    %6906 = vmatpush2.bf16.msra.mxu0 0
    %6907 = vmatprep.subr.bf16.mxu0 0
    %6908 = vmatpush2.bf16.msra.mxu0 0
    %6909 = vmatprep.mubr.bf16.mxu0 0
    %6910 = vmatmul.mubr.bf16.gmra.mxu0 %v6854
    %v6911 = vpop.f32.mrf.mxu0
    %v6912 = vadd.f32 0.0, %v6911
    %v6913 = vpop.f32.mrf.mxu0
    %v6914 = vpop.f32.mrf.mxu0
    %v6915 = vadd.f32 0.0, %v6914
    %v6916 = vpop.f32.mrf.mxu0
    %6917 = vmatprep.mubr.bf16.mxu0 0
    %6918 = vmatmul.mubr.bf16.gmra.mxu0 %v6857
    %v6919 = vpop.f32.mrf.mxu0
    %v6920 = vadd.f32 0.0, %v6919
    %v6921 = vpop.f32.mrf.mxu0
    %v6922 = vpop.f32.mrf.mxu0
    %v6923 = vadd.f32 0.0, %v6922
    %v6924 = vpop.f32.mrf.mxu0
    %6925 = vmatprep.mubr.bf16.mxu0 0
    %6926 = vmatmul.mubr.bf16.gmra.mxu0 %v6860
    %v6927 = vpop.f32.mrf.mxu0
    %v6928 = vadd.f32 0.0, %v6927
    %v6929 = vpop.f32.mrf.mxu0
    %v6930 = vpop.f32.mrf.mxu0
    %v6931 = vadd.f32 0.0, %v6930
    %v6932 = vpop.f32.mrf.mxu0
    %6933 = vmatprep.mubr.bf16.mxu0 0
    %6934 = vmatmul.mubr.bf16.gmra.mxu0 %v6863
    %v6935 = vpop.f32.mrf.mxu0
    %v6936 = vpop.f32.mrf.mxu0
    %v6937 = vpop.f32.mrf.mxu0
    %v6938 = vpop.f32.mrf.mxu0
    %6939 = vmatprep.mubr.bf16.mxu0 0
    %6940 = vmatmul.mubr.bf16.gmra.mxu0 %v6866
    %v6941 = vpop.f32.mrf.mxu0
    %v6942 = vpop.f32.mrf.mxu0
    %v6943 = vpop.f32.mrf.mxu0
    %v6944 = vpop.f32.mrf.mxu0
    %6945 = vmatprep.mubr.bf16.mxu0 0
    %6946 = vmatmul.mubr.bf16.gmra.mxu0 %v6869
    %v6947 = vpop.f32.mrf.mxu0
    %v6948 = vpop.f32.mrf.mxu0
    %v6949 = vpop.f32.mrf.mxu0
    %v6950 = vadd.f32 0.0, %v6949
    %v6951 = vpop.f32.mrf.mxu0
    %6952 = vmatprep.mubr.bf16.mxu0 0
    %6953 = vmatmul.mubr.bf16.gmra.mxu0 %v6872
    %v6954 = vpop.f32.mrf.mxu0
    %v6955 = vadd.f32 0.0, %v6954
    %v6956 = vpop.f32.mrf.mxu0
    %v6957 = vpop.f32.mrf.mxu0
    %v6958 = vadd.f32 0.0, %v6957
    %v6959 = vpop.f32.mrf.mxu0
    %6960 = vmatprep.mubr.bf16.mxu0 0
    %6961 = vmatmul.mubr.bf16.gmra.mxu0 %v6875
    %v6962 = vpop.f32.mrf.mxu0
    %v6963 = vadd.f32 0.0, %v6962
    %v6964 = vpop.f32.mrf.mxu0
    %v6965 = vpop.f32.mrf.mxu0
    %v6966 = vpop.f32.mrf.mxu0
    %6967 = vdwg.mxu0
    %v6968 = vadd.f32 %v6795, %v6912
    %v6969 = vadd.f32 %v6796, %v6915
    %v6970 = vadd.f32 %v6797, %v6920
    %v6971 = vadd.f32 %v6798, %v6923
    %v6972 = vadd.f32 %v6799, %v6928
    %v6973 = vadd.f32 %v6800, %v6931
    %v6974 = vadd.f32 %v6801, %v6950
    %v6975 = vadd.f32 %v6802, %v6955
    %v6976 = vadd.f32 %v6803, %v6958
    %v6977 = vadd.f32 %v6804, %v6963
    %v6978 = vld [vmem:[#allocation3 + $0x1e] sm:$0xff]
    %v6979 = vld [vmem:[#allocation3 + $0x26] sm:$0xff]
    %v6980 = vld [vmem:[#allocation3 + $0x2e] sm:$0xff]
    %v6981 = vld [vmem:[#allocation3 + $0x36] sm:$0xff]
    %v6982 = vld [vmem:[#allocation3 + $0x3e] sm:$0xff]
    %v6983 = vld [vmem:[#allocation3 + $0x46] sm:$0xff]
    %v6984 = vld [vmem:[#allocation3 + $0x4e] sm:$0xff]
    %v6985 = vld [vmem:[#allocation3 + $0x56] sm:$0xff]
    %v6986 = vld [vmem:[#allocation3 + $0x5e] sm:$0xff]
    %v6987 = vld [vmem:[#allocation3 + $0x66] sm:$0xff]
    %v6988 = vld [vmem:[#allocation3 + $0x6e] sm:$0xff]
    %v6989 = vld [vmem:[#allocation3 + $0x76] sm:$0xff]
    %v6990 = vld [vmem:[#allocation3 + $0x7e] sm:$0xff]
    %v6991 = vld [vmem:[#allocation3 + $0x86] sm:$0xff]
    %v6992 = vld [vmem:[#allocation3 + $0x8e] sm:$0xff]
    %v6993 = vpack.c.bf16 %v6979, %v6978
    %v6994 = vpack.c.bf16 %v6981, %v6980
    %v6995 = vpack.c.bf16 %v6983, %v6982
    %v6996 = vpack.c.bf16 %v6985, %v6984
    %v6997 = vpack.c.bf16 %v6987, %v6986
    %v6998 = vpack.c.bf16 %v6989, %v6988
    %v6999 = vpack.c.bf16 %v6991, %v6990
    %v7000 = vpack.c.bf16 %v6992, %v6992
    %s7001 = scalar_lea.vmem %s3, 432
    %v7002 = vld [vmem:[%s7001] sm:$0xf]
    %v7003 = vld [vmem:[%s7001 + $0x4] sm:$0xf]
    %v7004 = vld [vmem:[%s7001 + $0x8] sm:$0xf]
    %v7005 = vld [vmem:[%s7001 + $0xc] sm:$0xf]
    %v7006 = vld [vmem:[%s7001 + $0x10] sm:$0xf]
    %v7007 = vld [vmem:[%s7001 + $0x14] sm:$0xf]
    %v7014 = vunpack.c.l.b16 %v7002
    %v7015 = vunpack.c.l.b16 %v7003
    %v7016 = vunpack.c.l.b16 %v7004
    %v7017 = vunpack.c.l.b16 %v7005
    %v7018 = vunpack.c.l.b16 %v7006
    %v7019 = vunpack.c.l.b16 %v7007
    %v7020 = vpack.c.b16 %v7015, %v7014
    %v7021 = vpack.c.b16 %v7017, %v7016
    %v7022 = vpack.c.b16 %v7019, %v7018
    %v7027 = vsel %vm173, %v6993, 0
    %v7030 = vsel %vm173, %v6994, 0
    %v7033 = vsel %vm173, %v6995, 0
    %v7036 = vsel %vm173, %v6996, 0
    %v7039 = vsel %vm173, %v6997, 0
    %v7042 = vsel %vm173, %v6998, 0
    %v7045 = vsel %vm173, %v6999, 0
    %v7048 = vsel %vm173, %v7000, 0
    %7050 = vmatprep.subr.bf16.mxu0 0
    %7051 = vmatpush1.bf16.msra.mxu0 0
    %7052 = vmatprep.subr.bf16.mxu0 0
    %7053 = vmatpush1.bf16.msra.mxu0 0
    %7054 = vmatprep.subr.bf16.mxu0 0
    %7055 = vmatpush1.bf16.msra.mxu0 0
    %7056 = vmatprep.subr.bf16.mxu0 0
    %7057 = vmatpush1.bf16.msra.mxu0 0
    %7058 = vmatprep.subr.bf16.mxu0 0
    %7059 = vmatpush1.bf16.msra.mxu0 0
    %7060 = vmatprep.subr.bf16.mxu0 0
    %7061 = vmatpush1.bf16.msra.mxu0 %v7022
    %7062 = vmatprep.subr.bf16.mxu0 0
    %7063 = vmatpush1.bf16.msra.mxu0 %v7021
    %7064 = vmatprep.subr.bf16.mxu0 0
    %7065 = vmatpush1.bf16.msra.mxu0 %v7020
    %7066 = vmatprep.subr.bf16.mxu0 0
    %7067 = vmatpush2.bf16.msra.mxu0 0
    %7068 = vmatprep.subr.bf16.mxu0 0
    %7069 = vmatpush2.bf16.msra.mxu0 0
    %7070 = vmatprep.subr.bf16.mxu0 0
    %7071 = vmatpush2.bf16.msra.mxu0 0
    %7072 = vmatprep.subr.bf16.mxu0 0
    %7073 = vmatpush2.bf16.msra.mxu0 0
    %7074 = vmatprep.subr.bf16.mxu0 0
    %7075 = vmatpush2.bf16.msra.mxu0 0
    %7076 = vmatprep.subr.bf16.mxu0 0
    %7077 = vmatpush2.bf16.msra.mxu0 0
    %7078 = vmatprep.subr.bf16.mxu0 0
    %7079 = vmatpush2.bf16.msra.mxu0 0
    %7080 = vmatprep.subr.bf16.mxu0 0
    %7081 = vmatpush2.bf16.msra.mxu0 0
    %7082 = vmatprep.mubr.bf16.mxu0 0
    %7083 = vmatmul.mubr.bf16.gmra.mxu0 %v7027
    %v7084 = vpop.f32.mrf.mxu0
    %v7085 = vadd.f32 0.0, %v7084
    %v7086 = vpop.f32.mrf.mxu0
    %v7087 = vpop.f32.mrf.mxu0
    %v7088 = vadd.f32 0.0, %v7087
    %v7089 = vpop.f32.mrf.mxu0
    %7090 = vmatprep.mubr.bf16.mxu0 0
    %7091 = vmatmul.mubr.bf16.gmra.mxu0 %v7030
    %v7092 = vpop.f32.mrf.mxu0
    %v7093 = vadd.f32 0.0, %v7092
    %v7094 = vpop.f32.mrf.mxu0
    %v7095 = vpop.f32.mrf.mxu0
    %v7096 = vadd.f32 0.0, %v7095
    %v7097 = vpop.f32.mrf.mxu0
    %7098 = vmatprep.mubr.bf16.mxu0 0
    %7099 = vmatmul.mubr.bf16.gmra.mxu0 %v7033
    %v7100 = vpop.f32.mrf.mxu0
    %v7101 = vadd.f32 0.0, %v7100
    %v7102 = vpop.f32.mrf.mxu0
    %v7103 = vpop.f32.mrf.mxu0
    %v7104 = vadd.f32 0.0, %v7103
    %v7105 = vpop.f32.mrf.mxu0
    %7106 = vmatprep.mubr.bf16.mxu0 0
    %7107 = vmatmul.mubr.bf16.gmra.mxu0 %v7036
    %v7108 = vpop.f32.mrf.mxu0
    %v7109 = vpop.f32.mrf.mxu0
    %v7110 = vpop.f32.mrf.mxu0
    %v7111 = vpop.f32.mrf.mxu0
    %7112 = vmatprep.mubr.bf16.mxu0 0
    %7113 = vmatmul.mubr.bf16.gmra.mxu0 %v7039
    %v7114 = vpop.f32.mrf.mxu0
    %v7115 = vpop.f32.mrf.mxu0
    %v7116 = vpop.f32.mrf.mxu0
    %v7117 = vpop.f32.mrf.mxu0
    %7118 = vmatprep.mubr.bf16.mxu0 0
    %7119 = vmatmul.mubr.bf16.gmra.mxu0 %v7042
    %v7120 = vpop.f32.mrf.mxu0
    %v7121 = vpop.f32.mrf.mxu0
    %v7122 = vpop.f32.mrf.mxu0
    %v7123 = vadd.f32 0.0, %v7122
    %v7124 = vpop.f32.mrf.mxu0
    %7125 = vmatprep.mubr.bf16.mxu0 0
    %7126 = vmatmul.mubr.bf16.gmra.mxu0 %v7045
    %v7127 = vpop.f32.mrf.mxu0
    %v7128 = vadd.f32 0.0, %v7127
    %v7129 = vpop.f32.mrf.mxu0
    %v7130 = vpop.f32.mrf.mxu0
    %v7131 = vadd.f32 0.0, %v7130
    %v7132 = vpop.f32.mrf.mxu0
    %7133 = vmatprep.mubr.bf16.mxu0 0
    %7134 = vmatmul.mubr.bf16.gmra.mxu0 %v7048
    %v7135 = vpop.f32.mrf.mxu0
    %v7136 = vadd.f32 0.0, %v7135
    %v7137 = vpop.f32.mrf.mxu0
    %v7138 = vpop.f32.mrf.mxu0
    %v7139 = vpop.f32.mrf.mxu0
    %7140 = vdwg.mxu0
    %v7141 = vadd.f32 %v6968, %v7085
    %v7142 = vadd.f32 %v6969, %v7088
    %v7143 = vadd.f32 %v6970, %v7093
    %v7144 = vadd.f32 %v6971, %v7096
    %v7145 = vadd.f32 %v6972, %v7101
    %v7146 = vadd.f32 %v6973, %v7104
    %v7147 = vadd.f32 %v6974, %v7123
    %v7148 = vadd.f32 %v6975, %v7128
    %v7149 = vadd.f32 %v6976, %v7131
    %v7150 = vadd.f32 %v6977, %v7136
    %v7151 = vld [vmem:[#allocation3 + $0x1f] sm:$0xff]
    %v7152 = vld [vmem:[#allocation3 + $0x27] sm:$0xff]
    %v7153 = vld [vmem:[#allocation3 + $0x2f] sm:$0xff]
    %v7154 = vld [vmem:[#allocation3 + $0x37] sm:$0xff]
    %v7155 = vld [vmem:[#allocation3 + $0x3f] sm:$0xff]
    %v7156 = vld [vmem:[#allocation3 + $0x47] sm:$0xff]
    %v7157 = vld [vmem:[#allocation3 + $0x4f] sm:$0xff]
    %v7158 = vld [vmem:[#allocation3 + $0x57] sm:$0xff]
    %v7159 = vld [vmem:[#allocation3 + $0x5f] sm:$0xff]
    %v7160 = vld [vmem:[#allocation3 + $0x67] sm:$0xff]
    %v7161 = vld [vmem:[#allocation3 + $0x6f] sm:$0xff]
    %v7162 = vld [vmem:[#allocation3 + $0x77] sm:$0xff]
    %v7163 = vld [vmem:[#allocation3 + $0x7f] sm:$0xff]
    %v7164 = vld [vmem:[#allocation3 + $0x87] sm:$0xff]
    %v7165 = vld [vmem:[#allocation3 + $0x8f] sm:$0xff]
    %v7166 = vpack.c.bf16 %v7152, %v7151
    %v7167 = vpack.c.bf16 %v7154, %v7153
    %v7168 = vpack.c.bf16 %v7156, %v7155
    %v7169 = vpack.c.bf16 %v7158, %v7157
    %v7170 = vpack.c.bf16 %v7160, %v7159
    %v7171 = vpack.c.bf16 %v7162, %v7161
    %v7172 = vpack.c.bf16 %v7164, %v7163
    %v7173 = vpack.c.bf16 %v7165, %v7165
    %s7174 = scalar_lea.vmem %s3, 456
    %v7175 = vld [vmem:[%s7174] sm:$0xf]
    %v7176 = vld [vmem:[%s7174 + $0x4] sm:$0xf]
    %v7177 = vld [vmem:[%s7174 + $0x8] sm:$0xf]
    %v7178 = vld [vmem:[%s7174 + $0xc] sm:$0xf]
    %v7179 = vld [vmem:[%s7174 + $0x10] sm:$0xf]
    %v7180 = vld [vmem:[%s7174 + $0x14] sm:$0xf]
    %v7187 = vunpack.c.l.b16 %v7175
    %v7188 = vunpack.c.l.b16 %v7176
    %v7189 = vunpack.c.l.b16 %v7177
    %v7190 = vunpack.c.l.b16 %v7178
    %v7191 = vunpack.c.l.b16 %v7179
    %v7192 = vunpack.c.l.b16 %v7180
    %v7193 = vpack.c.b16 %v7188, %v7187
    %v7194 = vpack.c.b16 %v7190, %v7189
    %v7195 = vpack.c.b16 %v7192, %v7191
    %v7200 = vsel %vm173, %v7166, 0
    %v7203 = vsel %vm173, %v7167, 0
    %v7206 = vsel %vm173, %v7168, 0
    %v7209 = vsel %vm173, %v7169, 0
    %v7212 = vsel %vm173, %v7170, 0
    %v7215 = vsel %vm173, %v7171, 0
    %v7218 = vsel %vm173, %v7172, 0
    %v7221 = vsel %vm173, %v7173, 0
    %7223 = vmatprep.subr.bf16.mxu0 0
    %7224 = vmatpush1.bf16.msra.mxu0 0
    %7225 = vmatprep.subr.bf16.mxu0 0
    %7226 = vmatpush1.bf16.msra.mxu0 0
    %7227 = vmatprep.subr.bf16.mxu0 0
    %7228 = vmatpush1.bf16.msra.mxu0 0
    %7229 = vmatprep.subr.bf16.mxu0 0
    %7230 = vmatpush1.bf16.msra.mxu0 0
    %7231 = vmatprep.subr.bf16.mxu0 0
    %7232 = vmatpush1.bf16.msra.mxu0 0
    %7233 = vmatprep.subr.bf16.mxu0 0
    %7234 = vmatpush1.bf16.msra.mxu0 %v7195
    %7235 = vmatprep.subr.bf16.mxu0 0
    %7236 = vmatpush1.bf16.msra.mxu0 %v7194
    %7237 = vmatprep.subr.bf16.mxu0 0
    %7238 = vmatpush1.bf16.msra.mxu0 %v7193
    %7239 = vmatprep.subr.bf16.mxu0 0
    %7240 = vmatpush2.bf16.msra.mxu0 0
    %7241 = vmatprep.subr.bf16.mxu0 0
    %7242 = vmatpush2.bf16.msra.mxu0 0
    %7243 = vmatprep.subr.bf16.mxu0 0
    %7244 = vmatpush2.bf16.msra.mxu0 0
    %7245 = vmatprep.subr.bf16.mxu0 0
    %7246 = vmatpush2.bf16.msra.mxu0 0
    %7247 = vmatprep.subr.bf16.mxu0 0
    %7248 = vmatpush2.bf16.msra.mxu0 0
    %7249 = vmatprep.subr.bf16.mxu0 0
    %7250 = vmatpush2.bf16.msra.mxu0 0
    %7251 = vmatprep.subr.bf16.mxu0 0
    %7252 = vmatpush2.bf16.msra.mxu0 0
    %7253 = vmatprep.subr.bf16.mxu0 0
    %7254 = vmatpush2.bf16.msra.mxu0 0
    %7255 = vmatprep.mubr.bf16.mxu0 0
    %7256 = vmatmul.mubr.bf16.gmra.mxu0 %v7200
    %v7257 = vpop.f32.mrf.mxu0
    %v7258 = vadd.f32 0.0, %v7257
    %v7259 = vpop.f32.mrf.mxu0
    %v7260 = vpop.f32.mrf.mxu0
    %v7261 = vadd.f32 0.0, %v7260
    %v7262 = vpop.f32.mrf.mxu0
    %7263 = vmatprep.mubr.bf16.mxu0 0
    %7264 = vmatmul.mubr.bf16.gmra.mxu0 %v7203
    %v7265 = vpop.f32.mrf.mxu0
    %v7266 = vadd.f32 0.0, %v7265
    %v7267 = vpop.f32.mrf.mxu0
    %v7268 = vpop.f32.mrf.mxu0
    %v7269 = vadd.f32 0.0, %v7268
    %v7270 = vpop.f32.mrf.mxu0
    %7271 = vmatprep.mubr.bf16.mxu0 0
    %7272 = vmatmul.mubr.bf16.gmra.mxu0 %v7206
    %v7273 = vpop.f32.mrf.mxu0
    %v7274 = vadd.f32 0.0, %v7273
    %v7275 = vpop.f32.mrf.mxu0
    %v7276 = vpop.f32.mrf.mxu0
    %v7277 = vadd.f32 0.0, %v7276
    %v7278 = vpop.f32.mrf.mxu0
    %7279 = vmatprep.mubr.bf16.mxu0 0
    %7280 = vmatmul.mubr.bf16.gmra.mxu0 %v7209
    %v7281 = vpop.f32.mrf.mxu0
    %v7282 = vpop.f32.mrf.mxu0
    %v7283 = vpop.f32.mrf.mxu0
    %v7284 = vpop.f32.mrf.mxu0
    %7285 = vmatprep.mubr.bf16.mxu0 0
    %7286 = vmatmul.mubr.bf16.gmra.mxu0 %v7212
    %v7287 = vpop.f32.mrf.mxu0
    %v7288 = vpop.f32.mrf.mxu0
    %v7289 = vpop.f32.mrf.mxu0
    %v7290 = vpop.f32.mrf.mxu0
    %7291 = vmatprep.mubr.bf16.mxu0 0
    %7292 = vmatmul.mubr.bf16.gmra.mxu0 %v7215
    %v7293 = vpop.f32.mrf.mxu0
    %v7294 = vpop.f32.mrf.mxu0
    %v7295 = vpop.f32.mrf.mxu0
    %v7296 = vadd.f32 0.0, %v7295
    %v7297 = vpop.f32.mrf.mxu0
    %7298 = vmatprep.mubr.bf16.mxu0 0
    %7299 = vmatmul.mubr.bf16.gmra.mxu0 %v7218
    %v7300 = vpop.f32.mrf.mxu0
    %v7301 = vadd.f32 0.0, %v7300
    %v7302 = vpop.f32.mrf.mxu0
    %v7303 = vpop.f32.mrf.mxu0
    %v7304 = vadd.f32 0.0, %v7303
    %v7305 = vpop.f32.mrf.mxu0
    %7306 = vmatprep.mubr.bf16.mxu0 0
    %7307 = vmatmul.mubr.bf16.gmra.mxu0 %v7221
    %v7308 = vpop.f32.mrf.mxu0
    %v7309 = vadd.f32 0.0, %v7308
    %v7310 = vpop.f32.mrf.mxu0
    %v7311 = vpop.f32.mrf.mxu0
    %v7312 = vpop.f32.mrf.mxu0
    %7313 = vdwg.mxu0
    %v7314 = vadd.f32 %v7141, %v7258
    %v7315 = vadd.f32 %v7142, %v7261
    %v7316 = vadd.f32 %v7143, %v7266
    %v7317 = vadd.f32 %v7144, %v7269
    %v7318 = vadd.f32 %v7145, %v7274
    %v7319 = vadd.f32 %v7146, %v7277
    %v7320 = vadd.f32 %v7147, %v7296
    %v7321 = vadd.f32 %v7148, %v7301
    %v7322 = vadd.f32 %v7149, %v7304
    %v7323 = vadd.f32 %v7150, %v7309
    %v7324 = vld [vmem:[#allocation3 + $0x24] sm:$0xff]
    %v7325 = vld [vmem:[#allocation3 + $0x2c] sm:$0xff]
    %v7326 = vld [vmem:[#allocation3 + $0x34] sm:$0xff]
    %v7327 = vld [vmem:[#allocation3 + $0x3c] sm:$0xff]
    %v7328 = vld [vmem:[#allocation3 + $0x44] sm:$0xff]
    %v7329 = vld [vmem:[#allocation3 + $0x4c] sm:$0xff]
    %v7330 = vld [vmem:[#allocation3 + $0x54] sm:$0xff]
    %v7331 = vld [vmem:[#allocation3 + $0x5c] sm:$0xff]
    %v7332 = vld [vmem:[#allocation3 + $0x64] sm:$0xff]
    %v7333 = vld [vmem:[#allocation3 + $0x6c] sm:$0xff]
    %v7334 = vld [vmem:[#allocation3 + $0x74] sm:$0xff]
    %v7335 = vld [vmem:[#allocation3 + $0x7c] sm:$0xff]
    %v7336 = vld [vmem:[#allocation3 + $0x84] sm:$0xff]
    %v7337 = vld [vmem:[#allocation3 + $0x8c] sm:$0xff]
    %v7338 = vld [vmem:[#allocation3 + $0x94] sm:$0xff]
    %v7339 = vpack.c.bf16 %v7325, %v7324
    %v7340 = vpack.c.bf16 %v7327, %v7326
    %v7341 = vpack.c.bf16 %v7329, %v7328
    %v7342 = vpack.c.bf16 %v7331, %v7330
    %v7343 = vpack.c.bf16 %v7333, %v7332
    %v7344 = vpack.c.bf16 %v7335, %v7334
    %v7345 = vpack.c.bf16 %v7337, %v7336
    %v7346 = vpack.c.bf16 %v7338, %v7338
    %s7347 = scalar_lea.vmem %s3, 480
    %v7348 = vld [vmem:[%s7347] sm:$0xf]
    %v7349 = vld [vmem:[%s7347 + $0x4] sm:$0xf]
    %v7350 = vld [vmem:[%s7347 + $0x8] sm:$0xf]
    %v7351 = vld [vmem:[%s7347 + $0xc] sm:$0xf]
    %v7352 = vld [vmem:[%s7347 + $0x10] sm:$0xf]
    %v7353 = vld [vmem:[%s7347 + $0x14] sm:$0xf]
    %v7360 = vunpack.c.l.b16 %v7348
    %v7361 = vunpack.c.l.b16 %v7349
    %v7362 = vunpack.c.l.b16 %v7350
    %v7363 = vunpack.c.l.b16 %v7351
    %v7364 = vunpack.c.l.b16 %v7352
    %v7365 = vunpack.c.l.b16 %v7353
    %v7366 = vpack.c.b16 %v7361, %v7360
    %v7367 = vpack.c.b16 %v7363, %v7362
    %v7368 = vpack.c.b16 %v7365, %v7364
    %v7373 = vsel %vm173, %v7339, 0
    %v7376 = vsel %vm173, %v7340, 0
    %v7379 = vsel %vm173, %v7341, 0
    %v7382 = vsel %vm173, %v7342, 0
    %v7385 = vsel %vm173, %v7343, 0
    %v7388 = vsel %vm173, %v7344, 0
    %v7391 = vsel %vm173, %v7345, 0
    %v7394 = vsel %vm173, %v7346, 0
    %7396 = vmatprep.subr.bf16.mxu0 0
    %7397 = vmatpush1.bf16.msra.mxu0 0
    %7398 = vmatprep.subr.bf16.mxu0 0
    %7399 = vmatpush1.bf16.msra.mxu0 0
    %7400 = vmatprep.subr.bf16.mxu0 0
    %7401 = vmatpush1.bf16.msra.mxu0 0
    %7402 = vmatprep.subr.bf16.mxu0 0
    %7403 = vmatpush1.bf16.msra.mxu0 0
    %7404 = vmatprep.subr.bf16.mxu0 0
    %7405 = vmatpush1.bf16.msra.mxu0 0
    %7406 = vmatprep.subr.bf16.mxu0 0
    %7407 = vmatpush1.bf16.msra.mxu0 %v7368
    %7408 = vmatprep.subr.bf16.mxu0 0
    %7409 = vmatpush1.bf16.msra.mxu0 %v7367
    %7410 = vmatprep.subr.bf16.mxu0 0
    %7411 = vmatpush1.bf16.msra.mxu0 %v7366
    %7412 = vmatprep.subr.bf16.mxu0 0
    %7413 = vmatpush2.bf16.msra.mxu0 0
    %7414 = vmatprep.subr.bf16.mxu0 0
    %7415 = vmatpush2.bf16.msra.mxu0 0
    %7416 = vmatprep.subr.bf16.mxu0 0
    %7417 = vmatpush2.bf16.msra.mxu0 0
    %7418 = vmatprep.subr.bf16.mxu0 0
    %7419 = vmatpush2.bf16.msra.mxu0 0
    %7420 = vmatprep.subr.bf16.mxu0 0
    %7421 = vmatpush2.bf16.msra.mxu0 0
    %7422 = vmatprep.subr.bf16.mxu0 0
    %7423 = vmatpush2.bf16.msra.mxu0 0
    %7424 = vmatprep.subr.bf16.mxu0 0
    %7425 = vmatpush2.bf16.msra.mxu0 0
    %7426 = vmatprep.subr.bf16.mxu0 0
    %7427 = vmatpush2.bf16.msra.mxu0 0
    %7428 = vmatprep.mubr.bf16.mxu0 0
    %7429 = vmatmul.mubr.bf16.gmra.mxu0 %v7373
    %v7430 = vpop.f32.mrf.mxu0
    %v7431 = vadd.f32 0.0, %v7430
    %v7432 = vpop.f32.mrf.mxu0
    %v7433 = vpop.f32.mrf.mxu0
    %v7434 = vadd.f32 0.0, %v7433
    %v7435 = vpop.f32.mrf.mxu0
    %7436 = vmatprep.mubr.bf16.mxu0 0
    %7437 = vmatmul.mubr.bf16.gmra.mxu0 %v7376
    %v7438 = vpop.f32.mrf.mxu0
    %v7439 = vadd.f32 0.0, %v7438
    %v7440 = vpop.f32.mrf.mxu0
    %v7441 = vpop.f32.mrf.mxu0
    %v7442 = vadd.f32 0.0, %v7441
    %v7443 = vpop.f32.mrf.mxu0
    %7444 = vmatprep.mubr.bf16.mxu0 0
    %7445 = vmatmul.mubr.bf16.gmra.mxu0 %v7379
    %v7446 = vpop.f32.mrf.mxu0
    %v7447 = vadd.f32 0.0, %v7446
    %v7448 = vpop.f32.mrf.mxu0
    %v7449 = vpop.f32.mrf.mxu0
    %v7450 = vadd.f32 0.0, %v7449
    %v7451 = vpop.f32.mrf.mxu0
    %7452 = vmatprep.mubr.bf16.mxu0 0
    %7453 = vmatmul.mubr.bf16.gmra.mxu0 %v7382
    %v7454 = vpop.f32.mrf.mxu0
    %v7455 = vpop.f32.mrf.mxu0
    %v7456 = vpop.f32.mrf.mxu0
    %v7457 = vpop.f32.mrf.mxu0
    %7458 = vmatprep.mubr.bf16.mxu0 0
    %7459 = vmatmul.mubr.bf16.gmra.mxu0 %v7385
    %v7460 = vpop.f32.mrf.mxu0
    %v7461 = vpop.f32.mrf.mxu0
    %v7462 = vpop.f32.mrf.mxu0
    %v7463 = vpop.f32.mrf.mxu0
    %7464 = vmatprep.mubr.bf16.mxu0 0
    %7465 = vmatmul.mubr.bf16.gmra.mxu0 %v7388
    %v7466 = vpop.f32.mrf.mxu0
    %v7467 = vpop.f32.mrf.mxu0
    %v7468 = vpop.f32.mrf.mxu0
    %v7469 = vadd.f32 0.0, %v7468
    %v7470 = vpop.f32.mrf.mxu0
    %7471 = vmatprep.mubr.bf16.mxu0 0
    %7472 = vmatmul.mubr.bf16.gmra.mxu0 %v7391
    %v7473 = vpop.f32.mrf.mxu0
    %v7474 = vadd.f32 0.0, %v7473
    %v7475 = vpop.f32.mrf.mxu0
    %v7476 = vpop.f32.mrf.mxu0
    %v7477 = vadd.f32 0.0, %v7476
    %v7478 = vpop.f32.mrf.mxu0
    %7479 = vmatprep.mubr.bf16.mxu0 0
    %7480 = vmatmul.mubr.bf16.gmra.mxu0 %v7394
    %v7481 = vpop.f32.mrf.mxu0
    %v7482 = vadd.f32 0.0, %v7481
    %v7483 = vpop.f32.mrf.mxu0
    %v7484 = vpop.f32.mrf.mxu0
    %v7485 = vpop.f32.mrf.mxu0
    %7486 = vdwg.mxu0
    %v7487 = vadd.f32 %v7314, %v7431
    %v7488 = vadd.f32 %v7315, %v7434
    %v7489 = vadd.f32 %v7316, %v7439
    %v7490 = vadd.f32 %v7317, %v7442
    %v7491 = vadd.f32 %v7318, %v7447
    %v7492 = vadd.f32 %v7319, %v7450
    %v7493 = vadd.f32 %v7320, %v7469
    %v7494 = vadd.f32 %v7321, %v7474
    %v7495 = vadd.f32 %v7322, %v7477
    %v7496 = vadd.f32 %v7323, %v7482
    %v7497 = vld [vmem:[#allocation3 + $0x25] sm:$0xff]
    %v7498 = vld [vmem:[#allocation3 + $0x2d] sm:$0xff]
    %v7499 = vld [vmem:[#allocation3 + $0x35] sm:$0xff]
    %v7500 = vld [vmem:[#allocation3 + $0x3d] sm:$0xff]
    %v7501 = vld [vmem:[#allocation3 + $0x45] sm:$0xff]
    %v7502 = vld [vmem:[#allocation3 + $0x4d] sm:$0xff]
    %v7503 = vld [vmem:[#allocation3 + $0x55] sm:$0xff]
    %v7504 = vld [vmem:[#allocation3 + $0x5d] sm:$0xff]
    %v7505 = vld [vmem:[#allocation3 + $0x65] sm:$0xff]
    %v7506 = vld [vmem:[#allocation3 + $0x6d] sm:$0xff]
    %v7507 = vld [vmem:[#allocation3 + $0x75] sm:$0xff]
    %v7508 = vld [vmem:[#allocation3 + $0x7d] sm:$0xff]
    %v7509 = vld [vmem:[#allocation3 + $0x85] sm:$0xff]
    %v7510 = vld [vmem:[#allocation3 + $0x8d] sm:$0xff]
    %v7511 = vld [vmem:[#allocation3 + $0x95] sm:$0xff]
    %v7512 = vpack.c.bf16 %v7498, %v7497
    %v7513 = vpack.c.bf16 %v7500, %v7499
    %v7514 = vpack.c.bf16 %v7502, %v7501
    %v7515 = vpack.c.bf16 %v7504, %v7503
    %v7516 = vpack.c.bf16 %v7506, %v7505
    %v7517 = vpack.c.bf16 %v7508, %v7507
    %v7518 = vpack.c.bf16 %v7510, %v7509
    %v7519 = vpack.c.bf16 %v7511, %v7511
    %s7520 = scalar_lea.vmem %s3, 504
    %v7521 = vld [vmem:[%s7520] sm:$0xf]
    %v7522 = vld [vmem:[%s7520 + $0x4] sm:$0xf]
    %v7523 = vld [vmem:[%s7520 + $0x8] sm:$0xf]
    %v7524 = vld [vmem:[%s7520 + $0xc] sm:$0xf]
    %v7525 = vld [vmem:[%s7520 + $0x10] sm:$0xf]
    %v7526 = vld [vmem:[%s7520 + $0x14] sm:$0xf]
    %v7533 = vunpack.c.l.b16 %v7521
    %v7534 = vunpack.c.l.b16 %v7522
    %v7535 = vunpack.c.l.b16 %v7523
    %v7536 = vunpack.c.l.b16 %v7524
    %v7537 = vunpack.c.l.b16 %v7525
    %v7538 = vunpack.c.l.b16 %v7526
    %v7539 = vpack.c.b16 %v7534, %v7533
    %v7540 = vpack.c.b16 %v7536, %v7535
    %v7541 = vpack.c.b16 %v7538, %v7537
    %v7546 = vsel %vm173, %v7512, 0
    %v7549 = vsel %vm173, %v7513, 0
    %v7552 = vsel %vm173, %v7514, 0
    %v7555 = vsel %vm173, %v7515, 0
    %v7558 = vsel %vm173, %v7516, 0
    %v7561 = vsel %vm173, %v7517, 0
    %v7564 = vsel %vm173, %v7518, 0
    %v7567 = vsel %vm173, %v7519, 0
    %7569 = vmatprep.subr.bf16.mxu0 0
    %7570 = vmatpush1.bf16.msra.mxu0 0
    %7571 = vmatprep.subr.bf16.mxu0 0
    %7572 = vmatpush1.bf16.msra.mxu0 0
    %7573 = vmatprep.subr.bf16.mxu0 0
    %7574 = vmatpush1.bf16.msra.mxu0 0
    %7575 = vmatprep.subr.bf16.mxu0 0
    %7576 = vmatpush1.bf16.msra.mxu0 0
    %7577 = vmatprep.subr.bf16.mxu0 0
    %7578 = vmatpush1.bf16.msra.mxu0 0
    %7579 = vmatprep.subr.bf16.mxu0 0
    %7580 = vmatpush1.bf16.msra.mxu0 %v7541
    %7581 = vmatprep.subr.bf16.mxu0 0
    %7582 = vmatpush1.bf16.msra.mxu0 %v7540
    %7583 = vmatprep.subr.bf16.mxu0 0
    %7584 = vmatpush1.bf16.msra.mxu0 %v7539
    %7585 = vmatprep.subr.bf16.mxu0 0
    %7586 = vmatpush2.bf16.msra.mxu0 0
    %7587 = vmatprep.subr.bf16.mxu0 0
    %7588 = vmatpush2.bf16.msra.mxu0 0
    %7589 = vmatprep.subr.bf16.mxu0 0
    %7590 = vmatpush2.bf16.msra.mxu0 0
    %7591 = vmatprep.subr.bf16.mxu0 0
    %7592 = vmatpush2.bf16.msra.mxu0 0
    %7593 = vmatprep.subr.bf16.mxu0 0
    %7594 = vmatpush2.bf16.msra.mxu0 0
    %7595 = vmatprep.subr.bf16.mxu0 0
    %7596 = vmatpush2.bf16.msra.mxu0 0
    %7597 = vmatprep.subr.bf16.mxu0 0
    %7598 = vmatpush2.bf16.msra.mxu0 0
    %7599 = vmatprep.subr.bf16.mxu0 0
    %7600 = vmatpush2.bf16.msra.mxu0 0
    %7601 = vmatprep.mubr.bf16.mxu0 0
    %7602 = vmatmul.mubr.bf16.gmra.mxu0 %v7546
    %v7603 = vpop.f32.mrf.mxu0
    %v7604 = vadd.f32 0.0, %v7603
    %v7605 = vpop.f32.mrf.mxu0
    %v7606 = vpop.f32.mrf.mxu0
    %v7607 = vadd.f32 0.0, %v7606
    %v7608 = vpop.f32.mrf.mxu0
    %7609 = vmatprep.mubr.bf16.mxu0 0
    %7610 = vmatmul.mubr.bf16.gmra.mxu0 %v7549
    %v7611 = vpop.f32.mrf.mxu0
    %v7612 = vadd.f32 0.0, %v7611
    %v7613 = vpop.f32.mrf.mxu0
    %v7614 = vpop.f32.mrf.mxu0
    %v7615 = vadd.f32 0.0, %v7614
    %v7616 = vpop.f32.mrf.mxu0
    %7617 = vmatprep.mubr.bf16.mxu0 0
    %7618 = vmatmul.mubr.bf16.gmra.mxu0 %v7552
    %v7619 = vpop.f32.mrf.mxu0
    %v7620 = vadd.f32 0.0, %v7619
    %v7621 = vpop.f32.mrf.mxu0
    %v7622 = vpop.f32.mrf.mxu0
    %v7623 = vadd.f32 0.0, %v7622
    %v7624 = vpop.f32.mrf.mxu0
    %7625 = vmatprep.mubr.bf16.mxu0 0
    %7626 = vmatmul.mubr.bf16.gmra.mxu0 %v7555
    %v7627 = vpop.f32.mrf.mxu0
    %v7628 = vpop.f32.mrf.mxu0
    %v7629 = vpop.f32.mrf.mxu0
    %v7630 = vpop.f32.mrf.mxu0
    %7631 = vmatprep.mubr.bf16.mxu0 0
    %7632 = vmatmul.mubr.bf16.gmra.mxu0 %v7558
    %v7633 = vpop.f32.mrf.mxu0
    %v7634 = vpop.f32.mrf.mxu0
    %v7635 = vpop.f32.mrf.mxu0
    %v7636 = vpop.f32.mrf.mxu0
    %7637 = vmatprep.mubr.bf16.mxu0 0
    %7638 = vmatmul.mubr.bf16.gmra.mxu0 %v7561
    %v7639 = vpop.f32.mrf.mxu0
    %v7640 = vpop.f32.mrf.mxu0
    %v7641 = vpop.f32.mrf.mxu0
    %v7642 = vadd.f32 0.0, %v7641
    %v7643 = vpop.f32.mrf.mxu0
    %7644 = vmatprep.mubr.bf16.mxu0 0
    %7645 = vmatmul.mubr.bf16.gmra.mxu0 %v7564
    %v7646 = vpop.f32.mrf.mxu0
    %v7647 = vadd.f32 0.0, %v7646
    %v7648 = vpop.f32.mrf.mxu0
    %v7649 = vpop.f32.mrf.mxu0
    %v7650 = vadd.f32 0.0, %v7649
    %v7651 = vpop.f32.mrf.mxu0
    %7652 = vmatprep.mubr.bf16.mxu0 0
    %7653 = vmatmul.mubr.bf16.gmra.mxu0 %v7567
    %v7654 = vpop.f32.mrf.mxu0
    %v7655 = vadd.f32 0.0, %v7654
    %v7656 = vpop.f32.mrf.mxu0
    %v7657 = vpop.f32.mrf.mxu0
    %v7658 = vpop.f32.mrf.mxu0
    %7659 = vdwg.mxu0
    %v7660 = vadd.f32 %v7487, %v7604
    %v7661 = vadd.f32 %v7488, %v7607
    %v7662 = vadd.f32 %v7489, %v7612
    %v7663 = vadd.f32 %v7490, %v7615
    %v7664 = vadd.f32 %v7491, %v7620
    %v7665 = vadd.f32 %v7492, %v7623
    %v7666 = vadd.f32 %v7493, %v7642
    %v7667 = vadd.f32 %v7494, %v7647
    %v7668 = vadd.f32 %v7495, %v7650
    %v7669 = vadd.f32 %v7496, %v7655
    %v7670 = vld [vmem:[#allocation3 + $0x26] sm:$0xff]
    %v7671 = vld [vmem:[#allocation3 + $0x2e] sm:$0xff]
    %v7672 = vld [vmem:[#allocation3 + $0x36] sm:$0xff]
    %v7673 = vld [vmem:[#allocation3 + $0x3e] sm:$0xff]
    %v7674 = vld [vmem:[#allocation3 + $0x46] sm:$0xff]
    %v7675 = vld [vmem:[#allocation3 + $0x4e] sm:$0xff]
    %v7676 = vld [vmem:[#allocation3 + $0x56] sm:$0xff]
    %v7677 = vld [vmem:[#allocation3 + $0x5e] sm:$0xff]
    %v7678 = vld [vmem:[#allocation3 + $0x66] sm:$0xff]
    %v7679 = vld [vmem:[#allocation3 + $0x6e] sm:$0xff]
    %v7680 = vld [vmem:[#allocation3 + $0x76] sm:$0xff]
    %v7681 = vld [vmem:[#allocation3 + $0x7e] sm:$0xff]
    %v7682 = vld [vmem:[#allocation3 + $0x86] sm:$0xff]
    %v7683 = vld [vmem:[#allocation3 + $0x8e] sm:$0xff]
    %v7684 = vld [vmem:[#allocation3 + $0x96] sm:$0xff]
    %v7685 = vpack.c.bf16 %v7671, %v7670
    %v7686 = vpack.c.bf16 %v7673, %v7672
    %v7687 = vpack.c.bf16 %v7675, %v7674
    %v7688 = vpack.c.bf16 %v7677, %v7676
    %v7689 = vpack.c.bf16 %v7679, %v7678
    %v7690 = vpack.c.bf16 %v7681, %v7680
    %v7691 = vpack.c.bf16 %v7683, %v7682
    %v7692 = vpack.c.bf16 %v7684, %v7684
    %s7693 = scalar_lea.vmem %s3, 528
    %v7694 = vld [vmem:[%s7693] sm:$0xf]
    %v7695 = vld [vmem:[%s7693 + $0x4] sm:$0xf]
    %v7696 = vld [vmem:[%s7693 + $0x8] sm:$0xf]
    %v7697 = vld [vmem:[%s7693 + $0xc] sm:$0xf]
    %v7698 = vld [vmem:[%s7693 + $0x10] sm:$0xf]
    %v7699 = vld [vmem:[%s7693 + $0x14] sm:$0xf]
    %v7706 = vunpack.c.l.b16 %v7694
    %v7707 = vunpack.c.l.b16 %v7695
    %v7708 = vunpack.c.l.b16 %v7696
    %v7709 = vunpack.c.l.b16 %v7697
    %v7710 = vunpack.c.l.b16 %v7698
    %v7711 = vunpack.c.l.b16 %v7699
    %v7712 = vpack.c.b16 %v7707, %v7706
    %v7713 = vpack.c.b16 %v7709, %v7708
    %v7714 = vpack.c.b16 %v7711, %v7710
    %v7719 = vsel %vm173, %v7685, 0
    %v7722 = vsel %vm173, %v7686, 0
    %v7725 = vsel %vm173, %v7687, 0
    %v7728 = vsel %vm173, %v7688, 0
    %v7731 = vsel %vm173, %v7689, 0
    %v7734 = vsel %vm173, %v7690, 0
    %v7737 = vsel %vm173, %v7691, 0
    %v7740 = vsel %vm173, %v7692, 0
    %7742 = vmatprep.subr.bf16.mxu0 0
    %7743 = vmatpush1.bf16.msra.mxu0 0
    %7744 = vmatprep.subr.bf16.mxu0 0
    %7745 = vmatpush1.bf16.msra.mxu0 0
    %7746 = vmatprep.subr.bf16.mxu0 0
    %7747 = vmatpush1.bf16.msra.mxu0 0
    %7748 = vmatprep.subr.bf16.mxu0 0
    %7749 = vmatpush1.bf16.msra.mxu0 0
    %7750 = vmatprep.subr.bf16.mxu0 0
    %7751 = vmatpush1.bf16.msra.mxu0 0
    %7752 = vmatprep.subr.bf16.mxu0 0
    %7753 = vmatpush1.bf16.msra.mxu0 %v7714
    %7754 = vmatprep.subr.bf16.mxu0 0
    %7755 = vmatpush1.bf16.msra.mxu0 %v7713
    %7756 = vmatprep.subr.bf16.mxu0 0
    %7757 = vmatpush1.bf16.msra.mxu0 %v7712
    %7758 = vmatprep.subr.bf16.mxu0 0
    %7759 = vmatpush2.bf16.msra.mxu0 0
    %7760 = vmatprep.subr.bf16.mxu0 0
    %7761 = vmatpush2.bf16.msra.mxu0 0
    %7762 = vmatprep.subr.bf16.mxu0 0
    %7763 = vmatpush2.bf16.msra.mxu0 0
    %7764 = vmatprep.subr.bf16.mxu0 0
    %7765 = vmatpush2.bf16.msra.mxu0 0
    %7766 = vmatprep.subr.bf16.mxu0 0
    %7767 = vmatpush2.bf16.msra.mxu0 0
    %7768 = vmatprep.subr.bf16.mxu0 0
    %7769 = vmatpush2.bf16.msra.mxu0 0
    %7770 = vmatprep.subr.bf16.mxu0 0
    %7771 = vmatpush2.bf16.msra.mxu0 0
    %7772 = vmatprep.subr.bf16.mxu0 0
    %7773 = vmatpush2.bf16.msra.mxu0 0
    %7774 = vmatprep.mubr.bf16.mxu0 0
    %7775 = vmatmul.mubr.bf16.gmra.mxu0 %v7719
    %v7776 = vpop.f32.mrf.mxu0
    %v7777 = vadd.f32 0.0, %v7776
    %v7778 = vpop.f32.mrf.mxu0
    %v7779 = vpop.f32.mrf.mxu0
    %v7780 = vadd.f32 0.0, %v7779
    %v7781 = vpop.f32.mrf.mxu0
    %7782 = vmatprep.mubr.bf16.mxu0 0
    %7783 = vmatmul.mubr.bf16.gmra.mxu0 %v7722
    %v7784 = vpop.f32.mrf.mxu0
    %v7785 = vadd.f32 0.0, %v7784
    %v7786 = vpop.f32.mrf.mxu0
    %v7787 = vpop.f32.mrf.mxu0
    %v7788 = vadd.f32 0.0, %v7787
    %v7789 = vpop.f32.mrf.mxu0
    %7790 = vmatprep.mubr.bf16.mxu0 0
    %7791 = vmatmul.mubr.bf16.gmra.mxu0 %v7725
    %v7792 = vpop.f32.mrf.mxu0
    %v7793 = vadd.f32 0.0, %v7792
    %v7794 = vpop.f32.mrf.mxu0
    %v7795 = vpop.f32.mrf.mxu0
    %v7796 = vadd.f32 0.0, %v7795
    %v7797 = vpop.f32.mrf.mxu0
    %7798 = vmatprep.mubr.bf16.mxu0 0
    %7799 = vmatmul.mubr.bf16.gmra.mxu0 %v7728
    %v7800 = vpop.f32.mrf.mxu0
    %v7801 = vpop.f32.mrf.mxu0
    %v7802 = vpop.f32.mrf.mxu0
    %v7803 = vpop.f32.mrf.mxu0
    %7804 = vmatprep.mubr.bf16.mxu0 0
    %7805 = vmatmul.mubr.bf16.gmra.mxu0 %v7731
    %v7806 = vpop.f32.mrf.mxu0
    %v7807 = vpop.f32.mrf.mxu0
    %v7808 = vpop.f32.mrf.mxu0
    %v7809 = vpop.f32.mrf.mxu0
    %7810 = vmatprep.mubr.bf16.mxu0 0
    %7811 = vmatmul.mubr.bf16.gmra.mxu0 %v7734
    %v7812 = vpop.f32.mrf.mxu0
    %v7813 = vpop.f32.mrf.mxu0
    %v7814 = vpop.f32.mrf.mxu0
    %v7815 = vadd.f32 0.0, %v7814
    %v7816 = vpop.f32.mrf.mxu0
    %7817 = vmatprep.mubr.bf16.mxu0 0
    %7818 = vmatmul.mubr.bf16.gmra.mxu0 %v7737
    %v7819 = vpop.f32.mrf.mxu0
    %v7820 = vadd.f32 0.0, %v7819
    %v7821 = vpop.f32.mrf.mxu0
    %v7822 = vpop.f32.mrf.mxu0
    %v7823 = vadd.f32 0.0, %v7822
    %v7824 = vpop.f32.mrf.mxu0
    %7825 = vmatprep.mubr.bf16.mxu0 0
    %7826 = vmatmul.mubr.bf16.gmra.mxu0 %v7740
    %v7827 = vpop.f32.mrf.mxu0
    %v7828 = vadd.f32 0.0, %v7827
    %v7829 = vpop.f32.mrf.mxu0
    %v7830 = vpop.f32.mrf.mxu0
    %v7831 = vpop.f32.mrf.mxu0
    %7832 = vdwg.mxu0
    %v7833 = vadd.f32 %v7660, %v7777
    %v7834 = vadd.f32 %v7661, %v7780
    %v7835 = vadd.f32 %v7662, %v7785
    %v7836 = vadd.f32 %v7663, %v7788
    %v7837 = vadd.f32 %v7664, %v7793
    %v7838 = vadd.f32 %v7665, %v7796
    %v7839 = vadd.f32 %v7666, %v7815
    %v7840 = vadd.f32 %v7667, %v7820
    %v7841 = vadd.f32 %v7668, %v7823
    %v7842 = vadd.f32 %v7669, %v7828
    %v7843 = vld [vmem:[#allocation3 + $0x27] sm:$0xff]
    %v7844 = vld [vmem:[#allocation3 + $0x2f] sm:$0xff]
    %v7845 = vld [vmem:[#allocation3 + $0x37] sm:$0xff]
    %v7846 = vld [vmem:[#allocation3 + $0x3f] sm:$0xff]
    %v7847 = vld [vmem:[#allocation3 + $0x47] sm:$0xff]
    %v7848 = vld [vmem:[#allocation3 + $0x4f] sm:$0xff]
    %v7849 = vld [vmem:[#allocation3 + $0x57] sm:$0xff]
    %v7850 = vld [vmem:[#allocation3 + $0x5f] sm:$0xff]
    %v7851 = vld [vmem:[#allocation3 + $0x67] sm:$0xff]
    %v7852 = vld [vmem:[#allocation3 + $0x6f] sm:$0xff]
    %v7853 = vld [vmem:[#allocation3 + $0x77] sm:$0xff]
    %v7854 = vld [vmem:[#allocation3 + $0x7f] sm:$0xff]
    %v7855 = vld [vmem:[#allocation3 + $0x87] sm:$0xff]
    %v7856 = vld [vmem:[#allocation3 + $0x8f] sm:$0xff]
    %v7857 = vld [vmem:[#allocation3 + $0x97] sm:$0xff]
    %v7858 = vpack.c.bf16 %v7844, %v7843
    %v7859 = vpack.c.bf16 %v7846, %v7845
    %v7860 = vpack.c.bf16 %v7848, %v7847
    %v7861 = vpack.c.bf16 %v7850, %v7849
    %v7862 = vpack.c.bf16 %v7852, %v7851
    %v7863 = vpack.c.bf16 %v7854, %v7853
    %v7864 = vpack.c.bf16 %v7856, %v7855
    %v7865 = vpack.c.bf16 %v7857, %v7857
    %s7866 = scalar_lea.vmem %s3, 552
    %v7867 = vld [vmem:[%s7866] sm:$0xf]
    %v7868 = vld [vmem:[%s7866 + $0x4] sm:$0xf]
    %v7869 = vld [vmem:[%s7866 + $0x8] sm:$0xf]
    %v7870 = vld [vmem:[%s7866 + $0xc] sm:$0xf]
    %v7871 = vld [vmem:[%s7866 + $0x10] sm:$0xf]
    %v7872 = vld [vmem:[%s7866 + $0x14] sm:$0xf]
    %v7879 = vunpack.c.l.b16 %v7867
    %v7880 = vunpack.c.l.b16 %v7868
    %v7881 = vunpack.c.l.b16 %v7869
    %v7882 = vunpack.c.l.b16 %v7870
    %v7883 = vunpack.c.l.b16 %v7871
    %v7884 = vunpack.c.l.b16 %v7872
    %v7885 = vpack.c.b16 %v7880, %v7879
    %v7886 = vpack.c.b16 %v7882, %v7881
    %v7887 = vpack.c.b16 %v7884, %v7883
    %v7892 = vsel %vm173, %v7858, 0
    %v7895 = vsel %vm173, %v7859, 0
    %v7898 = vsel %vm173, %v7860, 0
    %v7901 = vsel %vm173, %v7861, 0
    %v7904 = vsel %vm173, %v7862, 0
    %v7907 = vsel %vm173, %v7863, 0
    %v7910 = vsel %vm173, %v7864, 0
    %v7913 = vsel %vm173, %v7865, 0
    %7915 = vmatprep.subr.bf16.mxu0 0
    %7916 = vmatpush1.bf16.msra.mxu0 0
    %7917 = vmatprep.subr.bf16.mxu0 0
    %7918 = vmatpush1.bf16.msra.mxu0 0
    %7919 = vmatprep.subr.bf16.mxu0 0
    %7920 = vmatpush1.bf16.msra.mxu0 0
    %7921 = vmatprep.subr.bf16.mxu0 0
    %7922 = vmatpush1.bf16.msra.mxu0 0
    %7923 = vmatprep.subr.bf16.mxu0 0
    %7924 = vmatpush1.bf16.msra.mxu0 0
    %7925 = vmatprep.subr.bf16.mxu0 0
    %7926 = vmatpush1.bf16.msra.mxu0 %v7887
    %7927 = vmatprep.subr.bf16.mxu0 0
    %7928 = vmatpush1.bf16.msra.mxu0 %v7886
    %7929 = vmatprep.subr.bf16.mxu0 0
    %7930 = vmatpush1.bf16.msra.mxu0 %v7885
    %7931 = vmatprep.subr.bf16.mxu0 0
    %7932 = vmatpush2.bf16.msra.mxu0 0
    %7933 = vmatprep.subr.bf16.mxu0 0
    %7934 = vmatpush2.bf16.msra.mxu0 0
    %7935 = vmatprep.subr.bf16.mxu0 0
    %7936 = vmatpush2.bf16.msra.mxu0 0
    %7937 = vmatprep.subr.bf16.mxu0 0
    %7938 = vmatpush2.bf16.msra.mxu0 0
    %7939 = vmatprep.subr.bf16.mxu0 0
    %7940 = vmatpush2.bf16.msra.mxu0 0
    %7941 = vmatprep.subr.bf16.mxu0 0
    %7942 = vmatpush2.bf16.msra.mxu0 0
    %7943 = vmatprep.subr.bf16.mxu0 0
    %7944 = vmatpush2.bf16.msra.mxu0 0
    %7945 = vmatprep.subr.bf16.mxu0 0
    %7946 = vmatpush2.bf16.msra.mxu0 0
    %7947 = vmatprep.mubr.bf16.mxu0 0
    %7948 = vmatmul.mubr.bf16.gmra.mxu0 %v7892
    %v7949 = vpop.f32.mrf.mxu0
    %v7950 = vadd.f32 0.0, %v7949
    %v7951 = vpop.f32.mrf.mxu0
    %v7952 = vpop.f32.mrf.mxu0
    %v7953 = vadd.f32 0.0, %v7952
    %v7954 = vpop.f32.mrf.mxu0
    %7955 = vmatprep.mubr.bf16.mxu0 0
    %7956 = vmatmul.mubr.bf16.gmra.mxu0 %v7895
    %v7957 = vpop.f32.mrf.mxu0
    %v7958 = vadd.f32 0.0, %v7957
    %v7959 = vpop.f32.mrf.mxu0
    %v7960 = vpop.f32.mrf.mxu0
    %v7961 = vadd.f32 0.0, %v7960
    %v7962 = vpop.f32.mrf.mxu0
    %7963 = vmatprep.mubr.bf16.mxu0 0
    %7964 = vmatmul.mubr.bf16.gmra.mxu0 %v7898
    %v7965 = vpop.f32.mrf.mxu0
    %v7966 = vadd.f32 0.0, %v7965
    %v7967 = vpop.f32.mrf.mxu0
    %v7968 = vpop.f32.mrf.mxu0
    %v7969 = vadd.f32 0.0, %v7968
    %v7970 = vpop.f32.mrf.mxu0
    %7971 = vmatprep.mubr.bf16.mxu0 0
    %7972 = vmatmul.mubr.bf16.gmra.mxu0 %v7901
    %v7973 = vpop.f32.mrf.mxu0
    %v7974 = vpop.f32.mrf.mxu0
    %v7975 = vpop.f32.mrf.mxu0
    %v7976 = vpop.f32.mrf.mxu0
    %7977 = vmatprep.mubr.bf16.mxu0 0
    %7978 = vmatmul.mubr.bf16.gmra.mxu0 %v7904
    %v7979 = vpop.f32.mrf.mxu0
    %v7980 = vpop.f32.mrf.mxu0
    %v7981 = vpop.f32.mrf.mxu0
    %v7982 = vpop.f32.mrf.mxu0
    %7983 = vmatprep.mubr.bf16.mxu0 0
    %7984 = vmatmul.mubr.bf16.gmra.mxu0 %v7907
    %v7985 = vpop.f32.mrf.mxu0
    %v7986 = vpop.f32.mrf.mxu0
    %v7987 = vpop.f32.mrf.mxu0
    %v7988 = vadd.f32 0.0, %v7987
    %v7989 = vpop.f32.mrf.mxu0
    %7990 = vmatprep.mubr.bf16.mxu0 0
    %7991 = vmatmul.mubr.bf16.gmra.mxu0 %v7910
    %v7992 = vpop.f32.mrf.mxu0
    %v7993 = vadd.f32 0.0, %v7992
    %v7994 = vpop.f32.mrf.mxu0
    %v7995 = vpop.f32.mrf.mxu0
    %v7996 = vadd.f32 0.0, %v7995
    %v7997 = vpop.f32.mrf.mxu0
    %7998 = vmatprep.mubr.bf16.mxu0 0
    %7999 = vmatmul.mubr.bf16.gmra.mxu0 %v7913
    %v8000 = vpop.f32.mrf.mxu0
    %v8001 = vadd.f32 0.0, %v8000
    %v8002 = vpop.f32.mrf.mxu0
    %v8003 = vpop.f32.mrf.mxu0
    %v8004 = vpop.f32.mrf.mxu0
    %8005 = vdwg.mxu0
    %v8006 = vadd.f32 %v7833, %v7950
    %v8007 = vadd.f32 %v7834, %v7953
    %v8008 = vadd.f32 %v7835, %v7958
    %v8009 = vadd.f32 %v7836, %v7961
    %v8010 = vadd.f32 %v7837, %v7966
    %v8011 = vadd.f32 %v7838, %v7969
    %v8012 = vadd.f32 %v7839, %v7988
    %v8013 = vadd.f32 %v7840, %v7993
    %v8014 = vadd.f32 %v7841, %v7996
    %v8015 = vadd.f32 %v7842, %v8001
    %v8016 = vld [vmem:[#allocation3 + $0x28] sm:$0xff]
    %v8017 = vld [vmem:[#allocation3 + $0x30] sm:$0xff]
    %v8018 = vld [vmem:[#allocation3 + $0x38] sm:$0xff]
    %v8019 = vld [vmem:[#allocation3 + $0x40] sm:$0xff]
    %v8020 = vld [vmem:[#allocation3 + $0x48] sm:$0xff]
    %v8021 = vld [vmem:[#allocation3 + $0x50] sm:$0xff]
    %v8022 = vld [vmem:[#allocation3 + $0x58] sm:$0xff]
    %v8023 = vld [vmem:[#allocation3 + $0x60] sm:$0xff]
    %v8024 = vld [vmem:[#allocation3 + $0x68] sm:$0xff]
    %v8025 = vld [vmem:[#allocation3 + $0x70] sm:$0xff]
    %v8026 = vld [vmem:[#allocation3 + $0x78] sm:$0xff]
    %v8027 = vld [vmem:[#allocation3 + $0x80] sm:$0xff]
    %v8028 = vld [vmem:[#allocation3 + $0x88] sm:$0xff]
    %v8029 = vld [vmem:[#allocation3 + $0x90] sm:$0xff]
    %v8030 = vld [vmem:[#allocation3 + $0x98] sm:$0xff]
    %v8031 = vpack.c.bf16 %v8017, %v8016
    %v8032 = vpack.c.bf16 %v8019, %v8018
    %v8033 = vpack.c.bf16 %v8021, %v8020
    %v8034 = vpack.c.bf16 %v8023, %v8022
    %v8035 = vpack.c.bf16 %v8025, %v8024
    %v8036 = vpack.c.bf16 %v8027, %v8026
    %v8037 = vpack.c.bf16 %v8029, %v8028
    %v8038 = vpack.c.bf16 %v8030, %v8030
    %s8039 = scalar_lea.vmem %s3, 576
    %v8040 = vld [vmem:[%s8039] sm:$0xf]
    %v8041 = vld [vmem:[%s8039 + $0x4] sm:$0xf]
    %v8042 = vld [vmem:[%s8039 + $0x8] sm:$0xf]
    %v8043 = vld [vmem:[%s8039 + $0xc] sm:$0xf]
    %v8044 = vld [vmem:[%s8039 + $0x10] sm:$0xf]
    %v8045 = vld [vmem:[%s8039 + $0x14] sm:$0xf]
    %v8052 = vunpack.c.l.b16 %v8040
    %v8053 = vunpack.c.l.b16 %v8041
    %v8054 = vunpack.c.l.b16 %v8042
    %v8055 = vunpack.c.l.b16 %v8043
    %v8056 = vunpack.c.l.b16 %v8044
    %v8057 = vunpack.c.l.b16 %v8045
    %v8058 = vpack.c.b16 %v8053, %v8052
    %v8059 = vpack.c.b16 %v8055, %v8054
    %v8060 = vpack.c.b16 %v8057, %v8056
    %v8065 = vsel %vm173, %v8031, 0
    %v8068 = vsel %vm173, %v8032, 0
    %v8071 = vsel %vm173, %v8033, 0
    %v8074 = vsel %vm173, %v8034, 0
    %v8077 = vsel %vm173, %v8035, 0
    %v8080 = vsel %vm173, %v8036, 0
    %v8083 = vsel %vm173, %v8037, 0
    %v8086 = vsel %vm173, %v8038, 0
    %8088 = vmatprep.subr.bf16.mxu0 0
    %8089 = vmatpush1.bf16.msra.mxu0 0
    %8090 = vmatprep.subr.bf16.mxu0 0
    %8091 = vmatpush1.bf16.msra.mxu0 0
    %8092 = vmatprep.subr.bf16.mxu0 0
    %8093 = vmatpush1.bf16.msra.mxu0 0
    %8094 = vmatprep.subr.bf16.mxu0 0
    %8095 = vmatpush1.bf16.msra.mxu0 0
    %8096 = vmatprep.subr.bf16.mxu0 0
    %8097 = vmatpush1.bf16.msra.mxu0 0
    %8098 = vmatprep.subr.bf16.mxu0 0
    %8099 = vmatpush1.bf16.msra.mxu0 %v8060
    %8100 = vmatprep.subr.bf16.mxu0 0
    %8101 = vmatpush1.bf16.msra.mxu0 %v8059
    %8102 = vmatprep.subr.bf16.mxu0 0
    %8103 = vmatpush1.bf16.msra.mxu0 %v8058
    %8104 = vmatprep.subr.bf16.mxu0 0
    %8105 = vmatpush2.bf16.msra.mxu0 0
    %8106 = vmatprep.subr.bf16.mxu0 0
    %8107 = vmatpush2.bf16.msra.mxu0 0
    %8108 = vmatprep.subr.bf16.mxu0 0
    %8109 = vmatpush2.bf16.msra.mxu0 0
    %8110 = vmatprep.subr.bf16.mxu0 0
    %8111 = vmatpush2.bf16.msra.mxu0 0
    %8112 = vmatprep.subr.bf16.mxu0 0
    %8113 = vmatpush2.bf16.msra.mxu0 0
    %8114 = vmatprep.subr.bf16.mxu0 0
    %8115 = vmatpush2.bf16.msra.mxu0 0
    %8116 = vmatprep.subr.bf16.mxu0 0
    %8117 = vmatpush2.bf16.msra.mxu0 0
    %8118 = vmatprep.subr.bf16.mxu0 0
    %8119 = vmatpush2.bf16.msra.mxu0 0
    %8120 = vmatprep.mubr.bf16.mxu0 0
    %8121 = vmatmul.mubr.bf16.gmra.mxu0 %v8065
    %v8122 = vpop.f32.mrf.mxu0
    %v8123 = vadd.f32 0.0, %v8122
    %v8124 = vpop.f32.mrf.mxu0
    %v8125 = vpop.f32.mrf.mxu0
    %v8126 = vadd.f32 0.0, %v8125
    %v8127 = vpop.f32.mrf.mxu0
    %8128 = vmatprep.mubr.bf16.mxu0 0
    %8129 = vmatmul.mubr.bf16.gmra.mxu0 %v8068
    %v8130 = vpop.f32.mrf.mxu0
    %v8131 = vadd.f32 0.0, %v8130
    %v8132 = vpop.f32.mrf.mxu0
    %v8133 = vpop.f32.mrf.mxu0
    %v8134 = vadd.f32 0.0, %v8133
    %v8135 = vpop.f32.mrf.mxu0
    %8136 = vmatprep.mubr.bf16.mxu0 0
    %8137 = vmatmul.mubr.bf16.gmra.mxu0 %v8071
    %v8138 = vpop.f32.mrf.mxu0
    %v8139 = vadd.f32 0.0, %v8138
    %v8140 = vpop.f32.mrf.mxu0
    %v8141 = vpop.f32.mrf.mxu0
    %v8142 = vadd.f32 0.0, %v8141
    %v8143 = vpop.f32.mrf.mxu0
    %8144 = vmatprep.mubr.bf16.mxu0 0
    %8145 = vmatmul.mubr.bf16.gmra.mxu0 %v8074
    %v8146 = vpop.f32.mrf.mxu0
    %v8147 = vpop.f32.mrf.mxu0
    %v8148 = vpop.f32.mrf.mxu0
    %v8149 = vpop.f32.mrf.mxu0
    %8150 = vmatprep.mubr.bf16.mxu0 0
    %8151 = vmatmul.mubr.bf16.gmra.mxu0 %v8077
    %v8152 = vpop.f32.mrf.mxu0
    %v8153 = vpop.f32.mrf.mxu0
    %v8154 = vpop.f32.mrf.mxu0
    %v8155 = vpop.f32.mrf.mxu0
    %8156 = vmatprep.mubr.bf16.mxu0 0
    %8157 = vmatmul.mubr.bf16.gmra.mxu0 %v8080
    %v8158 = vpop.f32.mrf.mxu0
    %v8159 = vpop.f32.mrf.mxu0
    %v8160 = vpop.f32.mrf.mxu0
    %v8161 = vadd.f32 0.0, %v8160
    %v8162 = vpop.f32.mrf.mxu0
    %8163 = vmatprep.mubr.bf16.mxu0 0
    %8164 = vmatmul.mubr.bf16.gmra.mxu0 %v8083
    %v8165 = vpop.f32.mrf.mxu0
    %v8166 = vadd.f32 0.0, %v8165
    %v8167 = vpop.f32.mrf.mxu0
    %v8168 = vpop.f32.mrf.mxu0
    %v8169 = vadd.f32 0.0, %v8168
    %v8170 = vpop.f32.mrf.mxu0
    %8171 = vmatprep.mubr.bf16.mxu0 0
    %8172 = vmatmul.mubr.bf16.gmra.mxu0 %v8086
    %v8173 = vpop.f32.mrf.mxu0
    %v8174 = vadd.f32 0.0, %v8173
    %v8175 = vpop.f32.mrf.mxu0
    %v8176 = vpop.f32.mrf.mxu0
    %v8177 = vpop.f32.mrf.mxu0
    %8178 = vdwg.mxu0
    %v8179 = vadd.f32 %v8006, %v8123
    %v8180 = vadd.f32 %v8007, %v8126
    %v8181 = vadd.f32 %v8008, %v8131
    %v8182 = vadd.f32 %v8009, %v8134
    %v8183 = vadd.f32 %v8010, %v8139
    %v8184 = vadd.f32 %v8011, %v8142
    %v8185 = vadd.f32 %v8012, %v8161
    %v8186 = vadd.f32 %v8013, %v8166
    %v8187 = vadd.f32 %v8014, %v8169
    %v8188 = vadd.f32 %v8015, %v8174
    %v8189 = vld [vmem:[%s4] sm:$0x1]
    %v8191 = vlaneseq
    %v8192 = vshrl.u32 %v8191, 7
    %v8193 = vsub.s32 0, %v8192
    %v8194 = vrot.slane %v8189, %v8193
    %v8196 = vadd.f32 %v8179, %v8194
    %v8197 = vadd.f32 %v8180, %v8194
    %v8198 = vadd.f32 %v8181, %v8194
    %v8199 = vadd.f32 %v8182, %v8194
    %v8200 = vadd.f32 %v8183, %v8194
    %v8201 = vadd.f32 %v8184, %v8194
    %v8202 = vadd.f32 %v8185, %v8194
    %v8203 = vadd.f32 %v8186, %v8194
    %v8204 = vadd.f32 %v8187, %v8194
    %v8205 = vadd.f32 %v8188, %v8194
    %v8206 = vmax.f32 %v8196, 0.0
    %v8207 = vmax.f32 %v8197, 0.0
    %v8208 = vmax.f32 %v8198, 0.0
    %v8209 = vmax.f32 %v8199, 0.0
    %v8210 = vmax.f32 %v8200, 0.0
    %v8211 = vmax.f32 %v8201, 0.0
    %v8212 = vmax.f32 %v8202, 0.0
    %v8213 = vmax.f32 %v8203, 0.0
    %v8214 = vmax.f32 %v8204, 0.0
    %v8215 = vmax.f32 %v8205, 0.0
    %v8226 = vrot.slane %v8206, 1
    %v8227 = vrot.slane %v8207, 1
    %v8228 = vsel %vm3452, %v8226, %v8227
    %v8229 = vrot.slane %v8208, 1
    %v8230 = vsel %vm3452, %v8227, %v8229
    %v8231 = vrot.slane %v8209, 1
    %v8232 = vsel %vm3452, %v8229, %v8231
    %v8233 = vrot.slane %v8210, 1
    %v8234 = vsel %vm3452, %v8231, %v8233
    %v8235 = vrot.slane %v8211, 1
    %v8236 = vsel %vm3452, %v8233, %v8235
    %v8237 = vrot.slane %v8212, 1
    %v8238 = vrot.slane %v8213, 1
    %v8239 = vsel %vm3452, %v8237, %v8238
    %v8240 = vrot.slane %v8214, 1
    %v8241 = vsel %vm3452, %v8238, %v8240
    %v8242 = vrot.slane %v8215, 1
    %v8243 = vsel %vm3452, %v8240, %v8242
    %v8253 = vmax.f32 %v8206, %v8228
    %v8254 = vmax.f32 %v8207, %v8230
    %v8255 = vmax.f32 %v8208, %v8232
    %v8256 = vmax.f32 %v8209, %v8234
    %v8257 = vmax.f32 %v8210, %v8236
    %v8258 = vmax.f32 %v8212, %v8239
    %v8259 = vmax.f32 %v8213, %v8241
    %v8260 = vmax.f32 %v8214, %v8243
    %v8261 = vmax.f32 %v8215, %v8242
    %v8269 = vrot.slane %v8254, 1
    %v8270 = vrot.slane %v8255, 1
    %v8271 = vsel %vm3452, %v8269, %v8270
    %v8272 = vrot.slane %v8256, 1
    %v8273 = vrot.slane %v8257, 1
    %v8274 = vsel %vm3452, %v8272, %v8273
    %v8275 = vrot.slane %v8259, 1
    %v8276 = vrot.slane %v8260, 1
    %v8277 = vsel %vm3452, %v8275, %v8276
    %v8278 = vrot.slane %v8261, 1
    %v8283 = vmax.f32 %v8253, %v8271
    %v8284 = vmax.f32 %v8255, %v8274
    %v8285 = vmax.f32 %v8258, %v8277
    %v8286 = vmax.f32 %v8260, %v8278
    %v8288 = vrot.slane %v8283, 1
    %v8291 = vrot.slane %v8284, 1
    %v8294 = vrot.slane %v8285, 4
    %v8296 = vrot.slane %v8285, 5
    %v8299 = vrot.slane %v8286, 4
    %v8301 = vrot.slane %v8286, 5
    %vm8303 = vcmask 1040384
    %v8304 = vsel %vm8303, %v8283, %v8288
    %vm8305 = vcmask 1041408
    %v8306 = vsel %vm8305, %v8304, %v8284
    %v8307 = vsel %vm3646, %v8306, %v8291
    %vm8308 = vcmask 1043456
    %v8309 = vsel %vm8308, %v8307, %v8294
    %vm8310 = vcmask 1044480
    %v8311 = vsel %vm8310, %v8309, %v8296
    %vm8312 = vcmask 1045504
    %v8313 = vsel %vm8312, %v8311, %v8299
    %v8314 = vsel %vm3452, %v8313, %v8301
    %8315 = vst [vmem:[#allocation4] sm:$0xff] %v8314
    // Predicated region
    $region22: #{module1_forward.1} parent=1 // pred_check
      _
    $region23: #{module1_forward.1} parent=1 // pred_check_branch
      %8317 = sbr.rel (0) target = $region25
    $region24: #{module1_forward.1} parent=1 // pred_region
      %s8319 = ssub.s32 128, 128
      %8320 = vsyncadd [#allocation5], %s8319
      %s8322 = sshll.u32 [#allocation4], 4
      %s8323 = int_to_ptr.vmem [resolvable:$true] %s8322
      %8325 = dma.vmem_to_hbm [thread:$0]  %s8323, 128, %s5, [#allocation5]
    $region25: #{module1_forward.1} parent=1 // pred_fallthru
      _
    // Predicated region
    $region26: #{module1_forward.1} parent=1 // pred_check
      _
    $region27: #{module1_forward.1} parent=1 // pred_check_branch
      %8327 = sbr.rel (0) target = $region29
    $region28: #{module1_forward.1} parent=1 // pred_region
      %8328 = dma.done [#allocation5], 128
    $region29: #{module1_forward.1} parent=1 // pred_fallthru
      _
    %8329 = vsyncpa [#allocation5], 1

</llo_original>
